<compile_context>
chip_gen: v5e
topology: v5e:2x2
jax: 0.10.0
libtpu: 0.0.40
codegen_flags: <defaults>
</compile_context>

<pallas_src>
import functools
import math

import jax
import jax.numpy as jnp
from jax.experimental import pallas as pl
from jax.experimental.pallas import tpu as pltpu

Z_DIM = 2
H1, H1_PAD = 100, 128
H2, H2_PAD = 300, 384
OUT, OUT_PAD = 7, 128

MAX_TILE_B = 2048            # per-step overhead amortization; still only ~7 MiB VMEM/tile
SPLIT_THRESHOLD = 1024       # below this, one tile; above, >=2 (even) steps for v7x megacore
VMEM_LIMIT_BYTES = 32 * 1024 * 1024   # explicit scoped-VMEM limit, safe on v5e..v7x


def _round_up(x, m):
    return (x + m - 1) // m * m


def _choose_tile_b(batch, max_tile=MAX_TILE_B, split_threshold=SPLIT_THRESHOLD):
    """Batch tile: multiple of 8; adaptive (small padding); >=2 even steps for big B."""
    b8 = _round_up(max(batch, 8), 8)
    if b8 < split_threshold:
        return b8                                  # single tile; step overhead dominates anyway
    n_steps = max(2, -(-b8 // max_tile))           # ceil division
    if n_steps % 2:                                # even step count: no tail bubble across 2 TCs
        n_steps += 1
    return _round_up(-(-b8 // n_steps), 8)


def _has_bf16_valu():
    """Perf-only toggle: bf16 elementwise epilogue on v6e/v7x, f32 on v5e and older."""
    try:
        kind = jax.devices()[0].device_kind.lower()
    except Exception:  # pragma: no cover - conservative fallback
        return False
    return not any(v in kind for v in ("v2", "v3", "v4", "v5"))


def decoder_kernel(z_ref, w1_ref, b1_ref, w2_ref, b2_ref, w3_ref, b3_ref, o_ref,
                   *, bf16_epilogue):
    z = z_ref[...]                                            # (tb, 2) f32
    # --- Layer 1 (K = 2): VPU broadcast-FMAs; an MXU matmul here is mostly zero padding.
    h = (z[:, 0:1] * w1_ref[0:1, :]
         + z[:, 1:2] * w1_ref[1:2, :]
         + b1_ref[...])
    h = jnp.maximum(h, 0.0)                                   # ReLU (f32)
    # --- Layer 2: bf16 MXU matmul, f32 accumulation.
    h = jnp.dot(h.astype(jnp.bfloat16), w2_ref[...],
                preferred_element_type=jnp.float32)
    if bf16_epilogue:
        # bf16 bias-add + ReLU on the widest (tb, 384) tensor (v6e/v7x bf16 VALU).
        h = jnp.maximum(h.astype(jnp.bfloat16) + b2_ref[...].astype(jnp.bfloat16), 0.0)
    else:
        # f32 elementwise path (v5e and older: no bf16 VPU), cast once for the MXU.
        h = jnp.maximum(h + b2_ref[...], 0.0).astype(jnp.bfloat16)
    # --- Layer 3 + sigmoid; lane-dense padded output, stored bf16 (valid lanes [:, :OUT]).
    h = jnp.dot(h, w3_ref[...], preferred_element_type=jnp.float32) + b3_ref[...]
    o_ref[...] = jax.nn.sigmoid(h).astype(o_ref.dtype)


def decoder_forward(z, packed_params, *, max_tile_b=MAX_TILE_B):
    """z: (B, Z_DIM) f32. Returns (B, OUT) f32."""
    w1, b1, w2, b2, w3, b3 = packed_params
    B = z.shape[0]
    tb = _choose_tile_b(B, max_tile=max_tile_b)
    B_pad = _round_up(B, tb)
    if B_pad != B:
        z = jnp.pad(z, ((0, B_pad - B), (0, 0)))
    grid = (B_pad // tb,)

    flops = 2 * B_pad * (Z_DIM * H1_PAD + H1_PAD * H2_PAD + H2_PAD * OUT_PAD)
    bytes_accessed = (z.size * 4
                      + w1.size * 4 + b1.size * 4
                      + w2.size * 2 + b2.size * 4
                      + w3.size * 2 + b3.size * 4
                      + B_pad * OUT_PAD * 2)                  # bf16 output writeback

    kernel = functools.partial(decoder_kernel, bf16_epilogue=_has_bf16_valu())

    out = pl.pallas_call(
        kernel,
        out_shape=jax.ShapeDtypeStruct((B_pad, OUT_PAD), jnp.bfloat16),
        grid=grid,
        in_specs=[
            pl.BlockSpec((tb, Z_DIM), lambda i: (i, 0)),       # z: tiled on batch
            pl.BlockSpec((Z_DIM, H1_PAD), lambda i: (0, 0)),   # weights/biases: resident
            pl.BlockSpec((1, H1_PAD), lambda i: (0, 0)),
            pl.BlockSpec((H1_PAD, H2_PAD), lambda i: (0, 0)),
            pl.BlockSpec((1, H2_PAD), lambda i: (0, 0)),
            pl.BlockSpec((H2_PAD, OUT_PAD), lambda i: (0, 0)),
            pl.BlockSpec((1, OUT_PAD), lambda i: (0, 0)),
        ],
        out_specs=pl.BlockSpec((tb, OUT_PAD), lambda i: (i, 0)),
        compiler_params=pltpu.CompilerParams(
            dimension_semantics=("parallel",),
            vmem_limit_bytes=VMEM_LIMIT_BYTES),
        cost_estimate=pl.CostEstimate(
            flops=flops,
            transcendentals=B_pad * OUT_PAD,
            bytes_accessed=bytes_accessed),
    )(z, w1, b1, w2, b2, w3, b3)

    # Valid rows/cols only; cast back to f32 so callers see the PyTorch dtype.
    return out[:B, :OUT].astype(jnp.float32)


def init_raw_params(key):
    """Unpadded f32 params mimicking nn.Linear U(-1/sqrt(fan_in), 1/sqrt(fan_in)).
    Weights stored as (in, out) so the forward is x @ W + b (== PyTorch x @ W.T + b)."""
    def linear(k, fan_in, fan_out):
        kw, kb = jax.random.split(k)
        bound = 1.0 / math.sqrt(fan_in)
        w = jax.random.uniform(kw, (fan_in, fan_out), jnp.float32, -bound, bound)
        b = jax.random.uniform(kb, (fan_out,), jnp.float32, -bound, bound)
        return w, b

    k1, k2, k3 = jax.random.split(key, 3)
    return (linear(k1, Z_DIM, H1), linear(k2, H1, H2), linear(k3, H2, OUT))


def pack_params(raw):
    """Zero-pad to lane-aligned shapes; layers 2/3 weights stored bf16 for the MXU."""
    (w1, b1), (w2, b2), (w3, b3) = raw
    w1p = jnp.zeros((Z_DIM, H1_PAD), jnp.float32).at[:, :H1].set(w1)
    b1p = jnp.zeros((1, H1_PAD), jnp.float32).at[0, :H1].set(b1)
    w2p = jnp.zeros((H1_PAD, H2_PAD), jnp.float32).at[:H1, :H2].set(w2).astype(jnp.bfloat16)
    b2p = jnp.zeros((1, H2_PAD), jnp.float32).at[0, :H2].set(b2)
    w3p = jnp.zeros((H2_PAD, OUT_PAD), jnp.float32).at[:H2, :OUT].set(w3).astype(jnp.bfloat16)
    b3p = jnp.zeros((1, OUT_PAD), jnp.float32).at[0, :OUT].set(b3)
    return (w1p, b1p, w2p, b2p, w3p, b3p)


def decoder_reference(z, raw):
    """Pure-JAX f32 reference matching the PyTorch module."""
    (w1, b1), (w2, b2), (w3, b3) = raw
    x = jnp.maximum(z @ w1 + b1, 0.0)
    x = jnp.maximum(x @ w2 + b2, 0.0)
    return jax.nn.sigmoid(x @ w3 + b3)


if __name__ == "__main__":
    key = jax.random.PRNGKey(0)
    k_params, k_z = jax.random.split(key)

    raw_params = init_raw_params(k_params)
    packed_params = pack_params(raw_params)

    # Matches the original script's data shape (2020 samples, z_dim=2); exercises the
    # multi-tile grid (2 parallel steps), adaptive batch padding, and valid-slice path.
    B = 2020
    z = jax.random.normal(k_z, (B, Z_DIM), jnp.float32)

    out = jax.block_until_ready(decoder_forward(z, packed_params))
    ref = decoder_reference(z, raw_params)

    assert out.shape == (B, OUT), out.shape
    assert out.dtype == jnp.float32, out.dtype
    # Tolerance relaxed vs the pure-f32 reference: layers 2/3 use bf16 MXU operands
    # (f32 accumulation) and the output is stored bf16; post-sigmoid error is ~1e-3.
    max_err = float(jnp.max(jnp.abs(out - ref)))
    assert jnp.allclose(out, ref, atol=2e-2, rtol=2e-2), f"max abs err {max_err}"

    # Also exercise the tiny-batch (single-tile, sublane-padded) path.
    z_small = jax.random.normal(k_z, (20, Z_DIM), jnp.float32)
    out_small = jax.block_until_ready(decoder_forward(z_small, packed_params))
    ref_small = decoder_reference(z_small, raw_params)
    assert out_small.shape == (20, OUT), out_small.shape
    max_err_small = float(jnp.max(jnp.abs(out_small - ref_small)))
    assert jnp.allclose(out_small, ref_small, atol=2e-2, rtol=2e-2), \
        f"max abs err {max_err_small}"

    print("KERNEL_OK")
</pallas_src>

<mosaic_0001>
module attributes {stable_mosaic.version = 11 : i64} {
  func.func @decoder_kernel(%arg0: i32, %arg1: memref<1016x2xf32, #tpu.memory_space<vmem>>, %arg2: memref<2x128xf32, #tpu.memory_space<vmem>>, %arg3: memref<1x128xf32, #tpu.memory_space<vmem>>, %arg4: memref<128x384xbf16, #tpu.memory_space<vmem>>, %arg5: memref<1x384xf32, #tpu.memory_space<vmem>>, %arg6: memref<384x128xbf16, #tpu.memory_space<vmem>>, %arg7: memref<1x128xf32, #tpu.memory_space<vmem>>, %arg8: memref<1016x128xbf16, #tpu.memory_space<vmem>>) attributes {dimension_semantics = [#tpu.dimension_semantics<parallel>], iteration_bounds = array<i64: 2>, scalar_prefetch = 0 : i64, scratch_operands = 0 : i64, tpu.core_type = #tpu.core_type<tc>, window_params = [{transform_indices = @transform_0, window_bounds = array<i64: 1016, 2>}, {pipeline_mode = #tpu.pipeline_mode<synchronous>, transform_indices = @transform_1, window_bounds = array<i64: 2, 128>}, {pipeline_mode = #tpu.pipeline_mode<synchronous>, transform_indices = @transform_2, window_bounds = array<i64: 1, 128>}, {pipeline_mode = #tpu.pipeline_mode<synchronous>, transform_indices = @transform_3, window_bounds = array<i64: 128, 384>}, {pipeline_mode = #tpu.pipeline_mode<synchronous>, transform_indices = @transform_4, window_bounds = array<i64: 1, 384>}, {pipeline_mode = #tpu.pipeline_mode<synchronous>, transform_indices = @transform_5, window_bounds = array<i64: 384, 128>}, {pipeline_mode = #tpu.pipeline_mode<synchronous>, transform_indices = @transform_6, window_bounds = array<i64: 1, 128>}, {transform_indices = @transform_7, window_bounds = array<i64: 1016, 128>}]} {
    %c0 = arith.constant 0 : index
    %c0_0 = arith.constant 0 : index
    %0 = vector.load %arg1[%c0, %c0_0] : memref<1016x2xf32, #tpu.memory_space<vmem>>, vector<1016x2xf32>
    %1 = vector.extract_strided_slice %0 {offsets = [0, 0], sizes = [1016, 1], strides = [1, 1]} : vector<1016x2xf32> to vector<1016x1xf32>
    %c0_1 = arith.constant 0 : index
    %c0_2 = arith.constant 0 : index
    %2 = vector.load %arg2[%c0_1, %c0_2] : memref<2x128xf32, #tpu.memory_space<vmem>>, vector<1x128xf32>
    %3 = vector.broadcast %1 : vector<1016x1xf32> to vector<1016x128xf32>
    %4 = vector.broadcast %2 : vector<1x128xf32> to vector<1016x128xf32>
    %5 = arith.mulf %3, %4 : vector<1016x128xf32>
    %6 = vector.extract_strided_slice %0 {offsets = [0, 1], sizes = [1016, 1], strides = [1, 1]} : vector<1016x2xf32> to vector<1016x1xf32>
    %c1 = arith.constant 1 : index
    %c0_3 = arith.constant 0 : index
    %7 = vector.load %arg2[%c1, %c0_3] : memref<2x128xf32, #tpu.memory_space<vmem>>, vector<1x128xf32>
    %8 = vector.broadcast %6 : vector<1016x1xf32> to vector<1016x128xf32>
    %9 = vector.broadcast %7 : vector<1x128xf32> to vector<1016x128xf32>
    %10 = arith.mulf %8, %9 : vector<1016x128xf32>
    %11 = arith.addf %5, %10 : vector<1016x128xf32>
    %c0_4 = arith.constant 0 : index
    %c0_5 = arith.constant 0 : index
    %12 = vector.load %arg3[%c0_4, %c0_5] : memref<1x128xf32, #tpu.memory_space<vmem>>, vector<1x128xf32>
    %13 = vector.broadcast %12 : vector<1x128xf32> to vector<1016x128xf32>
    %14 = arith.addf %11, %13 : vector<1016x128xf32>
    %cst = arith.constant 0.000000e+00 : f32
    %15 = vector.broadcast %cst : f32 to vector<1016x128xf32>
    %16 = arith.maximumf %14, %15 : vector<1016x128xf32>
    %17 = arith.truncf %16 : vector<1016x128xf32> to vector<1016x128xbf16>
    %c0_6 = arith.constant 0 : index
    %c0_7 = arith.constant 0 : index
    %18 = vector.load %arg4[%c0_6, %c0_7] : memref<128x384xbf16, #tpu.memory_space<vmem>>, vector<128x384xbf16>
    %cst_8 = arith.constant dense<0.000000e+00> : vector<1016x384xf32>
    %19 = tpu.matmul %17, %18, %cst_8 {dimension_numbers = #tpu.dot_dimension_numbers<[1], [0], [0], [1], [0, 0, 1, 1], [], []>} : vector<1016x128xbf16>, vector<128x384xbf16>, vector<1016x384xf32> -> vector<1016x384xf32>
    %20 = arith.truncf %19 : vector<1016x384xf32> to vector<1016x384xbf16>
    %c0_9 = arith.constant 0 : index
    %c0_10 = arith.constant 0 : index
    %21 = vector.load %arg5[%c0_9, %c0_10] : memref<1x384xf32, #tpu.memory_space<vmem>>, vector<1x384xf32>
    %22 = arith.truncf %21 : vector<1x384xf32> to vector<1x384xbf16>
    %23 = vector.broadcast %22 : vector<1x384xbf16> to vector<1016x384xbf16>
    %24 = arith.addf %20, %23 : vector<1016x384xbf16>
    %cst_11 = arith.constant 0.000000e+00 : bf16
    %25 = vector.broadcast %cst_11 : bf16 to vector<1016x384xbf16>
    %26 = arith.maximumf %24, %25 : vector<1016x384xbf16>
    %c0_12 = arith.constant 0 : index
    %c0_13 = arith.constant 0 : index
    %27 = vector.load %arg6[%c0_12, %c0_13] : memref<384x128xbf16, #tpu.memory_space<vmem>>, vector<384x128xbf16>
    %cst_14 = arith.constant dense<0.000000e+00> : vector<1016x128xf32>
    %28 = tpu.matmul %26, %27, %cst_14 {dimension_numbers = #tpu.dot_dimension_numbers<[1], [0], [0], [1], [0, 0, 1, 1], [], []>} : vector<1016x384xbf16>, vector<384x128xbf16>, vector<1016x128xf32> -> vector<1016x128xf32>
    %c0_15 = arith.constant 0 : index
    %c0_16 = arith.constant 0 : index
    %29 = vector.load %arg7[%c0_15, %c0_16] : memref<1x128xf32, #tpu.memory_space<vmem>>, vector<1x128xf32>
    %30 = vector.broadcast %29 : vector<1x128xf32> to vector<1016x128xf32>
    %31 = arith.addf %28, %30 : vector<1016x128xf32>
    %32 = arith.negf %31 : vector<1016x128xf32>
    %33 = math.exp %32 : vector<1016x128xf32>
    %cst_17 = arith.constant 1.000000e+00 : f32
    %34 = vector.broadcast %cst_17 : f32 to vector<1016x128xf32>
    %35 = arith.addf %34, %33 : vector<1016x128xf32>
    %36 = arith.divf %34, %35 : vector<1016x128xf32>
    %37 = arith.truncf %36 : vector<1016x128xf32> to vector<1016x128xbf16>
    %c0_18 = arith.constant 0 : index
    %c0_19 = arith.constant 0 : index
    %38 = vector.load %arg8[%c0_18, %c0_19] : memref<1016x128xbf16, #tpu.memory_space<vmem>>, vector<1016x128xbf16>
    tpu.vector_store %arg8[%c0_18, %c0_19], %37 {strides = array<i32>} : memref<1016x128xbf16, #tpu.memory_space<vmem>>, vector<1016x128xbf16>,
    return
  }
  func.func @transform_0(%arg0: i32) -> (i32, i32) {
    %c0_i32 = arith.constant 0 : i32
    %c0_i32_0 = arith.constant 0 : i32
    return %arg0, %c0_i32 : i32, i32
  }
  func.func @transform_1(%arg0: i32) -> (i32, i32) {
    %c0_i32 = arith.constant 0 : i32
    %c0_i32_0 = arith.constant 0 : i32
    %c0_i32_1 = arith.constant 0 : i32
    return %c0_i32, %c0_i32_0 : i32, i32
  }
  func.func @transform_2(%arg0: i32) -> (i32, i32) {
    %c0_i32 = arith.constant 0 : i32
    %c0_i32_0 = arith.constant 0 : i32
    %c0_i32_1 = arith.constant 0 : i32
    return %c0_i32, %c0_i32_0 : i32, i32
  }
  func.func @transform_3(%arg0: i32) -> (i32, i32) {
    %c0_i32 = arith.constant 0 : i32
    %c0_i32_0 = arith.constant 0 : i32
    %c0_i32_1 = arith.constant 0 : i32
    return %c0_i32, %c0_i32_0 : i32, i32
  }
  func.func @transform_4(%arg0: i32) -> (i32, i32) {
    %c0_i32 = arith.constant 0 : i32
    %c0_i32_0 = arith.constant 0 : i32
    %c0_i32_1 = arith.constant 0 : i32
    return %c0_i32, %c0_i32_0 : i32, i32
  }
  func.func @transform_5(%arg0: i32) -> (i32, i32) {
    %c0_i32 = arith.constant 0 : i32
    %c0_i32_0 = arith.constant 0 : i32
    %c0_i32_1 = arith.constant 0 : i32
    return %c0_i32, %c0_i32_0 : i32, i32
  }
  func.func @transform_6(%arg0: i32) -> (i32, i32) {
    %c0_i32 = arith.constant 0 : i32
    %c0_i32_0 = arith.constant 0 : i32
    %c0_i32_1 = arith.constant 0 : i32
    return %c0_i32, %c0_i32_0 : i32, i32
  }
  func.func @transform_7(%arg0: i32) -> (i32, i32) {
    %c0_i32 = arith.constant 0 : i32
    %c0_i32_0 = arith.constant 0 : i32
    return %arg0, %c0_i32 : i32, i32
  }
}

</mosaic_0001>

<llo_original>
// kernel: tpu_custom_call.1
$region0: #{tpu_custom_call.1}
  #allocation0 [shape = 'u32[]', space=smem, size = 0x4, offset = 0x4, fixed_abs, tag = 'smem constant byte address 0x4 - core index']
  #allocation1 [shape = 'u32[72,128]{1,0:T(1,128)}', space=vmem, size = 0x9000, scoped, tag = 'internal scratch']
  %s0 = inlined_call_operand.vmem [shape: f32[2032,2], index: 0, kind: input, shape index: {}]
  %s1 = inlined_call_operand.vmem [shape: f32[2,128], index: 1, kind: input, shape index: {}]
  %s2 = inlined_call_operand.vmem [shape: f32[1,128], index: 2, kind: input, shape index: {}]
  %s3 = inlined_call_operand.vmem [shape: bf16[128,384], index: 3, kind: input, shape index: {}]
  %s4 = inlined_call_operand.vmem [shape: f32[1,384], index: 4, kind: input, shape index: {}]
  %s5 = inlined_call_operand.vmem [shape: bf16[384,128], index: 5, kind: input, shape index: {}]
  %s6 = inlined_call_operand.vmem [shape: f32[1,128], index: 6, kind: input, shape index: {}]
  %s7 = inlined_call_operand.hbm [shape: bf16[2032,128], index: 7, kind: output, shape index: {}]
  %s8 = sld [smem:[#allocation0]]
  $region61: #{tpu_custom_call.1} parent=0
    _
  %s10 = ssub.s32 1, %s8
  %s11 = scalar_select 0, %s10, %s8
  $region1: #{tpu_custom_call.1} parent=0
    #allocation2 [shape = 'u8[520192]{0}', space=vmem, size = 0x7f000, scoped, tag = 'output window, operand 0']
    #allocation3 [shape = 's32[2]{0}', space=sflag, size = 0x8, scoped, tag = 'scoped memory for tpu_custom_call.1']
    %12 = vsyncpa [#allocation3], 0
    %s13 = scalar_lea.sflag [#allocation3], 1
    %14 = vsyncpa %s13, 0
    loop: start=0, step=1, limit=4
    $region2: #{tpu_custom_call.1} parent=1 // loop_pre_header
      _
    $region3: #{tpu_custom_call.1} parent=1 // loop_header
      %s16 = sphi 0, %s20
      %p17 = scmp.ge.s32.totalorder %s16, 4
      %s26 = sphi 0, %s28
      %s29 = sphi 0, %s26
      %s30 = sphi 0, %s29
      %s46 = sphi 0, %s30
      %s50 = sphi 0, %s50
      %s52 = sphi 0, %s50
      %s53 = sphi 0, %s52
      %s67 = sphi 0, %s53
      %s71 = sphi 0, %s71
      %s73 = sphi 0, %s71
      %s74 = sphi 0, %s73
      %s88 = sphi 0, %s74
      %s92 = sphi 0, %s92
      %s94 = sphi 0, %s92
      %s95 = sphi 0, %s94
      %s109 = sphi 0, %s95
      %s113 = sphi 0, %s113
      %s115 = sphi 0, %s113
      %s116 = sphi 0, %s115
      %s130 = sphi 0, %s116
      %s134 = sphi 0, %s134
      %s136 = sphi 0, %s134
      %s137 = sphi 0, %s136
      %s151 = sphi 0, %s137
      %s155 = sphi 0, %s155
      %s157 = sphi 0, %s155
      %s158 = sphi 0, %s157
      %s172 = sphi 0, %s158
      %s178 = sphi 0, %s180
      %s181 = sphi 0, %s178
      %s182 = sphi 0, %s181
      %s198 = sphi 0, %s182
    $region4: #{tpu_custom_call.1} parent=1 // loop_header_branch
      %19 = sbr.rel (%p17) target = $region8
    $region5: #{tpu_custom_call.1} parent=1 // loop_body
      %s21 = ssub.s32 %s16, 1
      %s22 = ssub.s32 %s16, 2
      %s23 = sadd.s32 %s16, 1
      %s24 = ssub.s32 %s16, %s23
      %p25 = scmp.eq.s32.totalorder %s24, 0
      %s27 = sadd.s32 %s26, 1
      %s28 = scalar_select %p25, %s26, %s27
      %p31 = pneg %p25
      %p32 = scmp.eq.s32.totalorder %s16, 1
      %p33 = por %p31, %p32
      %p34 = scmp.ne.s32.totalorder %s26, %s29
      %p35 = scmp.eq.s32.totalorder %s16, 0
      %p36 = por %p34, %p35
      %p37 = scmp.ne.s32.totalorder %s26, %s29
      %p38 = scmp.eq.s32.totalorder %s21, 1
      %p39 = por %p37, %p38
      %p40 = scmp.ne.s32.totalorder %s29, %s30
      %p41 = scmp.eq.s32.totalorder %s21, 0
      %p42 = por %p40, %p41
      %p43 = scmp.ne.s32.totalorder %s29, %s30
      %p44 = scmp.eq.s32.totalorder %s22, 1
      %p45 = por %p43, %p44
      %p47 = scmp.ne.s32.totalorder %s30, %s46
      %p48 = scmp.eq.s32.totalorder %s22, 0
      %p49 = por %p47, %p48
      %s51 = sadd.s32 %s50, 1
      %p54 = scmp.eq.s32.totalorder %s16, 1
      %p55 = scmp.ne.s32.totalorder %s50, %s52
      %p56 = scmp.eq.s32.totalorder %s16, 0
      %p57 = por %p55, %p56
      %p58 = scmp.ne.s32.totalorder %s50, %s52
      %p59 = scmp.eq.s32.totalorder %s21, 1
      %p60 = por %p58, %p59
      %p61 = scmp.ne.s32.totalorder %s52, %s53
      %p62 = scmp.eq.s32.totalorder %s21, 0
      %p63 = por %p61, %p62
      %p64 = scmp.ne.s32.totalorder %s52, %s53
      %p65 = scmp.eq.s32.totalorder %s22, 1
      %p66 = por %p64, %p65
      %p68 = scmp.ne.s32.totalorder %s53, %s67
      %p69 = scmp.eq.s32.totalorder %s22, 0
      %p70 = por %p68, %p69
      %s72 = sadd.s32 %s71, 1
      %p75 = scmp.eq.s32.totalorder %s16, 1
      %p76 = scmp.ne.s32.totalorder %s71, %s73
      %p77 = scmp.eq.s32.totalorder %s16, 0
      %p78 = por %p76, %p77
      %p79 = scmp.ne.s32.totalorder %s71, %s73
      %p80 = scmp.eq.s32.totalorder %s21, 1
      %p81 = por %p79, %p80
      %p82 = scmp.ne.s32.totalorder %s73, %s74
      %p83 = scmp.eq.s32.totalorder %s21, 0
      %p84 = por %p82, %p83
      %p85 = scmp.ne.s32.totalorder %s73, %s74
      %p86 = scmp.eq.s32.totalorder %s22, 1
      %p87 = por %p85, %p86
      %p89 = scmp.ne.s32.totalorder %s74, %s88
      %p90 = scmp.eq.s32.totalorder %s22, 0
      %p91 = por %p89, %p90
      %s93 = sadd.s32 %s92, 1
      %p96 = scmp.eq.s32.totalorder %s16, 1
      %p97 = scmp.ne.s32.totalorder %s92, %s94
      %p98 = scmp.eq.s32.totalorder %s16, 0
      %p99 = por %p97, %p98
      %p100 = scmp.ne.s32.totalorder %s92, %s94
      %p101 = scmp.eq.s32.totalorder %s21, 1
      %p102 = por %p100, %p101
      %p103 = scmp.ne.s32.totalorder %s94, %s95
      %p104 = scmp.eq.s32.totalorder %s21, 0
      %p105 = por %p103, %p104
      %p106 = scmp.ne.s32.totalorder %s94, %s95
      %p107 = scmp.eq.s32.totalorder %s22, 1
      %p108 = por %p106, %p107
      %p110 = scmp.ne.s32.totalorder %s95, %s109
      %p111 = scmp.eq.s32.totalorder %s22, 0
      %p112 = por %p110, %p111
      %s114 = sadd.s32 %s113, 1
      %p117 = scmp.eq.s32.totalorder %s16, 1
      %p118 = scmp.ne.s32.totalorder %s113, %s115
      %p119 = scmp.eq.s32.totalorder %s16, 0
      %p120 = por %p118, %p119
      %p121 = scmp.ne.s32.totalorder %s113, %s115
      %p122 = scmp.eq.s32.totalorder %s21, 1
      %p123 = por %p121, %p122
      %p124 = scmp.ne.s32.totalorder %s115, %s116
      %p125 = scmp.eq.s32.totalorder %s21, 0
      %p126 = por %p124, %p125
      %p127 = scmp.ne.s32.totalorder %s115, %s116
      %p128 = scmp.eq.s32.totalorder %s22, 1
      %p129 = por %p127, %p128
      %p131 = scmp.ne.s32.totalorder %s116, %s130
      %p132 = scmp.eq.s32.totalorder %s22, 0
      %p133 = por %p131, %p132
      %s135 = sadd.s32 %s134, 1
      %p138 = scmp.eq.s32.totalorder %s16, 1
      %p139 = scmp.ne.s32.totalorder %s134, %s136
      %p140 = scmp.eq.s32.totalorder %s16, 0
      %p141 = por %p139, %p140
      %p142 = scmp.ne.s32.totalorder %s134, %s136
      %p143 = scmp.eq.s32.totalorder %s21, 1
      %p144 = por %p142, %p143
      %p145 = scmp.ne.s32.totalorder %s136, %s137
      %p146 = scmp.eq.s32.totalorder %s21, 0
      %p147 = por %p145, %p146
      %p148 = scmp.ne.s32.totalorder %s136, %s137
      %p149 = scmp.eq.s32.totalorder %s22, 1
      %p150 = por %p148, %p149
      %p152 = scmp.ne.s32.totalorder %s137, %s151
      %p153 = scmp.eq.s32.totalorder %s22, 0
      %p154 = por %p152, %p153
      %s156 = sadd.s32 %s155, 1
      %p159 = scmp.eq.s32.totalorder %s16, 1
      %p160 = scmp.ne.s32.totalorder %s155, %s157
      %p161 = scmp.eq.s32.totalorder %s16, 0
      %p162 = por %p160, %p161
      %p163 = scmp.ne.s32.totalorder %s155, %s157
      %p164 = scmp.eq.s32.totalorder %s21, 1
      %p165 = por %p163, %p164
      %p166 = scmp.ne.s32.totalorder %s157, %s158
      %p167 = scmp.eq.s32.totalorder %s21, 0
      %p168 = por %p166, %p167
      %p169 = scmp.ne.s32.totalorder %s157, %s158
      %p170 = scmp.eq.s32.totalorder %s22, 1
      %p171 = por %p169, %p170
      %p173 = scmp.ne.s32.totalorder %s158, %s172
      %p174 = scmp.eq.s32.totalorder %s22, 0
      %p175 = por %p173, %p174
      %s176 = ssub.s32 %s16, %s23
      %p177 = scmp.eq.s32.totalorder %s176, 0
      %s179 = sadd.s32 %s178, 1
      %s180 = scalar_select %p177, %s178, %s179
      %p183 = pneg %p177
      %p184 = scmp.eq.s32.totalorder %s16, 1
      %p185 = por %p183, %p184
      %p186 = scmp.ne.s32.totalorder %s178, %s181
      %p187 = scmp.eq.s32.totalorder %s16, 0
      %p188 = por %p186, %p187
      %p189 = scmp.ne.s32.totalorder %s178, %s181
      %p190 = scmp.eq.s32.totalorder %s21, 1
      %p191 = por %p189, %p190
      %p192 = scmp.ne.s32.totalorder %s181, %s182
      %p193 = scmp.eq.s32.totalorder %s21, 0
      %p194 = por %p192, %p193
      %p195 = scmp.ne.s32.totalorder %s181, %s182
      %p196 = scmp.eq.s32.totalorder %s22, 1
      %p197 = por %p195, %p196
      %p199 = scmp.ne.s32.totalorder %s182, %s198
      %p200 = scmp.eq.s32.totalorder %s22, 0
      %p201 = por %p199, %p200
      %p202 = scmp.le.s32.totalorder 1, %s16
      %p203 = scmp.lt.s32.totalorder %s16, 3
      %p204 = pnand %p202, %p203
      %p205 = pneg %p204
      // Predicated region
      $region9: #{tpu_custom_call.1} parent=5 // pred_check
        _
      $region10: #{tpu_custom_call.1} parent=5 // pred_check_branch
        %207 = sbr.rel (%p204) target = $region12
      $region11: #{tpu_custom_call.1} parent=5 // pred_region
        %s208 = ssub.s32 %s16, 1
        // Predicated region
        $region13: #{tpu_custom_call.1} parent=11 // pred_check
          %p209 = pneg %p63
        $region14: #{tpu_custom_call.1} parent=11 // pred_check_branch
          %211 = sbr.rel (%p209) target = $region16
        $region15: #{tpu_custom_call.1} parent=11 // pred_region
          _
        $region16: #{tpu_custom_call.1} parent=11 // pred_fallthru
          _
        // Predicated region
        $region17: #{tpu_custom_call.1} parent=11 // pred_check
          %p212 = pneg %p84
        $region18: #{tpu_custom_call.1} parent=11 // pred_check_branch
          %214 = sbr.rel (%p212) target = $region20
        $region19: #{tpu_custom_call.1} parent=11 // pred_region
          _
        $region20: #{tpu_custom_call.1} parent=11 // pred_fallthru
          _
        // Predicated region
        $region21: #{tpu_custom_call.1} parent=11 // pred_check
          %p215 = pneg %p105
        $region22: #{tpu_custom_call.1} parent=11 // pred_check_branch
          %217 = sbr.rel (%p215) target = $region24
        $region23: #{tpu_custom_call.1} parent=11 // pred_region
          _
        $region24: #{tpu_custom_call.1} parent=11 // pred_fallthru
          _
        // Predicated region
        $region25: #{tpu_custom_call.1} parent=11 // pred_check
          %p218 = pneg %p126
        $region26: #{tpu_custom_call.1} parent=11 // pred_check_branch
          %220 = sbr.rel (%p218) target = $region28
        $region27: #{tpu_custom_call.1} parent=11 // pred_region
          _
        $region28: #{tpu_custom_call.1} parent=11 // pred_fallthru
          _
        // Predicated region
        $region29: #{tpu_custom_call.1} parent=11 // pred_check
          %p221 = pneg %p147
        $region30: #{tpu_custom_call.1} parent=11 // pred_check_branch
          %223 = sbr.rel (%p221) target = $region32
        $region31: #{tpu_custom_call.1} parent=11 // pred_region
          _
        $region32: #{tpu_custom_call.1} parent=11 // pred_fallthru
          _
        // Predicated region
        $region33: #{tpu_custom_call.1} parent=11 // pred_check
          %p224 = pneg %p168
        $region34: #{tpu_custom_call.1} parent=11 // pred_check_branch
          %226 = sbr.rel (%p224) target = $region36
        $region35: #{tpu_custom_call.1} parent=11 // pred_region
          _
        $region36: #{tpu_custom_call.1} parent=11 // pred_fallthru
          _
      $region12: #{tpu_custom_call.1} parent=5 // pred_fallthru
        _
      %p227 = scmp.lt.s32.totalorder %s16, 2
      // Predicated region
      $region37: #{tpu_custom_call.1} parent=5 // pred_check
        %p228 = pneg %p227
      $region38: #{tpu_custom_call.1} parent=5 // pred_check_branch
        %230 = sbr.rel (%p228) target = $region40
      $region39: #{tpu_custom_call.1} parent=5 // pred_region
        // Predicated region
        $region41: #{tpu_custom_call.1} parent=39 // pred_check
          %p231 = pneg %p36
        $region42: #{tpu_custom_call.1} parent=39 // pred_check_branch
          %233 = sbr.rel (%p231) target = $region44
        $region43: #{tpu_custom_call.1} parent=39 // pred_region
          %s234 = smul.u32 127, %s16
          %p235 = scmp.lt.s32.totalorder %s234, 253
          %s236 = scalar_select %p235, %s234, 253
          %s237 = smul.addr %s236, 8
          %s238 = scalar_lea.vmem %s0, %s237
          %s239 = smul.u32 127, %s16
        $region44: #{tpu_custom_call.1} parent=39 // pred_fallthru
          _
      $region40: #{tpu_custom_call.1} parent=5 // pred_fallthru
        _
      %p240 = scmp.le.s32.totalorder 1, %s16
      %p241 = scmp.lt.s32.totalorder %s16, 3
      %p242 = pnand %p240, %p241
      %p243 = pneg %p242
      // Predicated region
      $region45: #{tpu_custom_call.1} parent=5 // pred_check
        _
      $region46: #{tpu_custom_call.1} parent=5 // pred_check_branch
        %245 = sbr.rel (%p242) target = $region48
      $region47: #{tpu_custom_call.1} parent=5 // pred_region
        %s246 = ssub.s32 %s16, 1
        %s247 = smul.u32 127, %s21
        %p248 = scmp.lt.s32.totalorder %s247, 253
        %s249 = scalar_select %p248, %s247, 253
        %s250 = smul.addr %s249, 8
        %s251 = scalar_lea.vmem %s0, %s250
        %p252 = pneg %p42
        %p253 = pneg %p39
        %p254 = pneg %p63
        %p255 = pneg %p60
        %p256 = pneg %p84
        %p257 = pneg %p81
        %p258 = pneg %p105
        %p259 = pneg %p102
        %p260 = pneg %p126
        %p261 = pneg %p123
        %p262 = pneg %p147
        %p263 = pneg %p144
        %p264 = pneg %p168
        %p265 = pneg %p165
        %p266 = pneg %p194
        %p267 = pneg %p191
        %s268 = sand.u32 %s181, 1
        %s269 = scalar_lea.sflag [#allocation3], %s268
        %s270 = sand.u32 %s181, 1
        %s271 = smul.addr %s270, 508
        %s272 = scalar_lea.vmem [#allocation2], %s271
        %s273 = smul.u32 127, %s21
        %p274 = scmp.lt.s32.totalorder %s273, 253
        %s275 = scalar_select %p274, %s273, 253
        %s276 = smul.addr %s275, 8
        %s277 = scalar_lea.vmem %s0, %s276
        %s278 = smul.u32 127, %s21
        %s279 = smul.u32 127, %s21
        %v280 = vld [vmem:[%s277] sm:$0xff]
        %v281 = vld [vmem:[%s277 + $0x8] sm:$0xff]
        %v282 = vld [vmem:[%s277 + $0x10] sm:$0xff]
        %v283 = vld [vmem:[%s277 + $0x18] sm:$0xff]
        %v284 = vld [vmem:[%s277 + $0x20] sm:$0xff]
        %v285 = vld [vmem:[%s277 + $0x28] sm:$0xff]
        %v286 = vld [vmem:[%s277 + $0x30] sm:$0xff]
        %v287 = vld [vmem:[%s277 + $0x38] sm:$0xff]
        %v288 = vld [vmem:[%s277 + $0x40] sm:$0xff]
        %v289 = vld [vmem:[%s277 + $0x48] sm:$0xff]
        %v290 = vld [vmem:[%s277 + $0x50] sm:$0xff]
        %v291 = vld [vmem:[%s277 + $0x58] sm:$0xff]
        %v292 = vld [vmem:[%s277 + $0x60] sm:$0xff]
        %v293 = vld [vmem:[%s277 + $0x68] sm:$0xff]
        %v294 = vld [vmem:[%s277 + $0x70] sm:$0xff]
        %v295 = vld [vmem:[%s277 + $0x78] sm:$0xff]
        %v296 = vld [vmem:[%s277 + $0x80] sm:$0xff]
        %v297 = vld [vmem:[%s277 + $0x88] sm:$0xff]
        %v298 = vld [vmem:[%s277 + $0x90] sm:$0xff]
        %v299 = vld [vmem:[%s277 + $0x98] sm:$0xff]
        %v300 = vld [vmem:[%s277 + $0xa0] sm:$0xff]
        %v301 = vld [vmem:[%s277 + $0xa8] sm:$0xff]
        %v302 = vld [vmem:[%s277 + $0xb0] sm:$0xff]
        %v303 = vld [vmem:[%s277 + $0xb8] sm:$0xff]
        %v304 = vld [vmem:[%s277 + $0xc0] sm:$0xff]
        %v305 = vld [vmem:[%s277 + $0xc8] sm:$0xff]
        %v306 = vld [vmem:[%s277 + $0xd0] sm:$0xff]
        %v307 = vld [vmem:[%s277 + $0xd8] sm:$0xff]
        %v308 = vld [vmem:[%s277 + $0xe0] sm:$0xff]
        %v309 = vld [vmem:[%s277 + $0xe8] sm:$0xff]
        %v310 = vld [vmem:[%s277 + $0xf0] sm:$0xff]
        %v311 = vld [vmem:[%s277 + $0xf8] sm:$0xff]
        %v312 = vld [vmem:[%s277 + $0x100] sm:$0xff]
        %v313 = vld [vmem:[%s277 + $0x108] sm:$0xff]
        %v314 = vld [vmem:[%s277 + $0x110] sm:$0xff]
        %v315 = vld [vmem:[%s277 + $0x118] sm:$0xff]
        %v316 = vld [vmem:[%s277 + $0x120] sm:$0xff]
        %v317 = vld [vmem:[%s277 + $0x128] sm:$0xff]
        %v318 = vld [vmem:[%s277 + $0x130] sm:$0xff]
        %v319 = vld [vmem:[%s277 + $0x138] sm:$0xff]
        %v320 = vld [vmem:[%s277 + $0x140] sm:$0xff]
        %v321 = vld [vmem:[%s277 + $0x148] sm:$0xff]
        %v322 = vld [vmem:[%s277 + $0x150] sm:$0xff]
        %v323 = vld [vmem:[%s277 + $0x158] sm:$0xff]
        %v324 = vld [vmem:[%s277 + $0x160] sm:$0xff]
        %v325 = vld [vmem:[%s277 + $0x168] sm:$0xff]
        %v326 = vld [vmem:[%s277 + $0x170] sm:$0xff]
        %v327 = vld [vmem:[%s277 + $0x178] sm:$0xff]
        %v328 = vld [vmem:[%s277 + $0x180] sm:$0xff]
        %v329 = vld [vmem:[%s277 + $0x188] sm:$0xff]
        %v330 = vld [vmem:[%s277 + $0x190] sm:$0xff]
        %v331 = vld [vmem:[%s277 + $0x198] sm:$0xff]
        %v332 = vld [vmem:[%s277 + $0x1a0] sm:$0xff]
        %v333 = vld [vmem:[%s277 + $0x1a8] sm:$0xff]
        %v334 = vld [vmem:[%s277 + $0x1b0] sm:$0xff]
        %v335 = vld [vmem:[%s277 + $0x1b8] sm:$0xff]
        %v336 = vld [vmem:[%s277 + $0x1c0] sm:$0xff]
        %v337 = vld [vmem:[%s277 + $0x1c8] sm:$0xff]
        %v338 = vld [vmem:[%s277 + $0x1d0] sm:$0xff]
        %v339 = vld [vmem:[%s277 + $0x1d8] sm:$0xff]
        %v340 = vld [vmem:[%s277 + $0x1e0] sm:$0xff]
        %v341 = vld [vmem:[%s277 + $0x1e8] sm:$0xff]
        %v342 = vld [vmem:[%s277 + $0x1f0] sm:$0xff]
        %v343 = vld [vmem:[%s277 + $0x1f8] sm:$0xff]
        %v344 = vld [vmem:[%s277 + $0x200] sm:$0xff]
        %v345 = vld [vmem:[%s277 + $0x208] sm:$0xff]
        %v346 = vld [vmem:[%s277 + $0x210] sm:$0xff]
        %v347 = vld [vmem:[%s277 + $0x218] sm:$0xff]
        %v348 = vld [vmem:[%s277 + $0x220] sm:$0xff]
        %v349 = vld [vmem:[%s277 + $0x228] sm:$0xff]
        %v350 = vld [vmem:[%s277 + $0x230] sm:$0xff]
        %v351 = vld [vmem:[%s277 + $0x238] sm:$0xff]
        %v352 = vld [vmem:[%s277 + $0x240] sm:$0xff]
        %v353 = vld [vmem:[%s277 + $0x248] sm:$0xff]
        %v354 = vld [vmem:[%s277 + $0x250] sm:$0xff]
        %v355 = vld [vmem:[%s277 + $0x258] sm:$0xff]
        %v356 = vld [vmem:[%s277 + $0x260] sm:$0xff]
        %v357 = vld [vmem:[%s277 + $0x268] sm:$0xff]
        %v358 = vld [vmem:[%s277 + $0x270] sm:$0xff]
        %v359 = vld [vmem:[%s277 + $0x278] sm:$0xff]
        %v360 = vld [vmem:[%s277 + $0x280] sm:$0xff]
        %v361 = vld [vmem:[%s277 + $0x288] sm:$0xff]
        %v362 = vld [vmem:[%s277 + $0x290] sm:$0xff]
        %v363 = vld [vmem:[%s277 + $0x298] sm:$0xff]
        %v364 = vld [vmem:[%s277 + $0x2a0] sm:$0xff]
        %v365 = vld [vmem:[%s277 + $0x2a8] sm:$0xff]
        %v366 = vld [vmem:[%s277 + $0x2b0] sm:$0xff]
        %v367 = vld [vmem:[%s277 + $0x2b8] sm:$0xff]
        %v368 = vld [vmem:[%s277 + $0x2c0] sm:$0xff]
        %v369 = vld [vmem:[%s277 + $0x2c8] sm:$0xff]
        %v370 = vld [vmem:[%s277 + $0x2d0] sm:$0xff]
        %v371 = vld [vmem:[%s277 + $0x2d8] sm:$0xff]
        %v372 = vld [vmem:[%s277 + $0x2e0] sm:$0xff]
        %v373 = vld [vmem:[%s277 + $0x2e8] sm:$0xff]
        %v374 = vld [vmem:[%s277 + $0x2f0] sm:$0xff]
        %v375 = vld [vmem:[%s277 + $0x2f8] sm:$0xff]
        %v376 = vld [vmem:[%s277 + $0x300] sm:$0xff]
        %v377 = vld [vmem:[%s277 + $0x308] sm:$0xff]
        %v378 = vld [vmem:[%s277 + $0x310] sm:$0xff]
        %v379 = vld [vmem:[%s277 + $0x318] sm:$0xff]
        %v380 = vld [vmem:[%s277 + $0x320] sm:$0xff]
        %v381 = vld [vmem:[%s277 + $0x328] sm:$0xff]
        %v382 = vld [vmem:[%s277 + $0x330] sm:$0xff]
        %v383 = vld [vmem:[%s277 + $0x338] sm:$0xff]
        %v384 = vld [vmem:[%s277 + $0x340] sm:$0xff]
        %v385 = vld [vmem:[%s277 + $0x348] sm:$0xff]
        %v386 = vld [vmem:[%s277 + $0x350] sm:$0xff]
        %v387 = vld [vmem:[%s277 + $0x358] sm:$0xff]
        %v388 = vld [vmem:[%s277 + $0x360] sm:$0xff]
        %v389 = vld [vmem:[%s277 + $0x368] sm:$0xff]
        %v390 = vld [vmem:[%s277 + $0x370] sm:$0xff]
        %v391 = vld [vmem:[%s277 + $0x378] sm:$0xff]
        %v392 = vld [vmem:[%s277 + $0x380] sm:$0xff]
        %v393 = vld [vmem:[%s277 + $0x388] sm:$0xff]
        %v394 = vld [vmem:[%s277 + $0x390] sm:$0xff]
        %v395 = vld [vmem:[%s277 + $0x398] sm:$0xff]
        %v396 = vld [vmem:[%s277 + $0x3a0] sm:$0xff]
        %v397 = vld [vmem:[%s277 + $0x3a8] sm:$0xff]
        %v398 = vld [vmem:[%s277 + $0x3b0] sm:$0xff]
        %v399 = vld [vmem:[%s277 + $0x3b8] sm:$0xff]
        %v400 = vld [vmem:[%s277 + $0x3c0] sm:$0xff]
        %v401 = vld [vmem:[%s277 + $0x3c8] sm:$0xff]
        %v402 = vld [vmem:[%s277 + $0x3d0] sm:$0xff]
        %v403 = vld [vmem:[%s277 + $0x3d8] sm:$0xff]
        %v404 = vld [vmem:[%s277 + $0x3e0] sm:$0xff]
        %v405 = vld [vmem:[%s277 + $0x3e8] sm:$0xff]
        %v406 = vld [vmem:[%s277 + $0x3f0] sm:$0xff]
        %v407 = vld [vmem:[%s1] sm:$0x1]
        %409 = vset.pattern.permute.xlu0 0
        %410 = vperm.xlu0 %409, %v280
        %v411 = vpop.permute.xlu0 %410
        %414 = vset.pattern.permute.xlu0 0
        %415 = vperm.xlu0 %414, %v281
        %v416 = vpop.permute.xlu0 %415
        %419 = vset.pattern.permute.xlu0 0
        %420 = vperm.xlu0 %419, %v282
        %v421 = vpop.permute.xlu0 %420
        %424 = vset.pattern.permute.xlu0 0
        %425 = vperm.xlu0 %424, %v283
        %v426 = vpop.permute.xlu0 %425
        %429 = vset.pattern.permute.xlu0 0
        %430 = vperm.xlu0 %429, %v284
        %v431 = vpop.permute.xlu0 %430
        %434 = vset.pattern.permute.xlu0 0
        %435 = vperm.xlu0 %434, %v285
        %v436 = vpop.permute.xlu0 %435
        %439 = vset.pattern.permute.xlu0 0
        %440 = vperm.xlu0 %439, %v286
        %v441 = vpop.permute.xlu0 %440
        %444 = vset.pattern.permute.xlu0 0
        %445 = vperm.xlu0 %444, %v287
        %v446 = vpop.permute.xlu0 %445
        %449 = vset.pattern.permute.xlu0 0
        %450 = vperm.xlu0 %449, %v288
        %v451 = vpop.permute.xlu0 %450
        %454 = vset.pattern.permute.xlu0 0
        %455 = vperm.xlu0 %454, %v289
        %v456 = vpop.permute.xlu0 %455
        %459 = vset.pattern.permute.xlu0 0
        %460 = vperm.xlu0 %459, %v290
        %v461 = vpop.permute.xlu0 %460
        %464 = vset.pattern.permute.xlu0 0
        %465 = vperm.xlu0 %464, %v291
        %v466 = vpop.permute.xlu0 %465
        %469 = vset.pattern.permute.xlu0 0
        %470 = vperm.xlu0 %469, %v292
        %v471 = vpop.permute.xlu0 %470
        %474 = vset.pattern.permute.xlu0 0
        %475 = vperm.xlu0 %474, %v293
        %v476 = vpop.permute.xlu0 %475
        %479 = vset.pattern.permute.xlu0 0
        %480 = vperm.xlu0 %479, %v294
        %v481 = vpop.permute.xlu0 %480
        %484 = vset.pattern.permute.xlu0 0
        %485 = vperm.xlu0 %484, %v295
        %v486 = vpop.permute.xlu0 %485
        %489 = vset.pattern.permute.xlu0 0
        %490 = vperm.xlu0 %489, %v296
        %v491 = vpop.permute.xlu0 %490
        %494 = vset.pattern.permute.xlu0 0
        %495 = vperm.xlu0 %494, %v297
        %v496 = vpop.permute.xlu0 %495
        %499 = vset.pattern.permute.xlu0 0
        %500 = vperm.xlu0 %499, %v298
        %v501 = vpop.permute.xlu0 %500
        %504 = vset.pattern.permute.xlu0 0
        %505 = vperm.xlu0 %504, %v299
        %v506 = vpop.permute.xlu0 %505
        %509 = vset.pattern.permute.xlu0 0
        %510 = vperm.xlu0 %509, %v300
        %v511 = vpop.permute.xlu0 %510
        %514 = vset.pattern.permute.xlu0 0
        %515 = vperm.xlu0 %514, %v301
        %v516 = vpop.permute.xlu0 %515
        %519 = vset.pattern.permute.xlu0 0
        %520 = vperm.xlu0 %519, %v302
        %v521 = vpop.permute.xlu0 %520
        %524 = vset.pattern.permute.xlu0 0
        %525 = vperm.xlu0 %524, %v303
        %v526 = vpop.permute.xlu0 %525
        %529 = vset.pattern.permute.xlu0 0
        %530 = vperm.xlu0 %529, %v304
        %v531 = vpop.permute.xlu0 %530
        %534 = vset.pattern.permute.xlu0 0
        %535 = vperm.xlu0 %534, %v305
        %v536 = vpop.permute.xlu0 %535
        %539 = vset.pattern.permute.xlu0 0
        %540 = vperm.xlu0 %539, %v306
        %v541 = vpop.permute.xlu0 %540
        %544 = vset.pattern.permute.xlu0 0
        %545 = vperm.xlu0 %544, %v307
        %v546 = vpop.permute.xlu0 %545
        %549 = vset.pattern.permute.xlu0 0
        %550 = vperm.xlu0 %549, %v308
        %v551 = vpop.permute.xlu0 %550
        %554 = vset.pattern.permute.xlu0 0
        %555 = vperm.xlu0 %554, %v309
        %v556 = vpop.permute.xlu0 %555
        %559 = vset.pattern.permute.xlu0 0
        %560 = vperm.xlu0 %559, %v310
        %v561 = vpop.permute.xlu0 %560
        %564 = vset.pattern.permute.xlu0 0
        %565 = vperm.xlu0 %564, %v311
        %v566 = vpop.permute.xlu0 %565
        %569 = vset.pattern.permute.xlu0 0
        %570 = vperm.xlu0 %569, %v312
        %v571 = vpop.permute.xlu0 %570
        %574 = vset.pattern.permute.xlu0 0
        %575 = vperm.xlu0 %574, %v313
        %v576 = vpop.permute.xlu0 %575
        %579 = vset.pattern.permute.xlu0 0
        %580 = vperm.xlu0 %579, %v314
        %v581 = vpop.permute.xlu0 %580
        %584 = vset.pattern.permute.xlu0 0
        %585 = vperm.xlu0 %584, %v315
        %v586 = vpop.permute.xlu0 %585
        %589 = vset.pattern.permute.xlu0 0
        %590 = vperm.xlu0 %589, %v316
        %v591 = vpop.permute.xlu0 %590
        %594 = vset.pattern.permute.xlu0 0
        %595 = vperm.xlu0 %594, %v317
        %v596 = vpop.permute.xlu0 %595
        %599 = vset.pattern.permute.xlu0 0
        %600 = vperm.xlu0 %599, %v318
        %v601 = vpop.permute.xlu0 %600
        %604 = vset.pattern.permute.xlu0 0
        %605 = vperm.xlu0 %604, %v319
        %v606 = vpop.permute.xlu0 %605
        %609 = vset.pattern.permute.xlu0 0
        %610 = vperm.xlu0 %609, %v320
        %v611 = vpop.permute.xlu0 %610
        %614 = vset.pattern.permute.xlu0 0
        %615 = vperm.xlu0 %614, %v321
        %v616 = vpop.permute.xlu0 %615
        %619 = vset.pattern.permute.xlu0 0
        %620 = vperm.xlu0 %619, %v322
        %v621 = vpop.permute.xlu0 %620
        %624 = vset.pattern.permute.xlu0 0
        %625 = vperm.xlu0 %624, %v323
        %v626 = vpop.permute.xlu0 %625
        %629 = vset.pattern.permute.xlu0 0
        %630 = vperm.xlu0 %629, %v324
        %v631 = vpop.permute.xlu0 %630
        %634 = vset.pattern.permute.xlu0 0
        %635 = vperm.xlu0 %634, %v325
        %v636 = vpop.permute.xlu0 %635
        %639 = vset.pattern.permute.xlu0 0
        %640 = vperm.xlu0 %639, %v326
        %v641 = vpop.permute.xlu0 %640
        %644 = vset.pattern.permute.xlu0 0
        %645 = vperm.xlu0 %644, %v327
        %v646 = vpop.permute.xlu0 %645
        %649 = vset.pattern.permute.xlu0 0
        %650 = vperm.xlu0 %649, %v328
        %v651 = vpop.permute.xlu0 %650
        %654 = vset.pattern.permute.xlu0 0
        %655 = vperm.xlu0 %654, %v329
        %v656 = vpop.permute.xlu0 %655
        %659 = vset.pattern.permute.xlu0 0
        %660 = vperm.xlu0 %659, %v330
        %v661 = vpop.permute.xlu0 %660
        %664 = vset.pattern.permute.xlu0 0
        %665 = vperm.xlu0 %664, %v331
        %v666 = vpop.permute.xlu0 %665
        %669 = vset.pattern.permute.xlu0 0
        %670 = vperm.xlu0 %669, %v332
        %v671 = vpop.permute.xlu0 %670
        %674 = vset.pattern.permute.xlu0 0
        %675 = vperm.xlu0 %674, %v333
        %v676 = vpop.permute.xlu0 %675
        %679 = vset.pattern.permute.xlu0 0
        %680 = vperm.xlu0 %679, %v334
        %v681 = vpop.permute.xlu0 %680
        %684 = vset.pattern.permute.xlu0 0
        %685 = vperm.xlu0 %684, %v335
        %v686 = vpop.permute.xlu0 %685
        %689 = vset.pattern.permute.xlu0 0
        %690 = vperm.xlu0 %689, %v336
        %v691 = vpop.permute.xlu0 %690
        %694 = vset.pattern.permute.xlu0 0
        %695 = vperm.xlu0 %694, %v337
        %v696 = vpop.permute.xlu0 %695
        %699 = vset.pattern.permute.xlu0 0
        %700 = vperm.xlu0 %699, %v338
        %v701 = vpop.permute.xlu0 %700
        %704 = vset.pattern.permute.xlu0 0
        %705 = vperm.xlu0 %704, %v339
        %v706 = vpop.permute.xlu0 %705
        %709 = vset.pattern.permute.xlu0 0
        %710 = vperm.xlu0 %709, %v340
        %v711 = vpop.permute.xlu0 %710
        %714 = vset.pattern.permute.xlu0 0
        %715 = vperm.xlu0 %714, %v341
        %v716 = vpop.permute.xlu0 %715
        %719 = vset.pattern.permute.xlu0 0
        %720 = vperm.xlu0 %719, %v342
        %v721 = vpop.permute.xlu0 %720
        %724 = vset.pattern.permute.xlu0 0
        %725 = vperm.xlu0 %724, %v343
        %v726 = vpop.permute.xlu0 %725
        %729 = vset.pattern.permute.xlu0 0
        %730 = vperm.xlu0 %729, %v344
        %v731 = vpop.permute.xlu0 %730
        %734 = vset.pattern.permute.xlu0 0
        %735 = vperm.xlu0 %734, %v345
        %v736 = vpop.permute.xlu0 %735
        %739 = vset.pattern.permute.xlu0 0
        %740 = vperm.xlu0 %739, %v346
        %v741 = vpop.permute.xlu0 %740
        %744 = vset.pattern.permute.xlu0 0
        %745 = vperm.xlu0 %744, %v347
        %v746 = vpop.permute.xlu0 %745
        %749 = vset.pattern.permute.xlu0 0
        %750 = vperm.xlu0 %749, %v348
        %v751 = vpop.permute.xlu0 %750
        %754 = vset.pattern.permute.xlu0 0
        %755 = vperm.xlu0 %754, %v349
        %v756 = vpop.permute.xlu0 %755
        %759 = vset.pattern.permute.xlu0 0
        %760 = vperm.xlu0 %759, %v350
        %v761 = vpop.permute.xlu0 %760
        %764 = vset.pattern.permute.xlu0 0
        %765 = vperm.xlu0 %764, %v351
        %v766 = vpop.permute.xlu0 %765
        %769 = vset.pattern.permute.xlu0 0
        %770 = vperm.xlu0 %769, %v352
        %v771 = vpop.permute.xlu0 %770
        %774 = vset.pattern.permute.xlu0 0
        %775 = vperm.xlu0 %774, %v353
        %v776 = vpop.permute.xlu0 %775
        %779 = vset.pattern.permute.xlu0 0
        %780 = vperm.xlu0 %779, %v354
        %v781 = vpop.permute.xlu0 %780
        %784 = vset.pattern.permute.xlu0 0
        %785 = vperm.xlu0 %784, %v355
        %v786 = vpop.permute.xlu0 %785
        %789 = vset.pattern.permute.xlu0 0
        %790 = vperm.xlu0 %789, %v356
        %v791 = vpop.permute.xlu0 %790
        %794 = vset.pattern.permute.xlu0 0
        %795 = vperm.xlu0 %794, %v357
        %v796 = vpop.permute.xlu0 %795
        %799 = vset.pattern.permute.xlu0 0
        %800 = vperm.xlu0 %799, %v358
        %v801 = vpop.permute.xlu0 %800
        %804 = vset.pattern.permute.xlu0 0
        %805 = vperm.xlu0 %804, %v359
        %v806 = vpop.permute.xlu0 %805
        %809 = vset.pattern.permute.xlu0 0
        %810 = vperm.xlu0 %809, %v360
        %v811 = vpop.permute.xlu0 %810
        %814 = vset.pattern.permute.xlu0 0
        %815 = vperm.xlu0 %814, %v361
        %v816 = vpop.permute.xlu0 %815
        %819 = vset.pattern.permute.xlu0 0
        %820 = vperm.xlu0 %819, %v362
        %v821 = vpop.permute.xlu0 %820
        %824 = vset.pattern.permute.xlu0 0
        %825 = vperm.xlu0 %824, %v363
        %v826 = vpop.permute.xlu0 %825
        %829 = vset.pattern.permute.xlu0 0
        %830 = vperm.xlu0 %829, %v364
        %v831 = vpop.permute.xlu0 %830
        %834 = vset.pattern.permute.xlu0 0
        %835 = vperm.xlu0 %834, %v365
        %v836 = vpop.permute.xlu0 %835
        %839 = vset.pattern.permute.xlu0 0
        %840 = vperm.xlu0 %839, %v366
        %v841 = vpop.permute.xlu0 %840
        %844 = vset.pattern.permute.xlu0 0
        %845 = vperm.xlu0 %844, %v367
        %v846 = vpop.permute.xlu0 %845
        %849 = vset.pattern.permute.xlu0 0
        %850 = vperm.xlu0 %849, %v368
        %v851 = vpop.permute.xlu0 %850
        %854 = vset.pattern.permute.xlu0 0
        %855 = vperm.xlu0 %854, %v369
        %v856 = vpop.permute.xlu0 %855
        %859 = vset.pattern.permute.xlu0 0
        %860 = vperm.xlu0 %859, %v370
        %v861 = vpop.permute.xlu0 %860
        %864 = vset.pattern.permute.xlu0 0
        %865 = vperm.xlu0 %864, %v371
        %v866 = vpop.permute.xlu0 %865
        %869 = vset.pattern.permute.xlu0 0
        %870 = vperm.xlu0 %869, %v372
        %v871 = vpop.permute.xlu0 %870
        %874 = vset.pattern.permute.xlu0 0
        %875 = vperm.xlu0 %874, %v373
        %v876 = vpop.permute.xlu0 %875
        %879 = vset.pattern.permute.xlu0 0
        %880 = vperm.xlu0 %879, %v374
        %v881 = vpop.permute.xlu0 %880
        %884 = vset.pattern.permute.xlu0 0
        %885 = vperm.xlu0 %884, %v375
        %v886 = vpop.permute.xlu0 %885
        %889 = vset.pattern.permute.xlu0 0
        %890 = vperm.xlu0 %889, %v376
        %v891 = vpop.permute.xlu0 %890
        %894 = vset.pattern.permute.xlu0 0
        %895 = vperm.xlu0 %894, %v377
        %v896 = vpop.permute.xlu0 %895
        %899 = vset.pattern.permute.xlu0 0
        %900 = vperm.xlu0 %899, %v378
        %v901 = vpop.permute.xlu0 %900
        %904 = vset.pattern.permute.xlu0 0
        %905 = vperm.xlu0 %904, %v379
        %v906 = vpop.permute.xlu0 %905
        %909 = vset.pattern.permute.xlu0 0
        %910 = vperm.xlu0 %909, %v380
        %v911 = vpop.permute.xlu0 %910
        %914 = vset.pattern.permute.xlu0 0
        %915 = vperm.xlu0 %914, %v381
        %v916 = vpop.permute.xlu0 %915
        %919 = vset.pattern.permute.xlu0 0
        %920 = vperm.xlu0 %919, %v382
        %v921 = vpop.permute.xlu0 %920
        %924 = vset.pattern.permute.xlu0 0
        %925 = vperm.xlu0 %924, %v383
        %v926 = vpop.permute.xlu0 %925
        %929 = vset.pattern.permute.xlu0 0
        %930 = vperm.xlu0 %929, %v384
        %v931 = vpop.permute.xlu0 %930
        %934 = vset.pattern.permute.xlu0 0
        %935 = vperm.xlu0 %934, %v385
        %v936 = vpop.permute.xlu0 %935
        %939 = vset.pattern.permute.xlu0 0
        %940 = vperm.xlu0 %939, %v386
        %v941 = vpop.permute.xlu0 %940
        %944 = vset.pattern.permute.xlu0 0
        %945 = vperm.xlu0 %944, %v387
        %v946 = vpop.permute.xlu0 %945
        %949 = vset.pattern.permute.xlu0 0
        %950 = vperm.xlu0 %949, %v388
        %v951 = vpop.permute.xlu0 %950
        %954 = vset.pattern.permute.xlu0 0
        %955 = vperm.xlu0 %954, %v389
        %v956 = vpop.permute.xlu0 %955
        %959 = vset.pattern.permute.xlu0 0
        %960 = vperm.xlu0 %959, %v390
        %v961 = vpop.permute.xlu0 %960
        %964 = vset.pattern.permute.xlu0 0
        %965 = vperm.xlu0 %964, %v391
        %v966 = vpop.permute.xlu0 %965
        %969 = vset.pattern.permute.xlu0 0
        %970 = vperm.xlu0 %969, %v392
        %v971 = vpop.permute.xlu0 %970
        %974 = vset.pattern.permute.xlu0 0
        %975 = vperm.xlu0 %974, %v393
        %v976 = vpop.permute.xlu0 %975
        %979 = vset.pattern.permute.xlu0 0
        %980 = vperm.xlu0 %979, %v394
        %v981 = vpop.permute.xlu0 %980
        %984 = vset.pattern.permute.xlu0 0
        %985 = vperm.xlu0 %984, %v395
        %v986 = vpop.permute.xlu0 %985
        %989 = vset.pattern.permute.xlu0 0
        %990 = vperm.xlu0 %989, %v396
        %v991 = vpop.permute.xlu0 %990
        %994 = vset.pattern.permute.xlu0 0
        %995 = vperm.xlu0 %994, %v397
        %v996 = vpop.permute.xlu0 %995
        %999 = vset.pattern.permute.xlu0 0
        %1000 = vperm.xlu0 %999, %v398
        %v1001 = vpop.permute.xlu0 %1000
        %1004 = vset.pattern.permute.xlu0 0
        %1005 = vperm.xlu0 %1004, %v399
        %v1006 = vpop.permute.xlu0 %1005
        %1009 = vset.pattern.permute.xlu0 0
        %1010 = vperm.xlu0 %1009, %v400
        %v1011 = vpop.permute.xlu0 %1010
        %1014 = vset.pattern.permute.xlu0 0
        %1015 = vperm.xlu0 %1014, %v401
        %v1016 = vpop.permute.xlu0 %1015
        %1019 = vset.pattern.permute.xlu0 0
        %1020 = vperm.xlu0 %1019, %v402
        %v1021 = vpop.permute.xlu0 %1020
        %1024 = vset.pattern.permute.xlu0 0
        %1025 = vperm.xlu0 %1024, %v403
        %v1026 = vpop.permute.xlu0 %1025
        %1029 = vset.pattern.permute.xlu0 0
        %1030 = vperm.xlu0 %1029, %v404
        %v1031 = vpop.permute.xlu0 %1030
        %1034 = vset.pattern.permute.xlu0 0
        %1035 = vperm.xlu0 %1034, %v405
        %v1036 = vpop.permute.xlu0 %1035
        %1039 = vset.pattern.permute.xlu0 0
        %1040 = vperm.xlu0 %1039, %v406
        %v1041 = vpop.permute.xlu0 %1040
        %v1043 = vperm.slane %v407, 0
        %v1044 = vmul.f32 %v411, %v1043
        %v1045 = vmul.f32 %v416, %v1043
        %v1046 = vmul.f32 %v421, %v1043
        %v1047 = vmul.f32 %v426, %v1043
        %v1048 = vmul.f32 %v431, %v1043
        %v1049 = vmul.f32 %v436, %v1043
        %v1050 = vmul.f32 %v441, %v1043
        %v1051 = vmul.f32 %v446, %v1043
        %v1052 = vmul.f32 %v451, %v1043
        %v1053 = vmul.f32 %v456, %v1043
        %v1054 = vmul.f32 %v461, %v1043
        %v1055 = vmul.f32 %v466, %v1043
        %v1056 = vmul.f32 %v471, %v1043
        %v1057 = vmul.f32 %v476, %v1043
        %v1058 = vmul.f32 %v481, %v1043
        %v1059 = vmul.f32 %v486, %v1043
        %v1060 = vmul.f32 %v491, %v1043
        %v1061 = vmul.f32 %v496, %v1043
        %v1062 = vmul.f32 %v501, %v1043
        %v1063 = vmul.f32 %v506, %v1043
        %v1064 = vmul.f32 %v511, %v1043
        %v1065 = vmul.f32 %v516, %v1043
        %v1066 = vmul.f32 %v521, %v1043
        %v1067 = vmul.f32 %v526, %v1043
        %v1068 = vmul.f32 %v531, %v1043
        %v1069 = vmul.f32 %v536, %v1043
        %v1070 = vmul.f32 %v541, %v1043
        %v1071 = vmul.f32 %v546, %v1043
        %v1072 = vmul.f32 %v551, %v1043
        %v1073 = vmul.f32 %v556, %v1043
        %v1074 = vmul.f32 %v561, %v1043
        %v1075 = vmul.f32 %v566, %v1043
        %v1076 = vmul.f32 %v571, %v1043
        %v1077 = vmul.f32 %v576, %v1043
        %v1078 = vmul.f32 %v581, %v1043
        %v1079 = vmul.f32 %v586, %v1043
        %v1080 = vmul.f32 %v591, %v1043
        %v1081 = vmul.f32 %v596, %v1043
        %v1082 = vmul.f32 %v601, %v1043
        %v1083 = vmul.f32 %v606, %v1043
        %v1084 = vmul.f32 %v611, %v1043
        %v1085 = vmul.f32 %v616, %v1043
        %v1086 = vmul.f32 %v621, %v1043
        %v1087 = vmul.f32 %v626, %v1043
        %v1088 = vmul.f32 %v631, %v1043
        %v1089 = vmul.f32 %v636, %v1043
        %v1090 = vmul.f32 %v641, %v1043
        %v1091 = vmul.f32 %v646, %v1043
        %v1092 = vmul.f32 %v651, %v1043
        %v1093 = vmul.f32 %v656, %v1043
        %v1094 = vmul.f32 %v661, %v1043
        %v1095 = vmul.f32 %v666, %v1043
        %v1096 = vmul.f32 %v671, %v1043
        %v1097 = vmul.f32 %v676, %v1043
        %v1098 = vmul.f32 %v681, %v1043
        %v1099 = vmul.f32 %v686, %v1043
        %v1100 = vmul.f32 %v691, %v1043
        %v1101 = vmul.f32 %v696, %v1043
        %v1102 = vmul.f32 %v701, %v1043
        %v1103 = vmul.f32 %v706, %v1043
        %v1104 = vmul.f32 %v711, %v1043
        %v1105 = vmul.f32 %v716, %v1043
        %v1106 = vmul.f32 %v721, %v1043
        %v1107 = vmul.f32 %v726, %v1043
        %v1108 = vmul.f32 %v731, %v1043
        %v1109 = vmul.f32 %v736, %v1043
        %v1110 = vmul.f32 %v741, %v1043
        %v1111 = vmul.f32 %v746, %v1043
        %v1112 = vmul.f32 %v751, %v1043
        %v1113 = vmul.f32 %v756, %v1043
        %v1114 = vmul.f32 %v761, %v1043
        %v1115 = vmul.f32 %v766, %v1043
        %v1116 = vmul.f32 %v771, %v1043
        %v1117 = vmul.f32 %v776, %v1043
        %v1118 = vmul.f32 %v781, %v1043
        %v1119 = vmul.f32 %v786, %v1043
        %v1120 = vmul.f32 %v791, %v1043
        %v1121 = vmul.f32 %v796, %v1043
        %v1122 = vmul.f32 %v801, %v1043
        %v1123 = vmul.f32 %v806, %v1043
        %v1124 = vmul.f32 %v811, %v1043
        %v1125 = vmul.f32 %v816, %v1043
        %v1126 = vmul.f32 %v821, %v1043
        %v1127 = vmul.f32 %v826, %v1043
        %v1128 = vmul.f32 %v831, %v1043
        %v1129 = vmul.f32 %v836, %v1043
        %v1130 = vmul.f32 %v841, %v1043
        %v1131 = vmul.f32 %v846, %v1043
        %v1132 = vmul.f32 %v851, %v1043
        %v1133 = vmul.f32 %v856, %v1043
        %v1134 = vmul.f32 %v861, %v1043
        %v1135 = vmul.f32 %v866, %v1043
        %v1136 = vmul.f32 %v871, %v1043
        %v1137 = vmul.f32 %v876, %v1043
        %v1138 = vmul.f32 %v881, %v1043
        %v1139 = vmul.f32 %v886, %v1043
        %v1140 = vmul.f32 %v891, %v1043
        %v1141 = vmul.f32 %v896, %v1043
        %v1142 = vmul.f32 %v901, %v1043
        %v1143 = vmul.f32 %v906, %v1043
        %v1144 = vmul.f32 %v911, %v1043
        %v1145 = vmul.f32 %v916, %v1043
        %v1146 = vmul.f32 %v921, %v1043
        %v1147 = vmul.f32 %v926, %v1043
        %v1148 = vmul.f32 %v931, %v1043
        %v1149 = vmul.f32 %v936, %v1043
        %v1150 = vmul.f32 %v941, %v1043
        %v1151 = vmul.f32 %v946, %v1043
        %v1152 = vmul.f32 %v951, %v1043
        %v1153 = vmul.f32 %v956, %v1043
        %v1154 = vmul.f32 %v961, %v1043
        %v1155 = vmul.f32 %v966, %v1043
        %v1156 = vmul.f32 %v971, %v1043
        %v1157 = vmul.f32 %v976, %v1043
        %v1158 = vmul.f32 %v981, %v1043
        %v1159 = vmul.f32 %v986, %v1043
        %v1160 = vmul.f32 %v991, %v1043
        %v1161 = vmul.f32 %v996, %v1043
        %v1162 = vmul.f32 %v1001, %v1043
        %v1163 = vmul.f32 %v1006, %v1043
        %v1164 = vmul.f32 %v1011, %v1043
        %v1165 = vmul.f32 %v1016, %v1043
        %v1166 = vmul.f32 %v1021, %v1043
        %v1167 = vmul.f32 %v1026, %v1043
        %v1168 = vmul.f32 %v1031, %v1043
        %v1169 = vmul.f32 %v1036, %v1043
        %v1170 = vmul.f32 %v1041, %v1043
        %v1171 = vld [vmem:[%s1 + $0x1] sm:$0x1]
        %1172 = vset.pattern.permute.xlu0 1
        %1173 = vperm.xlu0 %1172, %v280
        %v1174 = vpop.permute.xlu0 %1173
        %1176 = vset.pattern.permute.xlu0 1
        %1177 = vperm.xlu0 %1176, %v281
        %v1178 = vpop.permute.xlu0 %1177
        %1180 = vset.pattern.permute.xlu0 1
        %1181 = vperm.xlu0 %1180, %v282
        %v1182 = vpop.permute.xlu0 %1181
        %1184 = vset.pattern.permute.xlu0 1
        %1185 = vperm.xlu0 %1184, %v283
        %v1186 = vpop.permute.xlu0 %1185
        %1188 = vset.pattern.permute.xlu0 1
        %1189 = vperm.xlu0 %1188, %v284
        %v1190 = vpop.permute.xlu0 %1189
        %1192 = vset.pattern.permute.xlu0 1
        %1193 = vperm.xlu0 %1192, %v285
        %v1194 = vpop.permute.xlu0 %1193
        %1196 = vset.pattern.permute.xlu0 1
        %1197 = vperm.xlu0 %1196, %v286
        %v1198 = vpop.permute.xlu0 %1197
        %1200 = vset.pattern.permute.xlu0 1
        %1201 = vperm.xlu0 %1200, %v287
        %v1202 = vpop.permute.xlu0 %1201
        %1204 = vset.pattern.permute.xlu0 1
        %1205 = vperm.xlu0 %1204, %v288
        %v1206 = vpop.permute.xlu0 %1205
        %1208 = vset.pattern.permute.xlu0 1
        %1209 = vperm.xlu0 %1208, %v289
        %v1210 = vpop.permute.xlu0 %1209
        %1212 = vset.pattern.permute.xlu0 1
        %1213 = vperm.xlu0 %1212, %v290
        %v1214 = vpop.permute.xlu0 %1213
        %1216 = vset.pattern.permute.xlu0 1
        %1217 = vperm.xlu0 %1216, %v291
        %v1218 = vpop.permute.xlu0 %1217
        %1220 = vset.pattern.permute.xlu0 1
        %1221 = vperm.xlu0 %1220, %v292
        %v1222 = vpop.permute.xlu0 %1221
        %1224 = vset.pattern.permute.xlu0 1
        %1225 = vperm.xlu0 %1224, %v293
        %v1226 = vpop.permute.xlu0 %1225
        %1228 = vset.pattern.permute.xlu0 1
        %1229 = vperm.xlu0 %1228, %v294
        %v1230 = vpop.permute.xlu0 %1229
        %1232 = vset.pattern.permute.xlu0 1
        %1233 = vperm.xlu0 %1232, %v295
        %v1234 = vpop.permute.xlu0 %1233
        %1236 = vset.pattern.permute.xlu0 1
        %1237 = vperm.xlu0 %1236, %v296
        %v1238 = vpop.permute.xlu0 %1237
        %1240 = vset.pattern.permute.xlu0 1
        %1241 = vperm.xlu0 %1240, %v297
        %v1242 = vpop.permute.xlu0 %1241
        %1244 = vset.pattern.permute.xlu0 1
        %1245 = vperm.xlu0 %1244, %v298
        %v1246 = vpop.permute.xlu0 %1245
        %1248 = vset.pattern.permute.xlu0 1
        %1249 = vperm.xlu0 %1248, %v299
        %v1250 = vpop.permute.xlu0 %1249
        %1252 = vset.pattern.permute.xlu0 1
        %1253 = vperm.xlu0 %1252, %v300
        %v1254 = vpop.permute.xlu0 %1253
        %1256 = vset.pattern.permute.xlu0 1
        %1257 = vperm.xlu0 %1256, %v301
        %v1258 = vpop.permute.xlu0 %1257
        %1260 = vset.pattern.permute.xlu0 1
        %1261 = vperm.xlu0 %1260, %v302
        %v1262 = vpop.permute.xlu0 %1261
        %1264 = vset.pattern.permute.xlu0 1
        %1265 = vperm.xlu0 %1264, %v303
        %v1266 = vpop.permute.xlu0 %1265
        %1268 = vset.pattern.permute.xlu0 1
        %1269 = vperm.xlu0 %1268, %v304
        %v1270 = vpop.permute.xlu0 %1269
        %1272 = vset.pattern.permute.xlu0 1
        %1273 = vperm.xlu0 %1272, %v305
        %v1274 = vpop.permute.xlu0 %1273
        %1276 = vset.pattern.permute.xlu0 1
        %1277 = vperm.xlu0 %1276, %v306
        %v1278 = vpop.permute.xlu0 %1277
        %1280 = vset.pattern.permute.xlu0 1
        %1281 = vperm.xlu0 %1280, %v307
        %v1282 = vpop.permute.xlu0 %1281
        %1284 = vset.pattern.permute.xlu0 1
        %1285 = vperm.xlu0 %1284, %v308
        %v1286 = vpop.permute.xlu0 %1285
        %1288 = vset.pattern.permute.xlu0 1
        %1289 = vperm.xlu0 %1288, %v309
        %v1290 = vpop.permute.xlu0 %1289
        %1292 = vset.pattern.permute.xlu0 1
        %1293 = vperm.xlu0 %1292, %v310
        %v1294 = vpop.permute.xlu0 %1293
        %1296 = vset.pattern.permute.xlu0 1
        %1297 = vperm.xlu0 %1296, %v311
        %v1298 = vpop.permute.xlu0 %1297
        %1300 = vset.pattern.permute.xlu0 1
        %1301 = vperm.xlu0 %1300, %v312
        %v1302 = vpop.permute.xlu0 %1301
        %1304 = vset.pattern.permute.xlu0 1
        %1305 = vperm.xlu0 %1304, %v313
        %v1306 = vpop.permute.xlu0 %1305
        %1308 = vset.pattern.permute.xlu0 1
        %1309 = vperm.xlu0 %1308, %v314
        %v1310 = vpop.permute.xlu0 %1309
        %1312 = vset.pattern.permute.xlu0 1
        %1313 = vperm.xlu0 %1312, %v315
        %v1314 = vpop.permute.xlu0 %1313
        %1316 = vset.pattern.permute.xlu0 1
        %1317 = vperm.xlu0 %1316, %v316
        %v1318 = vpop.permute.xlu0 %1317
        %1320 = vset.pattern.permute.xlu0 1
        %1321 = vperm.xlu0 %1320, %v317
        %v1322 = vpop.permute.xlu0 %1321
        %1324 = vset.pattern.permute.xlu0 1
        %1325 = vperm.xlu0 %1324, %v318
        %v1326 = vpop.permute.xlu0 %1325
        %1328 = vset.pattern.permute.xlu0 1
        %1329 = vperm.xlu0 %1328, %v319
        %v1330 = vpop.permute.xlu0 %1329
        %1332 = vset.pattern.permute.xlu0 1
        %1333 = vperm.xlu0 %1332, %v320
        %v1334 = vpop.permute.xlu0 %1333
        %1336 = vset.pattern.permute.xlu0 1
        %1337 = vperm.xlu0 %1336, %v321
        %v1338 = vpop.permute.xlu0 %1337
        %1340 = vset.pattern.permute.xlu0 1
        %1341 = vperm.xlu0 %1340, %v322
        %v1342 = vpop.permute.xlu0 %1341
        %1344 = vset.pattern.permute.xlu0 1
        %1345 = vperm.xlu0 %1344, %v323
        %v1346 = vpop.permute.xlu0 %1345
        %1348 = vset.pattern.permute.xlu0 1
        %1349 = vperm.xlu0 %1348, %v324
        %v1350 = vpop.permute.xlu0 %1349
        %1352 = vset.pattern.permute.xlu0 1
        %1353 = vperm.xlu0 %1352, %v325
        %v1354 = vpop.permute.xlu0 %1353
        %1356 = vset.pattern.permute.xlu0 1
        %1357 = vperm.xlu0 %1356, %v326
        %v1358 = vpop.permute.xlu0 %1357
        %1360 = vset.pattern.permute.xlu0 1
        %1361 = vperm.xlu0 %1360, %v327
        %v1362 = vpop.permute.xlu0 %1361
        %1364 = vset.pattern.permute.xlu0 1
        %1365 = vperm.xlu0 %1364, %v328
        %v1366 = vpop.permute.xlu0 %1365
        %1368 = vset.pattern.permute.xlu0 1
        %1369 = vperm.xlu0 %1368, %v329
        %v1370 = vpop.permute.xlu0 %1369
        %1372 = vset.pattern.permute.xlu0 1
        %1373 = vperm.xlu0 %1372, %v330
        %v1374 = vpop.permute.xlu0 %1373
        %1376 = vset.pattern.permute.xlu0 1
        %1377 = vperm.xlu0 %1376, %v331
        %v1378 = vpop.permute.xlu0 %1377
        %1380 = vset.pattern.permute.xlu0 1
        %1381 = vperm.xlu0 %1380, %v332
        %v1382 = vpop.permute.xlu0 %1381
        %1384 = vset.pattern.permute.xlu0 1
        %1385 = vperm.xlu0 %1384, %v333
        %v1386 = vpop.permute.xlu0 %1385
        %1388 = vset.pattern.permute.xlu0 1
        %1389 = vperm.xlu0 %1388, %v334
        %v1390 = vpop.permute.xlu0 %1389
        %1392 = vset.pattern.permute.xlu0 1
        %1393 = vperm.xlu0 %1392, %v335
        %v1394 = vpop.permute.xlu0 %1393
        %1396 = vset.pattern.permute.xlu0 1
        %1397 = vperm.xlu0 %1396, %v336
        %v1398 = vpop.permute.xlu0 %1397
        %1400 = vset.pattern.permute.xlu0 1
        %1401 = vperm.xlu0 %1400, %v337
        %v1402 = vpop.permute.xlu0 %1401
        %1404 = vset.pattern.permute.xlu0 1
        %1405 = vperm.xlu0 %1404, %v338
        %v1406 = vpop.permute.xlu0 %1405
        %1408 = vset.pattern.permute.xlu0 1
        %1409 = vperm.xlu0 %1408, %v339
        %v1410 = vpop.permute.xlu0 %1409
        %1412 = vset.pattern.permute.xlu0 1
        %1413 = vperm.xlu0 %1412, %v340
        %v1414 = vpop.permute.xlu0 %1413
        %1416 = vset.pattern.permute.xlu0 1
        %1417 = vperm.xlu0 %1416, %v341
        %v1418 = vpop.permute.xlu0 %1417
        %1420 = vset.pattern.permute.xlu0 1
        %1421 = vperm.xlu0 %1420, %v342
        %v1422 = vpop.permute.xlu0 %1421
        %1424 = vset.pattern.permute.xlu0 1
        %1425 = vperm.xlu0 %1424, %v343
        %v1426 = vpop.permute.xlu0 %1425
        %1428 = vset.pattern.permute.xlu0 1
        %1429 = vperm.xlu0 %1428, %v344
        %v1430 = vpop.permute.xlu0 %1429
        %1432 = vset.pattern.permute.xlu0 1
        %1433 = vperm.xlu0 %1432, %v345
        %v1434 = vpop.permute.xlu0 %1433
        %1436 = vset.pattern.permute.xlu0 1
        %1437 = vperm.xlu0 %1436, %v346
        %v1438 = vpop.permute.xlu0 %1437
        %1440 = vset.pattern.permute.xlu0 1
        %1441 = vperm.xlu0 %1440, %v347
        %v1442 = vpop.permute.xlu0 %1441
        %1444 = vset.pattern.permute.xlu0 1
        %1445 = vperm.xlu0 %1444, %v348
        %v1446 = vpop.permute.xlu0 %1445
        %1448 = vset.pattern.permute.xlu0 1
        %1449 = vperm.xlu0 %1448, %v349
        %v1450 = vpop.permute.xlu0 %1449
        %1452 = vset.pattern.permute.xlu0 1
        %1453 = vperm.xlu0 %1452, %v350
        %v1454 = vpop.permute.xlu0 %1453
        %1456 = vset.pattern.permute.xlu0 1
        %1457 = vperm.xlu0 %1456, %v351
        %v1458 = vpop.permute.xlu0 %1457
        %1460 = vset.pattern.permute.xlu0 1
        %1461 = vperm.xlu0 %1460, %v352
        %v1462 = vpop.permute.xlu0 %1461
        %1464 = vset.pattern.permute.xlu0 1
        %1465 = vperm.xlu0 %1464, %v353
        %v1466 = vpop.permute.xlu0 %1465
        %1468 = vset.pattern.permute.xlu0 1
        %1469 = vperm.xlu0 %1468, %v354
        %v1470 = vpop.permute.xlu0 %1469
        %1472 = vset.pattern.permute.xlu0 1
        %1473 = vperm.xlu0 %1472, %v355
        %v1474 = vpop.permute.xlu0 %1473
        %1476 = vset.pattern.permute.xlu0 1
        %1477 = vperm.xlu0 %1476, %v356
        %v1478 = vpop.permute.xlu0 %1477
        %1480 = vset.pattern.permute.xlu0 1
        %1481 = vperm.xlu0 %1480, %v357
        %v1482 = vpop.permute.xlu0 %1481
        %1484 = vset.pattern.permute.xlu0 1
        %1485 = vperm.xlu0 %1484, %v358
        %v1486 = vpop.permute.xlu0 %1485
        %1488 = vset.pattern.permute.xlu0 1
        %1489 = vperm.xlu0 %1488, %v359
        %v1490 = vpop.permute.xlu0 %1489
        %1492 = vset.pattern.permute.xlu0 1
        %1493 = vperm.xlu0 %1492, %v360
        %v1494 = vpop.permute.xlu0 %1493
        %1496 = vset.pattern.permute.xlu0 1
        %1497 = vperm.xlu0 %1496, %v361
        %v1498 = vpop.permute.xlu0 %1497
        %1500 = vset.pattern.permute.xlu0 1
        %1501 = vperm.xlu0 %1500, %v362
        %v1502 = vpop.permute.xlu0 %1501
        %1504 = vset.pattern.permute.xlu0 1
        %1505 = vperm.xlu0 %1504, %v363
        %v1506 = vpop.permute.xlu0 %1505
        %1508 = vset.pattern.permute.xlu0 1
        %1509 = vperm.xlu0 %1508, %v364
        %v1510 = vpop.permute.xlu0 %1509
        %1512 = vset.pattern.permute.xlu0 1
        %1513 = vperm.xlu0 %1512, %v365
        %v1514 = vpop.permute.xlu0 %1513
        %1516 = vset.pattern.permute.xlu0 1
        %1517 = vperm.xlu0 %1516, %v366
        %v1518 = vpop.permute.xlu0 %1517
        %1520 = vset.pattern.permute.xlu0 1
        %1521 = vperm.xlu0 %1520, %v367
        %v1522 = vpop.permute.xlu0 %1521
        %1524 = vset.pattern.permute.xlu0 1
        %1525 = vperm.xlu0 %1524, %v368
        %v1526 = vpop.permute.xlu0 %1525
        %1528 = vset.pattern.permute.xlu0 1
        %1529 = vperm.xlu0 %1528, %v369
        %v1530 = vpop.permute.xlu0 %1529
        %1532 = vset.pattern.permute.xlu0 1
        %1533 = vperm.xlu0 %1532, %v370
        %v1534 = vpop.permute.xlu0 %1533
        %1536 = vset.pattern.permute.xlu0 1
        %1537 = vperm.xlu0 %1536, %v371
        %v1538 = vpop.permute.xlu0 %1537
        %1540 = vset.pattern.permute.xlu0 1
        %1541 = vperm.xlu0 %1540, %v372
        %v1542 = vpop.permute.xlu0 %1541
        %1544 = vset.pattern.permute.xlu0 1
        %1545 = vperm.xlu0 %1544, %v373
        %v1546 = vpop.permute.xlu0 %1545
        %1548 = vset.pattern.permute.xlu0 1
        %1549 = vperm.xlu0 %1548, %v374
        %v1550 = vpop.permute.xlu0 %1549
        %1552 = vset.pattern.permute.xlu0 1
        %1553 = vperm.xlu0 %1552, %v375
        %v1554 = vpop.permute.xlu0 %1553
        %1556 = vset.pattern.permute.xlu0 1
        %1557 = vperm.xlu0 %1556, %v376
        %v1558 = vpop.permute.xlu0 %1557
        %1560 = vset.pattern.permute.xlu0 1
        %1561 = vperm.xlu0 %1560, %v377
        %v1562 = vpop.permute.xlu0 %1561
        %1564 = vset.pattern.permute.xlu0 1
        %1565 = vperm.xlu0 %1564, %v378
        %v1566 = vpop.permute.xlu0 %1565
        %1568 = vset.pattern.permute.xlu0 1
        %1569 = vperm.xlu0 %1568, %v379
        %v1570 = vpop.permute.xlu0 %1569
        %1572 = vset.pattern.permute.xlu0 1
        %1573 = vperm.xlu0 %1572, %v380
        %v1574 = vpop.permute.xlu0 %1573
        %1576 = vset.pattern.permute.xlu0 1
        %1577 = vperm.xlu0 %1576, %v381
        %v1578 = vpop.permute.xlu0 %1577
        %1580 = vset.pattern.permute.xlu0 1
        %1581 = vperm.xlu0 %1580, %v382
        %v1582 = vpop.permute.xlu0 %1581
        %1584 = vset.pattern.permute.xlu0 1
        %1585 = vperm.xlu0 %1584, %v383
        %v1586 = vpop.permute.xlu0 %1585
        %1588 = vset.pattern.permute.xlu0 1
        %1589 = vperm.xlu0 %1588, %v384
        %v1590 = vpop.permute.xlu0 %1589
        %1592 = vset.pattern.permute.xlu0 1
        %1593 = vperm.xlu0 %1592, %v385
        %v1594 = vpop.permute.xlu0 %1593
        %1596 = vset.pattern.permute.xlu0 1
        %1597 = vperm.xlu0 %1596, %v386
        %v1598 = vpop.permute.xlu0 %1597
        %1600 = vset.pattern.permute.xlu0 1
        %1601 = vperm.xlu0 %1600, %v387
        %v1602 = vpop.permute.xlu0 %1601
        %1604 = vset.pattern.permute.xlu0 1
        %1605 = vperm.xlu0 %1604, %v388
        %v1606 = vpop.permute.xlu0 %1605
        %1608 = vset.pattern.permute.xlu0 1
        %1609 = vperm.xlu0 %1608, %v389
        %v1610 = vpop.permute.xlu0 %1609
        %1612 = vset.pattern.permute.xlu0 1
        %1613 = vperm.xlu0 %1612, %v390
        %v1614 = vpop.permute.xlu0 %1613
        %1616 = vset.pattern.permute.xlu0 1
        %1617 = vperm.xlu0 %1616, %v391
        %v1618 = vpop.permute.xlu0 %1617
        %1620 = vset.pattern.permute.xlu0 1
        %1621 = vperm.xlu0 %1620, %v392
        %v1622 = vpop.permute.xlu0 %1621
        %1624 = vset.pattern.permute.xlu0 1
        %1625 = vperm.xlu0 %1624, %v393
        %v1626 = vpop.permute.xlu0 %1625
        %1628 = vset.pattern.permute.xlu0 1
        %1629 = vperm.xlu0 %1628, %v394
        %v1630 = vpop.permute.xlu0 %1629
        %1632 = vset.pattern.permute.xlu0 1
        %1633 = vperm.xlu0 %1632, %v395
        %v1634 = vpop.permute.xlu0 %1633
        %1636 = vset.pattern.permute.xlu0 1
        %1637 = vperm.xlu0 %1636, %v396
        %v1638 = vpop.permute.xlu0 %1637
        %1640 = vset.pattern.permute.xlu0 1
        %1641 = vperm.xlu0 %1640, %v397
        %v1642 = vpop.permute.xlu0 %1641
        %1644 = vset.pattern.permute.xlu0 1
        %1645 = vperm.xlu0 %1644, %v398
        %v1646 = vpop.permute.xlu0 %1645
        %1648 = vset.pattern.permute.xlu0 1
        %1649 = vperm.xlu0 %1648, %v399
        %v1650 = vpop.permute.xlu0 %1649
        %1652 = vset.pattern.permute.xlu0 1
        %1653 = vperm.xlu0 %1652, %v400
        %v1654 = vpop.permute.xlu0 %1653
        %1656 = vset.pattern.permute.xlu0 1
        %1657 = vperm.xlu0 %1656, %v401
        %v1658 = vpop.permute.xlu0 %1657
        %1660 = vset.pattern.permute.xlu0 1
        %1661 = vperm.xlu0 %1660, %v402
        %v1662 = vpop.permute.xlu0 %1661
        %1664 = vset.pattern.permute.xlu0 1
        %1665 = vperm.xlu0 %1664, %v403
        %v1666 = vpop.permute.xlu0 %1665
        %1668 = vset.pattern.permute.xlu0 1
        %1669 = vperm.xlu0 %1668, %v404
        %v1670 = vpop.permute.xlu0 %1669
        %1672 = vset.pattern.permute.xlu0 1
        %1673 = vperm.xlu0 %1672, %v405
        %v1674 = vpop.permute.xlu0 %1673
        %1676 = vset.pattern.permute.xlu0 1
        %1677 = vperm.xlu0 %1676, %v406
        %v1678 = vpop.permute.xlu0 %1677
        %v1680 = vperm.slane %v1171, 0
        %v1681 = vmul.f32 %v1174, %v1680
        %v1682 = vmul.f32 %v1178, %v1680
        %v1683 = vmul.f32 %v1182, %v1680
        %v1684 = vmul.f32 %v1186, %v1680
        %v1685 = vmul.f32 %v1190, %v1680
        %v1686 = vmul.f32 %v1194, %v1680
        %v1687 = vmul.f32 %v1198, %v1680
        %v1688 = vmul.f32 %v1202, %v1680
        %v1689 = vmul.f32 %v1206, %v1680
        %v1690 = vmul.f32 %v1210, %v1680
        %v1691 = vmul.f32 %v1214, %v1680
        %v1692 = vmul.f32 %v1218, %v1680
        %v1693 = vmul.f32 %v1222, %v1680
        %v1694 = vmul.f32 %v1226, %v1680
        %v1695 = vmul.f32 %v1230, %v1680
        %v1696 = vmul.f32 %v1234, %v1680
        %v1697 = vmul.f32 %v1238, %v1680
        %v1698 = vmul.f32 %v1242, %v1680
        %v1699 = vmul.f32 %v1246, %v1680
        %v1700 = vmul.f32 %v1250, %v1680
        %v1701 = vmul.f32 %v1254, %v1680
        %v1702 = vmul.f32 %v1258, %v1680
        %v1703 = vmul.f32 %v1262, %v1680
        %v1704 = vmul.f32 %v1266, %v1680
        %v1705 = vmul.f32 %v1270, %v1680
        %v1706 = vmul.f32 %v1274, %v1680
        %v1707 = vmul.f32 %v1278, %v1680
        %v1708 = vmul.f32 %v1282, %v1680
        %v1709 = vmul.f32 %v1286, %v1680
        %v1710 = vmul.f32 %v1290, %v1680
        %v1711 = vmul.f32 %v1294, %v1680
        %v1712 = vmul.f32 %v1298, %v1680
        %v1713 = vmul.f32 %v1302, %v1680
        %v1714 = vmul.f32 %v1306, %v1680
        %v1715 = vmul.f32 %v1310, %v1680
        %v1716 = vmul.f32 %v1314, %v1680
        %v1717 = vmul.f32 %v1318, %v1680
        %v1718 = vmul.f32 %v1322, %v1680
        %v1719 = vmul.f32 %v1326, %v1680
        %v1720 = vmul.f32 %v1330, %v1680
        %v1721 = vmul.f32 %v1334, %v1680
        %v1722 = vmul.f32 %v1338, %v1680
        %v1723 = vmul.f32 %v1342, %v1680
        %v1724 = vmul.f32 %v1346, %v1680
        %v1725 = vmul.f32 %v1350, %v1680
        %v1726 = vmul.f32 %v1354, %v1680
        %v1727 = vmul.f32 %v1358, %v1680
        %v1728 = vmul.f32 %v1362, %v1680
        %v1729 = vmul.f32 %v1366, %v1680
        %v1730 = vmul.f32 %v1370, %v1680
        %v1731 = vmul.f32 %v1374, %v1680
        %v1732 = vmul.f32 %v1378, %v1680
        %v1733 = vmul.f32 %v1382, %v1680
        %v1734 = vmul.f32 %v1386, %v1680
        %v1735 = vmul.f32 %v1390, %v1680
        %v1736 = vmul.f32 %v1394, %v1680
        %v1737 = vmul.f32 %v1398, %v1680
        %v1738 = vmul.f32 %v1402, %v1680
        %v1739 = vmul.f32 %v1406, %v1680
        %v1740 = vmul.f32 %v1410, %v1680
        %v1741 = vmul.f32 %v1414, %v1680
        %v1742 = vmul.f32 %v1418, %v1680
        %v1743 = vmul.f32 %v1422, %v1680
        %v1744 = vmul.f32 %v1426, %v1680
        %v1745 = vmul.f32 %v1430, %v1680
        %v1746 = vmul.f32 %v1434, %v1680
        %v1747 = vmul.f32 %v1438, %v1680
        %v1748 = vmul.f32 %v1442, %v1680
        %v1749 = vmul.f32 %v1446, %v1680
        %v1750 = vmul.f32 %v1450, %v1680
        %v1751 = vmul.f32 %v1454, %v1680
        %v1752 = vmul.f32 %v1458, %v1680
        %v1753 = vmul.f32 %v1462, %v1680
        %v1754 = vmul.f32 %v1466, %v1680
        %v1755 = vmul.f32 %v1470, %v1680
        %v1756 = vmul.f32 %v1474, %v1680
        %v1757 = vmul.f32 %v1478, %v1680
        %v1758 = vmul.f32 %v1482, %v1680
        %v1759 = vmul.f32 %v1486, %v1680
        %v1760 = vmul.f32 %v1490, %v1680
        %v1761 = vmul.f32 %v1494, %v1680
        %v1762 = vmul.f32 %v1498, %v1680
        %v1763 = vmul.f32 %v1502, %v1680
        %v1764 = vmul.f32 %v1506, %v1680
        %v1765 = vmul.f32 %v1510, %v1680
        %v1766 = vmul.f32 %v1514, %v1680
        %v1767 = vmul.f32 %v1518, %v1680
        %v1768 = vmul.f32 %v1522, %v1680
        %v1769 = vmul.f32 %v1526, %v1680
        %v1770 = vmul.f32 %v1530, %v1680
        %v1771 = vmul.f32 %v1534, %v1680
        %v1772 = vmul.f32 %v1538, %v1680
        %v1773 = vmul.f32 %v1542, %v1680
        %v1774 = vmul.f32 %v1546, %v1680
        %v1775 = vmul.f32 %v1550, %v1680
        %v1776 = vmul.f32 %v1554, %v1680
        %v1777 = vmul.f32 %v1558, %v1680
        %v1778 = vmul.f32 %v1562, %v1680
        %v1779 = vmul.f32 %v1566, %v1680
        %v1780 = vmul.f32 %v1570, %v1680
        %v1781 = vmul.f32 %v1574, %v1680
        %v1782 = vmul.f32 %v1578, %v1680
        %v1783 = vmul.f32 %v1582, %v1680
        %v1784 = vmul.f32 %v1586, %v1680
        %v1785 = vmul.f32 %v1590, %v1680
        %v1786 = vmul.f32 %v1594, %v1680
        %v1787 = vmul.f32 %v1598, %v1680
        %v1788 = vmul.f32 %v1602, %v1680
        %v1789 = vmul.f32 %v1606, %v1680
        %v1790 = vmul.f32 %v1610, %v1680
        %v1791 = vmul.f32 %v1614, %v1680
        %v1792 = vmul.f32 %v1618, %v1680
        %v1793 = vmul.f32 %v1622, %v1680
        %v1794 = vmul.f32 %v1626, %v1680
        %v1795 = vmul.f32 %v1630, %v1680
        %v1796 = vmul.f32 %v1634, %v1680
        %v1797 = vmul.f32 %v1638, %v1680
        %v1798 = vmul.f32 %v1642, %v1680
        %v1799 = vmul.f32 %v1646, %v1680
        %v1800 = vmul.f32 %v1650, %v1680
        %v1801 = vmul.f32 %v1654, %v1680
        %v1802 = vmul.f32 %v1658, %v1680
        %v1803 = vmul.f32 %v1662, %v1680
        %v1804 = vmul.f32 %v1666, %v1680
        %v1805 = vmul.f32 %v1670, %v1680
        %v1806 = vmul.f32 %v1674, %v1680
        %v1807 = vmul.f32 %v1678, %v1680
        %v1808 = vadd.f32 %v1044, %v1681
        %v1809 = vadd.f32 %v1045, %v1682
        %v1810 = vadd.f32 %v1046, %v1683
        %v1811 = vadd.f32 %v1047, %v1684
        %v1812 = vadd.f32 %v1048, %v1685
        %v1813 = vadd.f32 %v1049, %v1686
        %v1814 = vadd.f32 %v1050, %v1687
        %v1815 = vadd.f32 %v1051, %v1688
        %v1816 = vadd.f32 %v1052, %v1689
        %v1817 = vadd.f32 %v1053, %v1690
        %v1818 = vadd.f32 %v1054, %v1691
        %v1819 = vadd.f32 %v1055, %v1692
        %v1820 = vadd.f32 %v1056, %v1693
        %v1821 = vadd.f32 %v1057, %v1694
        %v1822 = vadd.f32 %v1058, %v1695
        %v1823 = vadd.f32 %v1059, %v1696
        %v1824 = vadd.f32 %v1060, %v1697
        %v1825 = vadd.f32 %v1061, %v1698
        %v1826 = vadd.f32 %v1062, %v1699
        %v1827 = vadd.f32 %v1063, %v1700
        %v1828 = vadd.f32 %v1064, %v1701
        %v1829 = vadd.f32 %v1065, %v1702
        %v1830 = vadd.f32 %v1066, %v1703
        %v1831 = vadd.f32 %v1067, %v1704
        %v1832 = vadd.f32 %v1068, %v1705
        %v1833 = vadd.f32 %v1069, %v1706
        %v1834 = vadd.f32 %v1070, %v1707
        %v1835 = vadd.f32 %v1071, %v1708
        %v1836 = vadd.f32 %v1072, %v1709
        %v1837 = vadd.f32 %v1073, %v1710
        %v1838 = vadd.f32 %v1074, %v1711
        %v1839 = vadd.f32 %v1075, %v1712
        %v1840 = vadd.f32 %v1076, %v1713
        %v1841 = vadd.f32 %v1077, %v1714
        %v1842 = vadd.f32 %v1078, %v1715
        %v1843 = vadd.f32 %v1079, %v1716
        %v1844 = vadd.f32 %v1080, %v1717
        %v1845 = vadd.f32 %v1081, %v1718
        %v1846 = vadd.f32 %v1082, %v1719
        %v1847 = vadd.f32 %v1083, %v1720
        %v1848 = vadd.f32 %v1084, %v1721
        %v1849 = vadd.f32 %v1085, %v1722
        %v1850 = vadd.f32 %v1086, %v1723
        %v1851 = vadd.f32 %v1087, %v1724
        %v1852 = vadd.f32 %v1088, %v1725
        %v1853 = vadd.f32 %v1089, %v1726
        %v1854 = vadd.f32 %v1090, %v1727
        %v1855 = vadd.f32 %v1091, %v1728
        %v1856 = vadd.f32 %v1092, %v1729
        %v1857 = vadd.f32 %v1093, %v1730
        %v1858 = vadd.f32 %v1094, %v1731
        %v1859 = vadd.f32 %v1095, %v1732
        %v1860 = vadd.f32 %v1096, %v1733
        %v1861 = vadd.f32 %v1097, %v1734
        %v1862 = vadd.f32 %v1098, %v1735
        %v1863 = vadd.f32 %v1099, %v1736
        %v1864 = vadd.f32 %v1100, %v1737
        %v1865 = vadd.f32 %v1101, %v1738
        %v1866 = vadd.f32 %v1102, %v1739
        %v1867 = vadd.f32 %v1103, %v1740
        %v1868 = vadd.f32 %v1104, %v1741
        %v1869 = vadd.f32 %v1105, %v1742
        %v1870 = vadd.f32 %v1106, %v1743
        %v1871 = vadd.f32 %v1107, %v1744
        %v1872 = vadd.f32 %v1108, %v1745
        %v1873 = vadd.f32 %v1109, %v1746
        %v1874 = vadd.f32 %v1110, %v1747
        %v1875 = vadd.f32 %v1111, %v1748
        %v1876 = vadd.f32 %v1112, %v1749
        %v1877 = vadd.f32 %v1113, %v1750
        %v1878 = vadd.f32 %v1114, %v1751
        %v1879 = vadd.f32 %v1115, %v1752
        %v1880 = vadd.f32 %v1116, %v1753
        %v1881 = vadd.f32 %v1117, %v1754
        %v1882 = vadd.f32 %v1118, %v1755
        %v1883 = vadd.f32 %v1119, %v1756
        %v1884 = vadd.f32 %v1120, %v1757
        %v1885 = vadd.f32 %v1121, %v1758
        %v1886 = vadd.f32 %v1122, %v1759
        %v1887 = vadd.f32 %v1123, %v1760
        %v1888 = vadd.f32 %v1124, %v1761
        %v1889 = vadd.f32 %v1125, %v1762
        %v1890 = vadd.f32 %v1126, %v1763
        %v1891 = vadd.f32 %v1127, %v1764
        %v1892 = vadd.f32 %v1128, %v1765
        %v1893 = vadd.f32 %v1129, %v1766
        %v1894 = vadd.f32 %v1130, %v1767
        %v1895 = vadd.f32 %v1131, %v1768
        %v1896 = vadd.f32 %v1132, %v1769
        %v1897 = vadd.f32 %v1133, %v1770
        %v1898 = vadd.f32 %v1134, %v1771
        %v1899 = vadd.f32 %v1135, %v1772
        %v1900 = vadd.f32 %v1136, %v1773
        %v1901 = vadd.f32 %v1137, %v1774
        %v1902 = vadd.f32 %v1138, %v1775
        %v1903 = vadd.f32 %v1139, %v1776
        %v1904 = vadd.f32 %v1140, %v1777
        %v1905 = vadd.f32 %v1141, %v1778
        %v1906 = vadd.f32 %v1142, %v1779
        %v1907 = vadd.f32 %v1143, %v1780
        %v1908 = vadd.f32 %v1144, %v1781
        %v1909 = vadd.f32 %v1145, %v1782
        %v1910 = vadd.f32 %v1146, %v1783
        %v1911 = vadd.f32 %v1147, %v1784
        %v1912 = vadd.f32 %v1148, %v1785
        %v1913 = vadd.f32 %v1149, %v1786
        %v1914 = vadd.f32 %v1150, %v1787
        %v1915 = vadd.f32 %v1151, %v1788
        %v1916 = vadd.f32 %v1152, %v1789
        %v1917 = vadd.f32 %v1153, %v1790
        %v1918 = vadd.f32 %v1154, %v1791
        %v1919 = vadd.f32 %v1155, %v1792
        %v1920 = vadd.f32 %v1156, %v1793
        %v1921 = vadd.f32 %v1157, %v1794
        %v1922 = vadd.f32 %v1158, %v1795
        %v1923 = vadd.f32 %v1159, %v1796
        %v1924 = vadd.f32 %v1160, %v1797
        %v1925 = vadd.f32 %v1161, %v1798
        %v1926 = vadd.f32 %v1162, %v1799
        %v1927 = vadd.f32 %v1163, %v1800
        %v1928 = vadd.f32 %v1164, %v1801
        %v1929 = vadd.f32 %v1165, %v1802
        %v1930 = vadd.f32 %v1166, %v1803
        %v1931 = vadd.f32 %v1167, %v1804
        %v1932 = vadd.f32 %v1168, %v1805
        %v1933 = vadd.f32 %v1169, %v1806
        %v1934 = vadd.f32 %v1170, %v1807
        %v1935 = vld [vmem:[%s2] sm:$0x1]
        %v1937 = vperm.slane %v1935, 0
        %v1939 = vadd.f32 %v1808, %v1937
        %v1940 = vadd.f32 %v1809, %v1937
        %v1941 = vadd.f32 %v1810, %v1937
        %v1942 = vadd.f32 %v1811, %v1937
        %v1943 = vadd.f32 %v1812, %v1937
        %v1944 = vadd.f32 %v1813, %v1937
        %v1945 = vadd.f32 %v1814, %v1937
        %v1946 = vadd.f32 %v1815, %v1937
        %v1947 = vadd.f32 %v1816, %v1937
        %v1948 = vadd.f32 %v1817, %v1937
        %v1949 = vadd.f32 %v1818, %v1937
        %v1950 = vadd.f32 %v1819, %v1937
        %v1951 = vadd.f32 %v1820, %v1937
        %v1952 = vadd.f32 %v1821, %v1937
        %v1953 = vadd.f32 %v1822, %v1937
        %v1954 = vadd.f32 %v1823, %v1937
        %v1955 = vadd.f32 %v1824, %v1937
        %v1956 = vadd.f32 %v1825, %v1937
        %v1957 = vadd.f32 %v1826, %v1937
        %v1958 = vadd.f32 %v1827, %v1937
        %v1959 = vadd.f32 %v1828, %v1937
        %v1960 = vadd.f32 %v1829, %v1937
        %v1961 = vadd.f32 %v1830, %v1937
        %v1962 = vadd.f32 %v1831, %v1937
        %v1963 = vadd.f32 %v1832, %v1937
        %v1964 = vadd.f32 %v1833, %v1937
        %v1965 = vadd.f32 %v1834, %v1937
        %v1966 = vadd.f32 %v1835, %v1937
        %v1967 = vadd.f32 %v1836, %v1937
        %v1968 = vadd.f32 %v1837, %v1937
        %v1969 = vadd.f32 %v1838, %v1937
        %v1970 = vadd.f32 %v1839, %v1937
        %v1971 = vadd.f32 %v1840, %v1937
        %v1972 = vadd.f32 %v1841, %v1937
        %v1973 = vadd.f32 %v1842, %v1937
        %v1974 = vadd.f32 %v1843, %v1937
        %v1975 = vadd.f32 %v1844, %v1937
        %v1976 = vadd.f32 %v1845, %v1937
        %v1977 = vadd.f32 %v1846, %v1937
        %v1978 = vadd.f32 %v1847, %v1937
        %v1979 = vadd.f32 %v1848, %v1937
        %v1980 = vadd.f32 %v1849, %v1937
        %v1981 = vadd.f32 %v1850, %v1937
        %v1982 = vadd.f32 %v1851, %v1937
        %v1983 = vadd.f32 %v1852, %v1937
        %v1984 = vadd.f32 %v1853, %v1937
        %v1985 = vadd.f32 %v1854, %v1937
        %v1986 = vadd.f32 %v1855, %v1937
        %v1987 = vadd.f32 %v1856, %v1937
        %v1988 = vadd.f32 %v1857, %v1937
        %v1989 = vadd.f32 %v1858, %v1937
        %v1990 = vadd.f32 %v1859, %v1937
        %v1991 = vadd.f32 %v1860, %v1937
        %v1992 = vadd.f32 %v1861, %v1937
        %v1993 = vadd.f32 %v1862, %v1937
        %v1994 = vadd.f32 %v1863, %v1937
        %v1995 = vadd.f32 %v1864, %v1937
        %v1996 = vadd.f32 %v1865, %v1937
        %v1997 = vadd.f32 %v1866, %v1937
        %v1998 = vadd.f32 %v1867, %v1937
        %v1999 = vadd.f32 %v1868, %v1937
        %v2000 = vadd.f32 %v1869, %v1937
        %v2001 = vadd.f32 %v1870, %v1937
        %v2002 = vadd.f32 %v1871, %v1937
        %v2003 = vadd.f32 %v1872, %v1937
        %v2004 = vadd.f32 %v1873, %v1937
        %v2005 = vadd.f32 %v1874, %v1937
        %v2006 = vadd.f32 %v1875, %v1937
        %v2007 = vadd.f32 %v1876, %v1937
        %v2008 = vadd.f32 %v1877, %v1937
        %v2009 = vadd.f32 %v1878, %v1937
        %v2010 = vadd.f32 %v1879, %v1937
        %v2011 = vadd.f32 %v1880, %v1937
        %v2012 = vadd.f32 %v1881, %v1937
        %v2013 = vadd.f32 %v1882, %v1937
        %v2014 = vadd.f32 %v1883, %v1937
        %v2015 = vadd.f32 %v1884, %v1937
        %v2016 = vadd.f32 %v1885, %v1937
        %v2017 = vadd.f32 %v1886, %v1937
        %v2018 = vadd.f32 %v1887, %v1937
        %v2019 = vadd.f32 %v1888, %v1937
        %v2020 = vadd.f32 %v1889, %v1937
        %v2021 = vadd.f32 %v1890, %v1937
        %v2022 = vadd.f32 %v1891, %v1937
        %v2023 = vadd.f32 %v1892, %v1937
        %v2024 = vadd.f32 %v1893, %v1937
        %v2025 = vadd.f32 %v1894, %v1937
        %v2026 = vadd.f32 %v1895, %v1937
        %v2027 = vadd.f32 %v1896, %v1937
        %v2028 = vadd.f32 %v1897, %v1937
        %v2029 = vadd.f32 %v1898, %v1937
        %v2030 = vadd.f32 %v1899, %v1937
        %v2031 = vadd.f32 %v1900, %v1937
        %v2032 = vadd.f32 %v1901, %v1937
        %v2033 = vadd.f32 %v1902, %v1937
        %v2034 = vadd.f32 %v1903, %v1937
        %v2035 = vadd.f32 %v1904, %v1937
        %v2036 = vadd.f32 %v1905, %v1937
        %v2037 = vadd.f32 %v1906, %v1937
        %v2038 = vadd.f32 %v1907, %v1937
        %v2039 = vadd.f32 %v1908, %v1937
        %v2040 = vadd.f32 %v1909, %v1937
        %v2041 = vadd.f32 %v1910, %v1937
        %v2042 = vadd.f32 %v1911, %v1937
        %v2043 = vadd.f32 %v1912, %v1937
        %v2044 = vadd.f32 %v1913, %v1937
        %v2045 = vadd.f32 %v1914, %v1937
        %v2046 = vadd.f32 %v1915, %v1937
        %v2047 = vadd.f32 %v1916, %v1937
        %v2048 = vadd.f32 %v1917, %v1937
        %v2049 = vadd.f32 %v1918, %v1937
        %v2050 = vadd.f32 %v1919, %v1937
        %v2051 = vadd.f32 %v1920, %v1937
        %v2052 = vadd.f32 %v1921, %v1937
        %v2053 = vadd.f32 %v1922, %v1937
        %v2054 = vadd.f32 %v1923, %v1937
        %v2055 = vadd.f32 %v1924, %v1937
        %v2056 = vadd.f32 %v1925, %v1937
        %v2057 = vadd.f32 %v1926, %v1937
        %v2058 = vadd.f32 %v1927, %v1937
        %v2059 = vadd.f32 %v1928, %v1937
        %v2060 = vadd.f32 %v1929, %v1937
        %v2061 = vadd.f32 %v1930, %v1937
        %v2062 = vadd.f32 %v1931, %v1937
        %v2063 = vadd.f32 %v1932, %v1937
        %v2064 = vadd.f32 %v1933, %v1937
        %v2065 = vadd.f32 %v1934, %v1937
        %v2066 = vmax.f32 %v1939, 0.0
        %v2067 = vmax.f32 %v1940, 0.0
        %v2068 = vmax.f32 %v1941, 0.0
        %v2069 = vmax.f32 %v1942, 0.0
        %v2070 = vmax.f32 %v1943, 0.0
        %v2071 = vmax.f32 %v1944, 0.0
        %v2072 = vmax.f32 %v1945, 0.0
        %v2073 = vmax.f32 %v1946, 0.0
        %v2074 = vmax.f32 %v1947, 0.0
        %v2075 = vmax.f32 %v1948, 0.0
        %v2076 = vmax.f32 %v1949, 0.0
        %v2077 = vmax.f32 %v1950, 0.0
        %v2078 = vmax.f32 %v1951, 0.0
        %v2079 = vmax.f32 %v1952, 0.0
        %v2080 = vmax.f32 %v1953, 0.0
        %v2081 = vmax.f32 %v1954, 0.0
        %v2082 = vmax.f32 %v1955, 0.0
        %v2083 = vmax.f32 %v1956, 0.0
        %v2084 = vmax.f32 %v1957, 0.0
        %v2085 = vmax.f32 %v1958, 0.0
        %v2086 = vmax.f32 %v1959, 0.0
        %v2087 = vmax.f32 %v1960, 0.0
        %v2088 = vmax.f32 %v1961, 0.0
        %v2089 = vmax.f32 %v1962, 0.0
        %v2090 = vmax.f32 %v1963, 0.0
        %v2091 = vmax.f32 %v1964, 0.0
        %v2092 = vmax.f32 %v1965, 0.0
        %v2093 = vmax.f32 %v1966, 0.0
        %v2094 = vmax.f32 %v1967, 0.0
        %v2095 = vmax.f32 %v1968, 0.0
        %v2096 = vmax.f32 %v1969, 0.0
        %v2097 = vmax.f32 %v1970, 0.0
        %v2098 = vmax.f32 %v1971, 0.0
        %v2099 = vmax.f32 %v1972, 0.0
        %v2100 = vmax.f32 %v1973, 0.0
        %v2101 = vmax.f32 %v1974, 0.0
        %v2102 = vmax.f32 %v1975, 0.0
        %v2103 = vmax.f32 %v1976, 0.0
        %v2104 = vmax.f32 %v1977, 0.0
        %v2105 = vmax.f32 %v1978, 0.0
        %v2106 = vmax.f32 %v1979, 0.0
        %v2107 = vmax.f32 %v1980, 0.0
        %v2108 = vmax.f32 %v1981, 0.0
        %v2109 = vmax.f32 %v1982, 0.0
        %v2110 = vmax.f32 %v1983, 0.0
        %v2111 = vmax.f32 %v1984, 0.0
        %v2112 = vmax.f32 %v1985, 0.0
        %v2113 = vmax.f32 %v1986, 0.0
        %v2114 = vmax.f32 %v1987, 0.0
        %v2115 = vmax.f32 %v1988, 0.0
        %v2116 = vmax.f32 %v1989, 0.0
        %v2117 = vmax.f32 %v1990, 0.0
        %v2118 = vmax.f32 %v1991, 0.0
        %v2119 = vmax.f32 %v1992, 0.0
        %v2120 = vmax.f32 %v1993, 0.0
        %v2121 = vmax.f32 %v1994, 0.0
        %v2122 = vmax.f32 %v1995, 0.0
        %v2123 = vmax.f32 %v1996, 0.0
        %v2124 = vmax.f32 %v1997, 0.0
        %v2125 = vmax.f32 %v1998, 0.0
        %v2126 = vmax.f32 %v1999, 0.0
        %v2127 = vmax.f32 %v2000, 0.0
        %v2128 = vmax.f32 %v2001, 0.0
        %v2129 = vmax.f32 %v2002, 0.0
        %v2130 = vmax.f32 %v2003, 0.0
        %v2131 = vmax.f32 %v2004, 0.0
        %v2132 = vmax.f32 %v2005, 0.0
        %v2133 = vmax.f32 %v2006, 0.0
        %v2134 = vmax.f32 %v2007, 0.0
        %v2135 = vmax.f32 %v2008, 0.0
        %v2136 = vmax.f32 %v2009, 0.0
        %v2137 = vmax.f32 %v2010, 0.0
        %v2138 = vmax.f32 %v2011, 0.0
        %v2139 = vmax.f32 %v2012, 0.0
        %v2140 = vmax.f32 %v2013, 0.0
        %v2141 = vmax.f32 %v2014, 0.0
        %v2142 = vmax.f32 %v2015, 0.0
        %v2143 = vmax.f32 %v2016, 0.0
        %v2144 = vmax.f32 %v2017, 0.0
        %v2145 = vmax.f32 %v2018, 0.0
        %v2146 = vmax.f32 %v2019, 0.0
        %v2147 = vmax.f32 %v2020, 0.0
        %v2148 = vmax.f32 %v2021, 0.0
        %v2149 = vmax.f32 %v2022, 0.0
        %v2150 = vmax.f32 %v2023, 0.0
        %v2151 = vmax.f32 %v2024, 0.0
        %v2152 = vmax.f32 %v2025, 0.0
        %v2153 = vmax.f32 %v2026, 0.0
        %v2154 = vmax.f32 %v2027, 0.0
        %v2155 = vmax.f32 %v2028, 0.0
        %v2156 = vmax.f32 %v2029, 0.0
        %v2157 = vmax.f32 %v2030, 0.0
        %v2158 = vmax.f32 %v2031, 0.0
        %v2159 = vmax.f32 %v2032, 0.0
        %v2160 = vmax.f32 %v2033, 0.0
        %v2161 = vmax.f32 %v2034, 0.0
        %v2162 = vmax.f32 %v2035, 0.0
        %v2163 = vmax.f32 %v2036, 0.0
        %v2164 = vmax.f32 %v2037, 0.0
        %v2165 = vmax.f32 %v2038, 0.0
        %v2166 = vmax.f32 %v2039, 0.0
        %v2167 = vmax.f32 %v2040, 0.0
        %v2168 = vmax.f32 %v2041, 0.0
        %v2169 = vmax.f32 %v2042, 0.0
        %v2170 = vmax.f32 %v2043, 0.0
        %v2171 = vmax.f32 %v2044, 0.0
        %v2172 = vmax.f32 %v2045, 0.0
        %v2173 = vmax.f32 %v2046, 0.0
        %v2174 = vmax.f32 %v2047, 0.0
        %v2175 = vmax.f32 %v2048, 0.0
        %v2176 = vmax.f32 %v2049, 0.0
        %v2177 = vmax.f32 %v2050, 0.0
        %v2178 = vmax.f32 %v2051, 0.0
        %v2179 = vmax.f32 %v2052, 0.0
        %v2180 = vmax.f32 %v2053, 0.0
        %v2181 = vmax.f32 %v2054, 0.0
        %v2182 = vmax.f32 %v2055, 0.0
        %v2183 = vmax.f32 %v2056, 0.0
        %v2184 = vmax.f32 %v2057, 0.0
        %v2185 = vmax.f32 %v2058, 0.0
        %v2186 = vmax.f32 %v2059, 0.0
        %v2187 = vmax.f32 %v2060, 0.0
        %v2188 = vmax.f32 %v2061, 0.0
        %v2189 = vmax.f32 %v2062, 0.0
        %v2190 = vmax.f32 %v2063, 0.0
        %v2191 = vmax.f32 %v2064, 0.0
        %v2192 = vmax.f32 %v2065, 0.0
        %v2193 = vpack.c.bf16 %v2067, %v2066
        %v2194 = vpack.c.bf16 %v2069, %v2068
        %v2195 = vpack.c.bf16 %v2071, %v2070
        %v2196 = vpack.c.bf16 %v2073, %v2072
        %v2197 = vpack.c.bf16 %v2075, %v2074
        %v2198 = vpack.c.bf16 %v2077, %v2076
        %v2199 = vpack.c.bf16 %v2079, %v2078
        %v2200 = vpack.c.bf16 %v2081, %v2080
        %v2201 = vpack.c.bf16 %v2083, %v2082
        %v2202 = vpack.c.bf16 %v2085, %v2084
        %v2203 = vpack.c.bf16 %v2087, %v2086
        %v2204 = vpack.c.bf16 %v2089, %v2088
        %v2205 = vpack.c.bf16 %v2091, %v2090
        %v2206 = vpack.c.bf16 %v2093, %v2092
        %v2207 = vpack.c.bf16 %v2095, %v2094
        %v2208 = vpack.c.bf16 %v2097, %v2096
        %v2209 = vpack.c.bf16 %v2099, %v2098
        %v2210 = vpack.c.bf16 %v2101, %v2100
        %v2211 = vpack.c.bf16 %v2103, %v2102
        %v2212 = vpack.c.bf16 %v2105, %v2104
        %v2213 = vpack.c.bf16 %v2107, %v2106
        %v2214 = vpack.c.bf16 %v2109, %v2108
        %v2215 = vpack.c.bf16 %v2111, %v2110
        %v2216 = vpack.c.bf16 %v2113, %v2112
        %v2217 = vpack.c.bf16 %v2115, %v2114
        %v2218 = vpack.c.bf16 %v2117, %v2116
        %v2219 = vpack.c.bf16 %v2119, %v2118
        %v2220 = vpack.c.bf16 %v2121, %v2120
        %v2221 = vpack.c.bf16 %v2123, %v2122
        %v2222 = vpack.c.bf16 %v2125, %v2124
        %v2223 = vpack.c.bf16 %v2127, %v2126
        %v2224 = vpack.c.bf16 %v2129, %v2128
        %v2225 = vpack.c.bf16 %v2131, %v2130
        %v2226 = vpack.c.bf16 %v2133, %v2132
        %v2227 = vpack.c.bf16 %v2135, %v2134
        %v2228 = vpack.c.bf16 %v2137, %v2136
        %v2229 = vpack.c.bf16 %v2139, %v2138
        %v2230 = vpack.c.bf16 %v2141, %v2140
        %v2231 = vpack.c.bf16 %v2143, %v2142
        %v2232 = vpack.c.bf16 %v2145, %v2144
        %v2233 = vpack.c.bf16 %v2147, %v2146
        %v2234 = vpack.c.bf16 %v2149, %v2148
        %v2235 = vpack.c.bf16 %v2151, %v2150
        %v2236 = vpack.c.bf16 %v2153, %v2152
        %v2237 = vpack.c.bf16 %v2155, %v2154
        %v2238 = vpack.c.bf16 %v2157, %v2156
        %v2239 = vpack.c.bf16 %v2159, %v2158
        %v2240 = vpack.c.bf16 %v2161, %v2160
        %v2241 = vpack.c.bf16 %v2163, %v2162
        %v2242 = vpack.c.bf16 %v2165, %v2164
        %v2243 = vpack.c.bf16 %v2167, %v2166
        %v2244 = vpack.c.bf16 %v2169, %v2168
        %v2245 = vpack.c.bf16 %v2171, %v2170
        %v2246 = vpack.c.bf16 %v2173, %v2172
        %v2247 = vpack.c.bf16 %v2175, %v2174
        %v2248 = vpack.c.bf16 %v2177, %v2176
        %v2249 = vpack.c.bf16 %v2179, %v2178
        %v2250 = vpack.c.bf16 %v2181, %v2180
        %v2251 = vpack.c.bf16 %v2183, %v2182
        %v2252 = vpack.c.bf16 %v2185, %v2184
        %v2253 = vpack.c.bf16 %v2187, %v2186
        %v2254 = vpack.c.bf16 %v2189, %v2188
        %v2255 = vpack.c.bf16 %v2191, %v2190
        %v2256 = vpack.c.bf16 %v2192, %v2192
        %v2257 = vld [vmem:[%s3] sm:$0xff]
        %v2258 = vld [vmem:[%s3 + $0x8] sm:$0xf]
        %v2259 = vld [vmem:[%s3 + $0xc] sm:$0xff]
        %v2260 = vld [vmem:[%s3 + $0x14] sm:$0xf]
        %v2261 = vld [vmem:[%s3 + $0x18] sm:$0xff]
        %v2262 = vld [vmem:[%s3 + $0x20] sm:$0xf]
        %v2263 = vld [vmem:[%s3 + $0x24] sm:$0xff]
        %v2264 = vld [vmem:[%s3 + $0x2c] sm:$0xf]
        %v2265 = vld [vmem:[%s3 + $0x30] sm:$0xff]
        %v2266 = vld [vmem:[%s3 + $0x38] sm:$0xf]
        %v2267 = vld [vmem:[%s3 + $0x3c] sm:$0xff]
        %v2268 = vld [vmem:[%s3 + $0x44] sm:$0xf]
        %v2269 = vld [vmem:[%s3 + $0x48] sm:$0xff]
        %v2270 = vld [vmem:[%s3 + $0x50] sm:$0xf]
        %v2271 = vld [vmem:[%s3 + $0x54] sm:$0xff]
        %v2272 = vld [vmem:[%s3 + $0x5c] sm:$0xf]
        %v2273 = vld [vmem:[%s3 + $0x60] sm:$0xff]
        %v2274 = vld [vmem:[%s3 + $0x68] sm:$0xf]
        %v2275 = vld [vmem:[%s3 + $0x6c] sm:$0xff]
        %v2276 = vld [vmem:[%s3 + $0x74] sm:$0xf]
        %v2277 = vld [vmem:[%s3 + $0x78] sm:$0xff]
        %v2278 = vld [vmem:[%s3 + $0x80] sm:$0xf]
        %v2279 = vld [vmem:[%s3 + $0x84] sm:$0xff]
        %v2280 = vld [vmem:[%s3 + $0x8c] sm:$0xf]
        %v2281 = vld [vmem:[%s3 + $0x90] sm:$0xff]
        %v2282 = vld [vmem:[%s3 + $0x98] sm:$0xf]
        %v2283 = vld [vmem:[%s3 + $0x9c] sm:$0xff]
        %v2284 = vld [vmem:[%s3 + $0xa4] sm:$0xf]
        %v2285 = vld [vmem:[%s3 + $0xa8] sm:$0xff]
        %v2286 = vld [vmem:[%s3 + $0xb0] sm:$0xf]
        %v2287 = vld [vmem:[%s3 + $0xb4] sm:$0xff]
        %v2288 = vld [vmem:[%s3 + $0xbc] sm:$0xf]
        %v2321 = vunpack.c.l.b16 %v2257
        %v2322 = vunpack.c.h.b16 %v2257
        %v2323 = vunpack.c.l.b16 %v2258
        %v2324 = vunpack.c.l.b16 %v2259
        %v2325 = vunpack.c.h.b16 %v2259
        %v2326 = vunpack.c.l.b16 %v2260
        %v2327 = vunpack.c.l.b16 %v2261
        %v2328 = vunpack.c.h.b16 %v2261
        %v2329 = vunpack.c.l.b16 %v2262
        %v2330 = vunpack.c.l.b16 %v2263
        %v2331 = vunpack.c.h.b16 %v2263
        %v2332 = vunpack.c.l.b16 %v2264
        %v2333 = vunpack.c.l.b16 %v2265
        %v2334 = vunpack.c.h.b16 %v2265
        %v2335 = vunpack.c.l.b16 %v2266
        %v2336 = vunpack.c.l.b16 %v2267
        %v2337 = vunpack.c.h.b16 %v2267
        %v2338 = vunpack.c.l.b16 %v2268
        %v2339 = vunpack.c.l.b16 %v2269
        %v2340 = vunpack.c.h.b16 %v2269
        %v2341 = vunpack.c.l.b16 %v2270
        %v2342 = vunpack.c.l.b16 %v2271
        %v2343 = vunpack.c.h.b16 %v2271
        %v2344 = vunpack.c.l.b16 %v2272
        %v2345 = vunpack.c.l.b16 %v2273
        %v2346 = vunpack.c.h.b16 %v2273
        %v2347 = vunpack.c.l.b16 %v2274
        %v2348 = vunpack.c.l.b16 %v2275
        %v2349 = vunpack.c.h.b16 %v2275
        %v2350 = vunpack.c.l.b16 %v2276
        %v2351 = vunpack.c.l.b16 %v2277
        %v2352 = vunpack.c.h.b16 %v2277
        %v2353 = vunpack.c.l.b16 %v2278
        %v2354 = vunpack.c.l.b16 %v2279
        %v2355 = vunpack.c.h.b16 %v2279
        %v2356 = vunpack.c.l.b16 %v2280
        %v2357 = vunpack.c.l.b16 %v2281
        %v2358 = vunpack.c.h.b16 %v2281
        %v2359 = vunpack.c.l.b16 %v2282
        %v2360 = vunpack.c.l.b16 %v2283
        %v2361 = vunpack.c.h.b16 %v2283
        %v2362 = vunpack.c.l.b16 %v2284
        %v2363 = vunpack.c.l.b16 %v2285
        %v2364 = vunpack.c.h.b16 %v2285
        %v2365 = vunpack.c.l.b16 %v2286
        %v2366 = vunpack.c.l.b16 %v2287
        %v2367 = vunpack.c.h.b16 %v2287
        %v2368 = vunpack.c.l.b16 %v2288
        %v2369 = vpack.c.b16 %v2324, %v2321
        %v2370 = vpack.c.b16 %v2325, %v2322
        %v2371 = vpack.c.b16 %v2326, %v2323
        %v2372 = vpack.c.b16 %v2330, %v2327
        %v2373 = vpack.c.b16 %v2331, %v2328
        %v2374 = vpack.c.b16 %v2332, %v2329
        %v2375 = vpack.c.b16 %v2336, %v2333
        %v2376 = vpack.c.b16 %v2337, %v2334
        %v2377 = vpack.c.b16 %v2338, %v2335
        %v2378 = vpack.c.b16 %v2342, %v2339
        %v2379 = vpack.c.b16 %v2343, %v2340
        %v2380 = vpack.c.b16 %v2344, %v2341
        %v2381 = vpack.c.b16 %v2348, %v2345
        %v2382 = vpack.c.b16 %v2349, %v2346
        %v2383 = vpack.c.b16 %v2350, %v2347
        %v2384 = vpack.c.b16 %v2354, %v2351
        %v2385 = vpack.c.b16 %v2355, %v2352
        %v2386 = vpack.c.b16 %v2356, %v2353
        %v2387 = vpack.c.b16 %v2360, %v2357
        %v2388 = vpack.c.b16 %v2361, %v2358
        %v2389 = vpack.c.b16 %v2362, %v2359
        %v2390 = vpack.c.b16 %v2366, %v2363
        %v2391 = vpack.c.b16 %v2367, %v2364
        %v2392 = vpack.c.b16 %v2368, %v2365
        %2417 = vmatpush.bf16.msra.mxu0 %v2390
        %2418 = vmatpush.bf16.msra.mxu0 %v2387
        %2419 = vmatpush.bf16.msra.mxu0 %v2384
        %2420 = vmatpush.bf16.msra.mxu0 %v2381
        %2421 = vmatpush.bf16.msra.mxu0 %v2378
        %2422 = vmatpush.bf16.msra.mxu0 %v2375
        %2423 = vmatpush.bf16.msra.mxu0 %v2372
        %2424 = vmatpush.bf16.msra.mxu0 %v2369
        %2425 = vmatmul.bf16.gmra.mxu0 %v2193
        %v2426 = vpop.f32.mrf.mxu0
        %v2427 = vadd.f32 0.0, %v2426
        %v2428 = vpop.f32.mrf.mxu0
        %v2429 = vadd.f32 0.0, %v2428
        %2430 = vmatmul.bf16.gmra.mxu0 %v2194
        %v2431 = vpop.f32.mrf.mxu0
        %v2432 = vadd.f32 0.0, %v2431
        %v2433 = vpop.f32.mrf.mxu0
        %v2434 = vadd.f32 0.0, %v2433
        %2435 = vmatmul.bf16.gmra.mxu0 %v2195
        %v2436 = vpop.f32.mrf.mxu0
        %v2437 = vadd.f32 0.0, %v2436
        %v2438 = vpop.f32.mrf.mxu0
        %v2439 = vadd.f32 0.0, %v2438
        %2440 = vmatmul.bf16.gmra.mxu0 %v2196
        %v2441 = vpop.f32.mrf.mxu0
        %v2442 = vadd.f32 0.0, %v2441
        %v2443 = vpop.f32.mrf.mxu0
        %v2444 = vadd.f32 0.0, %v2443
        %2445 = vmatmul.bf16.gmra.mxu0 %v2197
        %v2446 = vpop.f32.mrf.mxu0
        %v2447 = vadd.f32 0.0, %v2446
        %v2448 = vpop.f32.mrf.mxu0
        %v2449 = vadd.f32 0.0, %v2448
        %2450 = vmatmul.bf16.gmra.mxu0 %v2198
        %v2451 = vpop.f32.mrf.mxu0
        %v2452 = vadd.f32 0.0, %v2451
        %v2453 = vpop.f32.mrf.mxu0
        %v2454 = vadd.f32 0.0, %v2453
        %2455 = vmatmul.bf16.gmra.mxu0 %v2199
        %v2456 = vpop.f32.mrf.mxu0
        %v2457 = vadd.f32 0.0, %v2456
        %v2458 = vpop.f32.mrf.mxu0
        %v2459 = vadd.f32 0.0, %v2458
        %2460 = vmatmul.bf16.gmra.mxu0 %v2200
        %v2461 = vpop.f32.mrf.mxu0
        %v2462 = vadd.f32 0.0, %v2461
        %v2463 = vpop.f32.mrf.mxu0
        %v2464 = vadd.f32 0.0, %v2463
        %2465 = vmatmul.bf16.gmra.mxu0 %v2201
        %v2466 = vpop.f32.mrf.mxu0
        %v2467 = vadd.f32 0.0, %v2466
        %v2468 = vpop.f32.mrf.mxu0
        %v2469 = vadd.f32 0.0, %v2468
        %2470 = vmatmul.bf16.gmra.mxu0 %v2202
        %v2471 = vpop.f32.mrf.mxu0
        %v2472 = vadd.f32 0.0, %v2471
        %v2473 = vpop.f32.mrf.mxu0
        %v2474 = vadd.f32 0.0, %v2473
        %2475 = vmatmul.bf16.gmra.mxu0 %v2203
        %v2476 = vpop.f32.mrf.mxu0
        %v2477 = vadd.f32 0.0, %v2476
        %v2478 = vpop.f32.mrf.mxu0
        %v2479 = vadd.f32 0.0, %v2478
        %2480 = vmatmul.bf16.gmra.mxu0 %v2204
        %v2481 = vpop.f32.mrf.mxu0
        %v2482 = vadd.f32 0.0, %v2481
        %v2483 = vpop.f32.mrf.mxu0
        %v2484 = vadd.f32 0.0, %v2483
        %2485 = vmatmul.bf16.gmra.mxu0 %v2205
        %v2486 = vpop.f32.mrf.mxu0
        %v2487 = vadd.f32 0.0, %v2486
        %v2488 = vpop.f32.mrf.mxu0
        %v2489 = vadd.f32 0.0, %v2488
        %2490 = vmatmul.bf16.gmra.mxu0 %v2206
        %v2491 = vpop.f32.mrf.mxu0
        %v2492 = vadd.f32 0.0, %v2491
        %v2493 = vpop.f32.mrf.mxu0
        %v2494 = vadd.f32 0.0, %v2493
        %2495 = vmatmul.bf16.gmra.mxu0 %v2207
        %v2496 = vpop.f32.mrf.mxu0
        %v2497 = vadd.f32 0.0, %v2496
        %v2498 = vpop.f32.mrf.mxu0
        %v2499 = vadd.f32 0.0, %v2498
        %2500 = vmatmul.bf16.gmra.mxu0 %v2208
        %v2501 = vpop.f32.mrf.mxu0
        %v2502 = vadd.f32 0.0, %v2501
        %v2503 = vpop.f32.mrf.mxu0
        %v2504 = vadd.f32 0.0, %v2503
        %2505 = vmatmul.bf16.gmra.mxu0 %v2209
        %v2506 = vpop.f32.mrf.mxu0
        %v2507 = vadd.f32 0.0, %v2506
        %v2508 = vpop.f32.mrf.mxu0
        %v2509 = vadd.f32 0.0, %v2508
        %2510 = vmatmul.bf16.gmra.mxu0 %v2210
        %v2511 = vpop.f32.mrf.mxu0
        %v2512 = vadd.f32 0.0, %v2511
        %v2513 = vpop.f32.mrf.mxu0
        %v2514 = vadd.f32 0.0, %v2513
        %2515 = vmatmul.bf16.gmra.mxu0 %v2211
        %v2516 = vpop.f32.mrf.mxu0
        %v2517 = vadd.f32 0.0, %v2516
        %v2518 = vpop.f32.mrf.mxu0
        %v2519 = vadd.f32 0.0, %v2518
        %2520 = vmatmul.bf16.gmra.mxu0 %v2212
        %v2521 = vpop.f32.mrf.mxu0
        %v2522 = vadd.f32 0.0, %v2521
        %v2523 = vpop.f32.mrf.mxu0
        %v2524 = vadd.f32 0.0, %v2523
        %2525 = vmatmul.bf16.gmra.mxu0 %v2213
        %v2526 = vpop.f32.mrf.mxu0
        %v2527 = vadd.f32 0.0, %v2526
        %v2528 = vpop.f32.mrf.mxu0
        %v2529 = vadd.f32 0.0, %v2528
        %2530 = vmatmul.bf16.gmra.mxu0 %v2214
        %v2531 = vpop.f32.mrf.mxu0
        %v2532 = vadd.f32 0.0, %v2531
        %v2533 = vpop.f32.mrf.mxu0
        %v2534 = vadd.f32 0.0, %v2533
        %2535 = vmatmul.bf16.gmra.mxu0 %v2215
        %v2536 = vpop.f32.mrf.mxu0
        %v2537 = vadd.f32 0.0, %v2536
        %v2538 = vpop.f32.mrf.mxu0
        %v2539 = vadd.f32 0.0, %v2538
        %2540 = vmatmul.bf16.gmra.mxu0 %v2216
        %v2541 = vpop.f32.mrf.mxu0
        %v2542 = vadd.f32 0.0, %v2541
        %v2543 = vpop.f32.mrf.mxu0
        %v2544 = vadd.f32 0.0, %v2543
        %2545 = vmatmul.bf16.gmra.mxu0 %v2217
        %v2546 = vpop.f32.mrf.mxu0
        %v2547 = vadd.f32 0.0, %v2546
        %v2548 = vpop.f32.mrf.mxu0
        %v2549 = vadd.f32 0.0, %v2548
        %2550 = vmatmul.bf16.gmra.mxu0 %v2218
        %v2551 = vpop.f32.mrf.mxu0
        %v2552 = vadd.f32 0.0, %v2551
        %v2553 = vpop.f32.mrf.mxu0
        %v2554 = vadd.f32 0.0, %v2553
        %2555 = vmatmul.bf16.gmra.mxu0 %v2219
        %v2556 = vpop.f32.mrf.mxu0
        %v2557 = vadd.f32 0.0, %v2556
        %v2558 = vpop.f32.mrf.mxu0
        %v2559 = vadd.f32 0.0, %v2558
        %2560 = vmatmul.bf16.gmra.mxu0 %v2220
        %v2561 = vpop.f32.mrf.mxu0
        %v2562 = vadd.f32 0.0, %v2561
        %v2563 = vpop.f32.mrf.mxu0
        %v2564 = vadd.f32 0.0, %v2563
        %2565 = vmatmul.bf16.gmra.mxu0 %v2221
        %v2566 = vpop.f32.mrf.mxu0
        %v2567 = vadd.f32 0.0, %v2566
        %v2568 = vpop.f32.mrf.mxu0
        %v2569 = vadd.f32 0.0, %v2568
        %2570 = vmatmul.bf16.gmra.mxu0 %v2222
        %v2571 = vpop.f32.mrf.mxu0
        %v2572 = vadd.f32 0.0, %v2571
        %v2573 = vpop.f32.mrf.mxu0
        %v2574 = vadd.f32 0.0, %v2573
        %2575 = vmatmul.bf16.gmra.mxu0 %v2223
        %v2576 = vpop.f32.mrf.mxu0
        %v2577 = vadd.f32 0.0, %v2576
        %v2578 = vpop.f32.mrf.mxu0
        %v2579 = vadd.f32 0.0, %v2578
        %2580 = vmatmul.bf16.gmra.mxu0 %v2224
        %v2581 = vpop.f32.mrf.mxu0
        %v2582 = vadd.f32 0.0, %v2581
        %v2583 = vpop.f32.mrf.mxu0
        %v2584 = vadd.f32 0.0, %v2583
        %2585 = vmatmul.bf16.gmra.mxu0 %v2225
        %v2586 = vpop.f32.mrf.mxu0
        %v2587 = vadd.f32 0.0, %v2586
        %v2588 = vpop.f32.mrf.mxu0
        %v2589 = vadd.f32 0.0, %v2588
        %2590 = vmatmul.bf16.gmra.mxu0 %v2226
        %v2591 = vpop.f32.mrf.mxu0
        %v2592 = vadd.f32 0.0, %v2591
        %v2593 = vpop.f32.mrf.mxu0
        %v2594 = vadd.f32 0.0, %v2593
        %2595 = vmatmul.bf16.gmra.mxu0 %v2227
        %v2596 = vpop.f32.mrf.mxu0
        %v2597 = vadd.f32 0.0, %v2596
        %v2598 = vpop.f32.mrf.mxu0
        %v2599 = vadd.f32 0.0, %v2598
        %2600 = vmatmul.bf16.gmra.mxu0 %v2228
        %v2601 = vpop.f32.mrf.mxu0
        %v2602 = vadd.f32 0.0, %v2601
        %v2603 = vpop.f32.mrf.mxu0
        %v2604 = vadd.f32 0.0, %v2603
        %2605 = vmatmul.bf16.gmra.mxu0 %v2229
        %v2606 = vpop.f32.mrf.mxu0
        %v2607 = vadd.f32 0.0, %v2606
        %v2608 = vpop.f32.mrf.mxu0
        %v2609 = vadd.f32 0.0, %v2608
        %2610 = vmatmul.bf16.gmra.mxu0 %v2230
        %v2611 = vpop.f32.mrf.mxu0
        %v2612 = vadd.f32 0.0, %v2611
        %v2613 = vpop.f32.mrf.mxu0
        %v2614 = vadd.f32 0.0, %v2613
        %2615 = vmatmul.bf16.gmra.mxu0 %v2231
        %v2616 = vpop.f32.mrf.mxu0
        %v2617 = vadd.f32 0.0, %v2616
        %v2618 = vpop.f32.mrf.mxu0
        %v2619 = vadd.f32 0.0, %v2618
        %2620 = vmatmul.bf16.gmra.mxu0 %v2232
        %v2621 = vpop.f32.mrf.mxu0
        %v2622 = vadd.f32 0.0, %v2621
        %v2623 = vpop.f32.mrf.mxu0
        %v2624 = vadd.f32 0.0, %v2623
        %2625 = vmatmul.bf16.gmra.mxu0 %v2233
        %v2626 = vpop.f32.mrf.mxu0
        %v2627 = vadd.f32 0.0, %v2626
        %v2628 = vpop.f32.mrf.mxu0
        %v2629 = vadd.f32 0.0, %v2628
        %2630 = vmatmul.bf16.gmra.mxu0 %v2234
        %v2631 = vpop.f32.mrf.mxu0
        %v2632 = vadd.f32 0.0, %v2631
        %v2633 = vpop.f32.mrf.mxu0
        %v2634 = vadd.f32 0.0, %v2633
        %2635 = vmatmul.bf16.gmra.mxu0 %v2235
        %v2636 = vpop.f32.mrf.mxu0
        %v2637 = vadd.f32 0.0, %v2636
        %v2638 = vpop.f32.mrf.mxu0
        %v2639 = vadd.f32 0.0, %v2638
        %2640 = vmatmul.bf16.gmra.mxu0 %v2236
        %v2641 = vpop.f32.mrf.mxu0
        %v2642 = vadd.f32 0.0, %v2641
        %v2643 = vpop.f32.mrf.mxu0
        %v2644 = vadd.f32 0.0, %v2643
        %2645 = vmatmul.bf16.gmra.mxu0 %v2237
        %v2646 = vpop.f32.mrf.mxu0
        %v2647 = vadd.f32 0.0, %v2646
        %v2648 = vpop.f32.mrf.mxu0
        %v2649 = vadd.f32 0.0, %v2648
        %2650 = vmatmul.bf16.gmra.mxu0 %v2238
        %v2651 = vpop.f32.mrf.mxu0
        %v2652 = vadd.f32 0.0, %v2651
        %v2653 = vpop.f32.mrf.mxu0
        %v2654 = vadd.f32 0.0, %v2653
        %2655 = vmatmul.bf16.gmra.mxu0 %v2239
        %v2656 = vpop.f32.mrf.mxu0
        %v2657 = vadd.f32 0.0, %v2656
        %v2658 = vpop.f32.mrf.mxu0
        %v2659 = vadd.f32 0.0, %v2658
        %2660 = vmatmul.bf16.gmra.mxu0 %v2240
        %v2661 = vpop.f32.mrf.mxu0
        %v2662 = vadd.f32 0.0, %v2661
        %v2663 = vpop.f32.mrf.mxu0
        %v2664 = vadd.f32 0.0, %v2663
        %2665 = vmatmul.bf16.gmra.mxu0 %v2241
        %v2666 = vpop.f32.mrf.mxu0
        %v2667 = vadd.f32 0.0, %v2666
        %v2668 = vpop.f32.mrf.mxu0
        %v2669 = vadd.f32 0.0, %v2668
        %2670 = vmatmul.bf16.gmra.mxu0 %v2242
        %v2671 = vpop.f32.mrf.mxu0
        %v2672 = vadd.f32 0.0, %v2671
        %v2673 = vpop.f32.mrf.mxu0
        %v2674 = vadd.f32 0.0, %v2673
        %2675 = vmatmul.bf16.gmra.mxu0 %v2243
        %v2676 = vpop.f32.mrf.mxu0
        %v2677 = vadd.f32 0.0, %v2676
        %v2678 = vpop.f32.mrf.mxu0
        %v2679 = vadd.f32 0.0, %v2678
        %2680 = vmatmul.bf16.gmra.mxu0 %v2244
        %v2681 = vpop.f32.mrf.mxu0
        %v2682 = vadd.f32 0.0, %v2681
        %v2683 = vpop.f32.mrf.mxu0
        %v2684 = vadd.f32 0.0, %v2683
        %2685 = vmatmul.bf16.gmra.mxu0 %v2245
        %v2686 = vpop.f32.mrf.mxu0
        %v2687 = vadd.f32 0.0, %v2686
        %v2688 = vpop.f32.mrf.mxu0
        %v2689 = vadd.f32 0.0, %v2688
        %2690 = vmatmul.bf16.gmra.mxu0 %v2246
        %v2691 = vpop.f32.mrf.mxu0
        %v2692 = vadd.f32 0.0, %v2691
        %v2693 = vpop.f32.mrf.mxu0
        %v2694 = vadd.f32 0.0, %v2693
        %2695 = vmatmul.bf16.gmra.mxu0 %v2247
        %v2696 = vpop.f32.mrf.mxu0
        %v2697 = vadd.f32 0.0, %v2696
        %v2698 = vpop.f32.mrf.mxu0
        %v2699 = vadd.f32 0.0, %v2698
        %2700 = vmatmul.bf16.gmra.mxu0 %v2248
        %v2701 = vpop.f32.mrf.mxu0
        %v2702 = vadd.f32 0.0, %v2701
        %v2703 = vpop.f32.mrf.mxu0
        %v2704 = vadd.f32 0.0, %v2703
        %2705 = vmatmul.bf16.gmra.mxu0 %v2249
        %v2706 = vpop.f32.mrf.mxu0
        %v2707 = vadd.f32 0.0, %v2706
        %v2708 = vpop.f32.mrf.mxu0
        %v2709 = vadd.f32 0.0, %v2708
        %2710 = vmatmul.bf16.gmra.mxu0 %v2250
        %v2711 = vpop.f32.mrf.mxu0
        %v2712 = vadd.f32 0.0, %v2711
        %v2713 = vpop.f32.mrf.mxu0
        %v2714 = vadd.f32 0.0, %v2713
        %2715 = vmatmul.bf16.gmra.mxu0 %v2251
        %v2716 = vpop.f32.mrf.mxu0
        %v2717 = vadd.f32 0.0, %v2716
        %v2718 = vpop.f32.mrf.mxu0
        %v2719 = vadd.f32 0.0, %v2718
        %2720 = vmatmul.bf16.gmra.mxu0 %v2252
        %v2721 = vpop.f32.mrf.mxu0
        %v2722 = vadd.f32 0.0, %v2721
        %v2723 = vpop.f32.mrf.mxu0
        %v2724 = vadd.f32 0.0, %v2723
        %2725 = vmatmul.bf16.gmra.mxu0 %v2253
        %v2726 = vpop.f32.mrf.mxu0
        %v2727 = vadd.f32 0.0, %v2726
        %v2728 = vpop.f32.mrf.mxu0
        %v2729 = vadd.f32 0.0, %v2728
        %2730 = vmatmul.bf16.gmra.mxu0 %v2254
        %v2731 = vpop.f32.mrf.mxu0
        %v2732 = vadd.f32 0.0, %v2731
        %v2733 = vpop.f32.mrf.mxu0
        %v2734 = vadd.f32 0.0, %v2733
        %2735 = vmatmul.bf16.gmra.mxu0 %v2255
        %v2736 = vpop.f32.mrf.mxu0
        %v2737 = vadd.f32 0.0, %v2736
        %v2738 = vpop.f32.mrf.mxu0
        %v2739 = vadd.f32 0.0, %v2738
        %2740 = vmatmul.bf16.gmra.mxu0 %v2256
        %v2741 = vpop.f32.mrf.mxu0
        %v2742 = vadd.f32 0.0, %v2741
        %v2743 = vpop.f32.mrf.mxu0
        %2744 = vdwg.mxu0
        %2745 = vmatpush.bf16.msra.mxu0 %v2391
        %2746 = vmatpush.bf16.msra.mxu0 %v2388
        %2747 = vmatpush.bf16.msra.mxu0 %v2385
        %2748 = vmatpush.bf16.msra.mxu0 %v2382
        %2749 = vmatpush.bf16.msra.mxu0 %v2379
        %2750 = vmatpush.bf16.msra.mxu0 %v2376
        %2751 = vmatpush.bf16.msra.mxu0 %v2373
        %2752 = vmatpush.bf16.msra.mxu0 %v2370
        %2753 = vmatmul.bf16.gmra.mxu0 %v2193
        %v2754 = vpop.f32.mrf.mxu0
        %v2755 = vadd.f32 0.0, %v2754
        %v2756 = vpop.f32.mrf.mxu0
        %v2757 = vadd.f32 0.0, %v2756
        %2758 = vmatmul.bf16.gmra.mxu0 %v2194
        %v2759 = vpop.f32.mrf.mxu0
        %v2760 = vadd.f32 0.0, %v2759
        %v2761 = vpop.f32.mrf.mxu0
        %v2762 = vadd.f32 0.0, %v2761
        %2763 = vmatmul.bf16.gmra.mxu0 %v2195
        %v2764 = vpop.f32.mrf.mxu0
        %v2765 = vadd.f32 0.0, %v2764
        %v2766 = vpop.f32.mrf.mxu0
        %v2767 = vadd.f32 0.0, %v2766
        %2768 = vmatmul.bf16.gmra.mxu0 %v2196
        %v2769 = vpop.f32.mrf.mxu0
        %v2770 = vadd.f32 0.0, %v2769
        %v2771 = vpop.f32.mrf.mxu0
        %v2772 = vadd.f32 0.0, %v2771
        %2773 = vmatmul.bf16.gmra.mxu0 %v2197
        %v2774 = vpop.f32.mrf.mxu0
        %v2775 = vadd.f32 0.0, %v2774
        %v2776 = vpop.f32.mrf.mxu0
        %v2777 = vadd.f32 0.0, %v2776
        %2778 = vmatmul.bf16.gmra.mxu0 %v2198
        %v2779 = vpop.f32.mrf.mxu0
        %v2780 = vadd.f32 0.0, %v2779
        %v2781 = vpop.f32.mrf.mxu0
        %v2782 = vadd.f32 0.0, %v2781
        %2783 = vmatmul.bf16.gmra.mxu0 %v2199
        %v2784 = vpop.f32.mrf.mxu0
        %v2785 = vadd.f32 0.0, %v2784
        %v2786 = vpop.f32.mrf.mxu0
        %v2787 = vadd.f32 0.0, %v2786
        %2788 = vmatmul.bf16.gmra.mxu0 %v2200
        %v2789 = vpop.f32.mrf.mxu0
        %v2790 = vadd.f32 0.0, %v2789
        %v2791 = vpop.f32.mrf.mxu0
        %v2792 = vadd.f32 0.0, %v2791
        %2793 = vmatmul.bf16.gmra.mxu0 %v2201
        %v2794 = vpop.f32.mrf.mxu0
        %v2795 = vadd.f32 0.0, %v2794
        %v2796 = vpop.f32.mrf.mxu0
        %v2797 = vadd.f32 0.0, %v2796
        %2798 = vmatmul.bf16.gmra.mxu0 %v2202
        %v2799 = vpop.f32.mrf.mxu0
        %v2800 = vadd.f32 0.0, %v2799
        %v2801 = vpop.f32.mrf.mxu0
        %v2802 = vadd.f32 0.0, %v2801
        %2803 = vmatmul.bf16.gmra.mxu0 %v2203
        %v2804 = vpop.f32.mrf.mxu0
        %v2805 = vadd.f32 0.0, %v2804
        %v2806 = vpop.f32.mrf.mxu0
        %v2807 = vadd.f32 0.0, %v2806
        %2808 = vmatmul.bf16.gmra.mxu0 %v2204
        %v2809 = vpop.f32.mrf.mxu0
        %v2810 = vadd.f32 0.0, %v2809
        %v2811 = vpop.f32.mrf.mxu0
        %v2812 = vadd.f32 0.0, %v2811
        %2813 = vmatmul.bf16.gmra.mxu0 %v2205
        %v2814 = vpop.f32.mrf.mxu0
        %v2815 = vadd.f32 0.0, %v2814
        %v2816 = vpop.f32.mrf.mxu0
        %v2817 = vadd.f32 0.0, %v2816
        %2818 = vmatmul.bf16.gmra.mxu0 %v2206
        %v2819 = vpop.f32.mrf.mxu0
        %v2820 = vadd.f32 0.0, %v2819
        %v2821 = vpop.f32.mrf.mxu0
        %v2822 = vadd.f32 0.0, %v2821
        %2823 = vmatmul.bf16.gmra.mxu0 %v2207
        %v2824 = vpop.f32.mrf.mxu0
        %v2825 = vadd.f32 0.0, %v2824
        %v2826 = vpop.f32.mrf.mxu0
        %v2827 = vadd.f32 0.0, %v2826
        %2828 = vmatmul.bf16.gmra.mxu0 %v2208
        %v2829 = vpop.f32.mrf.mxu0
        %v2830 = vadd.f32 0.0, %v2829
        %v2831 = vpop.f32.mrf.mxu0
        %v2832 = vadd.f32 0.0, %v2831
        %2833 = vmatmul.bf16.gmra.mxu0 %v2209
        %v2834 = vpop.f32.mrf.mxu0
        %v2835 = vadd.f32 0.0, %v2834
        %v2836 = vpop.f32.mrf.mxu0
        %v2837 = vadd.f32 0.0, %v2836
        %2838 = vmatmul.bf16.gmra.mxu0 %v2210
        %v2839 = vpop.f32.mrf.mxu0
        %v2840 = vadd.f32 0.0, %v2839
        %v2841 = vpop.f32.mrf.mxu0
        %v2842 = vadd.f32 0.0, %v2841
        %2843 = vmatmul.bf16.gmra.mxu0 %v2211
        %v2844 = vpop.f32.mrf.mxu0
        %v2845 = vadd.f32 0.0, %v2844
        %v2846 = vpop.f32.mrf.mxu0
        %v2847 = vadd.f32 0.0, %v2846
        %2848 = vmatmul.bf16.gmra.mxu0 %v2212
        %v2849 = vpop.f32.mrf.mxu0
        %v2850 = vadd.f32 0.0, %v2849
        %v2851 = vpop.f32.mrf.mxu0
        %v2852 = vadd.f32 0.0, %v2851
        %2853 = vmatmul.bf16.gmra.mxu0 %v2213
        %v2854 = vpop.f32.mrf.mxu0
        %v2855 = vadd.f32 0.0, %v2854
        %v2856 = vpop.f32.mrf.mxu0
        %v2857 = vadd.f32 0.0, %v2856
        %2858 = vmatmul.bf16.gmra.mxu0 %v2214
        %v2859 = vpop.f32.mrf.mxu0
        %v2860 = vadd.f32 0.0, %v2859
        %v2861 = vpop.f32.mrf.mxu0
        %v2862 = vadd.f32 0.0, %v2861
        %2863 = vmatmul.bf16.gmra.mxu0 %v2215
        %v2864 = vpop.f32.mrf.mxu0
        %v2865 = vadd.f32 0.0, %v2864
        %v2866 = vpop.f32.mrf.mxu0
        %v2867 = vadd.f32 0.0, %v2866
        %2868 = vmatmul.bf16.gmra.mxu0 %v2216
        %v2869 = vpop.f32.mrf.mxu0
        %v2870 = vadd.f32 0.0, %v2869
        %v2871 = vpop.f32.mrf.mxu0
        %v2872 = vadd.f32 0.0, %v2871
        %2873 = vmatmul.bf16.gmra.mxu0 %v2217
        %v2874 = vpop.f32.mrf.mxu0
        %v2875 = vadd.f32 0.0, %v2874
        %v2876 = vpop.f32.mrf.mxu0
        %v2877 = vadd.f32 0.0, %v2876
        %2878 = vmatmul.bf16.gmra.mxu0 %v2218
        %v2879 = vpop.f32.mrf.mxu0
        %v2880 = vadd.f32 0.0, %v2879
        %v2881 = vpop.f32.mrf.mxu0
        %v2882 = vadd.f32 0.0, %v2881
        %2883 = vmatmul.bf16.gmra.mxu0 %v2219
        %v2884 = vpop.f32.mrf.mxu0
        %v2885 = vadd.f32 0.0, %v2884
        %v2886 = vpop.f32.mrf.mxu0
        %v2887 = vadd.f32 0.0, %v2886
        %2888 = vmatmul.bf16.gmra.mxu0 %v2220
        %v2889 = vpop.f32.mrf.mxu0
        %v2890 = vadd.f32 0.0, %v2889
        %v2891 = vpop.f32.mrf.mxu0
        %v2892 = vadd.f32 0.0, %v2891
        %2893 = vmatmul.bf16.gmra.mxu0 %v2221
        %v2894 = vpop.f32.mrf.mxu0
        %v2895 = vadd.f32 0.0, %v2894
        %v2896 = vpop.f32.mrf.mxu0
        %v2897 = vadd.f32 0.0, %v2896
        %2898 = vmatmul.bf16.gmra.mxu0 %v2222
        %v2899 = vpop.f32.mrf.mxu0
        %v2900 = vadd.f32 0.0, %v2899
        %v2901 = vpop.f32.mrf.mxu0
        %v2902 = vadd.f32 0.0, %v2901
        %2903 = vmatmul.bf16.gmra.mxu0 %v2223
        %v2904 = vpop.f32.mrf.mxu0
        %v2905 = vadd.f32 0.0, %v2904
        %v2906 = vpop.f32.mrf.mxu0
        %v2907 = vadd.f32 0.0, %v2906
        %2908 = vmatmul.bf16.gmra.mxu0 %v2224
        %v2909 = vpop.f32.mrf.mxu0
        %v2910 = vadd.f32 0.0, %v2909
        %v2911 = vpop.f32.mrf.mxu0
        %v2912 = vadd.f32 0.0, %v2911
        %2913 = vmatmul.bf16.gmra.mxu0 %v2225
        %v2914 = vpop.f32.mrf.mxu0
        %v2915 = vadd.f32 0.0, %v2914
        %v2916 = vpop.f32.mrf.mxu0
        %v2917 = vadd.f32 0.0, %v2916
        %2918 = vmatmul.bf16.gmra.mxu0 %v2226
        %v2919 = vpop.f32.mrf.mxu0
        %v2920 = vadd.f32 0.0, %v2919
        %v2921 = vpop.f32.mrf.mxu0
        %v2922 = vadd.f32 0.0, %v2921
        %2923 = vmatmul.bf16.gmra.mxu0 %v2227
        %v2924 = vpop.f32.mrf.mxu0
        %v2925 = vadd.f32 0.0, %v2924
        %v2926 = vpop.f32.mrf.mxu0
        %v2927 = vadd.f32 0.0, %v2926
        %2928 = vmatmul.bf16.gmra.mxu0 %v2228
        %v2929 = vpop.f32.mrf.mxu0
        %v2930 = vadd.f32 0.0, %v2929
        %v2931 = vpop.f32.mrf.mxu0
        %v2932 = vadd.f32 0.0, %v2931
        %2933 = vmatmul.bf16.gmra.mxu0 %v2229
        %v2934 = vpop.f32.mrf.mxu0
        %v2935 = vadd.f32 0.0, %v2934
        %v2936 = vpop.f32.mrf.mxu0
        %v2937 = vadd.f32 0.0, %v2936
        %2938 = vmatmul.bf16.gmra.mxu0 %v2230
        %v2939 = vpop.f32.mrf.mxu0
        %v2940 = vadd.f32 0.0, %v2939
        %v2941 = vpop.f32.mrf.mxu0
        %v2942 = vadd.f32 0.0, %v2941
        %2943 = vmatmul.bf16.gmra.mxu0 %v2231
        %v2944 = vpop.f32.mrf.mxu0
        %v2945 = vadd.f32 0.0, %v2944
        %v2946 = vpop.f32.mrf.mxu0
        %v2947 = vadd.f32 0.0, %v2946
        %2948 = vmatmul.bf16.gmra.mxu0 %v2232
        %v2949 = vpop.f32.mrf.mxu0
        %v2950 = vadd.f32 0.0, %v2949
        %v2951 = vpop.f32.mrf.mxu0
        %v2952 = vadd.f32 0.0, %v2951
        %2953 = vmatmul.bf16.gmra.mxu0 %v2233
        %v2954 = vpop.f32.mrf.mxu0
        %v2955 = vadd.f32 0.0, %v2954
        %v2956 = vpop.f32.mrf.mxu0
        %v2957 = vadd.f32 0.0, %v2956
        %2958 = vmatmul.bf16.gmra.mxu0 %v2234
        %v2959 = vpop.f32.mrf.mxu0
        %v2960 = vadd.f32 0.0, %v2959
        %v2961 = vpop.f32.mrf.mxu0
        %v2962 = vadd.f32 0.0, %v2961
        %2963 = vmatmul.bf16.gmra.mxu0 %v2235
        %v2964 = vpop.f32.mrf.mxu0
        %v2965 = vadd.f32 0.0, %v2964
        %v2966 = vpop.f32.mrf.mxu0
        %v2967 = vadd.f32 0.0, %v2966
        %2968 = vmatmul.bf16.gmra.mxu0 %v2236
        %v2969 = vpop.f32.mrf.mxu0
        %v2970 = vadd.f32 0.0, %v2969
        %v2971 = vpop.f32.mrf.mxu0
        %v2972 = vadd.f32 0.0, %v2971
        %2973 = vmatmul.bf16.gmra.mxu0 %v2237
        %v2974 = vpop.f32.mrf.mxu0
        %v2975 = vadd.f32 0.0, %v2974
        %v2976 = vpop.f32.mrf.mxu0
        %v2977 = vadd.f32 0.0, %v2976
        %2978 = vmatmul.bf16.gmra.mxu0 %v2238
        %v2979 = vpop.f32.mrf.mxu0
        %v2980 = vadd.f32 0.0, %v2979
        %v2981 = vpop.f32.mrf.mxu0
        %v2982 = vadd.f32 0.0, %v2981
        %2983 = vmatmul.bf16.gmra.mxu0 %v2239
        %v2984 = vpop.f32.mrf.mxu0
        %v2985 = vadd.f32 0.0, %v2984
        %v2986 = vpop.f32.mrf.mxu0
        %v2987 = vadd.f32 0.0, %v2986
        %2988 = vmatmul.bf16.gmra.mxu0 %v2240
        %v2989 = vpop.f32.mrf.mxu0
        %v2990 = vadd.f32 0.0, %v2989
        %v2991 = vpop.f32.mrf.mxu0
        %v2992 = vadd.f32 0.0, %v2991
        %2993 = vmatmul.bf16.gmra.mxu0 %v2241
        %v2994 = vpop.f32.mrf.mxu0
        %v2995 = vadd.f32 0.0, %v2994
        %v2996 = vpop.f32.mrf.mxu0
        %v2997 = vadd.f32 0.0, %v2996
        %2998 = vmatmul.bf16.gmra.mxu0 %v2242
        %v2999 = vpop.f32.mrf.mxu0
        %v3000 = vadd.f32 0.0, %v2999
        %v3001 = vpop.f32.mrf.mxu0
        %v3002 = vadd.f32 0.0, %v3001
        %3003 = vmatmul.bf16.gmra.mxu0 %v2243
        %v3004 = vpop.f32.mrf.mxu0
        %v3005 = vadd.f32 0.0, %v3004
        %v3006 = vpop.f32.mrf.mxu0
        %v3007 = vadd.f32 0.0, %v3006
        %3008 = vmatmul.bf16.gmra.mxu0 %v2244
        %v3009 = vpop.f32.mrf.mxu0
        %v3010 = vadd.f32 0.0, %v3009
        %v3011 = vpop.f32.mrf.mxu0
        %v3012 = vadd.f32 0.0, %v3011
        %3013 = vmatmul.bf16.gmra.mxu0 %v2245
        %v3014 = vpop.f32.mrf.mxu0
        %v3015 = vadd.f32 0.0, %v3014
        %v3016 = vpop.f32.mrf.mxu0
        %v3017 = vadd.f32 0.0, %v3016
        %3018 = vmatmul.bf16.gmra.mxu0 %v2246
        %v3019 = vpop.f32.mrf.mxu0
        %v3020 = vadd.f32 0.0, %v3019
        %v3021 = vpop.f32.mrf.mxu0
        %v3022 = vadd.f32 0.0, %v3021
        %3023 = vmatmul.bf16.gmra.mxu0 %v2247
        %v3024 = vpop.f32.mrf.mxu0
        %v3025 = vadd.f32 0.0, %v3024
        %v3026 = vpop.f32.mrf.mxu0
        %v3027 = vadd.f32 0.0, %v3026
        %3028 = vmatmul.bf16.gmra.mxu0 %v2248
        %v3029 = vpop.f32.mrf.mxu0
        %v3030 = vadd.f32 0.0, %v3029
        %v3031 = vpop.f32.mrf.mxu0
        %v3032 = vadd.f32 0.0, %v3031
        %3033 = vmatmul.bf16.gmra.mxu0 %v2249
        %v3034 = vpop.f32.mrf.mxu0
        %v3035 = vadd.f32 0.0, %v3034
        %v3036 = vpop.f32.mrf.mxu0
        %v3037 = vadd.f32 0.0, %v3036
        %3038 = vmatmul.bf16.gmra.mxu0 %v2250
        %v3039 = vpop.f32.mrf.mxu0
        %v3040 = vadd.f32 0.0, %v3039
        %v3041 = vpop.f32.mrf.mxu0
        %v3042 = vadd.f32 0.0, %v3041
        %3043 = vmatmul.bf16.gmra.mxu0 %v2251
        %v3044 = vpop.f32.mrf.mxu0
        %v3045 = vadd.f32 0.0, %v3044
        %v3046 = vpop.f32.mrf.mxu0
        %v3047 = vadd.f32 0.0, %v3046
        %3048 = vmatmul.bf16.gmra.mxu0 %v2252
        %v3049 = vpop.f32.mrf.mxu0
        %v3050 = vadd.f32 0.0, %v3049
        %v3051 = vpop.f32.mrf.mxu0
        %v3052 = vadd.f32 0.0, %v3051
        %3053 = vmatmul.bf16.gmra.mxu0 %v2253
        %v3054 = vpop.f32.mrf.mxu0
        %v3055 = vadd.f32 0.0, %v3054
        %v3056 = vpop.f32.mrf.mxu0
        %v3057 = vadd.f32 0.0, %v3056
        %3058 = vmatmul.bf16.gmra.mxu0 %v2254
        %v3059 = vpop.f32.mrf.mxu0
        %v3060 = vadd.f32 0.0, %v3059
        %v3061 = vpop.f32.mrf.mxu0
        %v3062 = vadd.f32 0.0, %v3061
        %3063 = vmatmul.bf16.gmra.mxu0 %v2255
        %v3064 = vpop.f32.mrf.mxu0
        %v3065 = vadd.f32 0.0, %v3064
        %v3066 = vpop.f32.mrf.mxu0
        %v3067 = vadd.f32 0.0, %v3066
        %3068 = vmatmul.bf16.gmra.mxu0 %v2256
        %v3069 = vpop.f32.mrf.mxu0
        %v3070 = vadd.f32 0.0, %v3069
        %v3071 = vpop.f32.mrf.mxu0
        %3072 = vdwg.mxu0
        %3073 = vmatpush.bf16.msra.mxu0 %v2392
        %3074 = vmatpush.bf16.msra.mxu0 %v2389
        %3075 = vmatpush.bf16.msra.mxu0 %v2386
        %3076 = vmatpush.bf16.msra.mxu0 %v2383
        %3077 = vmatpush.bf16.msra.mxu0 %v2380
        %3078 = vmatpush.bf16.msra.mxu0 %v2377
        %3079 = vmatpush.bf16.msra.mxu0 %v2374
        %3080 = vmatpush.bf16.msra.mxu0 %v2371
        %3081 = vmatmul.bf16.gmra.mxu0 %v2193
        %v3082 = vpop.f32.mrf.mxu0
        %v3083 = vadd.f32 0.0, %v3082
        %v3084 = vpop.f32.mrf.mxu0
        %v3085 = vadd.f32 0.0, %v3084
        %3086 = vmatmul.bf16.gmra.mxu0 %v2194
        %v3087 = vpop.f32.mrf.mxu0
        %v3088 = vadd.f32 0.0, %v3087
        %v3089 = vpop.f32.mrf.mxu0
        %v3090 = vadd.f32 0.0, %v3089
        %3091 = vmatmul.bf16.gmra.mxu0 %v2195
        %v3092 = vpop.f32.mrf.mxu0
        %v3093 = vadd.f32 0.0, %v3092
        %v3094 = vpop.f32.mrf.mxu0
        %v3095 = vadd.f32 0.0, %v3094
        %3096 = vmatmul.bf16.gmra.mxu0 %v2196
        %v3097 = vpop.f32.mrf.mxu0
        %v3098 = vadd.f32 0.0, %v3097
        %v3099 = vpop.f32.mrf.mxu0
        %v3100 = vadd.f32 0.0, %v3099
        %3101 = vmatmul.bf16.gmra.mxu0 %v2197
        %v3102 = vpop.f32.mrf.mxu0
        %v3103 = vadd.f32 0.0, %v3102
        %v3104 = vpop.f32.mrf.mxu0
        %v3105 = vadd.f32 0.0, %v3104
        %3106 = vmatmul.bf16.gmra.mxu0 %v2198
        %v3107 = vpop.f32.mrf.mxu0
        %v3108 = vadd.f32 0.0, %v3107
        %v3109 = vpop.f32.mrf.mxu0
        %v3110 = vadd.f32 0.0, %v3109
        %3111 = vmatmul.bf16.gmra.mxu0 %v2199
        %v3112 = vpop.f32.mrf.mxu0
        %v3113 = vadd.f32 0.0, %v3112
        %v3114 = vpop.f32.mrf.mxu0
        %v3115 = vadd.f32 0.0, %v3114
        %3116 = vmatmul.bf16.gmra.mxu0 %v2200
        %v3117 = vpop.f32.mrf.mxu0
        %v3118 = vadd.f32 0.0, %v3117
        %v3119 = vpop.f32.mrf.mxu0
        %v3120 = vadd.f32 0.0, %v3119
        %3121 = vmatmul.bf16.gmra.mxu0 %v2201
        %v3122 = vpop.f32.mrf.mxu0
        %v3123 = vadd.f32 0.0, %v3122
        %v3124 = vpop.f32.mrf.mxu0
        %v3125 = vadd.f32 0.0, %v3124
        %3126 = vmatmul.bf16.gmra.mxu0 %v2202
        %v3127 = vpop.f32.mrf.mxu0
        %v3128 = vadd.f32 0.0, %v3127
        %v3129 = vpop.f32.mrf.mxu0
        %v3130 = vadd.f32 0.0, %v3129
        %3131 = vmatmul.bf16.gmra.mxu0 %v2203
        %v3132 = vpop.f32.mrf.mxu0
        %v3133 = vadd.f32 0.0, %v3132
        %v3134 = vpop.f32.mrf.mxu0
        %v3135 = vadd.f32 0.0, %v3134
        %3136 = vmatmul.bf16.gmra.mxu0 %v2204
        %v3137 = vpop.f32.mrf.mxu0
        %v3138 = vadd.f32 0.0, %v3137
        %v3139 = vpop.f32.mrf.mxu0
        %v3140 = vadd.f32 0.0, %v3139
        %3141 = vmatmul.bf16.gmra.mxu0 %v2205
        %v3142 = vpop.f32.mrf.mxu0
        %v3143 = vadd.f32 0.0, %v3142
        %v3144 = vpop.f32.mrf.mxu0
        %v3145 = vadd.f32 0.0, %v3144
        %3146 = vmatmul.bf16.gmra.mxu0 %v2206
        %v3147 = vpop.f32.mrf.mxu0
        %v3148 = vadd.f32 0.0, %v3147
        %v3149 = vpop.f32.mrf.mxu0
        %v3150 = vadd.f32 0.0, %v3149
        %3151 = vmatmul.bf16.gmra.mxu0 %v2207
        %v3152 = vpop.f32.mrf.mxu0
        %v3153 = vadd.f32 0.0, %v3152
        %v3154 = vpop.f32.mrf.mxu0
        %v3155 = vadd.f32 0.0, %v3154
        %3156 = vmatmul.bf16.gmra.mxu0 %v2208
        %v3157 = vpop.f32.mrf.mxu0
        %v3158 = vadd.f32 0.0, %v3157
        %v3159 = vpop.f32.mrf.mxu0
        %v3160 = vadd.f32 0.0, %v3159
        %3161 = vmatmul.bf16.gmra.mxu0 %v2209
        %v3162 = vpop.f32.mrf.mxu0
        %v3163 = vadd.f32 0.0, %v3162
        %v3164 = vpop.f32.mrf.mxu0
        %v3165 = vadd.f32 0.0, %v3164
        %3166 = vmatmul.bf16.gmra.mxu0 %v2210
        %v3167 = vpop.f32.mrf.mxu0
        %v3168 = vadd.f32 0.0, %v3167
        %v3169 = vpop.f32.mrf.mxu0
        %v3170 = vadd.f32 0.0, %v3169
        %3171 = vmatmul.bf16.gmra.mxu0 %v2211
        %v3172 = vpop.f32.mrf.mxu0
        %v3173 = vadd.f32 0.0, %v3172
        %v3174 = vpop.f32.mrf.mxu0
        %v3175 = vadd.f32 0.0, %v3174
        %3176 = vmatmul.bf16.gmra.mxu0 %v2212
        %v3177 = vpop.f32.mrf.mxu0
        %v3178 = vadd.f32 0.0, %v3177
        %v3179 = vpop.f32.mrf.mxu0
        %v3180 = vadd.f32 0.0, %v3179
        %3181 = vmatmul.bf16.gmra.mxu0 %v2213
        %v3182 = vpop.f32.mrf.mxu0
        %v3183 = vadd.f32 0.0, %v3182
        %v3184 = vpop.f32.mrf.mxu0
        %v3185 = vadd.f32 0.0, %v3184
        %3186 = vmatmul.bf16.gmra.mxu0 %v2214
        %v3187 = vpop.f32.mrf.mxu0
        %v3188 = vadd.f32 0.0, %v3187
        %v3189 = vpop.f32.mrf.mxu0
        %v3190 = vadd.f32 0.0, %v3189
        %3191 = vmatmul.bf16.gmra.mxu0 %v2215
        %v3192 = vpop.f32.mrf.mxu0
        %v3193 = vadd.f32 0.0, %v3192
        %v3194 = vpop.f32.mrf.mxu0
        %v3195 = vadd.f32 0.0, %v3194
        %3196 = vmatmul.bf16.gmra.mxu0 %v2216
        %v3197 = vpop.f32.mrf.mxu0
        %v3198 = vadd.f32 0.0, %v3197
        %v3199 = vpop.f32.mrf.mxu0
        %v3200 = vadd.f32 0.0, %v3199
        %3201 = vmatmul.bf16.gmra.mxu0 %v2217
        %v3202 = vpop.f32.mrf.mxu0
        %v3203 = vadd.f32 0.0, %v3202
        %v3204 = vpop.f32.mrf.mxu0
        %v3205 = vadd.f32 0.0, %v3204
        %3206 = vmatmul.bf16.gmra.mxu0 %v2218
        %v3207 = vpop.f32.mrf.mxu0
        %v3208 = vadd.f32 0.0, %v3207
        %v3209 = vpop.f32.mrf.mxu0
        %v3210 = vadd.f32 0.0, %v3209
        %3211 = vmatmul.bf16.gmra.mxu0 %v2219
        %v3212 = vpop.f32.mrf.mxu0
        %v3213 = vadd.f32 0.0, %v3212
        %v3214 = vpop.f32.mrf.mxu0
        %v3215 = vadd.f32 0.0, %v3214
        %3216 = vmatmul.bf16.gmra.mxu0 %v2220
        %v3217 = vpop.f32.mrf.mxu0
        %v3218 = vadd.f32 0.0, %v3217
        %v3219 = vpop.f32.mrf.mxu0
        %v3220 = vadd.f32 0.0, %v3219
        %3221 = vmatmul.bf16.gmra.mxu0 %v2221
        %v3222 = vpop.f32.mrf.mxu0
        %v3223 = vadd.f32 0.0, %v3222
        %v3224 = vpop.f32.mrf.mxu0
        %v3225 = vadd.f32 0.0, %v3224
        %3226 = vmatmul.bf16.gmra.mxu0 %v2222
        %v3227 = vpop.f32.mrf.mxu0
        %v3228 = vadd.f32 0.0, %v3227
        %v3229 = vpop.f32.mrf.mxu0
        %v3230 = vadd.f32 0.0, %v3229
        %3231 = vmatmul.bf16.gmra.mxu0 %v2223
        %v3232 = vpop.f32.mrf.mxu0
        %v3233 = vadd.f32 0.0, %v3232
        %v3234 = vpop.f32.mrf.mxu0
        %v3235 = vadd.f32 0.0, %v3234
        %3236 = vmatmul.bf16.gmra.mxu0 %v2224
        %v3237 = vpop.f32.mrf.mxu0
        %v3238 = vadd.f32 0.0, %v3237
        %v3239 = vpop.f32.mrf.mxu0
        %v3240 = vadd.f32 0.0, %v3239
        %3241 = vmatmul.bf16.gmra.mxu0 %v2225
        %v3242 = vpop.f32.mrf.mxu0
        %v3243 = vadd.f32 0.0, %v3242
        %v3244 = vpop.f32.mrf.mxu0
        %v3245 = vadd.f32 0.0, %v3244
        %3246 = vmatmul.bf16.gmra.mxu0 %v2226
        %v3247 = vpop.f32.mrf.mxu0
        %v3248 = vadd.f32 0.0, %v3247
        %v3249 = vpop.f32.mrf.mxu0
        %v3250 = vadd.f32 0.0, %v3249
        %3251 = vmatmul.bf16.gmra.mxu0 %v2227
        %v3252 = vpop.f32.mrf.mxu0
        %v3253 = vadd.f32 0.0, %v3252
        %v3254 = vpop.f32.mrf.mxu0
        %v3255 = vadd.f32 0.0, %v3254
        %3256 = vmatmul.bf16.gmra.mxu0 %v2228
        %v3257 = vpop.f32.mrf.mxu0
        %v3258 = vadd.f32 0.0, %v3257
        %v3259 = vpop.f32.mrf.mxu0
        %v3260 = vadd.f32 0.0, %v3259
        %3261 = vmatmul.bf16.gmra.mxu0 %v2229
        %v3262 = vpop.f32.mrf.mxu0
        %v3263 = vadd.f32 0.0, %v3262
        %v3264 = vpop.f32.mrf.mxu0
        %v3265 = vadd.f32 0.0, %v3264
        %3266 = vmatmul.bf16.gmra.mxu0 %v2230
        %v3267 = vpop.f32.mrf.mxu0
        %v3268 = vadd.f32 0.0, %v3267
        %v3269 = vpop.f32.mrf.mxu0
        %v3270 = vadd.f32 0.0, %v3269
        %3271 = vmatmul.bf16.gmra.mxu0 %v2231
        %v3272 = vpop.f32.mrf.mxu0
        %v3273 = vadd.f32 0.0, %v3272
        %v3274 = vpop.f32.mrf.mxu0
        %v3275 = vadd.f32 0.0, %v3274
        %3276 = vmatmul.bf16.gmra.mxu0 %v2232
        %v3277 = vpop.f32.mrf.mxu0
        %v3278 = vadd.f32 0.0, %v3277
        %v3279 = vpop.f32.mrf.mxu0
        %v3280 = vadd.f32 0.0, %v3279
        %3281 = vmatmul.bf16.gmra.mxu0 %v2233
        %v3282 = vpop.f32.mrf.mxu0
        %v3283 = vadd.f32 0.0, %v3282
        %v3284 = vpop.f32.mrf.mxu0
        %v3285 = vadd.f32 0.0, %v3284
        %3286 = vmatmul.bf16.gmra.mxu0 %v2234
        %v3287 = vpop.f32.mrf.mxu0
        %v3288 = vadd.f32 0.0, %v3287
        %v3289 = vpop.f32.mrf.mxu0
        %v3290 = vadd.f32 0.0, %v3289
        %3291 = vmatmul.bf16.gmra.mxu0 %v2235
        %v3292 = vpop.f32.mrf.mxu0
        %v3293 = vadd.f32 0.0, %v3292
        %v3294 = vpop.f32.mrf.mxu0
        %v3295 = vadd.f32 0.0, %v3294
        %3296 = vmatmul.bf16.gmra.mxu0 %v2236
        %v3297 = vpop.f32.mrf.mxu0
        %v3298 = vadd.f32 0.0, %v3297
        %v3299 = vpop.f32.mrf.mxu0
        %v3300 = vadd.f32 0.0, %v3299
        %3301 = vmatmul.bf16.gmra.mxu0 %v2237
        %v3302 = vpop.f32.mrf.mxu0
        %v3303 = vadd.f32 0.0, %v3302
        %v3304 = vpop.f32.mrf.mxu0
        %v3305 = vadd.f32 0.0, %v3304
        %3306 = vmatmul.bf16.gmra.mxu0 %v2238
        %v3307 = vpop.f32.mrf.mxu0
        %v3308 = vadd.f32 0.0, %v3307
        %v3309 = vpop.f32.mrf.mxu0
        %v3310 = vadd.f32 0.0, %v3309
        %3311 = vmatmul.bf16.gmra.mxu0 %v2239
        %v3312 = vpop.f32.mrf.mxu0
        %v3313 = vadd.f32 0.0, %v3312
        %v3314 = vpop.f32.mrf.mxu0
        %v3315 = vadd.f32 0.0, %v3314
        %3316 = vmatmul.bf16.gmra.mxu0 %v2240
        %v3317 = vpop.f32.mrf.mxu0
        %v3318 = vadd.f32 0.0, %v3317
        %v3319 = vpop.f32.mrf.mxu0
        %v3320 = vadd.f32 0.0, %v3319
        %3321 = vmatmul.bf16.gmra.mxu0 %v2241
        %v3322 = vpop.f32.mrf.mxu0
        %v3323 = vadd.f32 0.0, %v3322
        %v3324 = vpop.f32.mrf.mxu0
        %v3325 = vadd.f32 0.0, %v3324
        %3326 = vmatmul.bf16.gmra.mxu0 %v2242
        %v3327 = vpop.f32.mrf.mxu0
        %v3328 = vadd.f32 0.0, %v3327
        %v3329 = vpop.f32.mrf.mxu0
        %v3330 = vadd.f32 0.0, %v3329
        %3331 = vmatmul.bf16.gmra.mxu0 %v2243
        %v3332 = vpop.f32.mrf.mxu0
        %v3333 = vadd.f32 0.0, %v3332
        %v3334 = vpop.f32.mrf.mxu0
        %v3335 = vadd.f32 0.0, %v3334
        %3336 = vmatmul.bf16.gmra.mxu0 %v2244
        %v3337 = vpop.f32.mrf.mxu0
        %v3338 = vadd.f32 0.0, %v3337
        %v3339 = vpop.f32.mrf.mxu0
        %v3340 = vadd.f32 0.0, %v3339
        %3341 = vmatmul.bf16.gmra.mxu0 %v2245
        %v3342 = vpop.f32.mrf.mxu0
        %v3343 = vadd.f32 0.0, %v3342
        %v3344 = vpop.f32.mrf.mxu0
        %v3345 = vadd.f32 0.0, %v3344
        %3346 = vmatmul.bf16.gmra.mxu0 %v2246
        %v3347 = vpop.f32.mrf.mxu0
        %v3348 = vadd.f32 0.0, %v3347
        %v3349 = vpop.f32.mrf.mxu0
        %v3350 = vadd.f32 0.0, %v3349
        %3351 = vmatmul.bf16.gmra.mxu0 %v2247
        %v3352 = vpop.f32.mrf.mxu0
        %v3353 = vadd.f32 0.0, %v3352
        %v3354 = vpop.f32.mrf.mxu0
        %v3355 = vadd.f32 0.0, %v3354
        %3356 = vmatmul.bf16.gmra.mxu0 %v2248
        %v3357 = vpop.f32.mrf.mxu0
        %v3358 = vadd.f32 0.0, %v3357
        %v3359 = vpop.f32.mrf.mxu0
        %v3360 = vadd.f32 0.0, %v3359
        %3361 = vmatmul.bf16.gmra.mxu0 %v2249
        %v3362 = vpop.f32.mrf.mxu0
        %v3363 = vadd.f32 0.0, %v3362
        %v3364 = vpop.f32.mrf.mxu0
        %v3365 = vadd.f32 0.0, %v3364
        %3366 = vmatmul.bf16.gmra.mxu0 %v2250
        %v3367 = vpop.f32.mrf.mxu0
        %v3368 = vadd.f32 0.0, %v3367
        %v3369 = vpop.f32.mrf.mxu0
        %v3370 = vadd.f32 0.0, %v3369
        %3371 = vmatmul.bf16.gmra.mxu0 %v2251
        %v3372 = vpop.f32.mrf.mxu0
        %v3373 = vadd.f32 0.0, %v3372
        %v3374 = vpop.f32.mrf.mxu0
        %v3375 = vadd.f32 0.0, %v3374
        %3376 = vmatmul.bf16.gmra.mxu0 %v2252
        %v3377 = vpop.f32.mrf.mxu0
        %v3378 = vadd.f32 0.0, %v3377
        %v3379 = vpop.f32.mrf.mxu0
        %v3380 = vadd.f32 0.0, %v3379
        %3381 = vmatmul.bf16.gmra.mxu0 %v2253
        %v3382 = vpop.f32.mrf.mxu0
        %v3383 = vadd.f32 0.0, %v3382
        %v3384 = vpop.f32.mrf.mxu0
        %v3385 = vadd.f32 0.0, %v3384
        %3386 = vmatmul.bf16.gmra.mxu0 %v2254
        %v3387 = vpop.f32.mrf.mxu0
        %v3388 = vadd.f32 0.0, %v3387
        %v3389 = vpop.f32.mrf.mxu0
        %v3390 = vadd.f32 0.0, %v3389
        %3391 = vmatmul.bf16.gmra.mxu0 %v2255
        %v3392 = vpop.f32.mrf.mxu0
        %v3393 = vadd.f32 0.0, %v3392
        %v3394 = vpop.f32.mrf.mxu0
        %v3395 = vadd.f32 0.0, %v3394
        %3396 = vmatmul.bf16.gmra.mxu0 %v2256
        %v3397 = vpop.f32.mrf.mxu0
        %v3398 = vadd.f32 0.0, %v3397
        %v3399 = vpop.f32.mrf.mxu0
        %3400 = vdwg.mxu0
        %v3401 = vpack.c.bf16 %v2755, %v2427
        %v3402 = vpack.c.bf16 %v3083, %v3083
        %v3403 = vpack.c.bf16 %v2757, %v2429
        %v3404 = vpack.c.bf16 %v3085, %v3085
        %v3405 = vpack.c.bf16 %v2760, %v2432
        %v3406 = vpack.c.bf16 %v3088, %v3088
        %v3407 = vpack.c.bf16 %v2762, %v2434
        %v3408 = vpack.c.bf16 %v3090, %v3090
        %v3409 = vpack.c.bf16 %v2765, %v2437
        %v3410 = vpack.c.bf16 %v3093, %v3093
        %v3411 = vpack.c.bf16 %v2767, %v2439
        %v3412 = vpack.c.bf16 %v3095, %v3095
        %v3413 = vpack.c.bf16 %v2770, %v2442
        %v3414 = vpack.c.bf16 %v3098, %v3098
        %v3415 = vpack.c.bf16 %v2772, %v2444
        %v3416 = vpack.c.bf16 %v3100, %v3100
        %v3417 = vpack.c.bf16 %v2775, %v2447
        %v3418 = vpack.c.bf16 %v3103, %v3103
        %v3419 = vpack.c.bf16 %v2777, %v2449
        %v3420 = vpack.c.bf16 %v3105, %v3105
        %v3421 = vpack.c.bf16 %v2780, %v2452
        %v3422 = vpack.c.bf16 %v3108, %v3108
        %v3423 = vpack.c.bf16 %v2782, %v2454
        %v3424 = vpack.c.bf16 %v3110, %v3110
        %v3425 = vpack.c.bf16 %v2785, %v2457
        %v3426 = vpack.c.bf16 %v3113, %v3113
        %v3427 = vpack.c.bf16 %v2787, %v2459
        %v3428 = vpack.c.bf16 %v3115, %v3115
        %v3429 = vpack.c.bf16 %v2790, %v2462
        %v3430 = vpack.c.bf16 %v3118, %v3118
        %v3431 = vpack.c.bf16 %v2792, %v2464
        %v3432 = vpack.c.bf16 %v3120, %v3120
        %v3433 = vpack.c.bf16 %v2795, %v2467
        %v3434 = vpack.c.bf16 %v3123, %v3123
        %v3435 = vpack.c.bf16 %v2797, %v2469
        %v3436 = vpack.c.bf16 %v3125, %v3125
        %v3437 = vpack.c.bf16 %v2800, %v2472
        %v3438 = vpack.c.bf16 %v3128, %v3128
        %v3439 = vpack.c.bf16 %v2802, %v2474
        %v3440 = vpack.c.bf16 %v3130, %v3130
        %v3441 = vpack.c.bf16 %v2805, %v2477
        %v3442 = vpack.c.bf16 %v3133, %v3133
        %v3443 = vpack.c.bf16 %v2807, %v2479
        %v3444 = vpack.c.bf16 %v3135, %v3135
        %v3445 = vpack.c.bf16 %v2810, %v2482
        %v3446 = vpack.c.bf16 %v3138, %v3138
        %v3447 = vpack.c.bf16 %v2812, %v2484
        %v3448 = vpack.c.bf16 %v3140, %v3140
        %v3449 = vpack.c.bf16 %v2815, %v2487
        %v3450 = vpack.c.bf16 %v3143, %v3143
        %v3451 = vpack.c.bf16 %v2817, %v2489
        %v3452 = vpack.c.bf16 %v3145, %v3145
        %v3453 = vpack.c.bf16 %v2820, %v2492
        %v3454 = vpack.c.bf16 %v3148, %v3148
        %v3455 = vpack.c.bf16 %v2822, %v2494
        %v3456 = vpack.c.bf16 %v3150, %v3150
        %v3457 = vpack.c.bf16 %v2825, %v2497
        %v3458 = vpack.c.bf16 %v3153, %v3153
        %v3459 = vpack.c.bf16 %v2827, %v2499
        %v3460 = vpack.c.bf16 %v3155, %v3155
        %v3461 = vpack.c.bf16 %v2830, %v2502
        %v3462 = vpack.c.bf16 %v3158, %v3158
        %v3463 = vpack.c.bf16 %v2832, %v2504
        %v3464 = vpack.c.bf16 %v3160, %v3160
        %v3465 = vpack.c.bf16 %v2835, %v2507
        %v3466 = vpack.c.bf16 %v3163, %v3163
        %v3467 = vpack.c.bf16 %v2837, %v2509
        %v3468 = vpack.c.bf16 %v3165, %v3165
        %v3469 = vpack.c.bf16 %v2840, %v2512
        %v3470 = vpack.c.bf16 %v3168, %v3168
        %v3471 = vpack.c.bf16 %v2842, %v2514
        %v3472 = vpack.c.bf16 %v3170, %v3170
        %v3473 = vpack.c.bf16 %v2845, %v2517
        %v3474 = vpack.c.bf16 %v3173, %v3173
        %v3475 = vpack.c.bf16 %v2847, %v2519
        %v3476 = vpack.c.bf16 %v3175, %v3175
        %v3477 = vpack.c.bf16 %v2850, %v2522
        %v3478 = vpack.c.bf16 %v3178, %v3178
        %v3479 = vpack.c.bf16 %v2852, %v2524
        %v3480 = vpack.c.bf16 %v3180, %v3180
        %v3481 = vpack.c.bf16 %v2855, %v2527
        %v3482 = vpack.c.bf16 %v3183, %v3183
        %v3483 = vpack.c.bf16 %v2857, %v2529
        %v3484 = vpack.c.bf16 %v3185, %v3185
        %v3485 = vpack.c.bf16 %v2860, %v2532
        %v3486 = vpack.c.bf16 %v3188, %v3188
        %v3487 = vpack.c.bf16 %v2862, %v2534
        %v3488 = vpack.c.bf16 %v3190, %v3190
        %v3489 = vpack.c.bf16 %v2865, %v2537
        %v3490 = vpack.c.bf16 %v3193, %v3193
        %v3491 = vpack.c.bf16 %v2867, %v2539
        %v3492 = vpack.c.bf16 %v3195, %v3195
        %v3493 = vpack.c.bf16 %v2870, %v2542
        %v3494 = vpack.c.bf16 %v3198, %v3198
        %v3495 = vpack.c.bf16 %v2872, %v2544
        %v3496 = vpack.c.bf16 %v3200, %v3200
        %v3497 = vpack.c.bf16 %v2875, %v2547
        %v3498 = vpack.c.bf16 %v3203, %v3203
        %v3499 = vpack.c.bf16 %v2877, %v2549
        %v3500 = vpack.c.bf16 %v3205, %v3205
        %v3501 = vpack.c.bf16 %v2880, %v2552
        %v3502 = vpack.c.bf16 %v3208, %v3208
        %v3503 = vpack.c.bf16 %v2882, %v2554
        %v3504 = vpack.c.bf16 %v3210, %v3210
        %v3505 = vpack.c.bf16 %v2885, %v2557
        %v3506 = vpack.c.bf16 %v3213, %v3213
        %v3507 = vpack.c.bf16 %v2887, %v2559
        %v3508 = vpack.c.bf16 %v3215, %v3215
        %v3509 = vpack.c.bf16 %v2890, %v2562
        %v3510 = vpack.c.bf16 %v3218, %v3218
        %v3511 = vpack.c.bf16 %v2892, %v2564
        %v3512 = vpack.c.bf16 %v3220, %v3220
        %v3513 = vpack.c.bf16 %v2895, %v2567
        %v3514 = vpack.c.bf16 %v3223, %v3223
        %v3515 = vpack.c.bf16 %v2897, %v2569
        %v3516 = vpack.c.bf16 %v3225, %v3225
        %v3517 = vpack.c.bf16 %v2900, %v2572
        %v3518 = vpack.c.bf16 %v3228, %v3228
        %v3519 = vpack.c.bf16 %v2902, %v2574
        %v3520 = vpack.c.bf16 %v3230, %v3230
        %v3521 = vpack.c.bf16 %v2905, %v2577
        %v3522 = vpack.c.bf16 %v3233, %v3233
        %v3523 = vpack.c.bf16 %v2907, %v2579
        %v3524 = vpack.c.bf16 %v3235, %v3235
        %v3525 = vpack.c.bf16 %v2910, %v2582
        %v3526 = vpack.c.bf16 %v3238, %v3238
        %v3527 = vpack.c.bf16 %v2912, %v2584
        %v3528 = vpack.c.bf16 %v3240, %v3240
        %v3529 = vpack.c.bf16 %v2915, %v2587
        %v3530 = vpack.c.bf16 %v3243, %v3243
        %v3531 = vpack.c.bf16 %v2917, %v2589
        %v3532 = vpack.c.bf16 %v3245, %v3245
        %v3533 = vpack.c.bf16 %v2920, %v2592
        %v3534 = vpack.c.bf16 %v3248, %v3248
        %v3535 = vpack.c.bf16 %v2922, %v2594
        %v3536 = vpack.c.bf16 %v3250, %v3250
        %v3537 = vpack.c.bf16 %v2925, %v2597
        %v3538 = vpack.c.bf16 %v3253, %v3253
        %v3539 = vpack.c.bf16 %v2927, %v2599
        %v3540 = vpack.c.bf16 %v3255, %v3255
        %v3541 = vpack.c.bf16 %v2930, %v2602
        %v3542 = vpack.c.bf16 %v3258, %v3258
        %v3543 = vpack.c.bf16 %v2932, %v2604
        %v3544 = vpack.c.bf16 %v3260, %v3260
        %v3545 = vpack.c.bf16 %v2935, %v2607
        %v3546 = vpack.c.bf16 %v3263, %v3263
        %v3547 = vpack.c.bf16 %v2937, %v2609
        %v3548 = vpack.c.bf16 %v3265, %v3265
        %v3549 = vpack.c.bf16 %v2940, %v2612
        %v3550 = vpack.c.bf16 %v3268, %v3268
        %v3551 = vpack.c.bf16 %v2942, %v2614
        %v3552 = vpack.c.bf16 %v3270, %v3270
        %v3553 = vpack.c.bf16 %v2945, %v2617
        %v3554 = vpack.c.bf16 %v3273, %v3273
        %v3555 = vpack.c.bf16 %v2947, %v2619
        %v3556 = vpack.c.bf16 %v3275, %v3275
        %v3557 = vpack.c.bf16 %v2950, %v2622
        %v3558 = vpack.c.bf16 %v3278, %v3278
        %v3559 = vpack.c.bf16 %v2952, %v2624
        %v3560 = vpack.c.bf16 %v3280, %v3280
        %v3561 = vpack.c.bf16 %v2955, %v2627
        %v3562 = vpack.c.bf16 %v3283, %v3283
        %v3563 = vpack.c.bf16 %v2957, %v2629
        %v3564 = vpack.c.bf16 %v3285, %v3285
        %v3565 = vpack.c.bf16 %v2960, %v2632
        %v3566 = vpack.c.bf16 %v3288, %v3288
        %v3567 = vpack.c.bf16 %v2962, %v2634
        %v3568 = vpack.c.bf16 %v3290, %v3290
        %v3569 = vpack.c.bf16 %v2965, %v2637
        %v3570 = vpack.c.bf16 %v3293, %v3293
        %v3571 = vpack.c.bf16 %v2967, %v2639
        %v3572 = vpack.c.bf16 %v3295, %v3295
        %v3573 = vpack.c.bf16 %v2970, %v2642
        %v3574 = vpack.c.bf16 %v3298, %v3298
        %v3575 = vpack.c.bf16 %v2972, %v2644
        %v3576 = vpack.c.bf16 %v3300, %v3300
        %v3577 = vpack.c.bf16 %v2975, %v2647
        %v3578 = vpack.c.bf16 %v3303, %v3303
        %v3579 = vpack.c.bf16 %v2977, %v2649
        %v3580 = vpack.c.bf16 %v3305, %v3305
        %v3581 = vpack.c.bf16 %v2980, %v2652
        %v3582 = vpack.c.bf16 %v3308, %v3308
        %v3583 = vpack.c.bf16 %v2982, %v2654
        %v3584 = vpack.c.bf16 %v3310, %v3310
        %v3585 = vpack.c.bf16 %v2985, %v2657
        %v3586 = vpack.c.bf16 %v3313, %v3313
        %v3587 = vpack.c.bf16 %v2987, %v2659
        %v3588 = vpack.c.bf16 %v3315, %v3315
        %v3589 = vpack.c.bf16 %v2990, %v2662
        %v3590 = vpack.c.bf16 %v3318, %v3318
        %v3591 = vpack.c.bf16 %v2992, %v2664
        %v3592 = vpack.c.bf16 %v3320, %v3320
        %v3593 = vpack.c.bf16 %v2995, %v2667
        %v3594 = vpack.c.bf16 %v3323, %v3323
        %v3595 = vpack.c.bf16 %v2997, %v2669
        %v3596 = vpack.c.bf16 %v3325, %v3325
        %v3597 = vpack.c.bf16 %v3000, %v2672
        %v3598 = vpack.c.bf16 %v3328, %v3328
        %v3599 = vpack.c.bf16 %v3002, %v2674
        %v3600 = vpack.c.bf16 %v3330, %v3330
        %v3601 = vpack.c.bf16 %v3005, %v2677
        %v3602 = vpack.c.bf16 %v3333, %v3333
        %v3603 = vpack.c.bf16 %v3007, %v2679
        %v3604 = vpack.c.bf16 %v3335, %v3335
        %v3605 = vpack.c.bf16 %v3010, %v2682
        %v3606 = vpack.c.bf16 %v3338, %v3338
        %v3607 = vpack.c.bf16 %v3012, %v2684
        %v3608 = vpack.c.bf16 %v3340, %v3340
        %v3609 = vpack.c.bf16 %v3015, %v2687
        %v3610 = vpack.c.bf16 %v3343, %v3343
        %v3611 = vpack.c.bf16 %v3017, %v2689
        %v3612 = vpack.c.bf16 %v3345, %v3345
        %v3613 = vpack.c.bf16 %v3020, %v2692
        %v3614 = vpack.c.bf16 %v3348, %v3348
        %v3615 = vpack.c.bf16 %v3022, %v2694
        %v3616 = vpack.c.bf16 %v3350, %v3350
        %v3617 = vpack.c.bf16 %v3025, %v2697
        %v3618 = vpack.c.bf16 %v3353, %v3353
        %v3619 = vpack.c.bf16 %v3027, %v2699
        %v3620 = vpack.c.bf16 %v3355, %v3355
        %v3621 = vpack.c.bf16 %v3030, %v2702
        %v3622 = vpack.c.bf16 %v3358, %v3358
        %v3623 = vpack.c.bf16 %v3032, %v2704
        %v3624 = vpack.c.bf16 %v3360, %v3360
        %v3625 = vpack.c.bf16 %v3035, %v2707
        %v3626 = vpack.c.bf16 %v3363, %v3363
        %v3627 = vpack.c.bf16 %v3037, %v2709
        %v3628 = vpack.c.bf16 %v3365, %v3365
        %v3629 = vpack.c.bf16 %v3040, %v2712
        %v3630 = vpack.c.bf16 %v3368, %v3368
        %v3631 = vpack.c.bf16 %v3042, %v2714
        %v3632 = vpack.c.bf16 %v3370, %v3370
        %v3633 = vpack.c.bf16 %v3045, %v2717
        %v3634 = vpack.c.bf16 %v3373, %v3373
        %v3635 = vpack.c.bf16 %v3047, %v2719
        %v3636 = vpack.c.bf16 %v3375, %v3375
        %v3637 = vpack.c.bf16 %v3050, %v2722
        %v3638 = vpack.c.bf16 %v3378, %v3378
        %v3639 = vpack.c.bf16 %v3052, %v2724
        %v3640 = vpack.c.bf16 %v3380, %v3380
        %v3641 = vpack.c.bf16 %v3055, %v2727
        %v3642 = vpack.c.bf16 %v3383, %v3383
        %v3643 = vpack.c.bf16 %v3057, %v2729
        %v3644 = vpack.c.bf16 %v3385, %v3385
        %v3645 = vpack.c.bf16 %v3060, %v2732
        %v3646 = vpack.c.bf16 %v3388, %v3388
        %v3647 = vpack.c.bf16 %v3062, %v2734
        %v3648 = vpack.c.bf16 %v3390, %v3390
        %v3649 = vpack.c.bf16 %v3065, %v2737
        %v3650 = vpack.c.bf16 %v3393, %v3393
        %v3651 = vpack.c.bf16 %v3067, %v2739
        %v3652 = vpack.c.bf16 %v3395, %v3395
        %v3653 = vpack.c.bf16 %v3070, %v2742
        %v3654 = vpack.c.bf16 %v3398, %v3398
        %v3655 = vld [vmem:[%s4] sm:$0x7]
        %v3657 = vperm.slane %v3655, 0
        %v3658 = vperm.slane %v3655, 1
        %v3659 = vperm.slane %v3655, 2
        %v3663 = vpack.c.bf16 %v3658, %v3657
        %v3664 = vpack.c.bf16 %v3659, %v3659
        %v3667 = vunpack.c.l.b16 %v3663
        %v3668 = vunpack.c.h.b16 %v3663
        %v3669 = vunpack.c.l.b16 %v3664
        %v3670 = vpack.c.b16 %v3667, %v3667
        %v3671 = vpack.c.b16 %v3668, %v3668
        %v3672 = vpack.c.b16 %v3669, %v3669
        %v3674 = vpack.i.b16 %v3670, %v3670
        %v3676 = vperm.slane %v3674, 0
        %v3678 = vpack.i.b16 %v3671, %v3671
        %v3680 = vperm.slane %v3678, 0
        %v3682 = vpack.i.b16 %v3672, %v3672
        %v3684 = vperm.slane %v3682, 0
        %v3685 = vunpack.c.l.bf16 %v3401
        %v3686 = vunpack.c.h.bf16 %v3401
        %v3687 = vunpack.c.l.bf16 %v3402
        %v3688 = vunpack.c.l.bf16 %v3403
        %v3689 = vunpack.c.h.bf16 %v3403
        %v3690 = vunpack.c.l.bf16 %v3404
        %v3691 = vunpack.c.l.bf16 %v3405
        %v3692 = vunpack.c.h.bf16 %v3405
        %v3693 = vunpack.c.l.bf16 %v3406
        %v3694 = vunpack.c.l.bf16 %v3407
        %v3695 = vunpack.c.h.bf16 %v3407
        %v3696 = vunpack.c.l.bf16 %v3408
        %v3697 = vunpack.c.l.bf16 %v3409
        %v3698 = vunpack.c.h.bf16 %v3409
        %v3699 = vunpack.c.l.bf16 %v3410
        %v3700 = vunpack.c.l.bf16 %v3411
        %v3701 = vunpack.c.h.bf16 %v3411
        %v3702 = vunpack.c.l.bf16 %v3412
        %v3703 = vunpack.c.l.bf16 %v3413
        %v3704 = vunpack.c.h.bf16 %v3413
        %v3705 = vunpack.c.l.bf16 %v3414
        %v3706 = vunpack.c.l.bf16 %v3415
        %v3707 = vunpack.c.h.bf16 %v3415
        %v3708 = vunpack.c.l.bf16 %v3416
        %v3709 = vunpack.c.l.bf16 %v3417
        %v3710 = vunpack.c.h.bf16 %v3417
        %v3711 = vunpack.c.l.bf16 %v3418
        %v3712 = vunpack.c.l.bf16 %v3419
        %v3713 = vunpack.c.h.bf16 %v3419
        %v3714 = vunpack.c.l.bf16 %v3420
        %v3715 = vunpack.c.l.bf16 %v3421
        %v3716 = vunpack.c.h.bf16 %v3421
        %v3717 = vunpack.c.l.bf16 %v3422
        %v3718 = vunpack.c.l.bf16 %v3423
        %v3719 = vunpack.c.h.bf16 %v3423
        %v3720 = vunpack.c.l.bf16 %v3424
        %v3721 = vunpack.c.l.bf16 %v3425
        %v3722 = vunpack.c.h.bf16 %v3425
        %v3723 = vunpack.c.l.bf16 %v3426
        %v3724 = vunpack.c.l.bf16 %v3427
        %v3725 = vunpack.c.h.bf16 %v3427
        %v3726 = vunpack.c.l.bf16 %v3428
        %v3727 = vunpack.c.l.bf16 %v3429
        %v3728 = vunpack.c.h.bf16 %v3429
        %v3729 = vunpack.c.l.bf16 %v3430
        %v3730 = vunpack.c.l.bf16 %v3431
        %v3731 = vunpack.c.h.bf16 %v3431
        %v3732 = vunpack.c.l.bf16 %v3432
        %v3733 = vunpack.c.l.bf16 %v3433
        %v3734 = vunpack.c.h.bf16 %v3433
        %v3735 = vunpack.c.l.bf16 %v3434
        %v3736 = vunpack.c.l.bf16 %v3435
        %v3737 = vunpack.c.h.bf16 %v3435
        %v3738 = vunpack.c.l.bf16 %v3436
        %v3739 = vunpack.c.l.bf16 %v3437
        %v3740 = vunpack.c.h.bf16 %v3437
        %v3741 = vunpack.c.l.bf16 %v3438
        %v3742 = vunpack.c.l.bf16 %v3439
        %v3743 = vunpack.c.h.bf16 %v3439
        %v3744 = vunpack.c.l.bf16 %v3440
        %v3745 = vunpack.c.l.bf16 %v3441
        %v3746 = vunpack.c.h.bf16 %v3441
        %v3747 = vunpack.c.l.bf16 %v3442
        %v3748 = vunpack.c.l.bf16 %v3443
        %v3749 = vunpack.c.h.bf16 %v3443
        %v3750 = vunpack.c.l.bf16 %v3444
        %v3751 = vunpack.c.l.bf16 %v3445
        %v3752 = vunpack.c.h.bf16 %v3445
        %v3753 = vunpack.c.l.bf16 %v3446
        %v3754 = vunpack.c.l.bf16 %v3447
        %v3755 = vunpack.c.h.bf16 %v3447
        %v3756 = vunpack.c.l.bf16 %v3448
        %v3757 = vunpack.c.l.bf16 %v3449
        %v3758 = vunpack.c.h.bf16 %v3449
        %v3759 = vunpack.c.l.bf16 %v3450
        %v3760 = vunpack.c.l.bf16 %v3451
        %v3761 = vunpack.c.h.bf16 %v3451
        %v3762 = vunpack.c.l.bf16 %v3452
        %v3763 = vunpack.c.l.bf16 %v3453
        %v3764 = vunpack.c.h.bf16 %v3453
        %v3765 = vunpack.c.l.bf16 %v3454
        %v3766 = vunpack.c.l.bf16 %v3455
        %v3767 = vunpack.c.h.bf16 %v3455
        %v3768 = vunpack.c.l.bf16 %v3456
        %v3769 = vunpack.c.l.bf16 %v3457
        %v3770 = vunpack.c.h.bf16 %v3457
        %v3771 = vunpack.c.l.bf16 %v3458
        %v3772 = vunpack.c.l.bf16 %v3459
        %v3773 = vunpack.c.h.bf16 %v3459
        %v3774 = vunpack.c.l.bf16 %v3460
        %v3775 = vunpack.c.l.bf16 %v3461
        %v3776 = vunpack.c.h.bf16 %v3461
        %v3777 = vunpack.c.l.bf16 %v3462
        %v3778 = vunpack.c.l.bf16 %v3463
        %v3779 = vunpack.c.h.bf16 %v3463
        %v3780 = vunpack.c.l.bf16 %v3464
        %v3781 = vunpack.c.l.bf16 %v3465
        %v3782 = vunpack.c.h.bf16 %v3465
        %v3783 = vunpack.c.l.bf16 %v3466
        %v3784 = vunpack.c.l.bf16 %v3467
        %v3785 = vunpack.c.h.bf16 %v3467
        %v3786 = vunpack.c.l.bf16 %v3468
        %v3787 = vunpack.c.l.bf16 %v3469
        %v3788 = vunpack.c.h.bf16 %v3469
        %v3789 = vunpack.c.l.bf16 %v3470
        %v3790 = vunpack.c.l.bf16 %v3471
        %v3791 = vunpack.c.h.bf16 %v3471
        %v3792 = vunpack.c.l.bf16 %v3472
        %v3793 = vunpack.c.l.bf16 %v3473
        %v3794 = vunpack.c.h.bf16 %v3473
        %v3795 = vunpack.c.l.bf16 %v3474
        %v3796 = vunpack.c.l.bf16 %v3475
        %v3797 = vunpack.c.h.bf16 %v3475
        %v3798 = vunpack.c.l.bf16 %v3476
        %v3799 = vunpack.c.l.bf16 %v3477
        %v3800 = vunpack.c.h.bf16 %v3477
        %v3801 = vunpack.c.l.bf16 %v3478
        %v3802 = vunpack.c.l.bf16 %v3479
        %v3803 = vunpack.c.h.bf16 %v3479
        %v3804 = vunpack.c.l.bf16 %v3480
        %v3805 = vunpack.c.l.bf16 %v3481
        %v3806 = vunpack.c.h.bf16 %v3481
        %v3807 = vunpack.c.l.bf16 %v3482
        %v3808 = vunpack.c.l.bf16 %v3483
        %v3809 = vunpack.c.h.bf16 %v3483
        %v3810 = vunpack.c.l.bf16 %v3484
        %v3811 = vunpack.c.l.bf16 %v3485
        %v3812 = vunpack.c.h.bf16 %v3485
        %v3813 = vunpack.c.l.bf16 %v3486
        %v3814 = vunpack.c.l.bf16 %v3487
        %v3815 = vunpack.c.h.bf16 %v3487
        %v3816 = vunpack.c.l.bf16 %v3488
        %v3817 = vunpack.c.l.bf16 %v3489
        %v3818 = vunpack.c.h.bf16 %v3489
        %v3819 = vunpack.c.l.bf16 %v3490
        %v3820 = vunpack.c.l.bf16 %v3491
        %v3821 = vunpack.c.h.bf16 %v3491
        %v3822 = vunpack.c.l.bf16 %v3492
        %v3823 = vunpack.c.l.bf16 %v3493
        %v3824 = vunpack.c.h.bf16 %v3493
        %v3825 = vunpack.c.l.bf16 %v3494
        %v3826 = vunpack.c.l.bf16 %v3495
        %v3827 = vunpack.c.h.bf16 %v3495
        %v3828 = vunpack.c.l.bf16 %v3496
        %v3829 = vunpack.c.l.bf16 %v3497
        %v3830 = vunpack.c.h.bf16 %v3497
        %v3831 = vunpack.c.l.bf16 %v3498
        %v3832 = vunpack.c.l.bf16 %v3499
        %v3833 = vunpack.c.h.bf16 %v3499
        %v3834 = vunpack.c.l.bf16 %v3500
        %v3835 = vunpack.c.l.bf16 %v3501
        %v3836 = vunpack.c.h.bf16 %v3501
        %v3837 = vunpack.c.l.bf16 %v3502
        %v3838 = vunpack.c.l.bf16 %v3503
        %v3839 = vunpack.c.h.bf16 %v3503
        %v3840 = vunpack.c.l.bf16 %v3504
        %v3841 = vunpack.c.l.bf16 %v3505
        %v3842 = vunpack.c.h.bf16 %v3505
        %v3843 = vunpack.c.l.bf16 %v3506
        %v3844 = vunpack.c.l.bf16 %v3507
        %v3845 = vunpack.c.h.bf16 %v3507
        %v3846 = vunpack.c.l.bf16 %v3508
        %v3847 = vunpack.c.l.bf16 %v3509
        %v3848 = vunpack.c.h.bf16 %v3509
        %v3849 = vunpack.c.l.bf16 %v3510
        %v3850 = vunpack.c.l.bf16 %v3511
        %v3851 = vunpack.c.h.bf16 %v3511
        %v3852 = vunpack.c.l.bf16 %v3512
        %v3853 = vunpack.c.l.bf16 %v3513
        %v3854 = vunpack.c.h.bf16 %v3513
        %v3855 = vunpack.c.l.bf16 %v3514
        %v3856 = vunpack.c.l.bf16 %v3515
        %v3857 = vunpack.c.h.bf16 %v3515
        %v3858 = vunpack.c.l.bf16 %v3516
        %v3859 = vunpack.c.l.bf16 %v3517
        %v3860 = vunpack.c.h.bf16 %v3517
        %v3861 = vunpack.c.l.bf16 %v3518
        %v3862 = vunpack.c.l.bf16 %v3519
        %v3863 = vunpack.c.h.bf16 %v3519
        %v3864 = vunpack.c.l.bf16 %v3520
        %v3865 = vunpack.c.l.bf16 %v3521
        %v3866 = vunpack.c.h.bf16 %v3521
        %v3867 = vunpack.c.l.bf16 %v3522
        %v3868 = vunpack.c.l.bf16 %v3523
        %v3869 = vunpack.c.h.bf16 %v3523
        %v3870 = vunpack.c.l.bf16 %v3524
        %v3871 = vunpack.c.l.bf16 %v3525
        %v3872 = vunpack.c.h.bf16 %v3525
        %v3873 = vunpack.c.l.bf16 %v3526
        %v3874 = vunpack.c.l.bf16 %v3527
        %v3875 = vunpack.c.h.bf16 %v3527
        %v3876 = vunpack.c.l.bf16 %v3528
        %v3877 = vunpack.c.l.bf16 %v3529
        %v3878 = vunpack.c.h.bf16 %v3529
        %v3879 = vunpack.c.l.bf16 %v3530
        %v3880 = vunpack.c.l.bf16 %v3531
        %v3881 = vunpack.c.h.bf16 %v3531
        %v3882 = vunpack.c.l.bf16 %v3532
        %v3883 = vunpack.c.l.bf16 %v3533
        %v3884 = vunpack.c.h.bf16 %v3533
        %v3885 = vunpack.c.l.bf16 %v3534
        %v3886 = vunpack.c.l.bf16 %v3535
        %v3887 = vunpack.c.h.bf16 %v3535
        %v3888 = vunpack.c.l.bf16 %v3536
        %v3889 = vunpack.c.l.bf16 %v3537
        %v3890 = vunpack.c.h.bf16 %v3537
        %v3891 = vunpack.c.l.bf16 %v3538
        %v3892 = vunpack.c.l.bf16 %v3539
        %v3893 = vunpack.c.h.bf16 %v3539
        %v3894 = vunpack.c.l.bf16 %v3540
        %v3895 = vunpack.c.l.bf16 %v3541
        %v3896 = vunpack.c.h.bf16 %v3541
        %v3897 = vunpack.c.l.bf16 %v3542
        %v3898 = vunpack.c.l.bf16 %v3543
        %v3899 = vunpack.c.h.bf16 %v3543
        %v3900 = vunpack.c.l.bf16 %v3544
        %v3901 = vunpack.c.l.bf16 %v3545
        %v3902 = vunpack.c.h.bf16 %v3545
        %v3903 = vunpack.c.l.bf16 %v3546
        %v3904 = vunpack.c.l.bf16 %v3547
        %v3905 = vunpack.c.h.bf16 %v3547
        %v3906 = vunpack.c.l.bf16 %v3548
        %v3907 = vunpack.c.l.bf16 %v3549
        %v3908 = vunpack.c.h.bf16 %v3549
        %v3909 = vunpack.c.l.bf16 %v3550
        %v3910 = vunpack.c.l.bf16 %v3551
        %v3911 = vunpack.c.h.bf16 %v3551
        %v3912 = vunpack.c.l.bf16 %v3552
        %v3913 = vunpack.c.l.bf16 %v3553
        %v3914 = vunpack.c.h.bf16 %v3553
        %v3915 = vunpack.c.l.bf16 %v3554
        %v3916 = vunpack.c.l.bf16 %v3555
        %v3917 = vunpack.c.h.bf16 %v3555
        %v3918 = vunpack.c.l.bf16 %v3556
        %v3919 = vunpack.c.l.bf16 %v3557
        %v3920 = vunpack.c.h.bf16 %v3557
        %v3921 = vunpack.c.l.bf16 %v3558
        %v3922 = vunpack.c.l.bf16 %v3559
        %v3923 = vunpack.c.h.bf16 %v3559
        %v3924 = vunpack.c.l.bf16 %v3560
        %v3925 = vunpack.c.l.bf16 %v3561
        %v3926 = vunpack.c.h.bf16 %v3561
        %v3927 = vunpack.c.l.bf16 %v3562
        %v3928 = vunpack.c.l.bf16 %v3563
        %v3929 = vunpack.c.h.bf16 %v3563
        %v3930 = vunpack.c.l.bf16 %v3564
        %v3931 = vunpack.c.l.bf16 %v3565
        %v3932 = vunpack.c.h.bf16 %v3565
        %v3933 = vunpack.c.l.bf16 %v3566
        %v3934 = vunpack.c.l.bf16 %v3567
        %v3935 = vunpack.c.h.bf16 %v3567
        %v3936 = vunpack.c.l.bf16 %v3568
        %v3937 = vunpack.c.l.bf16 %v3569
        %v3938 = vunpack.c.h.bf16 %v3569
        %v3939 = vunpack.c.l.bf16 %v3570
        %v3940 = vunpack.c.l.bf16 %v3571
        %v3941 = vunpack.c.h.bf16 %v3571
        %v3942 = vunpack.c.l.bf16 %v3572
        %v3943 = vunpack.c.l.bf16 %v3573
        %v3944 = vunpack.c.h.bf16 %v3573
        %v3945 = vunpack.c.l.bf16 %v3574
        %v3946 = vunpack.c.l.bf16 %v3575
        %v3947 = vunpack.c.h.bf16 %v3575
        %v3948 = vunpack.c.l.bf16 %v3576
        %v3949 = vunpack.c.l.bf16 %v3577
        %v3950 = vunpack.c.h.bf16 %v3577
        %v3951 = vunpack.c.l.bf16 %v3578
        %v3952 = vunpack.c.l.bf16 %v3579
        %v3953 = vunpack.c.h.bf16 %v3579
        %v3954 = vunpack.c.l.bf16 %v3580
        %v3955 = vunpack.c.l.bf16 %v3581
        %v3956 = vunpack.c.h.bf16 %v3581
        %v3957 = vunpack.c.l.bf16 %v3582
        %v3958 = vunpack.c.l.bf16 %v3583
        %v3959 = vunpack.c.h.bf16 %v3583
        %v3960 = vunpack.c.l.bf16 %v3584
        %v3961 = vunpack.c.l.bf16 %v3585
        %v3962 = vunpack.c.h.bf16 %v3585
        %v3963 = vunpack.c.l.bf16 %v3586
        %v3964 = vunpack.c.l.bf16 %v3587
        %v3965 = vunpack.c.h.bf16 %v3587
        %v3966 = vunpack.c.l.bf16 %v3588
        %v3967 = vunpack.c.l.bf16 %v3589
        %v3968 = vunpack.c.h.bf16 %v3589
        %v3969 = vunpack.c.l.bf16 %v3590
        %v3970 = vunpack.c.l.bf16 %v3591
        %v3971 = vunpack.c.h.bf16 %v3591
        %v3972 = vunpack.c.l.bf16 %v3592
        %v3973 = vunpack.c.l.bf16 %v3593
        %v3974 = vunpack.c.h.bf16 %v3593
        %v3975 = vunpack.c.l.bf16 %v3594
        %v3976 = vunpack.c.l.bf16 %v3595
        %v3977 = vunpack.c.h.bf16 %v3595
        %v3978 = vunpack.c.l.bf16 %v3596
        %v3979 = vunpack.c.l.bf16 %v3597
        %v3980 = vunpack.c.h.bf16 %v3597
        %v3981 = vunpack.c.l.bf16 %v3598
        %v3982 = vunpack.c.l.bf16 %v3599
        %v3983 = vunpack.c.h.bf16 %v3599
        %v3984 = vunpack.c.l.bf16 %v3600
        %v3985 = vunpack.c.l.bf16 %v3601
        %v3986 = vunpack.c.h.bf16 %v3601
        %v3987 = vunpack.c.l.bf16 %v3602
        %v3988 = vunpack.c.l.bf16 %v3603
        %v3989 = vunpack.c.h.bf16 %v3603
        %v3990 = vunpack.c.l.bf16 %v3604
        %v3991 = vunpack.c.l.bf16 %v3605
        %v3992 = vunpack.c.h.bf16 %v3605
        %v3993 = vunpack.c.l.bf16 %v3606
        %v3994 = vunpack.c.l.bf16 %v3607
        %v3995 = vunpack.c.h.bf16 %v3607
        %v3996 = vunpack.c.l.bf16 %v3608
        %v3997 = vunpack.c.l.bf16 %v3609
        %v3998 = vunpack.c.h.bf16 %v3609
        %v3999 = vunpack.c.l.bf16 %v3610
        %v4000 = vunpack.c.l.bf16 %v3611
        %v4001 = vunpack.c.h.bf16 %v3611
        %v4002 = vunpack.c.l.bf16 %v3612
        %v4003 = vunpack.c.l.bf16 %v3613
        %v4004 = vunpack.c.h.bf16 %v3613
        %v4005 = vunpack.c.l.bf16 %v3614
        %v4006 = vunpack.c.l.bf16 %v3615
        %v4007 = vunpack.c.h.bf16 %v3615
        %v4008 = vunpack.c.l.bf16 %v3616
        %v4009 = vunpack.c.l.bf16 %v3617
        %v4010 = vunpack.c.h.bf16 %v3617
        %v4011 = vunpack.c.l.bf16 %v3618
        %v4012 = vunpack.c.l.bf16 %v3619
        %v4013 = vunpack.c.h.bf16 %v3619
        %v4014 = vunpack.c.l.bf16 %v3620
        %v4015 = vunpack.c.l.bf16 %v3621
        %v4016 = vunpack.c.h.bf16 %v3621
        %v4017 = vunpack.c.l.bf16 %v3622
        %v4018 = vunpack.c.l.bf16 %v3623
        %v4019 = vunpack.c.h.bf16 %v3623
        %v4020 = vunpack.c.l.bf16 %v3624
        %v4021 = vunpack.c.l.bf16 %v3625
        %v4022 = vunpack.c.h.bf16 %v3625
        %v4023 = vunpack.c.l.bf16 %v3626
        %v4024 = vunpack.c.l.bf16 %v3627
        %v4025 = vunpack.c.h.bf16 %v3627
        %v4026 = vunpack.c.l.bf16 %v3628
        %v4027 = vunpack.c.l.bf16 %v3629
        %v4028 = vunpack.c.h.bf16 %v3629
        %v4029 = vunpack.c.l.bf16 %v3630
        %v4030 = vunpack.c.l.bf16 %v3631
        %v4031 = vunpack.c.h.bf16 %v3631
        %v4032 = vunpack.c.l.bf16 %v3632
        %v4033 = vunpack.c.l.bf16 %v3633
        %v4034 = vunpack.c.h.bf16 %v3633
        %v4035 = vunpack.c.l.bf16 %v3634
        %v4036 = vunpack.c.l.bf16 %v3635
        %v4037 = vunpack.c.h.bf16 %v3635
        %v4038 = vunpack.c.l.bf16 %v3636
        %v4039 = vunpack.c.l.bf16 %v3637
        %v4040 = vunpack.c.h.bf16 %v3637
        %v4041 = vunpack.c.l.bf16 %v3638
        %v4042 = vunpack.c.l.bf16 %v3639
        %v4043 = vunpack.c.h.bf16 %v3639
        %v4044 = vunpack.c.l.bf16 %v3640
        %v4045 = vunpack.c.l.bf16 %v3641
        %v4046 = vunpack.c.h.bf16 %v3641
        %v4047 = vunpack.c.l.bf16 %v3642
        %v4048 = vunpack.c.l.bf16 %v3643
        %v4049 = vunpack.c.h.bf16 %v3643
        %v4050 = vunpack.c.l.bf16 %v3644
        %v4051 = vunpack.c.l.bf16 %v3645
        %v4052 = vunpack.c.h.bf16 %v3645
        %v4053 = vunpack.c.l.bf16 %v3646
        %v4054 = vunpack.c.l.bf16 %v3647
        %v4055 = vunpack.c.h.bf16 %v3647
        %v4056 = vunpack.c.l.bf16 %v3648
        %v4057 = vunpack.c.l.bf16 %v3649
        %v4058 = vunpack.c.h.bf16 %v3649
        %v4059 = vunpack.c.l.bf16 %v3650
        %v4060 = vunpack.c.l.bf16 %v3651
        %v4061 = vunpack.c.h.bf16 %v3651
        %v4062 = vunpack.c.l.bf16 %v3652
        %v4063 = vunpack.c.l.bf16 %v3653
        %v4064 = vunpack.c.h.bf16 %v3653
        %v4065 = vunpack.c.l.bf16 %v3654
        %v4066 = vunpack.c.l.bf16 %v3676
        %v4067 = vunpack.c.l.bf16 %v3680
        %v4068 = vunpack.c.l.bf16 %v3684
        %v4069 = vadd.f32 %v3685, %v4066
        %v4070 = vadd.f32 %v3686, %v4067
        %v4071 = vadd.f32 %v3687, %v4068
        %v4072 = vadd.f32 %v3688, %v4066
        %v4073 = vadd.f32 %v3689, %v4067
        %v4074 = vadd.f32 %v3690, %v4068
        %v4075 = vadd.f32 %v3691, %v4066
        %v4076 = vadd.f32 %v3692, %v4067
        %v4077 = vadd.f32 %v3693, %v4068
        %v4078 = vadd.f32 %v3694, %v4066
        %v4079 = vadd.f32 %v3695, %v4067
        %v4080 = vadd.f32 %v3696, %v4068
        %v4081 = vadd.f32 %v3697, %v4066
        %v4082 = vadd.f32 %v3698, %v4067
        %v4083 = vadd.f32 %v3699, %v4068
        %v4084 = vadd.f32 %v3700, %v4066
        %v4085 = vadd.f32 %v3701, %v4067
        %v4086 = vadd.f32 %v3702, %v4068
        %v4087 = vadd.f32 %v3703, %v4066
        %v4088 = vadd.f32 %v3704, %v4067
        %v4089 = vadd.f32 %v3705, %v4068
        %v4090 = vadd.f32 %v3706, %v4066
        %v4091 = vadd.f32 %v3707, %v4067
        %v4092 = vadd.f32 %v3708, %v4068
        %v4093 = vadd.f32 %v3709, %v4066
        %v4094 = vadd.f32 %v3710, %v4067
        %v4095 = vadd.f32 %v3711, %v4068
        %v4096 = vadd.f32 %v3712, %v4066
        %v4097 = vadd.f32 %v3713, %v4067
        %v4098 = vadd.f32 %v3714, %v4068
        %v4099 = vadd.f32 %v3715, %v4066
        %v4100 = vadd.f32 %v3716, %v4067
        %v4101 = vadd.f32 %v3717, %v4068
        %v4102 = vadd.f32 %v3718, %v4066
        %v4103 = vadd.f32 %v3719, %v4067
        %v4104 = vadd.f32 %v3720, %v4068
        %v4105 = vadd.f32 %v3721, %v4066
        %v4106 = vadd.f32 %v3722, %v4067
        %v4107 = vadd.f32 %v3723, %v4068
        %v4108 = vadd.f32 %v3724, %v4066
        %v4109 = vadd.f32 %v3725, %v4067
        %v4110 = vadd.f32 %v3726, %v4068
        %v4111 = vadd.f32 %v3727, %v4066
        %v4112 = vadd.f32 %v3728, %v4067
        %v4113 = vadd.f32 %v3729, %v4068
        %v4114 = vadd.f32 %v3730, %v4066
        %v4115 = vadd.f32 %v3731, %v4067
        %v4116 = vadd.f32 %v3732, %v4068
        %v4117 = vadd.f32 %v3733, %v4066
        %v4118 = vadd.f32 %v3734, %v4067
        %v4119 = vadd.f32 %v3735, %v4068
        %v4120 = vadd.f32 %v3736, %v4066
        %v4121 = vadd.f32 %v3737, %v4067
        %v4122 = vadd.f32 %v3738, %v4068
        %v4123 = vadd.f32 %v3739, %v4066
        %v4124 = vadd.f32 %v3740, %v4067
        %v4125 = vadd.f32 %v3741, %v4068
        %v4126 = vadd.f32 %v3742, %v4066
        %v4127 = vadd.f32 %v3743, %v4067
        %v4128 = vadd.f32 %v3744, %v4068
        %v4129 = vadd.f32 %v3745, %v4066
        %v4130 = vadd.f32 %v3746, %v4067
        %v4131 = vadd.f32 %v3747, %v4068
        %v4132 = vadd.f32 %v3748, %v4066
        %v4133 = vadd.f32 %v3749, %v4067
        %v4134 = vadd.f32 %v3750, %v4068
        %v4135 = vadd.f32 %v3751, %v4066
        %v4136 = vadd.f32 %v3752, %v4067
        %v4137 = vadd.f32 %v3753, %v4068
        %v4138 = vadd.f32 %v3754, %v4066
        %v4139 = vadd.f32 %v3755, %v4067
        %v4140 = vadd.f32 %v3756, %v4068
        %v4141 = vadd.f32 %v3757, %v4066
        %v4142 = vadd.f32 %v3758, %v4067
        %v4143 = vadd.f32 %v3759, %v4068
        %v4144 = vadd.f32 %v3760, %v4066
        %v4145 = vadd.f32 %v3761, %v4067
        %v4146 = vadd.f32 %v3762, %v4068
        %v4147 = vadd.f32 %v3763, %v4066
        %v4148 = vadd.f32 %v3764, %v4067
        %v4149 = vadd.f32 %v3765, %v4068
        %v4150 = vadd.f32 %v3766, %v4066
        %v4151 = vadd.f32 %v3767, %v4067
        %v4152 = vadd.f32 %v3768, %v4068
        %v4153 = vadd.f32 %v3769, %v4066
        %v4154 = vadd.f32 %v3770, %v4067
        %v4155 = vadd.f32 %v3771, %v4068
        %v4156 = vadd.f32 %v3772, %v4066
        %v4157 = vadd.f32 %v3773, %v4067
        %v4158 = vadd.f32 %v3774, %v4068
        %v4159 = vadd.f32 %v3775, %v4066
        %v4160 = vadd.f32 %v3776, %v4067
        %v4161 = vadd.f32 %v3777, %v4068
        %v4162 = vadd.f32 %v3778, %v4066
        %v4163 = vadd.f32 %v3779, %v4067
        %v4164 = vadd.f32 %v3780, %v4068
        %v4165 = vadd.f32 %v3781, %v4066
        %v4166 = vadd.f32 %v3782, %v4067
        %v4167 = vadd.f32 %v3783, %v4068
        %v4168 = vadd.f32 %v3784, %v4066
        %v4169 = vadd.f32 %v3785, %v4067
        %v4170 = vadd.f32 %v3786, %v4068
        %v4171 = vadd.f32 %v3787, %v4066
        %v4172 = vadd.f32 %v3788, %v4067
        %v4173 = vadd.f32 %v3789, %v4068
        %v4174 = vadd.f32 %v3790, %v4066
        %v4175 = vadd.f32 %v3791, %v4067
        %v4176 = vadd.f32 %v3792, %v4068
        %v4177 = vadd.f32 %v3793, %v4066
        %v4178 = vadd.f32 %v3794, %v4067
        %v4179 = vadd.f32 %v3795, %v4068
        %v4180 = vadd.f32 %v3796, %v4066
        %v4181 = vadd.f32 %v3797, %v4067
        %v4182 = vadd.f32 %v3798, %v4068
        %v4183 = vadd.f32 %v3799, %v4066
        %v4184 = vadd.f32 %v3800, %v4067
        %v4185 = vadd.f32 %v3801, %v4068
        %v4186 = vadd.f32 %v3802, %v4066
        %v4187 = vadd.f32 %v3803, %v4067
        %v4188 = vadd.f32 %v3804, %v4068
        %v4189 = vadd.f32 %v3805, %v4066
        %v4190 = vadd.f32 %v3806, %v4067
        %v4191 = vadd.f32 %v3807, %v4068
        %v4192 = vadd.f32 %v3808, %v4066
        %v4193 = vadd.f32 %v3809, %v4067
        %v4194 = vadd.f32 %v3810, %v4068
        %v4195 = vadd.f32 %v3811, %v4066
        %v4196 = vadd.f32 %v3812, %v4067
        %v4197 = vadd.f32 %v3813, %v4068
        %v4198 = vadd.f32 %v3814, %v4066
        %v4199 = vadd.f32 %v3815, %v4067
        %v4200 = vadd.f32 %v3816, %v4068
        %v4201 = vadd.f32 %v3817, %v4066
        %v4202 = vadd.f32 %v3818, %v4067
        %v4203 = vadd.f32 %v3819, %v4068
        %v4204 = vadd.f32 %v3820, %v4066
        %v4205 = vadd.f32 %v3821, %v4067
        %v4206 = vadd.f32 %v3822, %v4068
        %v4207 = vadd.f32 %v3823, %v4066
        %v4208 = vadd.f32 %v3824, %v4067
        %v4209 = vadd.f32 %v3825, %v4068
        %v4210 = vadd.f32 %v3826, %v4066
        %v4211 = vadd.f32 %v3827, %v4067
        %v4212 = vadd.f32 %v3828, %v4068
        %v4213 = vadd.f32 %v3829, %v4066
        %v4214 = vadd.f32 %v3830, %v4067
        %v4215 = vadd.f32 %v3831, %v4068
        %v4216 = vadd.f32 %v3832, %v4066
        %v4217 = vadd.f32 %v3833, %v4067
        %v4218 = vadd.f32 %v3834, %v4068
        %v4219 = vadd.f32 %v3835, %v4066
        %v4220 = vadd.f32 %v3836, %v4067
        %v4221 = vadd.f32 %v3837, %v4068
        %v4222 = vadd.f32 %v3838, %v4066
        %v4223 = vadd.f32 %v3839, %v4067
        %v4224 = vadd.f32 %v3840, %v4068
        %v4225 = vadd.f32 %v3841, %v4066
        %v4226 = vadd.f32 %v3842, %v4067
        %v4227 = vadd.f32 %v3843, %v4068
        %v4228 = vadd.f32 %v3844, %v4066
        %v4229 = vadd.f32 %v3845, %v4067
        %v4230 = vadd.f32 %v3846, %v4068
        %v4231 = vadd.f32 %v3847, %v4066
        %v4232 = vadd.f32 %v3848, %v4067
        %v4233 = vadd.f32 %v3849, %v4068
        %v4234 = vadd.f32 %v3850, %v4066
        %v4235 = vadd.f32 %v3851, %v4067
        %v4236 = vadd.f32 %v3852, %v4068
        %v4237 = vadd.f32 %v3853, %v4066
        %v4238 = vadd.f32 %v3854, %v4067
        %v4239 = vadd.f32 %v3855, %v4068
        %v4240 = vadd.f32 %v3856, %v4066
        %v4241 = vadd.f32 %v3857, %v4067
        %v4242 = vadd.f32 %v3858, %v4068
        %v4243 = vadd.f32 %v3859, %v4066
        %v4244 = vadd.f32 %v3860, %v4067
        %v4245 = vadd.f32 %v3861, %v4068
        %v4246 = vadd.f32 %v3862, %v4066
        %v4247 = vadd.f32 %v3863, %v4067
        %v4248 = vadd.f32 %v3864, %v4068
        %v4249 = vadd.f32 %v3865, %v4066
        %v4250 = vadd.f32 %v3866, %v4067
        %v4251 = vadd.f32 %v3867, %v4068
        %v4252 = vadd.f32 %v3868, %v4066
        %v4253 = vadd.f32 %v3869, %v4067
        %v4254 = vadd.f32 %v3870, %v4068
        %v4255 = vadd.f32 %v3871, %v4066
        %v4256 = vadd.f32 %v3872, %v4067
        %v4257 = vadd.f32 %v3873, %v4068
        %v4258 = vadd.f32 %v3874, %v4066
        %v4259 = vadd.f32 %v3875, %v4067
        %v4260 = vadd.f32 %v3876, %v4068
        %v4261 = vadd.f32 %v3877, %v4066
        %v4262 = vadd.f32 %v3878, %v4067
        %v4263 = vadd.f32 %v3879, %v4068
        %v4264 = vadd.f32 %v3880, %v4066
        %v4265 = vadd.f32 %v3881, %v4067
        %v4266 = vadd.f32 %v3882, %v4068
        %v4267 = vadd.f32 %v3883, %v4066
        %v4268 = vadd.f32 %v3884, %v4067
        %v4269 = vadd.f32 %v3885, %v4068
        %v4270 = vadd.f32 %v3886, %v4066
        %v4271 = vadd.f32 %v3887, %v4067
        %v4272 = vadd.f32 %v3888, %v4068
        %v4273 = vadd.f32 %v3889, %v4066
        %v4274 = vadd.f32 %v3890, %v4067
        %v4275 = vadd.f32 %v3891, %v4068
        %v4276 = vadd.f32 %v3892, %v4066
        %v4277 = vadd.f32 %v3893, %v4067
        %v4278 = vadd.f32 %v3894, %v4068
        %v4279 = vadd.f32 %v3895, %v4066
        %v4280 = vadd.f32 %v3896, %v4067
        %v4281 = vadd.f32 %v3897, %v4068
        %v4282 = vadd.f32 %v3898, %v4066
        %v4283 = vadd.f32 %v3899, %v4067
        %v4284 = vadd.f32 %v3900, %v4068
        %v4285 = vadd.f32 %v3901, %v4066
        %v4286 = vadd.f32 %v3902, %v4067
        %v4287 = vadd.f32 %v3903, %v4068
        %v4288 = vadd.f32 %v3904, %v4066
        %v4289 = vadd.f32 %v3905, %v4067
        %v4290 = vadd.f32 %v3906, %v4068
        %v4291 = vadd.f32 %v3907, %v4066
        %v4292 = vadd.f32 %v3908, %v4067
        %v4293 = vadd.f32 %v3909, %v4068
        %v4294 = vadd.f32 %v3910, %v4066
        %v4295 = vadd.f32 %v3911, %v4067
        %v4296 = vadd.f32 %v3912, %v4068
        %v4297 = vadd.f32 %v3913, %v4066
        %v4298 = vadd.f32 %v3914, %v4067
        %v4299 = vadd.f32 %v3915, %v4068
        %v4300 = vadd.f32 %v3916, %v4066
        %v4301 = vadd.f32 %v3917, %v4067
        %v4302 = vadd.f32 %v3918, %v4068
        %v4303 = vadd.f32 %v3919, %v4066
        %v4304 = vadd.f32 %v3920, %v4067
        %v4305 = vadd.f32 %v3921, %v4068
        %v4306 = vadd.f32 %v3922, %v4066
        %v4307 = vadd.f32 %v3923, %v4067
        %v4308 = vadd.f32 %v3924, %v4068
        %v4309 = vadd.f32 %v3925, %v4066
        %v4310 = vadd.f32 %v3926, %v4067
        %v4311 = vadd.f32 %v3927, %v4068
        %v4312 = vadd.f32 %v3928, %v4066
        %v4313 = vadd.f32 %v3929, %v4067
        %v4314 = vadd.f32 %v3930, %v4068
        %v4315 = vadd.f32 %v3931, %v4066
        %v4316 = vadd.f32 %v3932, %v4067
        %v4317 = vadd.f32 %v3933, %v4068
        %v4318 = vadd.f32 %v3934, %v4066
        %v4319 = vadd.f32 %v3935, %v4067
        %v4320 = vadd.f32 %v3936, %v4068
        %v4321 = vadd.f32 %v3937, %v4066
        %v4322 = vadd.f32 %v3938, %v4067
        %v4323 = vadd.f32 %v3939, %v4068
        %v4324 = vadd.f32 %v3940, %v4066
        %v4325 = vadd.f32 %v3941, %v4067
        %v4326 = vadd.f32 %v3942, %v4068
        %v4327 = vadd.f32 %v3943, %v4066
        %v4328 = vadd.f32 %v3944, %v4067
        %v4329 = vadd.f32 %v3945, %v4068
        %v4330 = vadd.f32 %v3946, %v4066
        %v4331 = vadd.f32 %v3947, %v4067
        %v4332 = vadd.f32 %v3948, %v4068
        %v4333 = vadd.f32 %v3949, %v4066
        %v4334 = vadd.f32 %v3950, %v4067
        %v4335 = vadd.f32 %v3951, %v4068
        %v4336 = vadd.f32 %v3952, %v4066
        %v4337 = vadd.f32 %v3953, %v4067
        %v4338 = vadd.f32 %v3954, %v4068
        %v4339 = vadd.f32 %v3955, %v4066
        %v4340 = vadd.f32 %v3956, %v4067
        %v4341 = vadd.f32 %v3957, %v4068
        %v4342 = vadd.f32 %v3958, %v4066
        %v4343 = vadd.f32 %v3959, %v4067
        %v4344 = vadd.f32 %v3960, %v4068
        %v4345 = vadd.f32 %v3961, %v4066
        %v4346 = vadd.f32 %v3962, %v4067
        %v4347 = vadd.f32 %v3963, %v4068
        %v4348 = vadd.f32 %v3964, %v4066
        %v4349 = vadd.f32 %v3965, %v4067
        %v4350 = vadd.f32 %v3966, %v4068
        %v4351 = vadd.f32 %v3967, %v4066
        %v4352 = vadd.f32 %v3968, %v4067
        %v4353 = vadd.f32 %v3969, %v4068
        %v4354 = vadd.f32 %v3970, %v4066
        %v4355 = vadd.f32 %v3971, %v4067
        %v4356 = vadd.f32 %v3972, %v4068
        %v4357 = vadd.f32 %v3973, %v4066
        %v4358 = vadd.f32 %v3974, %v4067
        %v4359 = vadd.f32 %v3975, %v4068
        %v4360 = vadd.f32 %v3976, %v4066
        %v4361 = vadd.f32 %v3977, %v4067
        %v4362 = vadd.f32 %v3978, %v4068
        %v4363 = vadd.f32 %v3979, %v4066
        %v4364 = vadd.f32 %v3980, %v4067
        %v4365 = vadd.f32 %v3981, %v4068
        %v4366 = vadd.f32 %v3982, %v4066
        %v4367 = vadd.f32 %v3983, %v4067
        %v4368 = vadd.f32 %v3984, %v4068
        %v4369 = vadd.f32 %v3985, %v4066
        %v4370 = vadd.f32 %v3986, %v4067
        %v4371 = vadd.f32 %v3987, %v4068
        %v4372 = vadd.f32 %v3988, %v4066
        %v4373 = vadd.f32 %v3989, %v4067
        %v4374 = vadd.f32 %v3990, %v4068
        %v4375 = vadd.f32 %v3991, %v4066
        %v4376 = vadd.f32 %v3992, %v4067
        %v4377 = vadd.f32 %v3993, %v4068
        %v4378 = vadd.f32 %v3994, %v4066
        %v4379 = vadd.f32 %v3995, %v4067
        %v4380 = vadd.f32 %v3996, %v4068
        %v4381 = vadd.f32 %v3997, %v4066
        %v4382 = vadd.f32 %v3998, %v4067
        %v4383 = vadd.f32 %v3999, %v4068
        %v4384 = vadd.f32 %v4000, %v4066
        %v4385 = vadd.f32 %v4001, %v4067
        %v4386 = vadd.f32 %v4002, %v4068
        %v4387 = vadd.f32 %v4003, %v4066
        %v4388 = vadd.f32 %v4004, %v4067
        %v4389 = vadd.f32 %v4005, %v4068
        %v4390 = vadd.f32 %v4006, %v4066
        %v4391 = vadd.f32 %v4007, %v4067
        %v4392 = vadd.f32 %v4008, %v4068
        %v4393 = vadd.f32 %v4009, %v4066
        %v4394 = vadd.f32 %v4010, %v4067
        %v4395 = vadd.f32 %v4011, %v4068
        %v4396 = vadd.f32 %v4012, %v4066
        %v4397 = vadd.f32 %v4013, %v4067
        %v4398 = vadd.f32 %v4014, %v4068
        %v4399 = vadd.f32 %v4015, %v4066
        %v4400 = vadd.f32 %v4016, %v4067
        %v4401 = vadd.f32 %v4017, %v4068
        %v4402 = vadd.f32 %v4018, %v4066
        %v4403 = vadd.f32 %v4019, %v4067
        %v4404 = vadd.f32 %v4020, %v4068
        %v4405 = vadd.f32 %v4021, %v4066
        %v4406 = vadd.f32 %v4022, %v4067
        %v4407 = vadd.f32 %v4023, %v4068
        %v4408 = vadd.f32 %v4024, %v4066
        %v4409 = vadd.f32 %v4025, %v4067
        %v4410 = vadd.f32 %v4026, %v4068
        %v4411 = vadd.f32 %v4027, %v4066
        %v4412 = vadd.f32 %v4028, %v4067
        %v4413 = vadd.f32 %v4029, %v4068
        %v4414 = vadd.f32 %v4030, %v4066
        %v4415 = vadd.f32 %v4031, %v4067
        %v4416 = vadd.f32 %v4032, %v4068
        %v4417 = vadd.f32 %v4033, %v4066
        %v4418 = vadd.f32 %v4034, %v4067
        %v4419 = vadd.f32 %v4035, %v4068
        %v4420 = vadd.f32 %v4036, %v4066
        %v4421 = vadd.f32 %v4037, %v4067
        %v4422 = vadd.f32 %v4038, %v4068
        %v4423 = vadd.f32 %v4039, %v4066
        %v4424 = vadd.f32 %v4040, %v4067
        %v4425 = vadd.f32 %v4041, %v4068
        %v4426 = vadd.f32 %v4042, %v4066
        %v4427 = vadd.f32 %v4043, %v4067
        %v4428 = vadd.f32 %v4044, %v4068
        %v4429 = vadd.f32 %v4045, %v4066
        %v4430 = vadd.f32 %v4046, %v4067
        %v4431 = vadd.f32 %v4047, %v4068
        %v4432 = vadd.f32 %v4048, %v4066
        %v4433 = vadd.f32 %v4049, %v4067
        %v4434 = vadd.f32 %v4050, %v4068
        %v4435 = vadd.f32 %v4051, %v4066
        %v4436 = vadd.f32 %v4052, %v4067
        %v4437 = vadd.f32 %v4053, %v4068
        %v4438 = vadd.f32 %v4054, %v4066
        %v4439 = vadd.f32 %v4055, %v4067
        %v4440 = vadd.f32 %v4056, %v4068
        %v4441 = vadd.f32 %v4057, %v4066
        %v4442 = vadd.f32 %v4058, %v4067
        %v4443 = vadd.f32 %v4059, %v4068
        %v4444 = vadd.f32 %v4060, %v4066
        %v4445 = vadd.f32 %v4061, %v4067
        %v4446 = vadd.f32 %v4062, %v4068
        %v4447 = vadd.f32 %v4063, %v4066
        %v4448 = vadd.f32 %v4064, %v4067
        %v4449 = vadd.f32 %v4065, %v4068
        %v4450 = vpack.c.bf16 %v4070, %v4069
        %v4451 = vpack.c.bf16 %v4071, %v4071
        %v4452 = vpack.c.bf16 %v4073, %v4072
        %v4453 = vpack.c.bf16 %v4074, %v4074
        %v4454 = vpack.c.bf16 %v4076, %v4075
        %v4455 = vpack.c.bf16 %v4077, %v4077
        %v4456 = vpack.c.bf16 %v4079, %v4078
        %v4457 = vpack.c.bf16 %v4080, %v4080
        %v4458 = vpack.c.bf16 %v4082, %v4081
        %v4459 = vpack.c.bf16 %v4083, %v4083
        %v4460 = vpack.c.bf16 %v4085, %v4084
        %v4461 = vpack.c.bf16 %v4086, %v4086
        %v4462 = vpack.c.bf16 %v4088, %v4087
        %v4463 = vpack.c.bf16 %v4089, %v4089
        %v4464 = vpack.c.bf16 %v4091, %v4090
        %v4465 = vpack.c.bf16 %v4092, %v4092
        %v4466 = vpack.c.bf16 %v4094, %v4093
        %v4467 = vpack.c.bf16 %v4095, %v4095
        %v4468 = vpack.c.bf16 %v4097, %v4096
        %v4469 = vpack.c.bf16 %v4098, %v4098
        %v4470 = vpack.c.bf16 %v4100, %v4099
        %v4471 = vpack.c.bf16 %v4101, %v4101
        %v4472 = vpack.c.bf16 %v4103, %v4102
        %v4473 = vpack.c.bf16 %v4104, %v4104
        %v4474 = vpack.c.bf16 %v4106, %v4105
        %v4475 = vpack.c.bf16 %v4107, %v4107
        %v4476 = vpack.c.bf16 %v4109, %v4108
        %v4477 = vpack.c.bf16 %v4110, %v4110
        %v4478 = vpack.c.bf16 %v4112, %v4111
        %v4479 = vpack.c.bf16 %v4113, %v4113
        %v4480 = vpack.c.bf16 %v4115, %v4114
        %v4481 = vpack.c.bf16 %v4116, %v4116
        %v4482 = vpack.c.bf16 %v4118, %v4117
        %v4483 = vpack.c.bf16 %v4119, %v4119
        %v4484 = vpack.c.bf16 %v4121, %v4120
        %v4485 = vpack.c.bf16 %v4122, %v4122
        %v4486 = vpack.c.bf16 %v4124, %v4123
        %v4487 = vpack.c.bf16 %v4125, %v4125
        %v4488 = vpack.c.bf16 %v4127, %v4126
        %v4489 = vpack.c.bf16 %v4128, %v4128
        %v4490 = vpack.c.bf16 %v4130, %v4129
        %v4491 = vpack.c.bf16 %v4131, %v4131
        %v4492 = vpack.c.bf16 %v4133, %v4132
        %v4493 = vpack.c.bf16 %v4134, %v4134
        %v4494 = vpack.c.bf16 %v4136, %v4135
        %v4495 = vpack.c.bf16 %v4137, %v4137
        %v4496 = vpack.c.bf16 %v4139, %v4138
        %v4497 = vpack.c.bf16 %v4140, %v4140
        %v4498 = vpack.c.bf16 %v4142, %v4141
        %v4499 = vpack.c.bf16 %v4143, %v4143
        %v4500 = vpack.c.bf16 %v4145, %v4144
        %v4501 = vpack.c.bf16 %v4146, %v4146
        %v4502 = vpack.c.bf16 %v4148, %v4147
        %v4503 = vpack.c.bf16 %v4149, %v4149
        %v4504 = vpack.c.bf16 %v4151, %v4150
        %v4505 = vpack.c.bf16 %v4152, %v4152
        %v4506 = vpack.c.bf16 %v4154, %v4153
        %v4507 = vpack.c.bf16 %v4155, %v4155
        %v4508 = vpack.c.bf16 %v4157, %v4156
        %v4509 = vpack.c.bf16 %v4158, %v4158
        %v4510 = vpack.c.bf16 %v4160, %v4159
        %v4511 = vpack.c.bf16 %v4161, %v4161
        %v4512 = vpack.c.bf16 %v4163, %v4162
        %v4513 = vpack.c.bf16 %v4164, %v4164
        %v4514 = vpack.c.bf16 %v4166, %v4165
        %v4515 = vpack.c.bf16 %v4167, %v4167
        %v4516 = vpack.c.bf16 %v4169, %v4168
        %v4517 = vpack.c.bf16 %v4170, %v4170
        %v4518 = vpack.c.bf16 %v4172, %v4171
        %v4519 = vpack.c.bf16 %v4173, %v4173
        %v4520 = vpack.c.bf16 %v4175, %v4174
        %v4521 = vpack.c.bf16 %v4176, %v4176
        %v4522 = vpack.c.bf16 %v4178, %v4177
        %v4523 = vpack.c.bf16 %v4179, %v4179
        %v4524 = vpack.c.bf16 %v4181, %v4180
        %v4525 = vpack.c.bf16 %v4182, %v4182
        %v4526 = vpack.c.bf16 %v4184, %v4183
        %v4527 = vpack.c.bf16 %v4185, %v4185
        %v4528 = vpack.c.bf16 %v4187, %v4186
        %v4529 = vpack.c.bf16 %v4188, %v4188
        %v4530 = vpack.c.bf16 %v4190, %v4189
        %v4531 = vpack.c.bf16 %v4191, %v4191
        %v4532 = vpack.c.bf16 %v4193, %v4192
        %v4533 = vpack.c.bf16 %v4194, %v4194
        %v4534 = vpack.c.bf16 %v4196, %v4195
        %v4535 = vpack.c.bf16 %v4197, %v4197
        %v4536 = vpack.c.bf16 %v4199, %v4198
        %v4537 = vpack.c.bf16 %v4200, %v4200
        %v4538 = vpack.c.bf16 %v4202, %v4201
        %v4539 = vpack.c.bf16 %v4203, %v4203
        %v4540 = vpack.c.bf16 %v4205, %v4204
        %v4541 = vpack.c.bf16 %v4206, %v4206
        %v4542 = vpack.c.bf16 %v4208, %v4207
        %v4543 = vpack.c.bf16 %v4209, %v4209
        %v4544 = vpack.c.bf16 %v4211, %v4210
        %v4545 = vpack.c.bf16 %v4212, %v4212
        %v4546 = vpack.c.bf16 %v4214, %v4213
        %v4547 = vpack.c.bf16 %v4215, %v4215
        %v4548 = vpack.c.bf16 %v4217, %v4216
        %v4549 = vpack.c.bf16 %v4218, %v4218
        %v4550 = vpack.c.bf16 %v4220, %v4219
        %v4551 = vpack.c.bf16 %v4221, %v4221
        %v4552 = vpack.c.bf16 %v4223, %v4222
        %v4553 = vpack.c.bf16 %v4224, %v4224
        %v4554 = vpack.c.bf16 %v4226, %v4225
        %v4555 = vpack.c.bf16 %v4227, %v4227
        %v4556 = vpack.c.bf16 %v4229, %v4228
        %v4557 = vpack.c.bf16 %v4230, %v4230
        %v4558 = vpack.c.bf16 %v4232, %v4231
        %v4559 = vpack.c.bf16 %v4233, %v4233
        %v4560 = vpack.c.bf16 %v4235, %v4234
        %v4561 = vpack.c.bf16 %v4236, %v4236
        %v4562 = vpack.c.bf16 %v4238, %v4237
        %v4563 = vpack.c.bf16 %v4239, %v4239
        %v4564 = vpack.c.bf16 %v4241, %v4240
        %v4565 = vpack.c.bf16 %v4242, %v4242
        %v4566 = vpack.c.bf16 %v4244, %v4243
        %v4567 = vpack.c.bf16 %v4245, %v4245
        %v4568 = vpack.c.bf16 %v4247, %v4246
        %v4569 = vpack.c.bf16 %v4248, %v4248
        %v4570 = vpack.c.bf16 %v4250, %v4249
        %v4571 = vpack.c.bf16 %v4251, %v4251
        %v4572 = vpack.c.bf16 %v4253, %v4252
        %v4573 = vpack.c.bf16 %v4254, %v4254
        %v4574 = vpack.c.bf16 %v4256, %v4255
        %v4575 = vpack.c.bf16 %v4257, %v4257
        %v4576 = vpack.c.bf16 %v4259, %v4258
        %v4577 = vpack.c.bf16 %v4260, %v4260
        %v4578 = vpack.c.bf16 %v4262, %v4261
        %v4579 = vpack.c.bf16 %v4263, %v4263
        %v4580 = vpack.c.bf16 %v4265, %v4264
        %v4581 = vpack.c.bf16 %v4266, %v4266
        %v4582 = vpack.c.bf16 %v4268, %v4267
        %v4583 = vpack.c.bf16 %v4269, %v4269
        %v4584 = vpack.c.bf16 %v4271, %v4270
        %v4585 = vpack.c.bf16 %v4272, %v4272
        %v4586 = vpack.c.bf16 %v4274, %v4273
        %v4587 = vpack.c.bf16 %v4275, %v4275
        %v4588 = vpack.c.bf16 %v4277, %v4276
        %v4589 = vpack.c.bf16 %v4278, %v4278
        %v4590 = vpack.c.bf16 %v4280, %v4279
        %v4591 = vpack.c.bf16 %v4281, %v4281
        %v4592 = vpack.c.bf16 %v4283, %v4282
        %v4593 = vpack.c.bf16 %v4284, %v4284
        %v4594 = vpack.c.bf16 %v4286, %v4285
        %v4595 = vpack.c.bf16 %v4287, %v4287
        %v4596 = vpack.c.bf16 %v4289, %v4288
        %v4597 = vpack.c.bf16 %v4290, %v4290
        %v4598 = vpack.c.bf16 %v4292, %v4291
        %v4599 = vpack.c.bf16 %v4293, %v4293
        %v4600 = vpack.c.bf16 %v4295, %v4294
        %v4601 = vpack.c.bf16 %v4296, %v4296
        %v4602 = vpack.c.bf16 %v4298, %v4297
        %v4603 = vpack.c.bf16 %v4299, %v4299
        %v4604 = vpack.c.bf16 %v4301, %v4300
        %v4605 = vpack.c.bf16 %v4302, %v4302
        %v4606 = vpack.c.bf16 %v4304, %v4303
        %v4607 = vpack.c.bf16 %v4305, %v4305
        %v4608 = vpack.c.bf16 %v4307, %v4306
        %v4609 = vpack.c.bf16 %v4308, %v4308
        %v4610 = vpack.c.bf16 %v4310, %v4309
        %v4611 = vpack.c.bf16 %v4311, %v4311
        %v4612 = vpack.c.bf16 %v4313, %v4312
        %v4613 = vpack.c.bf16 %v4314, %v4314
        %v4614 = vpack.c.bf16 %v4316, %v4315
        %v4615 = vpack.c.bf16 %v4317, %v4317
        %v4616 = vpack.c.bf16 %v4319, %v4318
        %v4617 = vpack.c.bf16 %v4320, %v4320
        %v4618 = vpack.c.bf16 %v4322, %v4321
        %v4619 = vpack.c.bf16 %v4323, %v4323
        %v4620 = vpack.c.bf16 %v4325, %v4324
        %v4621 = vpack.c.bf16 %v4326, %v4326
        %v4622 = vpack.c.bf16 %v4328, %v4327
        %v4623 = vpack.c.bf16 %v4329, %v4329
        %v4624 = vpack.c.bf16 %v4331, %v4330
        %v4625 = vpack.c.bf16 %v4332, %v4332
        %v4626 = vpack.c.bf16 %v4334, %v4333
        %v4627 = vpack.c.bf16 %v4335, %v4335
        %v4628 = vpack.c.bf16 %v4337, %v4336
        %v4629 = vpack.c.bf16 %v4338, %v4338
        %v4630 = vpack.c.bf16 %v4340, %v4339
        %v4631 = vpack.c.bf16 %v4341, %v4341
        %v4632 = vpack.c.bf16 %v4343, %v4342
        %v4633 = vpack.c.bf16 %v4344, %v4344
        %v4634 = vpack.c.bf16 %v4346, %v4345
        %v4635 = vpack.c.bf16 %v4347, %v4347
        %v4636 = vpack.c.bf16 %v4349, %v4348
        %v4637 = vpack.c.bf16 %v4350, %v4350
        %v4638 = vpack.c.bf16 %v4352, %v4351
        %v4639 = vpack.c.bf16 %v4353, %v4353
        %v4640 = vpack.c.bf16 %v4355, %v4354
        %v4641 = vpack.c.bf16 %v4356, %v4356
        %v4642 = vpack.c.bf16 %v4358, %v4357
        %v4643 = vpack.c.bf16 %v4359, %v4359
        %v4644 = vpack.c.bf16 %v4361, %v4360
        %v4645 = vpack.c.bf16 %v4362, %v4362
        %v4646 = vpack.c.bf16 %v4364, %v4363
        %v4647 = vpack.c.bf16 %v4365, %v4365
        %v4648 = vpack.c.bf16 %v4367, %v4366
        %v4649 = vpack.c.bf16 %v4368, %v4368
        %v4650 = vpack.c.bf16 %v4370, %v4369
        %v4651 = vpack.c.bf16 %v4371, %v4371
        %v4652 = vpack.c.bf16 %v4373, %v4372
        %v4653 = vpack.c.bf16 %v4374, %v4374
        %v4654 = vpack.c.bf16 %v4376, %v4375
        %v4655 = vpack.c.bf16 %v4377, %v4377
        %v4656 = vpack.c.bf16 %v4379, %v4378
        %v4657 = vpack.c.bf16 %v4380, %v4380
        %v4658 = vpack.c.bf16 %v4382, %v4381
        %v4659 = vpack.c.bf16 %v4383, %v4383
        %v4660 = vpack.c.bf16 %v4385, %v4384
        %v4661 = vpack.c.bf16 %v4386, %v4386
        %v4662 = vpack.c.bf16 %v4388, %v4387
        %v4663 = vpack.c.bf16 %v4389, %v4389
        %v4664 = vpack.c.bf16 %v4391, %v4390
        %v4665 = vpack.c.bf16 %v4392, %v4392
        %v4666 = vpack.c.bf16 %v4394, %v4393
        %v4667 = vpack.c.bf16 %v4395, %v4395
        %v4668 = vpack.c.bf16 %v4397, %v4396
        %v4669 = vpack.c.bf16 %v4398, %v4398
        %v4670 = vpack.c.bf16 %v4400, %v4399
        %v4671 = vpack.c.bf16 %v4401, %v4401
        %v4672 = vpack.c.bf16 %v4403, %v4402
        %v4673 = vpack.c.bf16 %v4404, %v4404
        %v4674 = vpack.c.bf16 %v4406, %v4405
        %v4675 = vpack.c.bf16 %v4407, %v4407
        %v4676 = vpack.c.bf16 %v4409, %v4408
        %v4677 = vpack.c.bf16 %v4410, %v4410
        %v4678 = vpack.c.bf16 %v4412, %v4411
        %v4679 = vpack.c.bf16 %v4413, %v4413
        %v4680 = vpack.c.bf16 %v4415, %v4414
        %v4681 = vpack.c.bf16 %v4416, %v4416
        %v4682 = vpack.c.bf16 %v4418, %v4417
        %v4683 = vpack.c.bf16 %v4419, %v4419
        %v4684 = vpack.c.bf16 %v4421, %v4420
        %v4685 = vpack.c.bf16 %v4422, %v4422
        %v4686 = vpack.c.bf16 %v4424, %v4423
        %v4687 = vpack.c.bf16 %v4425, %v4425
        %v4688 = vpack.c.bf16 %v4427, %v4426
        %v4689 = vpack.c.bf16 %v4428, %v4428
        %v4690 = vpack.c.bf16 %v4430, %v4429
        %v4691 = vpack.c.bf16 %v4431, %v4431
        %v4692 = vpack.c.bf16 %v4433, %v4432
        %v4693 = vpack.c.bf16 %v4434, %v4434
        %v4694 = vpack.c.bf16 %v4436, %v4435
        %v4695 = vpack.c.bf16 %v4437, %v4437
        %v4696 = vpack.c.bf16 %v4439, %v4438
        %v4697 = vpack.c.bf16 %v4440, %v4440
        %v4698 = vpack.c.bf16 %v4442, %v4441
        %v4699 = vpack.c.bf16 %v4443, %v4443
        %v4700 = vpack.c.bf16 %v4445, %v4444
        %v4701 = vpack.c.bf16 %v4446, %v4446
        %v4702 = vpack.c.bf16 %v4448, %v4447
        %v4703 = vpack.c.bf16 %v4449, %v4449
        %v4704 = vunpack.c.l.bf16 %v4450
        %v4705 = vunpack.c.h.bf16 %v4450
        %v4706 = vunpack.c.l.bf16 %v4451
        %v4707 = vunpack.c.l.bf16 %v4452
        %v4708 = vunpack.c.h.bf16 %v4452
        %v4709 = vunpack.c.l.bf16 %v4453
        %v4710 = vunpack.c.l.bf16 %v4454
        %v4711 = vunpack.c.h.bf16 %v4454
        %v4712 = vunpack.c.l.bf16 %v4455
        %v4713 = vunpack.c.l.bf16 %v4456
        %v4714 = vunpack.c.h.bf16 %v4456
        %v4715 = vunpack.c.l.bf16 %v4457
        %v4716 = vunpack.c.l.bf16 %v4458
        %v4717 = vunpack.c.h.bf16 %v4458
        %v4718 = vunpack.c.l.bf16 %v4459
        %v4719 = vunpack.c.l.bf16 %v4460
        %v4720 = vunpack.c.h.bf16 %v4460
        %v4721 = vunpack.c.l.bf16 %v4461
        %v4722 = vunpack.c.l.bf16 %v4462
        %v4723 = vunpack.c.h.bf16 %v4462
        %v4724 = vunpack.c.l.bf16 %v4463
        %v4725 = vunpack.c.l.bf16 %v4464
        %v4726 = vunpack.c.h.bf16 %v4464
        %v4727 = vunpack.c.l.bf16 %v4465
        %v4728 = vunpack.c.l.bf16 %v4466
        %v4729 = vunpack.c.h.bf16 %v4466
        %v4730 = vunpack.c.l.bf16 %v4467
        %v4731 = vunpack.c.l.bf16 %v4468
        %v4732 = vunpack.c.h.bf16 %v4468
        %v4733 = vunpack.c.l.bf16 %v4469
        %v4734 = vunpack.c.l.bf16 %v4470
        %v4735 = vunpack.c.h.bf16 %v4470
        %v4736 = vunpack.c.l.bf16 %v4471
        %v4737 = vunpack.c.l.bf16 %v4472
        %v4738 = vunpack.c.h.bf16 %v4472
        %v4739 = vunpack.c.l.bf16 %v4473
        %v4740 = vunpack.c.l.bf16 %v4474
        %v4741 = vunpack.c.h.bf16 %v4474
        %v4742 = vunpack.c.l.bf16 %v4475
        %v4743 = vunpack.c.l.bf16 %v4476
        %v4744 = vunpack.c.h.bf16 %v4476
        %v4745 = vunpack.c.l.bf16 %v4477
        %v4746 = vunpack.c.l.bf16 %v4478
        %v4747 = vunpack.c.h.bf16 %v4478
        %v4748 = vunpack.c.l.bf16 %v4479
        %v4749 = vunpack.c.l.bf16 %v4480
        %v4750 = vunpack.c.h.bf16 %v4480
        %v4751 = vunpack.c.l.bf16 %v4481
        %v4752 = vunpack.c.l.bf16 %v4482
        %v4753 = vunpack.c.h.bf16 %v4482
        %v4754 = vunpack.c.l.bf16 %v4483
        %v4755 = vunpack.c.l.bf16 %v4484
        %v4756 = vunpack.c.h.bf16 %v4484
        %v4757 = vunpack.c.l.bf16 %v4485
        %v4758 = vunpack.c.l.bf16 %v4486
        %v4759 = vunpack.c.h.bf16 %v4486
        %v4760 = vunpack.c.l.bf16 %v4487
        %v4761 = vunpack.c.l.bf16 %v4488
        %v4762 = vunpack.c.h.bf16 %v4488
        %v4763 = vunpack.c.l.bf16 %v4489
        %v4764 = vunpack.c.l.bf16 %v4490
        %v4765 = vunpack.c.h.bf16 %v4490
        %v4766 = vunpack.c.l.bf16 %v4491
        %v4767 = vunpack.c.l.bf16 %v4492
        %v4768 = vunpack.c.h.bf16 %v4492
        %v4769 = vunpack.c.l.bf16 %v4493
        %v4770 = vunpack.c.l.bf16 %v4494
        %v4771 = vunpack.c.h.bf16 %v4494
        %v4772 = vunpack.c.l.bf16 %v4495
        %v4773 = vunpack.c.l.bf16 %v4496
        %v4774 = vunpack.c.h.bf16 %v4496
        %v4775 = vunpack.c.l.bf16 %v4497
        %v4776 = vunpack.c.l.bf16 %v4498
        %v4777 = vunpack.c.h.bf16 %v4498
        %v4778 = vunpack.c.l.bf16 %v4499
        %v4779 = vunpack.c.l.bf16 %v4500
        %v4780 = vunpack.c.h.bf16 %v4500
        %v4781 = vunpack.c.l.bf16 %v4501
        %v4782 = vunpack.c.l.bf16 %v4502
        %v4783 = vunpack.c.h.bf16 %v4502
        %v4784 = vunpack.c.l.bf16 %v4503
        %v4785 = vunpack.c.l.bf16 %v4504
        %v4786 = vunpack.c.h.bf16 %v4504
        %v4787 = vunpack.c.l.bf16 %v4505
        %v4788 = vunpack.c.l.bf16 %v4506
        %v4789 = vunpack.c.h.bf16 %v4506
        %v4790 = vunpack.c.l.bf16 %v4507
        %v4791 = vunpack.c.l.bf16 %v4508
        %v4792 = vunpack.c.h.bf16 %v4508
        %v4793 = vunpack.c.l.bf16 %v4509
        %v4794 = vunpack.c.l.bf16 %v4510
        %v4795 = vunpack.c.h.bf16 %v4510
        %v4796 = vunpack.c.l.bf16 %v4511
        %v4797 = vunpack.c.l.bf16 %v4512
        %v4798 = vunpack.c.h.bf16 %v4512
        %v4799 = vunpack.c.l.bf16 %v4513
        %v4800 = vunpack.c.l.bf16 %v4514
        %v4801 = vunpack.c.h.bf16 %v4514
        %v4802 = vunpack.c.l.bf16 %v4515
        %v4803 = vunpack.c.l.bf16 %v4516
        %v4804 = vunpack.c.h.bf16 %v4516
        %v4805 = vunpack.c.l.bf16 %v4517
        %v4806 = vunpack.c.l.bf16 %v4518
        %v4807 = vunpack.c.h.bf16 %v4518
        %v4808 = vunpack.c.l.bf16 %v4519
        %v4809 = vunpack.c.l.bf16 %v4520
        %v4810 = vunpack.c.h.bf16 %v4520
        %v4811 = vunpack.c.l.bf16 %v4521
        %v4812 = vunpack.c.l.bf16 %v4522
        %v4813 = vunpack.c.h.bf16 %v4522
        %v4814 = vunpack.c.l.bf16 %v4523
        %v4815 = vunpack.c.l.bf16 %v4524
        %v4816 = vunpack.c.h.bf16 %v4524
        %v4817 = vunpack.c.l.bf16 %v4525
        %v4818 = vunpack.c.l.bf16 %v4526
        %v4819 = vunpack.c.h.bf16 %v4526
        %v4820 = vunpack.c.l.bf16 %v4527
        %v4821 = vunpack.c.l.bf16 %v4528
        %v4822 = vunpack.c.h.bf16 %v4528
        %v4823 = vunpack.c.l.bf16 %v4529
        %v4824 = vunpack.c.l.bf16 %v4530
        %v4825 = vunpack.c.h.bf16 %v4530
        %v4826 = vunpack.c.l.bf16 %v4531
        %v4827 = vunpack.c.l.bf16 %v4532
        %v4828 = vunpack.c.h.bf16 %v4532
        %v4829 = vunpack.c.l.bf16 %v4533
        %v4830 = vunpack.c.l.bf16 %v4534
        %v4831 = vunpack.c.h.bf16 %v4534
        %v4832 = vunpack.c.l.bf16 %v4535
        %v4833 = vunpack.c.l.bf16 %v4536
        %v4834 = vunpack.c.h.bf16 %v4536
        %v4835 = vunpack.c.l.bf16 %v4537
        %v4836 = vunpack.c.l.bf16 %v4538
        %v4837 = vunpack.c.h.bf16 %v4538
        %v4838 = vunpack.c.l.bf16 %v4539
        %v4839 = vunpack.c.l.bf16 %v4540
        %v4840 = vunpack.c.h.bf16 %v4540
        %v4841 = vunpack.c.l.bf16 %v4541
        %v4842 = vunpack.c.l.bf16 %v4542
        %v4843 = vunpack.c.h.bf16 %v4542
        %v4844 = vunpack.c.l.bf16 %v4543
        %v4845 = vunpack.c.l.bf16 %v4544
        %v4846 = vunpack.c.h.bf16 %v4544
        %v4847 = vunpack.c.l.bf16 %v4545
        %v4848 = vunpack.c.l.bf16 %v4546
        %v4849 = vunpack.c.h.bf16 %v4546
        %v4850 = vunpack.c.l.bf16 %v4547
        %v4851 = vunpack.c.l.bf16 %v4548
        %v4852 = vunpack.c.h.bf16 %v4548
        %v4853 = vunpack.c.l.bf16 %v4549
        %v4854 = vunpack.c.l.bf16 %v4550
        %v4855 = vunpack.c.h.bf16 %v4550
        %v4856 = vunpack.c.l.bf16 %v4551
        %v4857 = vunpack.c.l.bf16 %v4552
        %v4858 = vunpack.c.h.bf16 %v4552
        %v4859 = vunpack.c.l.bf16 %v4553
        %v4860 = vunpack.c.l.bf16 %v4554
        %v4861 = vunpack.c.h.bf16 %v4554
        %v4862 = vunpack.c.l.bf16 %v4555
        %v4863 = vunpack.c.l.bf16 %v4556
        %v4864 = vunpack.c.h.bf16 %v4556
        %v4865 = vunpack.c.l.bf16 %v4557
        %v4866 = vunpack.c.l.bf16 %v4558
        %v4867 = vunpack.c.h.bf16 %v4558
        %v4868 = vunpack.c.l.bf16 %v4559
        %v4869 = vunpack.c.l.bf16 %v4560
        %v4870 = vunpack.c.h.bf16 %v4560
        %v4871 = vunpack.c.l.bf16 %v4561
        %v4872 = vunpack.c.l.bf16 %v4562
        %v4873 = vunpack.c.h.bf16 %v4562
        %v4874 = vunpack.c.l.bf16 %v4563
        %v4875 = vunpack.c.l.bf16 %v4564
        %v4876 = vunpack.c.h.bf16 %v4564
        %v4877 = vunpack.c.l.bf16 %v4565
        %v4878 = vunpack.c.l.bf16 %v4566
        %v4879 = vunpack.c.h.bf16 %v4566
        %v4880 = vunpack.c.l.bf16 %v4567
        %v4881 = vunpack.c.l.bf16 %v4568
        %v4882 = vunpack.c.h.bf16 %v4568
        %v4883 = vunpack.c.l.bf16 %v4569
        %v4884 = vunpack.c.l.bf16 %v4570
        %v4885 = vunpack.c.h.bf16 %v4570
        %v4886 = vunpack.c.l.bf16 %v4571
        %v4887 = vunpack.c.l.bf16 %v4572
        %v4888 = vunpack.c.h.bf16 %v4572
        %v4889 = vunpack.c.l.bf16 %v4573
        %v4890 = vunpack.c.l.bf16 %v4574
        %v4891 = vunpack.c.h.bf16 %v4574
        %v4892 = vunpack.c.l.bf16 %v4575
        %v4893 = vunpack.c.l.bf16 %v4576
        %v4894 = vunpack.c.h.bf16 %v4576
        %v4895 = vunpack.c.l.bf16 %v4577
        %v4896 = vunpack.c.l.bf16 %v4578
        %v4897 = vunpack.c.h.bf16 %v4578
        %v4898 = vunpack.c.l.bf16 %v4579
        %v4899 = vunpack.c.l.bf16 %v4580
        %v4900 = vunpack.c.h.bf16 %v4580
        %v4901 = vunpack.c.l.bf16 %v4581
        %v4902 = vunpack.c.l.bf16 %v4582
        %v4903 = vunpack.c.h.bf16 %v4582
        %v4904 = vunpack.c.l.bf16 %v4583
        %v4905 = vunpack.c.l.bf16 %v4584
        %v4906 = vunpack.c.h.bf16 %v4584
        %v4907 = vunpack.c.l.bf16 %v4585
        %v4908 = vunpack.c.l.bf16 %v4586
        %v4909 = vunpack.c.h.bf16 %v4586
        %v4910 = vunpack.c.l.bf16 %v4587
        %v4911 = vunpack.c.l.bf16 %v4588
        %v4912 = vunpack.c.h.bf16 %v4588
        %v4913 = vunpack.c.l.bf16 %v4589
        %v4914 = vunpack.c.l.bf16 %v4590
        %v4915 = vunpack.c.h.bf16 %v4590
        %v4916 = vunpack.c.l.bf16 %v4591
        %v4917 = vunpack.c.l.bf16 %v4592
        %v4918 = vunpack.c.h.bf16 %v4592
        %v4919 = vunpack.c.l.bf16 %v4593
        %v4920 = vunpack.c.l.bf16 %v4594
        %v4921 = vunpack.c.h.bf16 %v4594
        %v4922 = vunpack.c.l.bf16 %v4595
        %v4923 = vunpack.c.l.bf16 %v4596
        %v4924 = vunpack.c.h.bf16 %v4596
        %v4925 = vunpack.c.l.bf16 %v4597
        %v4926 = vunpack.c.l.bf16 %v4598
        %v4927 = vunpack.c.h.bf16 %v4598
        %v4928 = vunpack.c.l.bf16 %v4599
        %v4929 = vunpack.c.l.bf16 %v4600
        %v4930 = vunpack.c.h.bf16 %v4600
        %v4931 = vunpack.c.l.bf16 %v4601
        %v4932 = vunpack.c.l.bf16 %v4602
        %v4933 = vunpack.c.h.bf16 %v4602
        %v4934 = vunpack.c.l.bf16 %v4603
        %v4935 = vunpack.c.l.bf16 %v4604
        %v4936 = vunpack.c.h.bf16 %v4604
        %v4937 = vunpack.c.l.bf16 %v4605
        %v4938 = vunpack.c.l.bf16 %v4606
        %v4939 = vunpack.c.h.bf16 %v4606
        %v4940 = vunpack.c.l.bf16 %v4607
        %v4941 = vunpack.c.l.bf16 %v4608
        %v4942 = vunpack.c.h.bf16 %v4608
        %v4943 = vunpack.c.l.bf16 %v4609
        %v4944 = vunpack.c.l.bf16 %v4610
        %v4945 = vunpack.c.h.bf16 %v4610
        %v4946 = vunpack.c.l.bf16 %v4611
        %v4947 = vunpack.c.l.bf16 %v4612
        %v4948 = vunpack.c.h.bf16 %v4612
        %v4949 = vunpack.c.l.bf16 %v4613
        %v4950 = vunpack.c.l.bf16 %v4614
        %v4951 = vunpack.c.h.bf16 %v4614
        %v4952 = vunpack.c.l.bf16 %v4615
        %v4953 = vunpack.c.l.bf16 %v4616
        %v4954 = vunpack.c.h.bf16 %v4616
        %v4955 = vunpack.c.l.bf16 %v4617
        %v4956 = vunpack.c.l.bf16 %v4618
        %v4957 = vunpack.c.h.bf16 %v4618
        %v4958 = vunpack.c.l.bf16 %v4619
        %v4959 = vunpack.c.l.bf16 %v4620
        %v4960 = vunpack.c.h.bf16 %v4620
        %v4961 = vunpack.c.l.bf16 %v4621
        %v4962 = vunpack.c.l.bf16 %v4622
        %v4963 = vunpack.c.h.bf16 %v4622
        %v4964 = vunpack.c.l.bf16 %v4623
        %v4965 = vunpack.c.l.bf16 %v4624
        %v4966 = vunpack.c.h.bf16 %v4624
        %v4967 = vunpack.c.l.bf16 %v4625
        %v4968 = vunpack.c.l.bf16 %v4626
        %v4969 = vunpack.c.h.bf16 %v4626
        %v4970 = vunpack.c.l.bf16 %v4627
        %v4971 = vunpack.c.l.bf16 %v4628
        %v4972 = vunpack.c.h.bf16 %v4628
        %v4973 = vunpack.c.l.bf16 %v4629
        %v4974 = vunpack.c.l.bf16 %v4630
        %v4975 = vunpack.c.h.bf16 %v4630
        %v4976 = vunpack.c.l.bf16 %v4631
        %v4977 = vunpack.c.l.bf16 %v4632
        %v4978 = vunpack.c.h.bf16 %v4632
        %v4979 = vunpack.c.l.bf16 %v4633
        %v4980 = vunpack.c.l.bf16 %v4634
        %v4981 = vunpack.c.h.bf16 %v4634
        %v4982 = vunpack.c.l.bf16 %v4635
        %v4983 = vunpack.c.l.bf16 %v4636
        %v4984 = vunpack.c.h.bf16 %v4636
        %v4985 = vunpack.c.l.bf16 %v4637
        %v4986 = vunpack.c.l.bf16 %v4638
        %v4987 = vunpack.c.h.bf16 %v4638
        %v4988 = vunpack.c.l.bf16 %v4639
        %v4989 = vunpack.c.l.bf16 %v4640
        %v4990 = vunpack.c.h.bf16 %v4640
        %v4991 = vunpack.c.l.bf16 %v4641
        %v4992 = vunpack.c.l.bf16 %v4642
        %v4993 = vunpack.c.h.bf16 %v4642
        %v4994 = vunpack.c.l.bf16 %v4643
        %v4995 = vunpack.c.l.bf16 %v4644
        %v4996 = vunpack.c.h.bf16 %v4644
        %v4997 = vunpack.c.l.bf16 %v4645
        %v4998 = vunpack.c.l.bf16 %v4646
        %v4999 = vunpack.c.h.bf16 %v4646
        %v5000 = vunpack.c.l.bf16 %v4647
        %v5001 = vunpack.c.l.bf16 %v4648
        %v5002 = vunpack.c.h.bf16 %v4648
        %v5003 = vunpack.c.l.bf16 %v4649
        %v5004 = vunpack.c.l.bf16 %v4650
        %v5005 = vunpack.c.h.bf16 %v4650
        %v5006 = vunpack.c.l.bf16 %v4651
        %v5007 = vunpack.c.l.bf16 %v4652
        %v5008 = vunpack.c.h.bf16 %v4652
        %v5009 = vunpack.c.l.bf16 %v4653
        %v5010 = vunpack.c.l.bf16 %v4654
        %v5011 = vunpack.c.h.bf16 %v4654
        %v5012 = vunpack.c.l.bf16 %v4655
        %v5013 = vunpack.c.l.bf16 %v4656
        %v5014 = vunpack.c.h.bf16 %v4656
        %v5015 = vunpack.c.l.bf16 %v4657
        %v5016 = vunpack.c.l.bf16 %v4658
        %v5017 = vunpack.c.h.bf16 %v4658
        %v5018 = vunpack.c.l.bf16 %v4659
        %v5019 = vunpack.c.l.bf16 %v4660
        %v5020 = vunpack.c.h.bf16 %v4660
        %v5021 = vunpack.c.l.bf16 %v4661
        %v5022 = vunpack.c.l.bf16 %v4662
        %v5023 = vunpack.c.h.bf16 %v4662
        %v5024 = vunpack.c.l.bf16 %v4663
        %v5025 = vunpack.c.l.bf16 %v4664
        %v5026 = vunpack.c.h.bf16 %v4664
        %v5027 = vunpack.c.l.bf16 %v4665
        %v5028 = vunpack.c.l.bf16 %v4666
        %v5029 = vunpack.c.h.bf16 %v4666
        %v5030 = vunpack.c.l.bf16 %v4667
        %v5031 = vunpack.c.l.bf16 %v4668
        %v5032 = vunpack.c.h.bf16 %v4668
        %v5033 = vunpack.c.l.bf16 %v4669
        %v5034 = vunpack.c.l.bf16 %v4670
        %v5035 = vunpack.c.h.bf16 %v4670
        %v5036 = vunpack.c.l.bf16 %v4671
        %v5037 = vunpack.c.l.bf16 %v4672
        %v5038 = vunpack.c.h.bf16 %v4672
        %v5039 = vunpack.c.l.bf16 %v4673
        %v5040 = vunpack.c.l.bf16 %v4674
        %v5041 = vunpack.c.h.bf16 %v4674
        %v5042 = vunpack.c.l.bf16 %v4675
        %v5043 = vunpack.c.l.bf16 %v4676
        %v5044 = vunpack.c.h.bf16 %v4676
        %v5045 = vunpack.c.l.bf16 %v4677
        %v5046 = vunpack.c.l.bf16 %v4678
        %v5047 = vunpack.c.h.bf16 %v4678
        %v5048 = vunpack.c.l.bf16 %v4679
        %v5049 = vunpack.c.l.bf16 %v4680
        %v5050 = vunpack.c.h.bf16 %v4680
        %v5051 = vunpack.c.l.bf16 %v4681
        %v5052 = vunpack.c.l.bf16 %v4682
        %v5053 = vunpack.c.h.bf16 %v4682
        %v5054 = vunpack.c.l.bf16 %v4683
        %v5055 = vunpack.c.l.bf16 %v4684
        %v5056 = vunpack.c.h.bf16 %v4684
        %v5057 = vunpack.c.l.bf16 %v4685
        %v5058 = vunpack.c.l.bf16 %v4686
        %v5059 = vunpack.c.h.bf16 %v4686
        %v5060 = vunpack.c.l.bf16 %v4687
        %v5061 = vunpack.c.l.bf16 %v4688
        %v5062 = vunpack.c.h.bf16 %v4688
        %v5063 = vunpack.c.l.bf16 %v4689
        %v5064 = vunpack.c.l.bf16 %v4690
        %v5065 = vunpack.c.h.bf16 %v4690
        %v5066 = vunpack.c.l.bf16 %v4691
        %v5067 = vunpack.c.l.bf16 %v4692
        %v5068 = vunpack.c.h.bf16 %v4692
        %v5069 = vunpack.c.l.bf16 %v4693
        %v5070 = vunpack.c.l.bf16 %v4694
        %v5071 = vunpack.c.h.bf16 %v4694
        %v5072 = vunpack.c.l.bf16 %v4695
        %v5073 = vunpack.c.l.bf16 %v4696
        %v5074 = vunpack.c.h.bf16 %v4696
        %v5075 = vunpack.c.l.bf16 %v4697
        %v5076 = vunpack.c.l.bf16 %v4698
        %v5077 = vunpack.c.h.bf16 %v4698
        %v5078 = vunpack.c.l.bf16 %v4699
        %v5079 = vunpack.c.l.bf16 %v4700
        %v5080 = vunpack.c.h.bf16 %v4700
        %v5081 = vunpack.c.l.bf16 %v4701
        %v5082 = vunpack.c.l.bf16 %v4702
        %v5083 = vunpack.c.h.bf16 %v4702
        %v5084 = vunpack.c.l.bf16 %v4703
        %v5085 = vmax.f32 %v4704, 0.0
        %v5086 = vmax.f32 %v4705, 0.0
        %v5087 = vmax.f32 %v4706, 0.0
        %v5088 = vmax.f32 %v4707, 0.0
        %v5089 = vmax.f32 %v4708, 0.0
        %v5090 = vmax.f32 %v4709, 0.0
        %v5091 = vmax.f32 %v4710, 0.0
        %v5092 = vmax.f32 %v4711, 0.0
        %v5093 = vmax.f32 %v4712, 0.0
        %v5094 = vmax.f32 %v4713, 0.0
        %v5095 = vmax.f32 %v4714, 0.0
        %v5096 = vmax.f32 %v4715, 0.0
        %v5097 = vmax.f32 %v4716, 0.0
        %v5098 = vmax.f32 %v4717, 0.0
        %v5099 = vmax.f32 %v4718, 0.0
        %v5100 = vmax.f32 %v4719, 0.0
        %v5101 = vmax.f32 %v4720, 0.0
        %v5102 = vmax.f32 %v4721, 0.0
        %v5103 = vmax.f32 %v4722, 0.0
        %v5104 = vmax.f32 %v4723, 0.0
        %v5105 = vmax.f32 %v4724, 0.0
        %v5106 = vmax.f32 %v4725, 0.0
        %v5107 = vmax.f32 %v4726, 0.0
        %v5108 = vmax.f32 %v4727, 0.0
        %v5109 = vmax.f32 %v4728, 0.0
        %v5110 = vmax.f32 %v4729, 0.0
        %v5111 = vmax.f32 %v4730, 0.0
        %v5112 = vmax.f32 %v4731, 0.0
        %v5113 = vmax.f32 %v4732, 0.0
        %v5114 = vmax.f32 %v4733, 0.0
        %v5115 = vmax.f32 %v4734, 0.0
        %v5116 = vmax.f32 %v4735, 0.0
        %v5117 = vmax.f32 %v4736, 0.0
        %v5118 = vmax.f32 %v4737, 0.0
        %v5119 = vmax.f32 %v4738, 0.0
        %v5120 = vmax.f32 %v4739, 0.0
        %v5121 = vmax.f32 %v4740, 0.0
        %v5122 = vmax.f32 %v4741, 0.0
        %v5123 = vmax.f32 %v4742, 0.0
        %v5124 = vmax.f32 %v4743, 0.0
        %v5125 = vmax.f32 %v4744, 0.0
        %v5126 = vmax.f32 %v4745, 0.0
        %v5127 = vmax.f32 %v4746, 0.0
        %v5128 = vmax.f32 %v4747, 0.0
        %v5129 = vmax.f32 %v4748, 0.0
        %v5130 = vmax.f32 %v4749, 0.0
        %v5131 = vmax.f32 %v4750, 0.0
        %v5132 = vmax.f32 %v4751, 0.0
        %v5133 = vmax.f32 %v4752, 0.0
        %v5134 = vmax.f32 %v4753, 0.0
        %v5135 = vmax.f32 %v4754, 0.0
        %v5136 = vmax.f32 %v4755, 0.0
        %v5137 = vmax.f32 %v4756, 0.0
        %v5138 = vmax.f32 %v4757, 0.0
        %v5139 = vmax.f32 %v4758, 0.0
        %v5140 = vmax.f32 %v4759, 0.0
        %v5141 = vmax.f32 %v4760, 0.0
        %v5142 = vmax.f32 %v4761, 0.0
        %v5143 = vmax.f32 %v4762, 0.0
        %v5144 = vmax.f32 %v4763, 0.0
        %v5145 = vmax.f32 %v4764, 0.0
        %v5146 = vmax.f32 %v4765, 0.0
        %v5147 = vmax.f32 %v4766, 0.0
        %v5148 = vmax.f32 %v4767, 0.0
        %v5149 = vmax.f32 %v4768, 0.0
        %v5150 = vmax.f32 %v4769, 0.0
        %v5151 = vmax.f32 %v4770, 0.0
        %v5152 = vmax.f32 %v4771, 0.0
        %v5153 = vmax.f32 %v4772, 0.0
        %v5154 = vmax.f32 %v4773, 0.0
        %v5155 = vmax.f32 %v4774, 0.0
        %v5156 = vmax.f32 %v4775, 0.0
        %v5157 = vmax.f32 %v4776, 0.0
        %v5158 = vmax.f32 %v4777, 0.0
        %v5159 = vmax.f32 %v4778, 0.0
        %v5160 = vmax.f32 %v4779, 0.0
        %v5161 = vmax.f32 %v4780, 0.0
        %v5162 = vmax.f32 %v4781, 0.0
        %v5163 = vmax.f32 %v4782, 0.0
        %v5164 = vmax.f32 %v4783, 0.0
        %v5165 = vmax.f32 %v4784, 0.0
        %v5166 = vmax.f32 %v4785, 0.0
        %v5167 = vmax.f32 %v4786, 0.0
        %v5168 = vmax.f32 %v4787, 0.0
        %v5169 = vmax.f32 %v4788, 0.0
        %v5170 = vmax.f32 %v4789, 0.0
        %v5171 = vmax.f32 %v4790, 0.0
        %v5172 = vmax.f32 %v4791, 0.0
        %v5173 = vmax.f32 %v4792, 0.0
        %v5174 = vmax.f32 %v4793, 0.0
        %v5175 = vmax.f32 %v4794, 0.0
        %v5176 = vmax.f32 %v4795, 0.0
        %v5177 = vmax.f32 %v4796, 0.0
        %v5178 = vmax.f32 %v4797, 0.0
        %v5179 = vmax.f32 %v4798, 0.0
        %v5180 = vmax.f32 %v4799, 0.0
        %v5181 = vmax.f32 %v4800, 0.0
        %v5182 = vmax.f32 %v4801, 0.0
        %v5183 = vmax.f32 %v4802, 0.0
        %v5184 = vmax.f32 %v4803, 0.0
        %v5185 = vmax.f32 %v4804, 0.0
        %v5186 = vmax.f32 %v4805, 0.0
        %v5187 = vmax.f32 %v4806, 0.0
        %v5188 = vmax.f32 %v4807, 0.0
        %v5189 = vmax.f32 %v4808, 0.0
        %v5190 = vmax.f32 %v4809, 0.0
        %v5191 = vmax.f32 %v4810, 0.0
        %v5192 = vmax.f32 %v4811, 0.0
        %v5193 = vmax.f32 %v4812, 0.0
        %v5194 = vmax.f32 %v4813, 0.0
        %v5195 = vmax.f32 %v4814, 0.0
        %v5196 = vmax.f32 %v4815, 0.0
        %v5197 = vmax.f32 %v4816, 0.0
        %v5198 = vmax.f32 %v4817, 0.0
        %v5199 = vmax.f32 %v4818, 0.0
        %v5200 = vmax.f32 %v4819, 0.0
        %v5201 = vmax.f32 %v4820, 0.0
        %v5202 = vmax.f32 %v4821, 0.0
        %v5203 = vmax.f32 %v4822, 0.0
        %v5204 = vmax.f32 %v4823, 0.0
        %v5205 = vmax.f32 %v4824, 0.0
        %v5206 = vmax.f32 %v4825, 0.0
        %v5207 = vmax.f32 %v4826, 0.0
        %v5208 = vmax.f32 %v4827, 0.0
        %v5209 = vmax.f32 %v4828, 0.0
        %v5210 = vmax.f32 %v4829, 0.0
        %v5211 = vmax.f32 %v4830, 0.0
        %v5212 = vmax.f32 %v4831, 0.0
        %v5213 = vmax.f32 %v4832, 0.0
        %v5214 = vmax.f32 %v4833, 0.0
        %v5215 = vmax.f32 %v4834, 0.0
        %v5216 = vmax.f32 %v4835, 0.0
        %v5217 = vmax.f32 %v4836, 0.0
        %v5218 = vmax.f32 %v4837, 0.0
        %v5219 = vmax.f32 %v4838, 0.0
        %v5220 = vmax.f32 %v4839, 0.0
        %v5221 = vmax.f32 %v4840, 0.0
        %v5222 = vmax.f32 %v4841, 0.0
        %v5223 = vmax.f32 %v4842, 0.0
        %v5224 = vmax.f32 %v4843, 0.0
        %v5225 = vmax.f32 %v4844, 0.0
        %v5226 = vmax.f32 %v4845, 0.0
        %v5227 = vmax.f32 %v4846, 0.0
        %v5228 = vmax.f32 %v4847, 0.0
        %v5229 = vmax.f32 %v4848, 0.0
        %v5230 = vmax.f32 %v4849, 0.0
        %v5231 = vmax.f32 %v4850, 0.0
        %v5232 = vmax.f32 %v4851, 0.0
        %v5233 = vmax.f32 %v4852, 0.0
        %v5234 = vmax.f32 %v4853, 0.0
        %v5235 = vmax.f32 %v4854, 0.0
        %v5236 = vmax.f32 %v4855, 0.0
        %v5237 = vmax.f32 %v4856, 0.0
        %v5238 = vmax.f32 %v4857, 0.0
        %v5239 = vmax.f32 %v4858, 0.0
        %v5240 = vmax.f32 %v4859, 0.0
        %v5241 = vmax.f32 %v4860, 0.0
        %v5242 = vmax.f32 %v4861, 0.0
        %v5243 = vmax.f32 %v4862, 0.0
        %v5244 = vmax.f32 %v4863, 0.0
        %v5245 = vmax.f32 %v4864, 0.0
        %v5246 = vmax.f32 %v4865, 0.0
        %v5247 = vmax.f32 %v4866, 0.0
        %v5248 = vmax.f32 %v4867, 0.0
        %v5249 = vmax.f32 %v4868, 0.0
        %v5250 = vmax.f32 %v4869, 0.0
        %v5251 = vmax.f32 %v4870, 0.0
        %v5252 = vmax.f32 %v4871, 0.0
        %v5253 = vmax.f32 %v4872, 0.0
        %v5254 = vmax.f32 %v4873, 0.0
        %v5255 = vmax.f32 %v4874, 0.0
        %v5256 = vmax.f32 %v4875, 0.0
        %v5257 = vmax.f32 %v4876, 0.0
        %v5258 = vmax.f32 %v4877, 0.0
        %v5259 = vmax.f32 %v4878, 0.0
        %v5260 = vmax.f32 %v4879, 0.0
        %v5261 = vmax.f32 %v4880, 0.0
        %v5262 = vmax.f32 %v4881, 0.0
        %v5263 = vmax.f32 %v4882, 0.0
        %v5264 = vmax.f32 %v4883, 0.0
        %v5265 = vmax.f32 %v4884, 0.0
        %v5266 = vmax.f32 %v4885, 0.0
        %v5267 = vmax.f32 %v4886, 0.0
        %v5268 = vmax.f32 %v4887, 0.0
        %v5269 = vmax.f32 %v4888, 0.0
        %v5270 = vmax.f32 %v4889, 0.0
        %v5271 = vmax.f32 %v4890, 0.0
        %v5272 = vmax.f32 %v4891, 0.0
        %v5273 = vmax.f32 %v4892, 0.0
        %v5274 = vmax.f32 %v4893, 0.0
        %v5275 = vmax.f32 %v4894, 0.0
        %v5276 = vmax.f32 %v4895, 0.0
        %v5277 = vmax.f32 %v4896, 0.0
        %v5278 = vmax.f32 %v4897, 0.0
        %v5279 = vmax.f32 %v4898, 0.0
        %v5280 = vmax.f32 %v4899, 0.0
        %v5281 = vmax.f32 %v4900, 0.0
        %v5282 = vmax.f32 %v4901, 0.0
        %v5283 = vmax.f32 %v4902, 0.0
        %v5284 = vmax.f32 %v4903, 0.0
        %v5285 = vmax.f32 %v4904, 0.0
        %v5286 = vmax.f32 %v4905, 0.0
        %v5287 = vmax.f32 %v4906, 0.0
        %v5288 = vmax.f32 %v4907, 0.0
        %v5289 = vmax.f32 %v4908, 0.0
        %v5290 = vmax.f32 %v4909, 0.0
        %v5291 = vmax.f32 %v4910, 0.0
        %v5292 = vmax.f32 %v4911, 0.0
        %v5293 = vmax.f32 %v4912, 0.0
        %v5294 = vmax.f32 %v4913, 0.0
        %v5295 = vmax.f32 %v4914, 0.0
        %v5296 = vmax.f32 %v4915, 0.0
        %v5297 = vmax.f32 %v4916, 0.0
        %v5298 = vmax.f32 %v4917, 0.0
        %v5299 = vmax.f32 %v4918, 0.0
        %v5300 = vmax.f32 %v4919, 0.0
        %v5301 = vmax.f32 %v4920, 0.0
        %v5302 = vmax.f32 %v4921, 0.0
        %v5303 = vmax.f32 %v4922, 0.0
        %v5304 = vmax.f32 %v4923, 0.0
        %v5305 = vmax.f32 %v4924, 0.0
        %v5306 = vmax.f32 %v4925, 0.0
        %v5307 = vmax.f32 %v4926, 0.0
        %v5308 = vmax.f32 %v4927, 0.0
        %v5309 = vmax.f32 %v4928, 0.0
        %v5310 = vmax.f32 %v4929, 0.0
        %v5311 = vmax.f32 %v4930, 0.0
        %v5312 = vmax.f32 %v4931, 0.0
        %v5313 = vmax.f32 %v4932, 0.0
        %v5314 = vmax.f32 %v4933, 0.0
        %v5315 = vmax.f32 %v4934, 0.0
        %v5316 = vmax.f32 %v4935, 0.0
        %v5317 = vmax.f32 %v4936, 0.0
        %v5318 = vmax.f32 %v4937, 0.0
        %v5319 = vmax.f32 %v4938, 0.0
        %v5320 = vmax.f32 %v4939, 0.0
        %v5321 = vmax.f32 %v4940, 0.0
        %v5322 = vmax.f32 %v4941, 0.0
        %v5323 = vmax.f32 %v4942, 0.0
        %v5324 = vmax.f32 %v4943, 0.0
        %v5325 = vmax.f32 %v4944, 0.0
        %v5326 = vmax.f32 %v4945, 0.0
        %v5327 = vmax.f32 %v4946, 0.0
        %v5328 = vmax.f32 %v4947, 0.0
        %v5329 = vmax.f32 %v4948, 0.0
        %v5330 = vmax.f32 %v4949, 0.0
        %v5331 = vmax.f32 %v4950, 0.0
        %v5332 = vmax.f32 %v4951, 0.0
        %v5333 = vmax.f32 %v4952, 0.0
        %v5334 = vmax.f32 %v4953, 0.0
        %v5335 = vmax.f32 %v4954, 0.0
        %v5336 = vmax.f32 %v4955, 0.0
        %v5337 = vmax.f32 %v4956, 0.0
        %v5338 = vmax.f32 %v4957, 0.0
        %v5339 = vmax.f32 %v4958, 0.0
        %v5340 = vmax.f32 %v4959, 0.0
        %v5341 = vmax.f32 %v4960, 0.0
        %v5342 = vmax.f32 %v4961, 0.0
        %v5343 = vmax.f32 %v4962, 0.0
        %v5344 = vmax.f32 %v4963, 0.0
        %v5345 = vmax.f32 %v4964, 0.0
        %v5346 = vmax.f32 %v4965, 0.0
        %v5347 = vmax.f32 %v4966, 0.0
        %v5348 = vmax.f32 %v4967, 0.0
        %v5349 = vmax.f32 %v4968, 0.0
        %v5350 = vmax.f32 %v4969, 0.0
        %v5351 = vmax.f32 %v4970, 0.0
        %v5352 = vmax.f32 %v4971, 0.0
        %v5353 = vmax.f32 %v4972, 0.0
        %v5354 = vmax.f32 %v4973, 0.0
        %v5355 = vmax.f32 %v4974, 0.0
        %v5356 = vmax.f32 %v4975, 0.0
        %v5357 = vmax.f32 %v4976, 0.0
        %v5358 = vmax.f32 %v4977, 0.0
        %v5359 = vmax.f32 %v4978, 0.0
        %v5360 = vmax.f32 %v4979, 0.0
        %v5361 = vmax.f32 %v4980, 0.0
        %v5362 = vmax.f32 %v4981, 0.0
        %v5363 = vmax.f32 %v4982, 0.0
        %v5364 = vmax.f32 %v4983, 0.0
        %v5365 = vmax.f32 %v4984, 0.0
        %v5366 = vmax.f32 %v4985, 0.0
        %v5367 = vmax.f32 %v4986, 0.0
        %v5368 = vmax.f32 %v4987, 0.0
        %v5369 = vmax.f32 %v4988, 0.0
        %v5370 = vmax.f32 %v4989, 0.0
        %v5371 = vmax.f32 %v4990, 0.0
        %v5372 = vmax.f32 %v4991, 0.0
        %v5373 = vmax.f32 %v4992, 0.0
        %v5374 = vmax.f32 %v4993, 0.0
        %v5375 = vmax.f32 %v4994, 0.0
        %v5376 = vmax.f32 %v4995, 0.0
        %v5377 = vmax.f32 %v4996, 0.0
        %v5378 = vmax.f32 %v4997, 0.0
        %v5379 = vmax.f32 %v4998, 0.0
        %v5380 = vmax.f32 %v4999, 0.0
        %v5381 = vmax.f32 %v5000, 0.0
        %v5382 = vmax.f32 %v5001, 0.0
        %v5383 = vmax.f32 %v5002, 0.0
        %v5384 = vmax.f32 %v5003, 0.0
        %v5385 = vmax.f32 %v5004, 0.0
        %v5386 = vmax.f32 %v5005, 0.0
        %v5387 = vmax.f32 %v5006, 0.0
        %v5388 = vmax.f32 %v5007, 0.0
        %v5389 = vmax.f32 %v5008, 0.0
        %v5390 = vmax.f32 %v5009, 0.0
        %v5391 = vmax.f32 %v5010, 0.0
        %v5392 = vmax.f32 %v5011, 0.0
        %v5393 = vmax.f32 %v5012, 0.0
        %v5394 = vmax.f32 %v5013, 0.0
        %v5395 = vmax.f32 %v5014, 0.0
        %v5396 = vmax.f32 %v5015, 0.0
        %v5397 = vmax.f32 %v5016, 0.0
        %v5398 = vmax.f32 %v5017, 0.0
        %v5399 = vmax.f32 %v5018, 0.0
        %v5400 = vmax.f32 %v5019, 0.0
        %v5401 = vmax.f32 %v5020, 0.0
        %v5402 = vmax.f32 %v5021, 0.0
        %v5403 = vmax.f32 %v5022, 0.0
        %v5404 = vmax.f32 %v5023, 0.0
        %v5405 = vmax.f32 %v5024, 0.0
        %v5406 = vmax.f32 %v5025, 0.0
        %v5407 = vmax.f32 %v5026, 0.0
        %v5408 = vmax.f32 %v5027, 0.0
        %v5409 = vmax.f32 %v5028, 0.0
        %v5410 = vmax.f32 %v5029, 0.0
        %v5411 = vmax.f32 %v5030, 0.0
        %v5412 = vmax.f32 %v5031, 0.0
        %v5413 = vmax.f32 %v5032, 0.0
        %v5414 = vmax.f32 %v5033, 0.0
        %v5415 = vmax.f32 %v5034, 0.0
        %v5416 = vmax.f32 %v5035, 0.0
        %v5417 = vmax.f32 %v5036, 0.0
        %v5418 = vmax.f32 %v5037, 0.0
        %v5419 = vmax.f32 %v5038, 0.0
        %v5420 = vmax.f32 %v5039, 0.0
        %v5421 = vmax.f32 %v5040, 0.0
        %v5422 = vmax.f32 %v5041, 0.0
        %v5423 = vmax.f32 %v5042, 0.0
        %v5424 = vmax.f32 %v5043, 0.0
        %v5425 = vmax.f32 %v5044, 0.0
        %v5426 = vmax.f32 %v5045, 0.0
        %v5427 = vmax.f32 %v5046, 0.0
        %v5428 = vmax.f32 %v5047, 0.0
        %v5429 = vmax.f32 %v5048, 0.0
        %v5430 = vmax.f32 %v5049, 0.0
        %v5431 = vmax.f32 %v5050, 0.0
        %v5432 = vmax.f32 %v5051, 0.0
        %v5433 = vmax.f32 %v5052, 0.0
        %v5434 = vmax.f32 %v5053, 0.0
        %v5435 = vmax.f32 %v5054, 0.0
        %v5436 = vmax.f32 %v5055, 0.0
        %v5437 = vmax.f32 %v5056, 0.0
        %v5438 = vmax.f32 %v5057, 0.0
        %v5439 = vmax.f32 %v5058, 0.0
        %v5440 = vmax.f32 %v5059, 0.0
        %v5441 = vmax.f32 %v5060, 0.0
        %v5442 = vmax.f32 %v5061, 0.0
        %v5443 = vmax.f32 %v5062, 0.0
        %v5444 = vmax.f32 %v5063, 0.0
        %v5445 = vmax.f32 %v5064, 0.0
        %v5446 = vmax.f32 %v5065, 0.0
        %v5447 = vmax.f32 %v5066, 0.0
        %v5448 = vmax.f32 %v5067, 0.0
        %v5449 = vmax.f32 %v5068, 0.0
        %v5450 = vmax.f32 %v5069, 0.0
        %v5451 = vmax.f32 %v5070, 0.0
        %v5452 = vmax.f32 %v5071, 0.0
        %v5453 = vmax.f32 %v5072, 0.0
        %v5454 = vmax.f32 %v5073, 0.0
        %v5455 = vmax.f32 %v5074, 0.0
        %v5456 = vmax.f32 %v5075, 0.0
        %v5457 = vmax.f32 %v5076, 0.0
        %v5458 = vmax.f32 %v5077, 0.0
        %v5459 = vmax.f32 %v5078, 0.0
        %v5460 = vmax.f32 %v5079, 0.0
        %v5461 = vmax.f32 %v5080, 0.0
        %v5462 = vmax.f32 %v5081, 0.0
        %v5463 = vmax.f32 %v5082, 0.0
        %v5464 = vmax.f32 %v5083, 0.0
        %v5465 = vmax.f32 %v5084, 0.0
        %v5466 = vpack.c.bf16 %v5088, %v5085
        %v5467 = vpack.c.bf16 %v5089, %v5086
        %v5468 = vpack.c.bf16 %v5090, %v5087
        %v5469 = vpack.c.bf16 %v5094, %v5091
        %v5470 = vpack.c.bf16 %v5095, %v5092
        %v5471 = vpack.c.bf16 %v5096, %v5093
        %v5472 = vpack.c.bf16 %v5100, %v5097
        %v5473 = vpack.c.bf16 %v5101, %v5098
        %v5474 = vpack.c.bf16 %v5102, %v5099
        %v5475 = vpack.c.bf16 %v5106, %v5103
        %v5476 = vpack.c.bf16 %v5107, %v5104
        %v5477 = vpack.c.bf16 %v5108, %v5105
        %v5478 = vpack.c.bf16 %v5112, %v5109
        %v5479 = vpack.c.bf16 %v5113, %v5110
        %v5480 = vpack.c.bf16 %v5114, %v5111
        %v5481 = vpack.c.bf16 %v5118, %v5115
        %v5482 = vpack.c.bf16 %v5119, %v5116
        %v5483 = vpack.c.bf16 %v5120, %v5117
        %v5484 = vpack.c.bf16 %v5124, %v5121
        %v5485 = vpack.c.bf16 %v5125, %v5122
        %v5486 = vpack.c.bf16 %v5126, %v5123
        %v5487 = vpack.c.bf16 %v5130, %v5127
        %v5488 = vpack.c.bf16 %v5131, %v5128
        %v5489 = vpack.c.bf16 %v5132, %v5129
        %v5490 = vpack.c.bf16 %v5136, %v5133
        %v5491 = vpack.c.bf16 %v5137, %v5134
        %v5492 = vpack.c.bf16 %v5138, %v5135
        %v5493 = vpack.c.bf16 %v5142, %v5139
        %v5494 = vpack.c.bf16 %v5143, %v5140
        %v5495 = vpack.c.bf16 %v5144, %v5141
        %v5496 = vpack.c.bf16 %v5148, %v5145
        %v5497 = vpack.c.bf16 %v5149, %v5146
        %v5498 = vpack.c.bf16 %v5150, %v5147
        %v5499 = vpack.c.bf16 %v5154, %v5151
        %v5500 = vpack.c.bf16 %v5155, %v5152
        %v5501 = vpack.c.bf16 %v5156, %v5153
        %v5502 = vpack.c.bf16 %v5160, %v5157
        %v5503 = vpack.c.bf16 %v5161, %v5158
        %v5504 = vpack.c.bf16 %v5162, %v5159
        %v5505 = vpack.c.bf16 %v5166, %v5163
        %v5506 = vpack.c.bf16 %v5167, %v5164
        %v5507 = vpack.c.bf16 %v5168, %v5165
        %v5508 = vpack.c.bf16 %v5172, %v5169
        %v5509 = vpack.c.bf16 %v5173, %v5170
        %v5510 = vpack.c.bf16 %v5174, %v5171
        %v5511 = vpack.c.bf16 %v5178, %v5175
        %v5512 = vpack.c.bf16 %v5179, %v5176
        %v5513 = vpack.c.bf16 %v5180, %v5177
        %v5514 = vpack.c.bf16 %v5184, %v5181
        %v5515 = vpack.c.bf16 %v5185, %v5182
        %v5516 = vpack.c.bf16 %v5186, %v5183
        %v5517 = vpack.c.bf16 %v5190, %v5187
        %v5518 = vpack.c.bf16 %v5191, %v5188
        %v5519 = vpack.c.bf16 %v5192, %v5189
        %v5520 = vpack.c.bf16 %v5196, %v5193
        %v5521 = vpack.c.bf16 %v5197, %v5194
        %v5522 = vpack.c.bf16 %v5198, %v5195
        %v5523 = vpack.c.bf16 %v5202, %v5199
        %v5524 = vpack.c.bf16 %v5203, %v5200
        %v5525 = vpack.c.bf16 %v5204, %v5201
        %v5526 = vpack.c.bf16 %v5208, %v5205
        %v5527 = vpack.c.bf16 %v5209, %v5206
        %v5528 = vpack.c.bf16 %v5210, %v5207
        %v5529 = vpack.c.bf16 %v5214, %v5211
        %v5530 = vpack.c.bf16 %v5215, %v5212
        %v5531 = vpack.c.bf16 %v5216, %v5213
        %v5532 = vpack.c.bf16 %v5220, %v5217
        %v5533 = vpack.c.bf16 %v5221, %v5218
        %v5534 = vpack.c.bf16 %v5222, %v5219
        %v5535 = vpack.c.bf16 %v5226, %v5223
        %v5536 = vpack.c.bf16 %v5227, %v5224
        %v5537 = vpack.c.bf16 %v5228, %v5225
        %v5538 = vpack.c.bf16 %v5232, %v5229
        %v5539 = vpack.c.bf16 %v5233, %v5230
        %v5540 = vpack.c.bf16 %v5234, %v5231
        %v5541 = vpack.c.bf16 %v5238, %v5235
        %v5542 = vpack.c.bf16 %v5239, %v5236
        %v5543 = vpack.c.bf16 %v5240, %v5237
        %v5544 = vpack.c.bf16 %v5244, %v5241
        %v5545 = vpack.c.bf16 %v5245, %v5242
        %v5546 = vpack.c.bf16 %v5246, %v5243
        %v5547 = vpack.c.bf16 %v5250, %v5247
        %v5548 = vpack.c.bf16 %v5251, %v5248
        %v5549 = vpack.c.bf16 %v5252, %v5249
        %v5550 = vpack.c.bf16 %v5256, %v5253
        %v5551 = vpack.c.bf16 %v5257, %v5254
        %v5552 = vpack.c.bf16 %v5258, %v5255
        %v5553 = vpack.c.bf16 %v5262, %v5259
        %v5554 = vpack.c.bf16 %v5263, %v5260
        %v5555 = vpack.c.bf16 %v5264, %v5261
        %v5556 = vpack.c.bf16 %v5268, %v5265
        %v5557 = vpack.c.bf16 %v5269, %v5266
        %v5558 = vpack.c.bf16 %v5270, %v5267
        %v5559 = vpack.c.bf16 %v5274, %v5271
        %v5560 = vpack.c.bf16 %v5275, %v5272
        %v5561 = vpack.c.bf16 %v5276, %v5273
        %v5562 = vpack.c.bf16 %v5280, %v5277
        %v5563 = vpack.c.bf16 %v5281, %v5278
        %v5564 = vpack.c.bf16 %v5282, %v5279
        %v5565 = vpack.c.bf16 %v5286, %v5283
        %v5566 = vpack.c.bf16 %v5287, %v5284
        %v5567 = vpack.c.bf16 %v5288, %v5285
        %v5568 = vpack.c.bf16 %v5292, %v5289
        %v5569 = vpack.c.bf16 %v5293, %v5290
        %v5570 = vpack.c.bf16 %v5294, %v5291
        %v5571 = vpack.c.bf16 %v5298, %v5295
        %v5572 = vpack.c.bf16 %v5299, %v5296
        %v5573 = vpack.c.bf16 %v5300, %v5297
        %v5574 = vpack.c.bf16 %v5304, %v5301
        %v5575 = vpack.c.bf16 %v5305, %v5302
        %v5576 = vpack.c.bf16 %v5306, %v5303
        %v5577 = vpack.c.bf16 %v5310, %v5307
        %v5578 = vpack.c.bf16 %v5311, %v5308
        %v5579 = vpack.c.bf16 %v5312, %v5309
        %v5580 = vpack.c.bf16 %v5316, %v5313
        %v5581 = vpack.c.bf16 %v5317, %v5314
        %v5582 = vpack.c.bf16 %v5318, %v5315
        %v5583 = vpack.c.bf16 %v5322, %v5319
        %v5584 = vpack.c.bf16 %v5323, %v5320
        %v5585 = vpack.c.bf16 %v5324, %v5321
        %v5586 = vpack.c.bf16 %v5328, %v5325
        %v5587 = vpack.c.bf16 %v5329, %v5326
        %v5588 = vpack.c.bf16 %v5330, %v5327
        %v5589 = vpack.c.bf16 %v5334, %v5331
        %v5590 = vpack.c.bf16 %v5335, %v5332
        %v5591 = vpack.c.bf16 %v5336, %v5333
        %v5592 = vpack.c.bf16 %v5340, %v5337
        %v5593 = vpack.c.bf16 %v5341, %v5338
        %v5594 = vpack.c.bf16 %v5342, %v5339
        %v5595 = vpack.c.bf16 %v5346, %v5343
        %v5596 = vpack.c.bf16 %v5347, %v5344
        %v5597 = vpack.c.bf16 %v5348, %v5345
        %v5598 = vpack.c.bf16 %v5352, %v5349
        %v5599 = vpack.c.bf16 %v5353, %v5350
        %v5600 = vpack.c.bf16 %v5354, %v5351
        %v5601 = vpack.c.bf16 %v5358, %v5355
        %v5602 = vpack.c.bf16 %v5359, %v5356
        %v5603 = vpack.c.bf16 %v5360, %v5357
        %v5604 = vpack.c.bf16 %v5364, %v5361
        %v5605 = vpack.c.bf16 %v5365, %v5362
        %v5606 = vpack.c.bf16 %v5366, %v5363
        %v5607 = vpack.c.bf16 %v5370, %v5367
        %v5608 = vpack.c.bf16 %v5371, %v5368
        %v5609 = vpack.c.bf16 %v5372, %v5369
        %v5610 = vpack.c.bf16 %v5376, %v5373
        %v5611 = vpack.c.bf16 %v5377, %v5374
        %v5612 = vpack.c.bf16 %v5378, %v5375
        %v5613 = vpack.c.bf16 %v5382, %v5379
        %v5614 = vpack.c.bf16 %v5383, %v5380
        %v5615 = vpack.c.bf16 %v5384, %v5381
        %v5616 = vpack.c.bf16 %v5388, %v5385
        %v5617 = vpack.c.bf16 %v5389, %v5386
        %v5618 = vpack.c.bf16 %v5390, %v5387
        %v5619 = vpack.c.bf16 %v5394, %v5391
        %v5620 = vpack.c.bf16 %v5395, %v5392
        %v5621 = vpack.c.bf16 %v5396, %v5393
        %v5622 = vpack.c.bf16 %v5400, %v5397
        %v5623 = vpack.c.bf16 %v5401, %v5398
        %v5624 = vpack.c.bf16 %v5402, %v5399
        %v5625 = vpack.c.bf16 %v5406, %v5403
        %v5626 = vpack.c.bf16 %v5407, %v5404
        %v5627 = vpack.c.bf16 %v5408, %v5405
        %v5628 = vpack.c.bf16 %v5412, %v5409
        %v5629 = vpack.c.bf16 %v5413, %v5410
        %v5630 = vpack.c.bf16 %v5414, %v5411
        %v5631 = vpack.c.bf16 %v5418, %v5415
        %v5632 = vpack.c.bf16 %v5419, %v5416
        %v5633 = vpack.c.bf16 %v5420, %v5417
        %v5634 = vpack.c.bf16 %v5424, %v5421
        %v5635 = vpack.c.bf16 %v5425, %v5422
        %v5636 = vpack.c.bf16 %v5426, %v5423
        %v5637 = vpack.c.bf16 %v5430, %v5427
        %v5638 = vpack.c.bf16 %v5431, %v5428
        %v5639 = vpack.c.bf16 %v5432, %v5429
        %v5640 = vpack.c.bf16 %v5436, %v5433
        %v5641 = vpack.c.bf16 %v5437, %v5434
        %v5642 = vpack.c.bf16 %v5438, %v5435
        %v5643 = vpack.c.bf16 %v5442, %v5439
        %v5644 = vpack.c.bf16 %v5443, %v5440
        %v5645 = vpack.c.bf16 %v5444, %v5441
        %v5646 = vpack.c.bf16 %v5448, %v5445
        %v5647 = vpack.c.bf16 %v5449, %v5446
        %v5648 = vpack.c.bf16 %v5450, %v5447
        %v5649 = vpack.c.bf16 %v5454, %v5451
        %v5650 = vpack.c.bf16 %v5455, %v5452
        %v5651 = vpack.c.bf16 %v5456, %v5453
        %v5652 = vpack.c.bf16 %v5460, %v5457
        %v5653 = vpack.c.bf16 %v5461, %v5458
        %v5654 = vpack.c.bf16 %v5462, %v5459
        %v5655 = vpack.c.bf16 %v5463, %v5463
        %v5656 = vpack.c.bf16 %v5464, %v5464
        %v5657 = vpack.c.bf16 %v5465, %v5465
        %v5658 = vld [vmem:[%s5] sm:$0xf]
        %v5659 = vld [vmem:[%s5 + $0x4] sm:$0xf]
        %v5660 = vld [vmem:[%s5 + $0x8] sm:$0xf]
        %v5661 = vld [vmem:[%s5 + $0xc] sm:$0xf]
        %v5662 = vld [vmem:[%s5 + $0x10] sm:$0xf]
        %v5663 = vld [vmem:[%s5 + $0x14] sm:$0xf]
        %v5664 = vld [vmem:[%s5 + $0x18] sm:$0xf]
        %v5665 = vld [vmem:[%s5 + $0x1c] sm:$0xf]
        %v5666 = vld [vmem:[%s5 + $0x20] sm:$0xf]
        %v5667 = vld [vmem:[%s5 + $0x24] sm:$0xf]
        %v5668 = vld [vmem:[%s5 + $0x28] sm:$0xf]
        %v5669 = vld [vmem:[%s5 + $0x2c] sm:$0xf]
        %v5670 = vld [vmem:[%s5 + $0x30] sm:$0xf]
        %v5671 = vld [vmem:[%s5 + $0x34] sm:$0xf]
        %v5672 = vld [vmem:[%s5 + $0x38] sm:$0xf]
        %v5673 = vld [vmem:[%s5 + $0x3c] sm:$0xf]
        %v5674 = vld [vmem:[%s5 + $0x40] sm:$0xf]
        %v5675 = vld [vmem:[%s5 + $0x44] sm:$0xf]
        %v5676 = vld [vmem:[%s5 + $0x48] sm:$0xf]
        %v5677 = vld [vmem:[%s5 + $0x4c] sm:$0xf]
        %v5678 = vld [vmem:[%s5 + $0x50] sm:$0xf]
        %v5679 = vld [vmem:[%s5 + $0x54] sm:$0xf]
        %v5680 = vld [vmem:[%s5 + $0x58] sm:$0xf]
        %v5681 = vld [vmem:[%s5 + $0x5c] sm:$0xf]
        %v5682 = vld [vmem:[%s5 + $0x60] sm:$0xf]
        %v5683 = vld [vmem:[%s5 + $0x64] sm:$0xf]
        %v5684 = vld [vmem:[%s5 + $0x68] sm:$0xf]
        %v5685 = vld [vmem:[%s5 + $0x6c] sm:$0xf]
        %v5686 = vld [vmem:[%s5 + $0x70] sm:$0xf]
        %v5687 = vld [vmem:[%s5 + $0x74] sm:$0xf]
        %v5688 = vld [vmem:[%s5 + $0x78] sm:$0xf]
        %v5689 = vld [vmem:[%s5 + $0x7c] sm:$0xf]
        %v5690 = vld [vmem:[%s5 + $0x80] sm:$0xf]
        %v5691 = vld [vmem:[%s5 + $0x84] sm:$0xf]
        %v5692 = vld [vmem:[%s5 + $0x88] sm:$0xf]
        %v5693 = vld [vmem:[%s5 + $0x8c] sm:$0xf]
        %v5694 = vld [vmem:[%s5 + $0x90] sm:$0xf]
        %v5695 = vld [vmem:[%s5 + $0x94] sm:$0xf]
        %v5696 = vld [vmem:[%s5 + $0x98] sm:$0xf]
        %v5697 = vld [vmem:[%s5 + $0x9c] sm:$0xf]
        %v5698 = vld [vmem:[%s5 + $0xa0] sm:$0xf]
        %v5699 = vld [vmem:[%s5 + $0xa4] sm:$0xf]
        %v5700 = vld [vmem:[%s5 + $0xa8] sm:$0xf]
        %v5701 = vld [vmem:[%s5 + $0xac] sm:$0xf]
        %v5702 = vld [vmem:[%s5 + $0xb0] sm:$0xf]
        %v5703 = vld [vmem:[%s5 + $0xb4] sm:$0xf]
        %v5704 = vld [vmem:[%s5 + $0xb8] sm:$0xf]
        %v5705 = vld [vmem:[%s5 + $0xbc] sm:$0xf]
        %v5706 = vld [vmem:[%s6] sm:$0x1]
        %v5708 = vperm.slane %v5706, 0
        %v5758 = vunpack.c.l.b16 %v5658
        %v5759 = vunpack.c.l.b16 %v5659
        %v5760 = vunpack.c.l.b16 %v5660
        %v5761 = vunpack.c.l.b16 %v5661
        %v5762 = vunpack.c.l.b16 %v5662
        %v5763 = vunpack.c.l.b16 %v5663
        %v5764 = vunpack.c.l.b16 %v5664
        %v5765 = vunpack.c.l.b16 %v5665
        %v5766 = vunpack.c.l.b16 %v5666
        %v5767 = vunpack.c.l.b16 %v5667
        %v5768 = vunpack.c.l.b16 %v5668
        %v5769 = vunpack.c.l.b16 %v5669
        %v5770 = vunpack.c.l.b16 %v5670
        %v5771 = vunpack.c.l.b16 %v5671
        %v5772 = vunpack.c.l.b16 %v5672
        %v5773 = vunpack.c.l.b16 %v5673
        %v5774 = vunpack.c.l.b16 %v5674
        %v5775 = vunpack.c.l.b16 %v5675
        %v5776 = vunpack.c.l.b16 %v5676
        %v5777 = vunpack.c.l.b16 %v5677
        %v5778 = vunpack.c.l.b16 %v5678
        %v5779 = vunpack.c.l.b16 %v5679
        %v5780 = vunpack.c.l.b16 %v5680
        %v5781 = vunpack.c.l.b16 %v5681
        %v5782 = vunpack.c.l.b16 %v5682
        %v5783 = vunpack.c.l.b16 %v5683
        %v5784 = vunpack.c.l.b16 %v5684
        %v5785 = vunpack.c.l.b16 %v5685
        %v5786 = vunpack.c.l.b16 %v5686
        %v5787 = vunpack.c.l.b16 %v5687
        %v5788 = vunpack.c.l.b16 %v5688
        %v5789 = vunpack.c.l.b16 %v5689
        %v5790 = vunpack.c.l.b16 %v5690
        %v5791 = vunpack.c.l.b16 %v5691
        %v5792 = vunpack.c.l.b16 %v5692
        %v5793 = vunpack.c.l.b16 %v5693
        %v5794 = vunpack.c.l.b16 %v5694
        %v5795 = vunpack.c.l.b16 %v5695
        %v5796 = vunpack.c.l.b16 %v5696
        %v5797 = vunpack.c.l.b16 %v5697
        %v5798 = vunpack.c.l.b16 %v5698
        %v5799 = vunpack.c.l.b16 %v5699
        %v5800 = vunpack.c.l.b16 %v5700
        %v5801 = vunpack.c.l.b16 %v5701
        %v5802 = vunpack.c.l.b16 %v5702
        %v5803 = vunpack.c.l.b16 %v5703
        %v5804 = vunpack.c.l.b16 %v5704
        %v5805 = vunpack.c.l.b16 %v5705
        %v5806 = vpack.c.b16 %v5759, %v5758
        %v5807 = vpack.c.b16 %v5761, %v5760
        %v5808 = vpack.c.b16 %v5763, %v5762
        %v5809 = vpack.c.b16 %v5765, %v5764
        %v5810 = vpack.c.b16 %v5767, %v5766
        %v5811 = vpack.c.b16 %v5769, %v5768
        %v5812 = vpack.c.b16 %v5771, %v5770
        %v5813 = vpack.c.b16 %v5773, %v5772
        %v5814 = vpack.c.b16 %v5775, %v5774
        %v5815 = vpack.c.b16 %v5777, %v5776
        %v5816 = vpack.c.b16 %v5779, %v5778
        %v5817 = vpack.c.b16 %v5781, %v5780
        %v5818 = vpack.c.b16 %v5783, %v5782
        %v5819 = vpack.c.b16 %v5785, %v5784
        %v5820 = vpack.c.b16 %v5787, %v5786
        %v5821 = vpack.c.b16 %v5789, %v5788
        %v5822 = vpack.c.b16 %v5791, %v5790
        %v5823 = vpack.c.b16 %v5793, %v5792
        %v5824 = vpack.c.b16 %v5795, %v5794
        %v5825 = vpack.c.b16 %v5797, %v5796
        %v5826 = vpack.c.b16 %v5799, %v5798
        %v5827 = vpack.c.b16 %v5801, %v5800
        %v5828 = vpack.c.b16 %v5803, %v5802
        %v5829 = vpack.c.b16 %v5805, %v5804
        %5854 = vmatpush.bf16.msra.mxu0 %v5813
        %5855 = vmatpush.bf16.msra.mxu0 %v5812
        %5856 = vmatpush.bf16.msra.mxu0 %v5811
        %5857 = vmatpush.bf16.msra.mxu0 %v5810
        %5858 = vmatpush.bf16.msra.mxu0 %v5809
        %5859 = vmatpush.bf16.msra.mxu0 %v5808
        %5860 = vmatpush.bf16.msra.mxu0 %v5807
        %5861 = vmatpush.bf16.msra.mxu0 %v5806
        %5862 = vmatmul.bf16.gmra.mxu0 %v5466
        %v5863 = vpop.f32.mrf.mxu0
        %v5864 = vadd.f32 %v5708, %v5863
        %v5865 = vpop.f32.mrf.mxu0
        %v5866 = vadd.f32 %v5708, %v5865
        %5867 = vmatmul.bf16.gmra.mxu0 %v5469
        %v5868 = vpop.f32.mrf.mxu0
        %v5869 = vadd.f32 %v5708, %v5868
        %v5870 = vpop.f32.mrf.mxu0
        %v5871 = vadd.f32 %v5708, %v5870
        %5872 = vmatmul.bf16.gmra.mxu0 %v5472
        %v5873 = vpop.f32.mrf.mxu0
        %v5874 = vadd.f32 %v5708, %v5873
        %v5875 = vpop.f32.mrf.mxu0
        %v5876 = vadd.f32 %v5708, %v5875
        %5877 = vmatmul.bf16.gmra.mxu0 %v5475
        %v5878 = vpop.f32.mrf.mxu0
        %v5879 = vadd.f32 %v5708, %v5878
        %v5880 = vpop.f32.mrf.mxu0
        %v5881 = vadd.f32 %v5708, %v5880
        %5882 = vmatmul.bf16.gmra.mxu0 %v5478
        %v5883 = vpop.f32.mrf.mxu0
        %v5884 = vadd.f32 %v5708, %v5883
        %v5885 = vpop.f32.mrf.mxu0
        %v5886 = vadd.f32 %v5708, %v5885
        %5887 = vmatmul.bf16.gmra.mxu0 %v5481
        %v5888 = vpop.f32.mrf.mxu0
        %v5889 = vadd.f32 %v5708, %v5888
        %v5890 = vpop.f32.mrf.mxu0
        %v5891 = vadd.f32 %v5708, %v5890
        %5892 = vmatmul.bf16.gmra.mxu0 %v5484
        %v5893 = vpop.f32.mrf.mxu0
        %v5894 = vadd.f32 %v5708, %v5893
        %v5895 = vpop.f32.mrf.mxu0
        %v5896 = vadd.f32 %v5708, %v5895
        %5897 = vmatmul.bf16.gmra.mxu0 %v5487
        %v5898 = vpop.f32.mrf.mxu0
        %v5899 = vadd.f32 %v5708, %v5898
        %v5900 = vpop.f32.mrf.mxu0
        %v5901 = vadd.f32 %v5708, %v5900
        %5902 = vmatmul.bf16.gmra.mxu0 %v5490
        %v5903 = vpop.f32.mrf.mxu0
        %v5904 = vadd.f32 %v5708, %v5903
        %v5905 = vpop.f32.mrf.mxu0
        %v5906 = vadd.f32 %v5708, %v5905
        %5907 = vmatmul.bf16.gmra.mxu0 %v5493
        %v5908 = vpop.f32.mrf.mxu0
        %v5909 = vadd.f32 %v5708, %v5908
        %v5910 = vpop.f32.mrf.mxu0
        %v5911 = vadd.f32 %v5708, %v5910
        %5912 = vmatmul.bf16.gmra.mxu0 %v5496
        %v5913 = vpop.f32.mrf.mxu0
        %v5914 = vadd.f32 %v5708, %v5913
        %v5915 = vpop.f32.mrf.mxu0
        %v5916 = vadd.f32 %v5708, %v5915
        %5917 = vmatmul.bf16.gmra.mxu0 %v5499
        %v5918 = vpop.f32.mrf.mxu0
        %v5919 = vadd.f32 %v5708, %v5918
        %v5920 = vpop.f32.mrf.mxu0
        %v5921 = vadd.f32 %v5708, %v5920
        %5922 = vmatmul.bf16.gmra.mxu0 %v5502
        %v5923 = vpop.f32.mrf.mxu0
        %v5924 = vadd.f32 %v5708, %v5923
        %v5925 = vpop.f32.mrf.mxu0
        %v5926 = vadd.f32 %v5708, %v5925
        %5927 = vmatmul.bf16.gmra.mxu0 %v5505
        %v5928 = vpop.f32.mrf.mxu0
        %v5929 = vadd.f32 %v5708, %v5928
        %v5930 = vpop.f32.mrf.mxu0
        %v5931 = vadd.f32 %v5708, %v5930
        %5932 = vmatmul.bf16.gmra.mxu0 %v5508
        %v5933 = vpop.f32.mrf.mxu0
        %v5934 = vadd.f32 %v5708, %v5933
        %v5935 = vpop.f32.mrf.mxu0
        %v5936 = vadd.f32 %v5708, %v5935
        %5937 = vmatmul.bf16.gmra.mxu0 %v5511
        %v5938 = vpop.f32.mrf.mxu0
        %v5939 = vadd.f32 %v5708, %v5938
        %v5940 = vpop.f32.mrf.mxu0
        %v5941 = vadd.f32 %v5708, %v5940
        %5942 = vmatmul.bf16.gmra.mxu0 %v5514
        %v5943 = vpop.f32.mrf.mxu0
        %v5944 = vadd.f32 %v5708, %v5943
        %v5945 = vpop.f32.mrf.mxu0
        %v5946 = vadd.f32 %v5708, %v5945
        %5947 = vmatmul.bf16.gmra.mxu0 %v5517
        %v5948 = vpop.f32.mrf.mxu0
        %v5949 = vadd.f32 %v5708, %v5948
        %v5950 = vpop.f32.mrf.mxu0
        %v5951 = vadd.f32 %v5708, %v5950
        %5952 = vmatmul.bf16.gmra.mxu0 %v5520
        %v5953 = vpop.f32.mrf.mxu0
        %v5954 = vadd.f32 %v5708, %v5953
        %v5955 = vpop.f32.mrf.mxu0
        %v5956 = vadd.f32 %v5708, %v5955
        %5957 = vmatmul.bf16.gmra.mxu0 %v5523
        %v5958 = vpop.f32.mrf.mxu0
        %v5959 = vadd.f32 %v5708, %v5958
        %v5960 = vpop.f32.mrf.mxu0
        %v5961 = vadd.f32 %v5708, %v5960
        %5962 = vmatmul.bf16.gmra.mxu0 %v5526
        %v5963 = vpop.f32.mrf.mxu0
        %v5964 = vadd.f32 %v5708, %v5963
        %v5965 = vpop.f32.mrf.mxu0
        %v5966 = vadd.f32 %v5708, %v5965
        %5967 = vmatmul.bf16.gmra.mxu0 %v5529
        %v5968 = vpop.f32.mrf.mxu0
        %v5969 = vadd.f32 %v5708, %v5968
        %v5970 = vpop.f32.mrf.mxu0
        %v5971 = vadd.f32 %v5708, %v5970
        %5972 = vmatmul.bf16.gmra.mxu0 %v5532
        %v5973 = vpop.f32.mrf.mxu0
        %v5974 = vadd.f32 %v5708, %v5973
        %v5975 = vpop.f32.mrf.mxu0
        %v5976 = vadd.f32 %v5708, %v5975
        %5977 = vmatmul.bf16.gmra.mxu0 %v5535
        %v5978 = vpop.f32.mrf.mxu0
        %v5979 = vadd.f32 %v5708, %v5978
        %v5980 = vpop.f32.mrf.mxu0
        %v5981 = vadd.f32 %v5708, %v5980
        %5982 = vmatmul.bf16.gmra.mxu0 %v5538
        %v5983 = vpop.f32.mrf.mxu0
        %v5984 = vadd.f32 %v5708, %v5983
        %v5985 = vpop.f32.mrf.mxu0
        %v5986 = vadd.f32 %v5708, %v5985
        %5987 = vmatmul.bf16.gmra.mxu0 %v5541
        %v5988 = vpop.f32.mrf.mxu0
        %v5989 = vadd.f32 %v5708, %v5988
        %v5990 = vpop.f32.mrf.mxu0
        %v5991 = vadd.f32 %v5708, %v5990
        %5992 = vmatmul.bf16.gmra.mxu0 %v5544
        %v5993 = vpop.f32.mrf.mxu0
        %v5994 = vadd.f32 %v5708, %v5993
        %v5995 = vpop.f32.mrf.mxu0
        %v5996 = vadd.f32 %v5708, %v5995
        %5997 = vmatmul.bf16.gmra.mxu0 %v5547
        %v5998 = vpop.f32.mrf.mxu0
        %v5999 = vadd.f32 %v5708, %v5998
        %v6000 = vpop.f32.mrf.mxu0
        %v6001 = vadd.f32 %v5708, %v6000
        %6002 = vmatmul.bf16.gmra.mxu0 %v5550
        %v6003 = vpop.f32.mrf.mxu0
        %v6004 = vadd.f32 %v5708, %v6003
        %v6005 = vpop.f32.mrf.mxu0
        %v6006 = vadd.f32 %v5708, %v6005
        %6007 = vmatmul.bf16.gmra.mxu0 %v5553
        %v6008 = vpop.f32.mrf.mxu0
        %v6009 = vadd.f32 %v5708, %v6008
        %v6010 = vpop.f32.mrf.mxu0
        %v6011 = vadd.f32 %v5708, %v6010
        %6012 = vmatmul.bf16.gmra.mxu0 %v5556
        %v6013 = vpop.f32.mrf.mxu0
        %v6014 = vadd.f32 %v5708, %v6013
        %v6015 = vpop.f32.mrf.mxu0
        %v6016 = vadd.f32 %v5708, %v6015
        %6017 = vmatmul.bf16.gmra.mxu0 %v5559
        %v6018 = vpop.f32.mrf.mxu0
        %v6019 = vadd.f32 %v5708, %v6018
        %v6020 = vpop.f32.mrf.mxu0
        %v6021 = vadd.f32 %v5708, %v6020
        %6022 = vmatmul.bf16.gmra.mxu0 %v5562
        %v6023 = vpop.f32.mrf.mxu0
        %v6024 = vadd.f32 %v5708, %v6023
        %v6025 = vpop.f32.mrf.mxu0
        %v6026 = vadd.f32 %v5708, %v6025
        %6027 = vmatmul.bf16.gmra.mxu0 %v5565
        %v6028 = vpop.f32.mrf.mxu0
        %v6029 = vadd.f32 %v5708, %v6028
        %v6030 = vpop.f32.mrf.mxu0
        %v6031 = vadd.f32 %v5708, %v6030
        %6032 = vmatmul.bf16.gmra.mxu0 %v5568
        %v6033 = vpop.f32.mrf.mxu0
        %v6034 = vadd.f32 %v5708, %v6033
        %v6035 = vpop.f32.mrf.mxu0
        %v6036 = vadd.f32 %v5708, %v6035
        %6037 = vmatmul.bf16.gmra.mxu0 %v5571
        %v6038 = vpop.f32.mrf.mxu0
        %v6039 = vadd.f32 %v5708, %v6038
        %v6040 = vpop.f32.mrf.mxu0
        %v6041 = vadd.f32 %v5708, %v6040
        %6042 = vmatmul.bf16.gmra.mxu0 %v5574
        %v6043 = vpop.f32.mrf.mxu0
        %v6044 = vadd.f32 %v5708, %v6043
        %v6045 = vpop.f32.mrf.mxu0
        %v6046 = vadd.f32 %v5708, %v6045
        %6047 = vmatmul.bf16.gmra.mxu0 %v5577
        %v6048 = vpop.f32.mrf.mxu0
        %v6049 = vadd.f32 %v5708, %v6048
        %v6050 = vpop.f32.mrf.mxu0
        %v6051 = vadd.f32 %v5708, %v6050
        %6052 = vmatmul.bf16.gmra.mxu0 %v5580
        %v6053 = vpop.f32.mrf.mxu0
        %v6054 = vadd.f32 %v5708, %v6053
        %v6055 = vpop.f32.mrf.mxu0
        %v6056 = vadd.f32 %v5708, %v6055
        %6057 = vmatmul.bf16.gmra.mxu0 %v5583
        %v6058 = vpop.f32.mrf.mxu0
        %v6059 = vadd.f32 %v5708, %v6058
        %v6060 = vpop.f32.mrf.mxu0
        %v6061 = vadd.f32 %v5708, %v6060
        %6062 = vmatmul.bf16.gmra.mxu0 %v5586
        %v6063 = vpop.f32.mrf.mxu0
        %v6064 = vadd.f32 %v5708, %v6063
        %v6065 = vpop.f32.mrf.mxu0
        %v6066 = vadd.f32 %v5708, %v6065
        %6067 = vmatmul.bf16.gmra.mxu0 %v5589
        %v6068 = vpop.f32.mrf.mxu0
        %v6069 = vadd.f32 %v5708, %v6068
        %v6070 = vpop.f32.mrf.mxu0
        %v6071 = vadd.f32 %v5708, %v6070
        %6072 = vmatmul.bf16.gmra.mxu0 %v5592
        %v6073 = vpop.f32.mrf.mxu0
        %v6074 = vadd.f32 %v5708, %v6073
        %v6075 = vpop.f32.mrf.mxu0
        %v6076 = vadd.f32 %v5708, %v6075
        %6077 = vmatmul.bf16.gmra.mxu0 %v5595
        %v6078 = vpop.f32.mrf.mxu0
        %v6079 = vadd.f32 %v5708, %v6078
        %v6080 = vpop.f32.mrf.mxu0
        %v6081 = vadd.f32 %v5708, %v6080
        %6082 = vmatmul.bf16.gmra.mxu0 %v5598
        %v6083 = vpop.f32.mrf.mxu0
        %v6084 = vadd.f32 %v5708, %v6083
        %v6085 = vpop.f32.mrf.mxu0
        %v6086 = vadd.f32 %v5708, %v6085
        %6087 = vmatmul.bf16.gmra.mxu0 %v5601
        %v6088 = vpop.f32.mrf.mxu0
        %v6089 = vadd.f32 %v5708, %v6088
        %v6090 = vpop.f32.mrf.mxu0
        %v6091 = vadd.f32 %v5708, %v6090
        %6092 = vmatmul.bf16.gmra.mxu0 %v5604
        %v6093 = vpop.f32.mrf.mxu0
        %v6094 = vadd.f32 %v5708, %v6093
        %v6095 = vpop.f32.mrf.mxu0
        %v6096 = vadd.f32 %v5708, %v6095
        %6097 = vmatmul.bf16.gmra.mxu0 %v5607
        %v6098 = vpop.f32.mrf.mxu0
        %v6099 = vadd.f32 %v5708, %v6098
        %v6100 = vpop.f32.mrf.mxu0
        %v6101 = vadd.f32 %v5708, %v6100
        %6102 = vmatmul.bf16.gmra.mxu0 %v5610
        %v6103 = vpop.f32.mrf.mxu0
        %v6104 = vadd.f32 %v5708, %v6103
        %v6105 = vpop.f32.mrf.mxu0
        %v6106 = vadd.f32 %v5708, %v6105
        %6107 = vmatmul.bf16.gmra.mxu0 %v5613
        %v6108 = vpop.f32.mrf.mxu0
        %v6109 = vadd.f32 %v5708, %v6108
        %v6110 = vpop.f32.mrf.mxu0
        %v6111 = vadd.f32 %v5708, %v6110
        %6112 = vmatmul.bf16.gmra.mxu0 %v5616
        %v6113 = vpop.f32.mrf.mxu0
        %v6114 = vadd.f32 %v5708, %v6113
        %v6115 = vpop.f32.mrf.mxu0
        %v6116 = vadd.f32 %v5708, %v6115
        %6117 = vmatmul.bf16.gmra.mxu0 %v5619
        %v6118 = vpop.f32.mrf.mxu0
        %v6119 = vadd.f32 %v5708, %v6118
        %v6120 = vpop.f32.mrf.mxu0
        %v6121 = vadd.f32 %v5708, %v6120
        %6122 = vmatmul.bf16.gmra.mxu0 %v5622
        %v6123 = vpop.f32.mrf.mxu0
        %v6124 = vadd.f32 %v5708, %v6123
        %v6125 = vpop.f32.mrf.mxu0
        %v6126 = vadd.f32 %v5708, %v6125
        %6127 = vmatmul.bf16.gmra.mxu0 %v5625
        %v6128 = vpop.f32.mrf.mxu0
        %v6129 = vadd.f32 %v5708, %v6128
        %v6130 = vpop.f32.mrf.mxu0
        %v6131 = vadd.f32 %v5708, %v6130
        %6132 = vmatmul.bf16.gmra.mxu0 %v5628
        %v6133 = vpop.f32.mrf.mxu0
        %v6134 = vadd.f32 %v5708, %v6133
        %v6135 = vpop.f32.mrf.mxu0
        %v6136 = vadd.f32 %v5708, %v6135
        %6137 = vmatmul.bf16.gmra.mxu0 %v5631
        %v6138 = vpop.f32.mrf.mxu0
        %v6139 = vadd.f32 %v5708, %v6138
        %v6140 = vpop.f32.mrf.mxu0
        %v6141 = vadd.f32 %v5708, %v6140
        %6142 = vmatmul.bf16.gmra.mxu0 %v5634
        %v6143 = vpop.f32.mrf.mxu0
        %v6144 = vadd.f32 %v5708, %v6143
        %v6145 = vpop.f32.mrf.mxu0
        %v6146 = vadd.f32 %v5708, %v6145
        %6147 = vmatmul.bf16.gmra.mxu0 %v5637
        %v6148 = vpop.f32.mrf.mxu0
        %v6149 = vadd.f32 %v5708, %v6148
        %v6150 = vpop.f32.mrf.mxu0
        %v6151 = vadd.f32 %v5708, %v6150
        %6152 = vmatmul.bf16.gmra.mxu0 %v5640
        %v6153 = vpop.f32.mrf.mxu0
        %v6154 = vadd.f32 %v5708, %v6153
        %v6155 = vpop.f32.mrf.mxu0
        %v6156 = vadd.f32 %v5708, %v6155
        %6157 = vmatmul.bf16.gmra.mxu0 %v5643
        %v6158 = vpop.f32.mrf.mxu0
        %v6159 = vadd.f32 %v5708, %v6158
        %v6160 = vpop.f32.mrf.mxu0
        %v6161 = vadd.f32 %v5708, %v6160
        %6162 = vmatmul.bf16.gmra.mxu0 %v5646
        %v6163 = vpop.f32.mrf.mxu0
        %v6164 = vadd.f32 %v5708, %v6163
        %v6165 = vpop.f32.mrf.mxu0
        %v6166 = vadd.f32 %v5708, %v6165
        %6167 = vmatmul.bf16.gmra.mxu0 %v5649
        %v6168 = vpop.f32.mrf.mxu0
        %v6169 = vadd.f32 %v5708, %v6168
        %v6170 = vpop.f32.mrf.mxu0
        %v6171 = vadd.f32 %v5708, %v6170
        %6172 = vmatmul.bf16.gmra.mxu0 %v5652
        %v6173 = vpop.f32.mrf.mxu0
        %v6174 = vadd.f32 %v5708, %v6173
        %v6175 = vpop.f32.mrf.mxu0
        %v6176 = vadd.f32 %v5708, %v6175
        %6177 = vmatmul.bf16.gmra.mxu0 %v5655
        %v6178 = vpop.f32.mrf.mxu0
        %v6179 = vadd.f32 %v5708, %v6178
        %v6180 = vpop.f32.mrf.mxu0
        %6181 = vdwg.mxu0
        %6182 = vmatpush.bf16.msra.mxu0 %v5821
        %6183 = vmatpush.bf16.msra.mxu0 %v5820
        %6184 = vmatpush.bf16.msra.mxu0 %v5819
        %6185 = vmatpush.bf16.msra.mxu0 %v5818
        %6186 = vmatpush.bf16.msra.mxu0 %v5817
        %6187 = vmatpush.bf16.msra.mxu0 %v5816
        %6188 = vmatpush.bf16.msra.mxu0 %v5815
        %6189 = vmatpush.bf16.msra.mxu0 %v5814
        %6190 = vmatmul.bf16.gmra.mxu0 %v5467
        %v6191 = vpop.f32.mrf.mxu0
        %v6192 = vadd.f32 %v5864, %v6191
        %v6193 = vpop.f32.mrf.mxu0
        %v6194 = vadd.f32 %v5866, %v6193
        %6195 = vmatmul.bf16.gmra.mxu0 %v5470
        %v6196 = vpop.f32.mrf.mxu0
        %v6197 = vadd.f32 %v5869, %v6196
        %v6198 = vpop.f32.mrf.mxu0
        %v6199 = vadd.f32 %v5871, %v6198
        %6200 = vmatmul.bf16.gmra.mxu0 %v5473
        %v6201 = vpop.f32.mrf.mxu0
        %v6202 = vadd.f32 %v5874, %v6201
        %v6203 = vpop.f32.mrf.mxu0
        %v6204 = vadd.f32 %v5876, %v6203
        %6205 = vmatmul.bf16.gmra.mxu0 %v5476
        %v6206 = vpop.f32.mrf.mxu0
        %v6207 = vadd.f32 %v5879, %v6206
        %v6208 = vpop.f32.mrf.mxu0
        %v6209 = vadd.f32 %v5881, %v6208
        %6210 = vmatmul.bf16.gmra.mxu0 %v5479
        %v6211 = vpop.f32.mrf.mxu0
        %v6212 = vadd.f32 %v5884, %v6211
        %v6213 = vpop.f32.mrf.mxu0
        %v6214 = vadd.f32 %v5886, %v6213
        %6215 = vmatmul.bf16.gmra.mxu0 %v5482
        %v6216 = vpop.f32.mrf.mxu0
        %v6217 = vadd.f32 %v5889, %v6216
        %v6218 = vpop.f32.mrf.mxu0
        %v6219 = vadd.f32 %v5891, %v6218
        %6220 = vmatmul.bf16.gmra.mxu0 %v5485
        %v6221 = vpop.f32.mrf.mxu0
        %v6222 = vadd.f32 %v5894, %v6221
        %v6223 = vpop.f32.mrf.mxu0
        %v6224 = vadd.f32 %v5896, %v6223
        %6225 = vmatmul.bf16.gmra.mxu0 %v5488
        %v6226 = vpop.f32.mrf.mxu0
        %v6227 = vadd.f32 %v5899, %v6226
        %v6228 = vpop.f32.mrf.mxu0
        %v6229 = vadd.f32 %v5901, %v6228
        %6230 = vmatmul.bf16.gmra.mxu0 %v5491
        %v6231 = vpop.f32.mrf.mxu0
        %v6232 = vadd.f32 %v5904, %v6231
        %v6233 = vpop.f32.mrf.mxu0
        %v6234 = vadd.f32 %v5906, %v6233
        %6235 = vmatmul.bf16.gmra.mxu0 %v5494
        %v6236 = vpop.f32.mrf.mxu0
        %v6237 = vadd.f32 %v5909, %v6236
        %v6238 = vpop.f32.mrf.mxu0
        %v6239 = vadd.f32 %v5911, %v6238
        %6240 = vmatmul.bf16.gmra.mxu0 %v5497
        %v6241 = vpop.f32.mrf.mxu0
        %v6242 = vadd.f32 %v5914, %v6241
        %v6243 = vpop.f32.mrf.mxu0
        %v6244 = vadd.f32 %v5916, %v6243
        %6245 = vmatmul.bf16.gmra.mxu0 %v5500
        %v6246 = vpop.f32.mrf.mxu0
        %v6247 = vadd.f32 %v5919, %v6246
        %v6248 = vpop.f32.mrf.mxu0
        %v6249 = vadd.f32 %v5921, %v6248
        %6250 = vmatmul.bf16.gmra.mxu0 %v5503
        %v6251 = vpop.f32.mrf.mxu0
        %v6252 = vadd.f32 %v5924, %v6251
        %v6253 = vpop.f32.mrf.mxu0
        %v6254 = vadd.f32 %v5926, %v6253
        %6255 = vmatmul.bf16.gmra.mxu0 %v5506
        %v6256 = vpop.f32.mrf.mxu0
        %v6257 = vadd.f32 %v5929, %v6256
        %v6258 = vpop.f32.mrf.mxu0
        %v6259 = vadd.f32 %v5931, %v6258
        %6260 = vmatmul.bf16.gmra.mxu0 %v5509
        %v6261 = vpop.f32.mrf.mxu0
        %v6262 = vadd.f32 %v5934, %v6261
        %v6263 = vpop.f32.mrf.mxu0
        %v6264 = vadd.f32 %v5936, %v6263
        %6265 = vmatmul.bf16.gmra.mxu0 %v5512
        %v6266 = vpop.f32.mrf.mxu0
        %v6267 = vadd.f32 %v5939, %v6266
        %v6268 = vpop.f32.mrf.mxu0
        %v6269 = vadd.f32 %v5941, %v6268
        %6270 = vmatmul.bf16.gmra.mxu0 %v5515
        %v6271 = vpop.f32.mrf.mxu0
        %v6272 = vadd.f32 %v5944, %v6271
        %v6273 = vpop.f32.mrf.mxu0
        %v6274 = vadd.f32 %v5946, %v6273
        %6275 = vmatmul.bf16.gmra.mxu0 %v5518
        %v6276 = vpop.f32.mrf.mxu0
        %v6277 = vadd.f32 %v5949, %v6276
        %v6278 = vpop.f32.mrf.mxu0
        %v6279 = vadd.f32 %v5951, %v6278
        %6280 = vmatmul.bf16.gmra.mxu0 %v5521
        %v6281 = vpop.f32.mrf.mxu0
        %v6282 = vadd.f32 %v5954, %v6281
        %v6283 = vpop.f32.mrf.mxu0
        %v6284 = vadd.f32 %v5956, %v6283
        %6285 = vmatmul.bf16.gmra.mxu0 %v5524
        %v6286 = vpop.f32.mrf.mxu0
        %v6287 = vadd.f32 %v5959, %v6286
        %v6288 = vpop.f32.mrf.mxu0
        %v6289 = vadd.f32 %v5961, %v6288
        %6290 = vmatmul.bf16.gmra.mxu0 %v5527
        %v6291 = vpop.f32.mrf.mxu0
        %v6292 = vadd.f32 %v5964, %v6291
        %v6293 = vpop.f32.mrf.mxu0
        %v6294 = vadd.f32 %v5966, %v6293
        %6295 = vmatmul.bf16.gmra.mxu0 %v5530
        %v6296 = vpop.f32.mrf.mxu0
        %v6297 = vadd.f32 %v5969, %v6296
        %v6298 = vpop.f32.mrf.mxu0
        %v6299 = vadd.f32 %v5971, %v6298
        %6300 = vmatmul.bf16.gmra.mxu0 %v5533
        %v6301 = vpop.f32.mrf.mxu0
        %v6302 = vadd.f32 %v5974, %v6301
        %v6303 = vpop.f32.mrf.mxu0
        %v6304 = vadd.f32 %v5976, %v6303
        %6305 = vmatmul.bf16.gmra.mxu0 %v5536
        %v6306 = vpop.f32.mrf.mxu0
        %v6307 = vadd.f32 %v5979, %v6306
        %v6308 = vpop.f32.mrf.mxu0
        %v6309 = vadd.f32 %v5981, %v6308
        %6310 = vmatmul.bf16.gmra.mxu0 %v5539
        %v6311 = vpop.f32.mrf.mxu0
        %v6312 = vadd.f32 %v5984, %v6311
        %v6313 = vpop.f32.mrf.mxu0
        %v6314 = vadd.f32 %v5986, %v6313
        %6315 = vmatmul.bf16.gmra.mxu0 %v5542
        %v6316 = vpop.f32.mrf.mxu0
        %v6317 = vadd.f32 %v5989, %v6316
        %v6318 = vpop.f32.mrf.mxu0
        %v6319 = vadd.f32 %v5991, %v6318
        %6320 = vmatmul.bf16.gmra.mxu0 %v5545
        %v6321 = vpop.f32.mrf.mxu0
        %v6322 = vadd.f32 %v5994, %v6321
        %v6323 = vpop.f32.mrf.mxu0
        %v6324 = vadd.f32 %v5996, %v6323
        %6325 = vmatmul.bf16.gmra.mxu0 %v5548
        %v6326 = vpop.f32.mrf.mxu0
        %v6327 = vadd.f32 %v5999, %v6326
        %v6328 = vpop.f32.mrf.mxu0
        %v6329 = vadd.f32 %v6001, %v6328
        %6330 = vmatmul.bf16.gmra.mxu0 %v5551
        %v6331 = vpop.f32.mrf.mxu0
        %v6332 = vadd.f32 %v6004, %v6331
        %v6333 = vpop.f32.mrf.mxu0
        %v6334 = vadd.f32 %v6006, %v6333
        %6335 = vmatmul.bf16.gmra.mxu0 %v5554
        %v6336 = vpop.f32.mrf.mxu0
        %v6337 = vadd.f32 %v6009, %v6336
        %v6338 = vpop.f32.mrf.mxu0
        %v6339 = vadd.f32 %v6011, %v6338
        %6340 = vmatmul.bf16.gmra.mxu0 %v5557
        %v6341 = vpop.f32.mrf.mxu0
        %v6342 = vadd.f32 %v6014, %v6341
        %v6343 = vpop.f32.mrf.mxu0
        %v6344 = vadd.f32 %v6016, %v6343
        %6345 = vmatmul.bf16.gmra.mxu0 %v5560
        %v6346 = vpop.f32.mrf.mxu0
        %v6347 = vadd.f32 %v6019, %v6346
        %v6348 = vpop.f32.mrf.mxu0
        %v6349 = vadd.f32 %v6021, %v6348
        %6350 = vmatmul.bf16.gmra.mxu0 %v5563
        %v6351 = vpop.f32.mrf.mxu0
        %v6352 = vadd.f32 %v6024, %v6351
        %v6353 = vpop.f32.mrf.mxu0
        %v6354 = vadd.f32 %v6026, %v6353
        %6355 = vmatmul.bf16.gmra.mxu0 %v5566
        %v6356 = vpop.f32.mrf.mxu0
        %v6357 = vadd.f32 %v6029, %v6356
        %v6358 = vpop.f32.mrf.mxu0
        %v6359 = vadd.f32 %v6031, %v6358
        %6360 = vmatmul.bf16.gmra.mxu0 %v5569
        %v6361 = vpop.f32.mrf.mxu0
        %v6362 = vadd.f32 %v6034, %v6361
        %v6363 = vpop.f32.mrf.mxu0
        %v6364 = vadd.f32 %v6036, %v6363
        %6365 = vmatmul.bf16.gmra.mxu0 %v5572
        %v6366 = vpop.f32.mrf.mxu0
        %v6367 = vadd.f32 %v6039, %v6366
        %v6368 = vpop.f32.mrf.mxu0
        %v6369 = vadd.f32 %v6041, %v6368
        %6370 = vmatmul.bf16.gmra.mxu0 %v5575
        %v6371 = vpop.f32.mrf.mxu0
        %v6372 = vadd.f32 %v6044, %v6371
        %v6373 = vpop.f32.mrf.mxu0
        %v6374 = vadd.f32 %v6046, %v6373
        %6375 = vmatmul.bf16.gmra.mxu0 %v5578
        %v6376 = vpop.f32.mrf.mxu0
        %v6377 = vadd.f32 %v6049, %v6376
        %v6378 = vpop.f32.mrf.mxu0
        %v6379 = vadd.f32 %v6051, %v6378
        %6380 = vmatmul.bf16.gmra.mxu0 %v5581
        %v6381 = vpop.f32.mrf.mxu0
        %v6382 = vadd.f32 %v6054, %v6381
        %v6383 = vpop.f32.mrf.mxu0
        %v6384 = vadd.f32 %v6056, %v6383
        %6385 = vmatmul.bf16.gmra.mxu0 %v5584
        %v6386 = vpop.f32.mrf.mxu0
        %v6387 = vadd.f32 %v6059, %v6386
        %v6388 = vpop.f32.mrf.mxu0
        %v6389 = vadd.f32 %v6061, %v6388
        %6390 = vmatmul.bf16.gmra.mxu0 %v5587
        %v6391 = vpop.f32.mrf.mxu0
        %v6392 = vadd.f32 %v6064, %v6391
        %v6393 = vpop.f32.mrf.mxu0
        %v6394 = vadd.f32 %v6066, %v6393
        %6395 = vmatmul.bf16.gmra.mxu0 %v5590
        %v6396 = vpop.f32.mrf.mxu0
        %v6397 = vadd.f32 %v6069, %v6396
        %v6398 = vpop.f32.mrf.mxu0
        %v6399 = vadd.f32 %v6071, %v6398
        %6400 = vmatmul.bf16.gmra.mxu0 %v5593
        %v6401 = vpop.f32.mrf.mxu0
        %v6402 = vadd.f32 %v6074, %v6401
        %v6403 = vpop.f32.mrf.mxu0
        %v6404 = vadd.f32 %v6076, %v6403
        %6405 = vmatmul.bf16.gmra.mxu0 %v5596
        %v6406 = vpop.f32.mrf.mxu0
        %v6407 = vadd.f32 %v6079, %v6406
        %v6408 = vpop.f32.mrf.mxu0
        %v6409 = vadd.f32 %v6081, %v6408
        %6410 = vmatmul.bf16.gmra.mxu0 %v5599
        %v6411 = vpop.f32.mrf.mxu0
        %v6412 = vadd.f32 %v6084, %v6411
        %v6413 = vpop.f32.mrf.mxu0
        %v6414 = vadd.f32 %v6086, %v6413
        %6415 = vmatmul.bf16.gmra.mxu0 %v5602
        %v6416 = vpop.f32.mrf.mxu0
        %v6417 = vadd.f32 %v6089, %v6416
        %v6418 = vpop.f32.mrf.mxu0
        %v6419 = vadd.f32 %v6091, %v6418
        %6420 = vmatmul.bf16.gmra.mxu0 %v5605
        %v6421 = vpop.f32.mrf.mxu0
        %v6422 = vadd.f32 %v6094, %v6421
        %v6423 = vpop.f32.mrf.mxu0
        %v6424 = vadd.f32 %v6096, %v6423
        %6425 = vmatmul.bf16.gmra.mxu0 %v5608
        %v6426 = vpop.f32.mrf.mxu0
        %v6427 = vadd.f32 %v6099, %v6426
        %v6428 = vpop.f32.mrf.mxu0
        %v6429 = vadd.f32 %v6101, %v6428
        %6430 = vmatmul.bf16.gmra.mxu0 %v5611
        %v6431 = vpop.f32.mrf.mxu0
        %v6432 = vadd.f32 %v6104, %v6431
        %v6433 = vpop.f32.mrf.mxu0
        %v6434 = vadd.f32 %v6106, %v6433
        %6435 = vmatmul.bf16.gmra.mxu0 %v5614
        %v6436 = vpop.f32.mrf.mxu0
        %v6437 = vadd.f32 %v6109, %v6436
        %v6438 = vpop.f32.mrf.mxu0
        %v6439 = vadd.f32 %v6111, %v6438
        %6440 = vmatmul.bf16.gmra.mxu0 %v5617
        %v6441 = vpop.f32.mrf.mxu0
        %v6442 = vadd.f32 %v6114, %v6441
        %v6443 = vpop.f32.mrf.mxu0
        %v6444 = vadd.f32 %v6116, %v6443
        %6445 = vmatmul.bf16.gmra.mxu0 %v5620
        %v6446 = vpop.f32.mrf.mxu0
        %v6447 = vadd.f32 %v6119, %v6446
        %v6448 = vpop.f32.mrf.mxu0
        %v6449 = vadd.f32 %v6121, %v6448
        %6450 = vmatmul.bf16.gmra.mxu0 %v5623
        %v6451 = vpop.f32.mrf.mxu0
        %v6452 = vadd.f32 %v6124, %v6451
        %v6453 = vpop.f32.mrf.mxu0
        %v6454 = vadd.f32 %v6126, %v6453
        %6455 = vmatmul.bf16.gmra.mxu0 %v5626
        %v6456 = vpop.f32.mrf.mxu0
        %v6457 = vadd.f32 %v6129, %v6456
        %v6458 = vpop.f32.mrf.mxu0
        %v6459 = vadd.f32 %v6131, %v6458
        %6460 = vmatmul.bf16.gmra.mxu0 %v5629
        %v6461 = vpop.f32.mrf.mxu0
        %v6462 = vadd.f32 %v6134, %v6461
        %v6463 = vpop.f32.mrf.mxu0
        %v6464 = vadd.f32 %v6136, %v6463
        %6465 = vmatmul.bf16.gmra.mxu0 %v5632
        %v6466 = vpop.f32.mrf.mxu0
        %v6467 = vadd.f32 %v6139, %v6466
        %v6468 = vpop.f32.mrf.mxu0
        %v6469 = vadd.f32 %v6141, %v6468
        %6470 = vmatmul.bf16.gmra.mxu0 %v5635
        %v6471 = vpop.f32.mrf.mxu0
        %v6472 = vadd.f32 %v6144, %v6471
        %v6473 = vpop.f32.mrf.mxu0
        %v6474 = vadd.f32 %v6146, %v6473
        %6475 = vmatmul.bf16.gmra.mxu0 %v5638
        %v6476 = vpop.f32.mrf.mxu0
        %v6477 = vadd.f32 %v6149, %v6476
        %v6478 = vpop.f32.mrf.mxu0
        %v6479 = vadd.f32 %v6151, %v6478
        %6480 = vmatmul.bf16.gmra.mxu0 %v5641
        %v6481 = vpop.f32.mrf.mxu0
        %v6482 = vadd.f32 %v6154, %v6481
        %v6483 = vpop.f32.mrf.mxu0
        %v6484 = vadd.f32 %v6156, %v6483
        %6485 = vmatmul.bf16.gmra.mxu0 %v5644
        %v6486 = vpop.f32.mrf.mxu0
        %v6487 = vadd.f32 %v6159, %v6486
        %v6488 = vpop.f32.mrf.mxu0
        %v6489 = vadd.f32 %v6161, %v6488
        %6490 = vmatmul.bf16.gmra.mxu0 %v5647
        %v6491 = vpop.f32.mrf.mxu0
        %v6492 = vadd.f32 %v6164, %v6491
        %v6493 = vpop.f32.mrf.mxu0
        %v6494 = vadd.f32 %v6166, %v6493
        %6495 = vmatmul.bf16.gmra.mxu0 %v5650
        %v6496 = vpop.f32.mrf.mxu0
        %v6497 = vadd.f32 %v6169, %v6496
        %v6498 = vpop.f32.mrf.mxu0
        %v6499 = vadd.f32 %v6171, %v6498
        %6500 = vmatmul.bf16.gmra.mxu0 %v5653
        %v6501 = vpop.f32.mrf.mxu0
        %v6502 = vadd.f32 %v6174, %v6501
        %v6503 = vpop.f32.mrf.mxu0
        %v6504 = vadd.f32 %v6176, %v6503
        %6505 = vmatmul.bf16.gmra.mxu0 %v5656
        %v6506 = vpop.f32.mrf.mxu0
        %v6507 = vadd.f32 %v6179, %v6506
        %v6508 = vpop.f32.mrf.mxu0
        %6509 = vdwg.mxu0
        %6510 = vmatpush.bf16.msra.mxu0 %v5829
        %6511 = vmatpush.bf16.msra.mxu0 %v5828
        %6512 = vmatpush.bf16.msra.mxu0 %v5827
        %6513 = vmatpush.bf16.msra.mxu0 %v5826
        %6514 = vmatpush.bf16.msra.mxu0 %v5825
        %6515 = vmatpush.bf16.msra.mxu0 %v5824
        %6516 = vmatpush.bf16.msra.mxu0 %v5823
        %6517 = vmatpush.bf16.msra.mxu0 %v5822
        %6518 = vmatmul.bf16.gmra.mxu0 %v5468
        %v6519 = vpop.f32.mrf.mxu0
        %v6520 = vadd.f32 %v6192, %v6519
        %v6521 = vpop.f32.mrf.mxu0
        %v6522 = vadd.f32 %v6194, %v6521
        %6523 = vmatmul.bf16.gmra.mxu0 %v5471
        %v6524 = vpop.f32.mrf.mxu0
        %v6525 = vadd.f32 %v6197, %v6524
        %v6526 = vpop.f32.mrf.mxu0
        %v6527 = vadd.f32 %v6199, %v6526
        %6528 = vmatmul.bf16.gmra.mxu0 %v5474
        %v6529 = vpop.f32.mrf.mxu0
        %v6530 = vadd.f32 %v6202, %v6529
        %v6531 = vpop.f32.mrf.mxu0
        %v6532 = vadd.f32 %v6204, %v6531
        %6533 = vmatmul.bf16.gmra.mxu0 %v5477
        %v6534 = vpop.f32.mrf.mxu0
        %v6535 = vadd.f32 %v6207, %v6534
        %v6536 = vpop.f32.mrf.mxu0
        %v6537 = vadd.f32 %v6209, %v6536
        %6538 = vmatmul.bf16.gmra.mxu0 %v5480
        %v6539 = vpop.f32.mrf.mxu0
        %v6540 = vadd.f32 %v6212, %v6539
        %v6541 = vpop.f32.mrf.mxu0
        %v6542 = vadd.f32 %v6214, %v6541
        %6543 = vmatmul.bf16.gmra.mxu0 %v5483
        %v6544 = vpop.f32.mrf.mxu0
        %v6545 = vadd.f32 %v6217, %v6544
        %v6546 = vpop.f32.mrf.mxu0
        %v6547 = vadd.f32 %v6219, %v6546
        %6548 = vmatmul.bf16.gmra.mxu0 %v5486
        %v6549 = vpop.f32.mrf.mxu0
        %v6550 = vadd.f32 %v6222, %v6549
        %v6551 = vpop.f32.mrf.mxu0
        %v6552 = vadd.f32 %v6224, %v6551
        %6553 = vmatmul.bf16.gmra.mxu0 %v5489
        %v6554 = vpop.f32.mrf.mxu0
        %v6555 = vadd.f32 %v6227, %v6554
        %v6556 = vpop.f32.mrf.mxu0
        %v6557 = vadd.f32 %v6229, %v6556
        %6558 = vmatmul.bf16.gmra.mxu0 %v5492
        %v6559 = vpop.f32.mrf.mxu0
        %v6560 = vadd.f32 %v6232, %v6559
        %v6561 = vpop.f32.mrf.mxu0
        %v6562 = vadd.f32 %v6234, %v6561
        %6563 = vmatmul.bf16.gmra.mxu0 %v5495
        %v6564 = vpop.f32.mrf.mxu0
        %v6565 = vadd.f32 %v6237, %v6564
        %v6566 = vpop.f32.mrf.mxu0
        %v6567 = vadd.f32 %v6239, %v6566
        %6568 = vmatmul.bf16.gmra.mxu0 %v5498
        %v6569 = vpop.f32.mrf.mxu0
        %v6570 = vadd.f32 %v6242, %v6569
        %v6571 = vpop.f32.mrf.mxu0
        %v6572 = vadd.f32 %v6244, %v6571
        %6573 = vmatmul.bf16.gmra.mxu0 %v5501
        %v6574 = vpop.f32.mrf.mxu0
        %v6575 = vadd.f32 %v6247, %v6574
        %v6576 = vpop.f32.mrf.mxu0
        %v6577 = vadd.f32 %v6249, %v6576
        %6578 = vmatmul.bf16.gmra.mxu0 %v5504
        %v6579 = vpop.f32.mrf.mxu0
        %v6580 = vadd.f32 %v6252, %v6579
        %v6581 = vpop.f32.mrf.mxu0
        %v6582 = vadd.f32 %v6254, %v6581
        %6583 = vmatmul.bf16.gmra.mxu0 %v5507
        %v6584 = vpop.f32.mrf.mxu0
        %v6585 = vadd.f32 %v6257, %v6584
        %v6586 = vpop.f32.mrf.mxu0
        %v6587 = vadd.f32 %v6259, %v6586
        %6588 = vmatmul.bf16.gmra.mxu0 %v5510
        %v6589 = vpop.f32.mrf.mxu0
        %v6590 = vadd.f32 %v6262, %v6589
        %v6591 = vpop.f32.mrf.mxu0
        %v6592 = vadd.f32 %v6264, %v6591
        %6593 = vmatmul.bf16.gmra.mxu0 %v5513
        %v6594 = vpop.f32.mrf.mxu0
        %v6595 = vadd.f32 %v6267, %v6594
        %v6596 = vpop.f32.mrf.mxu0
        %v6597 = vadd.f32 %v6269, %v6596
        %6598 = vmatmul.bf16.gmra.mxu0 %v5516
        %v6599 = vpop.f32.mrf.mxu0
        %v6600 = vadd.f32 %v6272, %v6599
        %v6601 = vpop.f32.mrf.mxu0
        %v6602 = vadd.f32 %v6274, %v6601
        %6603 = vmatmul.bf16.gmra.mxu0 %v5519
        %v6604 = vpop.f32.mrf.mxu0
        %v6605 = vadd.f32 %v6277, %v6604
        %v6606 = vpop.f32.mrf.mxu0
        %v6607 = vadd.f32 %v6279, %v6606
        %6608 = vmatmul.bf16.gmra.mxu0 %v5522
        %v6609 = vpop.f32.mrf.mxu0
        %v6610 = vadd.f32 %v6282, %v6609
        %v6611 = vpop.f32.mrf.mxu0
        %v6612 = vadd.f32 %v6284, %v6611
        %6613 = vmatmul.bf16.gmra.mxu0 %v5525
        %v6614 = vpop.f32.mrf.mxu0
        %v6615 = vadd.f32 %v6287, %v6614
        %v6616 = vpop.f32.mrf.mxu0
        %v6617 = vadd.f32 %v6289, %v6616
        %6618 = vmatmul.bf16.gmra.mxu0 %v5528
        %v6619 = vpop.f32.mrf.mxu0
        %v6620 = vadd.f32 %v6292, %v6619
        %v6621 = vpop.f32.mrf.mxu0
        %v6622 = vadd.f32 %v6294, %v6621
        %6623 = vmatmul.bf16.gmra.mxu0 %v5531
        %v6624 = vpop.f32.mrf.mxu0
        %v6625 = vadd.f32 %v6297, %v6624
        %v6626 = vpop.f32.mrf.mxu0
        %v6627 = vadd.f32 %v6299, %v6626
        %6628 = vmatmul.bf16.gmra.mxu0 %v5534
        %v6629 = vpop.f32.mrf.mxu0
        %v6630 = vadd.f32 %v6302, %v6629
        %v6631 = vpop.f32.mrf.mxu0
        %v6632 = vadd.f32 %v6304, %v6631
        %6633 = vmatmul.bf16.gmra.mxu0 %v5537
        %v6634 = vpop.f32.mrf.mxu0
        %v6635 = vadd.f32 %v6307, %v6634
        %v6636 = vpop.f32.mrf.mxu0
        %v6637 = vadd.f32 %v6309, %v6636
        %6638 = vmatmul.bf16.gmra.mxu0 %v5540
        %v6639 = vpop.f32.mrf.mxu0
        %v6640 = vadd.f32 %v6312, %v6639
        %v6641 = vpop.f32.mrf.mxu0
        %v6642 = vadd.f32 %v6314, %v6641
        %6643 = vmatmul.bf16.gmra.mxu0 %v5543
        %v6644 = vpop.f32.mrf.mxu0
        %v6645 = vadd.f32 %v6317, %v6644
        %v6646 = vpop.f32.mrf.mxu0
        %v6647 = vadd.f32 %v6319, %v6646
        %6648 = vmatmul.bf16.gmra.mxu0 %v5546
        %v6649 = vpop.f32.mrf.mxu0
        %v6650 = vadd.f32 %v6322, %v6649
        %v6651 = vpop.f32.mrf.mxu0
        %v6652 = vadd.f32 %v6324, %v6651
        %6653 = vmatmul.bf16.gmra.mxu0 %v5549
        %v6654 = vpop.f32.mrf.mxu0
        %v6655 = vadd.f32 %v6327, %v6654
        %v6656 = vpop.f32.mrf.mxu0
        %v6657 = vadd.f32 %v6329, %v6656
        %6658 = vmatmul.bf16.gmra.mxu0 %v5552
        %v6659 = vpop.f32.mrf.mxu0
        %v6660 = vadd.f32 %v6332, %v6659
        %v6661 = vpop.f32.mrf.mxu0
        %v6662 = vadd.f32 %v6334, %v6661
        %6663 = vmatmul.bf16.gmra.mxu0 %v5555
        %v6664 = vpop.f32.mrf.mxu0
        %v6665 = vadd.f32 %v6337, %v6664
        %v6666 = vpop.f32.mrf.mxu0
        %v6667 = vadd.f32 %v6339, %v6666
        %6668 = vmatmul.bf16.gmra.mxu0 %v5558
        %v6669 = vpop.f32.mrf.mxu0
        %v6670 = vadd.f32 %v6342, %v6669
        %v6671 = vpop.f32.mrf.mxu0
        %v6672 = vadd.f32 %v6344, %v6671
        %6673 = vmatmul.bf16.gmra.mxu0 %v5561
        %v6674 = vpop.f32.mrf.mxu0
        %v6675 = vadd.f32 %v6347, %v6674
        %v6676 = vpop.f32.mrf.mxu0
        %v6677 = vadd.f32 %v6349, %v6676
        %6678 = vmatmul.bf16.gmra.mxu0 %v5564
        %v6679 = vpop.f32.mrf.mxu0
        %v6680 = vadd.f32 %v6352, %v6679
        %v6681 = vpop.f32.mrf.mxu0
        %v6682 = vadd.f32 %v6354, %v6681
        %6683 = vmatmul.bf16.gmra.mxu0 %v5567
        %v6684 = vpop.f32.mrf.mxu0
        %v6685 = vadd.f32 %v6357, %v6684
        %v6686 = vpop.f32.mrf.mxu0
        %v6687 = vadd.f32 %v6359, %v6686
        %6688 = vmatmul.bf16.gmra.mxu0 %v5570
        %v6689 = vpop.f32.mrf.mxu0
        %v6690 = vadd.f32 %v6362, %v6689
        %v6691 = vpop.f32.mrf.mxu0
        %v6692 = vadd.f32 %v6364, %v6691
        %6693 = vmatmul.bf16.gmra.mxu0 %v5573
        %v6694 = vpop.f32.mrf.mxu0
        %v6695 = vadd.f32 %v6367, %v6694
        %v6696 = vpop.f32.mrf.mxu0
        %v6697 = vadd.f32 %v6369, %v6696
        %6698 = vmatmul.bf16.gmra.mxu0 %v5576
        %v6699 = vpop.f32.mrf.mxu0
        %v6700 = vadd.f32 %v6372, %v6699
        %v6701 = vpop.f32.mrf.mxu0
        %v6702 = vadd.f32 %v6374, %v6701
        %6703 = vmatmul.bf16.gmra.mxu0 %v5579
        %v6704 = vpop.f32.mrf.mxu0
        %v6705 = vadd.f32 %v6377, %v6704
        %v6706 = vpop.f32.mrf.mxu0
        %v6707 = vadd.f32 %v6379, %v6706
        %6708 = vmatmul.bf16.gmra.mxu0 %v5582
        %v6709 = vpop.f32.mrf.mxu0
        %v6710 = vadd.f32 %v6382, %v6709
        %v6711 = vpop.f32.mrf.mxu0
        %v6712 = vadd.f32 %v6384, %v6711
        %6713 = vmatmul.bf16.gmra.mxu0 %v5585
        %v6714 = vpop.f32.mrf.mxu0
        %v6715 = vadd.f32 %v6387, %v6714
        %v6716 = vpop.f32.mrf.mxu0
        %v6717 = vadd.f32 %v6389, %v6716
        %6718 = vmatmul.bf16.gmra.mxu0 %v5588
        %v6719 = vpop.f32.mrf.mxu0
        %v6720 = vadd.f32 %v6392, %v6719
        %v6721 = vpop.f32.mrf.mxu0
        %v6722 = vadd.f32 %v6394, %v6721
        %6723 = vmatmul.bf16.gmra.mxu0 %v5591
        %v6724 = vpop.f32.mrf.mxu0
        %v6725 = vadd.f32 %v6397, %v6724
        %v6726 = vpop.f32.mrf.mxu0
        %v6727 = vadd.f32 %v6399, %v6726
        %6728 = vmatmul.bf16.gmra.mxu0 %v5594
        %v6729 = vpop.f32.mrf.mxu0
        %v6730 = vadd.f32 %v6402, %v6729
        %v6731 = vpop.f32.mrf.mxu0
        %v6732 = vadd.f32 %v6404, %v6731
        %6733 = vmatmul.bf16.gmra.mxu0 %v5597
        %v6734 = vpop.f32.mrf.mxu0
        %v6735 = vadd.f32 %v6407, %v6734
        %v6736 = vpop.f32.mrf.mxu0
        %v6737 = vadd.f32 %v6409, %v6736
        %6738 = vmatmul.bf16.gmra.mxu0 %v5600
        %v6739 = vpop.f32.mrf.mxu0
        %v6740 = vadd.f32 %v6412, %v6739
        %v6741 = vpop.f32.mrf.mxu0
        %v6742 = vadd.f32 %v6414, %v6741
        %6743 = vmatmul.bf16.gmra.mxu0 %v5603
        %v6744 = vpop.f32.mrf.mxu0
        %v6745 = vadd.f32 %v6417, %v6744
        %v6746 = vpop.f32.mrf.mxu0
        %v6747 = vadd.f32 %v6419, %v6746
        %6748 = vmatmul.bf16.gmra.mxu0 %v5606
        %v6749 = vpop.f32.mrf.mxu0
        %v6750 = vadd.f32 %v6422, %v6749
        %v6751 = vpop.f32.mrf.mxu0
        %v6752 = vadd.f32 %v6424, %v6751
        %6753 = vmatmul.bf16.gmra.mxu0 %v5609
        %v6754 = vpop.f32.mrf.mxu0
        %v6755 = vadd.f32 %v6427, %v6754
        %v6756 = vpop.f32.mrf.mxu0
        %v6757 = vadd.f32 %v6429, %v6756
        %6758 = vmatmul.bf16.gmra.mxu0 %v5612
        %v6759 = vpop.f32.mrf.mxu0
        %v6760 = vadd.f32 %v6432, %v6759
        %v6761 = vpop.f32.mrf.mxu0
        %v6762 = vadd.f32 %v6434, %v6761
        %6763 = vmatmul.bf16.gmra.mxu0 %v5615
        %v6764 = vpop.f32.mrf.mxu0
        %v6765 = vadd.f32 %v6437, %v6764
        %v6766 = vpop.f32.mrf.mxu0
        %v6767 = vadd.f32 %v6439, %v6766
        %6768 = vmatmul.bf16.gmra.mxu0 %v5618
        %v6769 = vpop.f32.mrf.mxu0
        %v6770 = vadd.f32 %v6442, %v6769
        %v6771 = vpop.f32.mrf.mxu0
        %v6772 = vadd.f32 %v6444, %v6771
        %6773 = vmatmul.bf16.gmra.mxu0 %v5621
        %v6774 = vpop.f32.mrf.mxu0
        %v6775 = vadd.f32 %v6447, %v6774
        %v6776 = vpop.f32.mrf.mxu0
        %v6777 = vadd.f32 %v6449, %v6776
        %6778 = vmatmul.bf16.gmra.mxu0 %v5624
        %v6779 = vpop.f32.mrf.mxu0
        %v6780 = vadd.f32 %v6452, %v6779
        %v6781 = vpop.f32.mrf.mxu0
        %v6782 = vadd.f32 %v6454, %v6781
        %6783 = vmatmul.bf16.gmra.mxu0 %v5627
        %v6784 = vpop.f32.mrf.mxu0
        %v6785 = vadd.f32 %v6457, %v6784
        %v6786 = vpop.f32.mrf.mxu0
        %v6787 = vadd.f32 %v6459, %v6786
        %6788 = vmatmul.bf16.gmra.mxu0 %v5630
        %v6789 = vpop.f32.mrf.mxu0
        %v6790 = vadd.f32 %v6462, %v6789
        %v6791 = vpop.f32.mrf.mxu0
        %v6792 = vadd.f32 %v6464, %v6791
        %6793 = vmatmul.bf16.gmra.mxu0 %v5633
        %v6794 = vpop.f32.mrf.mxu0
        %v6795 = vadd.f32 %v6467, %v6794
        %v6796 = vpop.f32.mrf.mxu0
        %v6797 = vadd.f32 %v6469, %v6796
        %6798 = vmatmul.bf16.gmra.mxu0 %v5636
        %v6799 = vpop.f32.mrf.mxu0
        %v6800 = vadd.f32 %v6472, %v6799
        %v6801 = vpop.f32.mrf.mxu0
        %v6802 = vadd.f32 %v6474, %v6801
        %6803 = vmatmul.bf16.gmra.mxu0 %v5639
        %v6804 = vpop.f32.mrf.mxu0
        %v6805 = vadd.f32 %v6477, %v6804
        %v6806 = vpop.f32.mrf.mxu0
        %v6807 = vadd.f32 %v6479, %v6806
        %6808 = vmatmul.bf16.gmra.mxu0 %v5642
        %v6809 = vpop.f32.mrf.mxu0
        %v6810 = vadd.f32 %v6482, %v6809
        %v6811 = vpop.f32.mrf.mxu0
        %v6812 = vadd.f32 %v6484, %v6811
        %6813 = vmatmul.bf16.gmra.mxu0 %v5645
        %v6814 = vpop.f32.mrf.mxu0
        %v6815 = vadd.f32 %v6487, %v6814
        %v6816 = vpop.f32.mrf.mxu0
        %v6817 = vadd.f32 %v6489, %v6816
        %6818 = vmatmul.bf16.gmra.mxu0 %v5648
        %v6819 = vpop.f32.mrf.mxu0
        %v6820 = vadd.f32 %v6492, %v6819
        %v6821 = vpop.f32.mrf.mxu0
        %v6822 = vadd.f32 %v6494, %v6821
        %6823 = vmatmul.bf16.gmra.mxu0 %v5651
        %v6824 = vpop.f32.mrf.mxu0
        %v6825 = vadd.f32 %v6497, %v6824
        %v6826 = vpop.f32.mrf.mxu0
        %v6827 = vadd.f32 %v6499, %v6826
        %6828 = vmatmul.bf16.gmra.mxu0 %v5654
        %v6829 = vpop.f32.mrf.mxu0
        %v6830 = vadd.f32 %v6502, %v6829
        %v6831 = vpop.f32.mrf.mxu0
        %v6832 = vadd.f32 %v6504, %v6831
        %6833 = vmatmul.bf16.gmra.mxu0 %v5657
        %v6834 = vpop.f32.mrf.mxu0
        %v6835 = vadd.f32 %v6507, %v6834
        %v6836 = vpop.f32.mrf.mxu0
        %6837 = vdwg.mxu0
        %v6838 = vxor.u32 %v6520, 2147483648
        %v6839 = vxor.u32 %v6522, 2147483648
        %v6840 = vxor.u32 %v6525, 2147483648
        %v6841 = vxor.u32 %v6527, 2147483648
        %v6842 = vxor.u32 %v6530, 2147483648
        %v6843 = vxor.u32 %v6532, 2147483648
        %v6844 = vxor.u32 %v6535, 2147483648
        %v6845 = vxor.u32 %v6537, 2147483648
        %v6846 = vxor.u32 %v6540, 2147483648
        %v6847 = vxor.u32 %v6542, 2147483648
        %v6848 = vxor.u32 %v6545, 2147483648
        %v6849 = vxor.u32 %v6547, 2147483648
        %v6850 = vxor.u32 %v6550, 2147483648
        %v6851 = vxor.u32 %v6552, 2147483648
        %v6852 = vxor.u32 %v6555, 2147483648
        %v6853 = vxor.u32 %v6557, 2147483648
        %v6854 = vxor.u32 %v6560, 2147483648
        %v6855 = vxor.u32 %v6562, 2147483648
        %v6856 = vxor.u32 %v6565, 2147483648
        %v6857 = vxor.u32 %v6567, 2147483648
        %v6858 = vxor.u32 %v6570, 2147483648
        %v6859 = vxor.u32 %v6572, 2147483648
        %v6860 = vxor.u32 %v6575, 2147483648
        %v6861 = vxor.u32 %v6577, 2147483648
        %v6862 = vxor.u32 %v6580, 2147483648
        %v6863 = vxor.u32 %v6582, 2147483648
        %v6864 = vxor.u32 %v6585, 2147483648
        %v6865 = vxor.u32 %v6587, 2147483648
        %v6866 = vxor.u32 %v6590, 2147483648
        %v6867 = vxor.u32 %v6592, 2147483648
        %v6868 = vxor.u32 %v6595, 2147483648
        %v6869 = vxor.u32 %v6597, 2147483648
        %v6870 = vxor.u32 %v6600, 2147483648
        %v6871 = vxor.u32 %v6602, 2147483648
        %v6872 = vxor.u32 %v6605, 2147483648
        %v6873 = vxor.u32 %v6607, 2147483648
        %v6874 = vxor.u32 %v6610, 2147483648
        %v6875 = vxor.u32 %v6612, 2147483648
        %v6876 = vxor.u32 %v6615, 2147483648
        %v6877 = vxor.u32 %v6617, 2147483648
        %v6878 = vxor.u32 %v6620, 2147483648
        %v6879 = vxor.u32 %v6622, 2147483648
        %v6880 = vxor.u32 %v6625, 2147483648
        %v6881 = vxor.u32 %v6627, 2147483648
        %v6882 = vxor.u32 %v6630, 2147483648
        %v6883 = vxor.u32 %v6632, 2147483648
        %v6884 = vxor.u32 %v6635, 2147483648
        %v6885 = vxor.u32 %v6637, 2147483648
        %v6886 = vxor.u32 %v6640, 2147483648
        %v6887 = vxor.u32 %v6642, 2147483648
        %v6888 = vxor.u32 %v6645, 2147483648
        %v6889 = vxor.u32 %v6647, 2147483648
        %v6890 = vxor.u32 %v6650, 2147483648
        %v6891 = vxor.u32 %v6652, 2147483648
        %v6892 = vxor.u32 %v6655, 2147483648
        %v6893 = vxor.u32 %v6657, 2147483648
        %v6894 = vxor.u32 %v6660, 2147483648
        %v6895 = vxor.u32 %v6662, 2147483648
        %v6896 = vxor.u32 %v6665, 2147483648
        %v6897 = vxor.u32 %v6667, 2147483648
        %v6898 = vxor.u32 %v6670, 2147483648
        %v6899 = vxor.u32 %v6672, 2147483648
        %v6900 = vxor.u32 %v6675, 2147483648
        %v6901 = vxor.u32 %v6677, 2147483648
        %v6902 = vxor.u32 %v6680, 2147483648
        %v6903 = vxor.u32 %v6682, 2147483648
        %v6904 = vxor.u32 %v6685, 2147483648
        %v6905 = vxor.u32 %v6687, 2147483648
        %v6906 = vxor.u32 %v6690, 2147483648
        %v6907 = vxor.u32 %v6692, 2147483648
        %v6908 = vxor.u32 %v6695, 2147483648
        %v6909 = vxor.u32 %v6697, 2147483648
        %v6910 = vxor.u32 %v6700, 2147483648
        %v6911 = vxor.u32 %v6702, 2147483648
        %v6912 = vxor.u32 %v6705, 2147483648
        %v6913 = vxor.u32 %v6707, 2147483648
        %v6914 = vxor.u32 %v6710, 2147483648
        %v6915 = vxor.u32 %v6712, 2147483648
        %v6916 = vxor.u32 %v6715, 2147483648
        %v6917 = vxor.u32 %v6717, 2147483648
        %v6918 = vxor.u32 %v6720, 2147483648
        %v6919 = vxor.u32 %v6722, 2147483648
        %v6920 = vxor.u32 %v6725, 2147483648
        %v6921 = vxor.u32 %v6727, 2147483648
        %v6922 = vxor.u32 %v6730, 2147483648
        %v6923 = vxor.u32 %v6732, 2147483648
        %v6924 = vxor.u32 %v6735, 2147483648
        %v6925 = vxor.u32 %v6737, 2147483648
        %v6926 = vxor.u32 %v6740, 2147483648
        %v6927 = vxor.u32 %v6742, 2147483648
        %v6928 = vxor.u32 %v6745, 2147483648
        %v6929 = vxor.u32 %v6747, 2147483648
        %v6930 = vxor.u32 %v6750, 2147483648
        %v6931 = vxor.u32 %v6752, 2147483648
        %v6932 = vxor.u32 %v6755, 2147483648
        %v6933 = vxor.u32 %v6757, 2147483648
        %v6934 = vxor.u32 %v6760, 2147483648
        %v6935 = vxor.u32 %v6762, 2147483648
        %v6936 = vxor.u32 %v6765, 2147483648
        %v6937 = vxor.u32 %v6767, 2147483648
        %v6938 = vxor.u32 %v6770, 2147483648
        %v6939 = vxor.u32 %v6772, 2147483648
        %v6940 = vxor.u32 %v6775, 2147483648
        %v6941 = vxor.u32 %v6777, 2147483648
        %v6942 = vxor.u32 %v6780, 2147483648
        %v6943 = vxor.u32 %v6782, 2147483648
        %v6944 = vxor.u32 %v6785, 2147483648
        %v6945 = vxor.u32 %v6787, 2147483648
        %v6946 = vxor.u32 %v6790, 2147483648
        %v6947 = vxor.u32 %v6792, 2147483648
        %v6948 = vxor.u32 %v6795, 2147483648
        %v6949 = vxor.u32 %v6797, 2147483648
        %v6950 = vxor.u32 %v6800, 2147483648
        %v6951 = vxor.u32 %v6802, 2147483648
        %v6952 = vxor.u32 %v6805, 2147483648
        %v6953 = vxor.u32 %v6807, 2147483648
        %v6954 = vxor.u32 %v6810, 2147483648
        %v6955 = vxor.u32 %v6812, 2147483648
        %v6956 = vxor.u32 %v6815, 2147483648
        %v6957 = vxor.u32 %v6817, 2147483648
        %v6958 = vxor.u32 %v6820, 2147483648
        %v6959 = vxor.u32 %v6822, 2147483648
        %v6960 = vxor.u32 %v6825, 2147483648
        %v6961 = vxor.u32 %v6827, 2147483648
        %v6962 = vxor.u32 %v6830, 2147483648
        %v6963 = vxor.u32 %v6832, 2147483648
        %v6964 = vxor.u32 %v6835, 2147483648
        %v6965 = vmul.f32 %v6838, 1.442695
        %v6966 = vpow.pop %v6965
        %v6967 = vmul.f32 %v6839, 1.442695
        %v6968 = vpow.pop %v6967
        %v6969 = vmul.f32 %v6840, 1.442695
        %v6970 = vpow.pop %v6969
        %v6971 = vmul.f32 %v6841, 1.442695
        %v6972 = vpow.pop %v6971
        %v6973 = vmul.f32 %v6842, 1.442695
        %v6974 = vpow.pop %v6973
        %v6975 = vmul.f32 %v6843, 1.442695
        %v6976 = vpow.pop %v6975
        %v6977 = vmul.f32 %v6844, 1.442695
        %v6978 = vpow.pop %v6977
        %v6979 = vmul.f32 %v6845, 1.442695
        %v6980 = vpow.pop %v6979
        %v6981 = vmul.f32 %v6846, 1.442695
        %v6982 = vpow.pop %v6981
        %v6983 = vmul.f32 %v6847, 1.442695
        %v6984 = vpow.pop %v6983
        %v6985 = vmul.f32 %v6848, 1.442695
        %v6986 = vpow.pop %v6985
        %v6987 = vmul.f32 %v6849, 1.442695
        %v6988 = vpow.pop %v6987
        %v6989 = vmul.f32 %v6850, 1.442695
        %v6990 = vpow.pop %v6989
        %v6991 = vmul.f32 %v6851, 1.442695
        %v6992 = vpow.pop %v6991
        %v6993 = vmul.f32 %v6852, 1.442695
        %v6994 = vpow.pop %v6993
        %v6995 = vmul.f32 %v6853, 1.442695
        %v6996 = vpow.pop %v6995
        %v6997 = vmul.f32 %v6854, 1.442695
        %v6998 = vpow.pop %v6997
        %v6999 = vmul.f32 %v6855, 1.442695
        %v7000 = vpow.pop %v6999
        %v7001 = vmul.f32 %v6856, 1.442695
        %v7002 = vpow.pop %v7001
        %v7003 = vmul.f32 %v6857, 1.442695
        %v7004 = vpow.pop %v7003
        %v7005 = vmul.f32 %v6858, 1.442695
        %v7006 = vpow.pop %v7005
        %v7007 = vmul.f32 %v6859, 1.442695
        %v7008 = vpow.pop %v7007
        %v7009 = vmul.f32 %v6860, 1.442695
        %v7010 = vpow.pop %v7009
        %v7011 = vmul.f32 %v6861, 1.442695
        %v7012 = vpow.pop %v7011
        %v7013 = vmul.f32 %v6862, 1.442695
        %v7014 = vpow.pop %v7013
        %v7015 = vmul.f32 %v6863, 1.442695
        %v7016 = vpow.pop %v7015
        %v7017 = vmul.f32 %v6864, 1.442695
        %v7018 = vpow.pop %v7017
        %v7019 = vmul.f32 %v6865, 1.442695
        %v7020 = vpow.pop %v7019
        %v7021 = vmul.f32 %v6866, 1.442695
        %v7022 = vpow.pop %v7021
        %v7023 = vmul.f32 %v6867, 1.442695
        %v7024 = vpow.pop %v7023
        %v7025 = vmul.f32 %v6868, 1.442695
        %v7026 = vpow.pop %v7025
        %v7027 = vmul.f32 %v6869, 1.442695
        %v7028 = vpow.pop %v7027
        %v7029 = vmul.f32 %v6870, 1.442695
        %v7030 = vpow.pop %v7029
        %v7031 = vmul.f32 %v6871, 1.442695
        %v7032 = vpow.pop %v7031
        %v7033 = vmul.f32 %v6872, 1.442695
        %v7034 = vpow.pop %v7033
        %v7035 = vmul.f32 %v6873, 1.442695
        %v7036 = vpow.pop %v7035
        %v7037 = vmul.f32 %v6874, 1.442695
        %v7038 = vpow.pop %v7037
        %v7039 = vmul.f32 %v6875, 1.442695
        %v7040 = vpow.pop %v7039
        %v7041 = vmul.f32 %v6876, 1.442695
        %v7042 = vpow.pop %v7041
        %v7043 = vmul.f32 %v6877, 1.442695
        %v7044 = vpow.pop %v7043
        %v7045 = vmul.f32 %v6878, 1.442695
        %v7046 = vpow.pop %v7045
        %v7047 = vmul.f32 %v6879, 1.442695
        %v7048 = vpow.pop %v7047
        %v7049 = vmul.f32 %v6880, 1.442695
        %v7050 = vpow.pop %v7049
        %v7051 = vmul.f32 %v6881, 1.442695
        %v7052 = vpow.pop %v7051
        %v7053 = vmul.f32 %v6882, 1.442695
        %v7054 = vpow.pop %v7053
        %v7055 = vmul.f32 %v6883, 1.442695
        %v7056 = vpow.pop %v7055
        %v7057 = vmul.f32 %v6884, 1.442695
        %v7058 = vpow.pop %v7057
        %v7059 = vmul.f32 %v6885, 1.442695
        %v7060 = vpow.pop %v7059
        %v7061 = vmul.f32 %v6886, 1.442695
        %v7062 = vpow.pop %v7061
        %v7063 = vmul.f32 %v6887, 1.442695
        %v7064 = vpow.pop %v7063
        %v7065 = vmul.f32 %v6888, 1.442695
        %v7066 = vpow.pop %v7065
        %v7067 = vmul.f32 %v6889, 1.442695
        %v7068 = vpow.pop %v7067
        %v7069 = vmul.f32 %v6890, 1.442695
        %v7070 = vpow.pop %v7069
        %v7071 = vmul.f32 %v6891, 1.442695
        %v7072 = vpow.pop %v7071
        %v7073 = vmul.f32 %v6892, 1.442695
        %v7074 = vpow.pop %v7073
        %v7075 = vmul.f32 %v6893, 1.442695
        %v7076 = vpow.pop %v7075
        %v7077 = vmul.f32 %v6894, 1.442695
        %v7078 = vpow.pop %v7077
        %v7079 = vmul.f32 %v6895, 1.442695
        %v7080 = vpow.pop %v7079
        %v7081 = vmul.f32 %v6896, 1.442695
        %v7082 = vpow.pop %v7081
        %v7083 = vmul.f32 %v6897, 1.442695
        %v7084 = vpow.pop %v7083
        %v7085 = vmul.f32 %v6898, 1.442695
        %v7086 = vpow.pop %v7085
        %v7087 = vmul.f32 %v6899, 1.442695
        %v7088 = vpow.pop %v7087
        %v7089 = vmul.f32 %v6900, 1.442695
        %v7090 = vpow.pop %v7089
        %v7091 = vmul.f32 %v6901, 1.442695
        %v7092 = vpow.pop %v7091
        %v7093 = vmul.f32 %v6902, 1.442695
        %v7094 = vpow.pop %v7093
        %v7095 = vmul.f32 %v6903, 1.442695
        %v7096 = vpow.pop %v7095
        %v7097 = vmul.f32 %v6904, 1.442695
        %v7098 = vpow.pop %v7097
        %v7099 = vmul.f32 %v6905, 1.442695
        %v7100 = vpow.pop %v7099
        %v7101 = vmul.f32 %v6906, 1.442695
        %v7102 = vpow.pop %v7101
        %v7103 = vmul.f32 %v6907, 1.442695
        %v7104 = vpow.pop %v7103
        %v7105 = vmul.f32 %v6908, 1.442695
        %v7106 = vpow.pop %v7105
        %v7107 = vmul.f32 %v6909, 1.442695
        %v7108 = vpow.pop %v7107
        %v7109 = vmul.f32 %v6910, 1.442695
        %v7110 = vpow.pop %v7109
        %v7111 = vmul.f32 %v6911, 1.442695
        %v7112 = vpow.pop %v7111
        %v7113 = vmul.f32 %v6912, 1.442695
        %v7114 = vpow.pop %v7113
        %v7115 = vmul.f32 %v6913, 1.442695
        %v7116 = vpow.pop %v7115
        %v7117 = vmul.f32 %v6914, 1.442695
        %v7118 = vpow.pop %v7117
        %v7119 = vmul.f32 %v6915, 1.442695
        %v7120 = vpow.pop %v7119
        %v7121 = vmul.f32 %v6916, 1.442695
        %v7122 = vpow.pop %v7121
        %v7123 = vmul.f32 %v6917, 1.442695
        %v7124 = vpow.pop %v7123
        %v7125 = vmul.f32 %v6918, 1.442695
        %v7126 = vpow.pop %v7125
        %v7127 = vmul.f32 %v6919, 1.442695
        %v7128 = vpow.pop %v7127
        %v7129 = vmul.f32 %v6920, 1.442695
        %v7130 = vpow.pop %v7129
        %v7131 = vmul.f32 %v6921, 1.442695
        %v7132 = vpow.pop %v7131
        %v7133 = vmul.f32 %v6922, 1.442695
        %v7134 = vpow.pop %v7133
        %v7135 = vmul.f32 %v6923, 1.442695
        %v7136 = vpow.pop %v7135
        %v7137 = vmul.f32 %v6924, 1.442695
        %v7138 = vpow.pop %v7137
        %v7139 = vmul.f32 %v6925, 1.442695
        %v7140 = vpow.pop %v7139
        %v7141 = vmul.f32 %v6926, 1.442695
        %v7142 = vpow.pop %v7141
        %v7143 = vmul.f32 %v6927, 1.442695
        %v7144 = vpow.pop %v7143
        %v7145 = vmul.f32 %v6928, 1.442695
        %v7146 = vpow.pop %v7145
        %v7147 = vmul.f32 %v6929, 1.442695
        %v7148 = vpow.pop %v7147
        %v7149 = vmul.f32 %v6930, 1.442695
        %v7150 = vpow.pop %v7149
        %v7151 = vmul.f32 %v6931, 1.442695
        %v7152 = vpow.pop %v7151
        %v7153 = vmul.f32 %v6932, 1.442695
        %v7154 = vpow.pop %v7153
        %v7155 = vmul.f32 %v6933, 1.442695
        %v7156 = vpow.pop %v7155
        %v7157 = vmul.f32 %v6934, 1.442695
        %v7158 = vpow.pop %v7157
        %v7159 = vmul.f32 %v6935, 1.442695
        %v7160 = vpow.pop %v7159
        %v7161 = vmul.f32 %v6936, 1.442695
        %v7162 = vpow.pop %v7161
        %v7163 = vmul.f32 %v6937, 1.442695
        %v7164 = vpow.pop %v7163
        %v7165 = vmul.f32 %v6938, 1.442695
        %v7166 = vpow.pop %v7165
        %v7167 = vmul.f32 %v6939, 1.442695
        %v7168 = vpow.pop %v7167
        %v7169 = vmul.f32 %v6940, 1.442695
        %v7170 = vpow.pop %v7169
        %v7171 = vmul.f32 %v6941, 1.442695
        %v7172 = vpow.pop %v7171
        %v7173 = vmul.f32 %v6942, 1.442695
        %v7174 = vpow.pop %v7173
        %v7175 = vmul.f32 %v6943, 1.442695
        %v7176 = vpow.pop %v7175
        %v7177 = vmul.f32 %v6944, 1.442695
        %v7178 = vpow.pop %v7177
        %v7179 = vmul.f32 %v6945, 1.442695
        %v7180 = vpow.pop %v7179
        %v7181 = vmul.f32 %v6946, 1.442695
        %v7182 = vpow.pop %v7181
        %v7183 = vmul.f32 %v6947, 1.442695
        %v7184 = vpow.pop %v7183
        %v7185 = vmul.f32 %v6948, 1.442695
        %v7186 = vpow.pop %v7185
        %v7187 = vmul.f32 %v6949, 1.442695
        %v7188 = vpow.pop %v7187
        %v7189 = vmul.f32 %v6950, 1.442695
        %v7190 = vpow.pop %v7189
        %v7191 = vmul.f32 %v6951, 1.442695
        %v7192 = vpow.pop %v7191
        %v7193 = vmul.f32 %v6952, 1.442695
        %v7194 = vpow.pop %v7193
        %v7195 = vmul.f32 %v6953, 1.442695
        %v7196 = vpow.pop %v7195
        %v7197 = vmul.f32 %v6954, 1.442695
        %v7198 = vpow.pop %v7197
        %v7199 = vmul.f32 %v6955, 1.442695
        %v7200 = vpow.pop %v7199
        %v7201 = vmul.f32 %v6956, 1.442695
        %v7202 = vpow.pop %v7201
        %v7203 = vmul.f32 %v6957, 1.442695
        %v7204 = vpow.pop %v7203
        %v7205 = vmul.f32 %v6958, 1.442695
        %v7206 = vpow.pop %v7205
        %v7207 = vmul.f32 %v6959, 1.442695
        %v7208 = vpow.pop %v7207
        %v7209 = vmul.f32 %v6960, 1.442695
        %v7210 = vpow.pop %v7209
        %v7211 = vmul.f32 %v6961, 1.442695
        %v7212 = vpow.pop %v7211
        %v7213 = vmul.f32 %v6962, 1.442695
        %v7214 = vpow.pop %v7213
        %v7215 = vmul.f32 %v6963, 1.442695
        %v7216 = vpow.pop %v7215
        %v7217 = vmul.f32 %v6964, 1.442695
        %v7218 = vpow.pop %v7217
        %v7219 = vadd.f32 %v6966, 1.0
        %v7220 = vadd.f32 %v6968, 1.0
        %v7221 = vadd.f32 %v6970, 1.0
        %v7222 = vadd.f32 %v6972, 1.0
        %v7223 = vadd.f32 %v6974, 1.0
        %v7224 = vadd.f32 %v6976, 1.0
        %v7225 = vadd.f32 %v6978, 1.0
        %v7226 = vadd.f32 %v6980, 1.0
        %v7227 = vadd.f32 %v6982, 1.0
        %v7228 = vadd.f32 %v6984, 1.0
        %v7229 = vadd.f32 %v6986, 1.0
        %v7230 = vadd.f32 %v6988, 1.0
        %v7231 = vadd.f32 %v6990, 1.0
        %v7232 = vadd.f32 %v6992, 1.0
        %v7233 = vadd.f32 %v6994, 1.0
        %v7234 = vadd.f32 %v6996, 1.0
        %v7235 = vadd.f32 %v6998, 1.0
        %v7236 = vadd.f32 %v7000, 1.0
        %v7237 = vadd.f32 %v7002, 1.0
        %v7238 = vadd.f32 %v7004, 1.0
        %v7239 = vadd.f32 %v7006, 1.0
        %v7240 = vadd.f32 %v7008, 1.0
        %v7241 = vadd.f32 %v7010, 1.0
        %v7242 = vadd.f32 %v7012, 1.0
        %v7243 = vadd.f32 %v7014, 1.0
        %v7244 = vadd.f32 %v7016, 1.0
        %v7245 = vadd.f32 %v7018, 1.0
        %v7246 = vadd.f32 %v7020, 1.0
        %v7247 = vadd.f32 %v7022, 1.0
        %v7248 = vadd.f32 %v7024, 1.0
        %v7249 = vadd.f32 %v7026, 1.0
        %v7250 = vadd.f32 %v7028, 1.0
        %v7251 = vadd.f32 %v7030, 1.0
        %v7252 = vadd.f32 %v7032, 1.0
        %v7253 = vadd.f32 %v7034, 1.0
        %v7254 = vadd.f32 %v7036, 1.0
        %v7255 = vadd.f32 %v7038, 1.0
        %v7256 = vadd.f32 %v7040, 1.0
        %v7257 = vadd.f32 %v7042, 1.0
        %v7258 = vadd.f32 %v7044, 1.0
        %v7259 = vadd.f32 %v7046, 1.0
        %v7260 = vadd.f32 %v7048, 1.0
        %v7261 = vadd.f32 %v7050, 1.0
        %v7262 = vadd.f32 %v7052, 1.0
        %v7263 = vadd.f32 %v7054, 1.0
        %v7264 = vadd.f32 %v7056, 1.0
        %v7265 = vadd.f32 %v7058, 1.0
        %v7266 = vadd.f32 %v7060, 1.0
        %v7267 = vadd.f32 %v7062, 1.0
        %v7268 = vadd.f32 %v7064, 1.0
        %v7269 = vadd.f32 %v7066, 1.0
        %v7270 = vadd.f32 %v7068, 1.0
        %v7271 = vadd.f32 %v7070, 1.0
        %v7272 = vadd.f32 %v7072, 1.0
        %v7273 = vadd.f32 %v7074, 1.0
        %v7274 = vadd.f32 %v7076, 1.0
        %v7275 = vadd.f32 %v7078, 1.0
        %v7276 = vadd.f32 %v7080, 1.0
        %v7277 = vadd.f32 %v7082, 1.0
        %v7278 = vadd.f32 %v7084, 1.0
        %v7279 = vadd.f32 %v7086, 1.0
        %v7280 = vadd.f32 %v7088, 1.0
        %v7281 = vadd.f32 %v7090, 1.0
        %v7282 = vadd.f32 %v7092, 1.0
        %v7283 = vadd.f32 %v7094, 1.0
        %v7284 = vadd.f32 %v7096, 1.0
        %v7285 = vadd.f32 %v7098, 1.0
        %v7286 = vadd.f32 %v7100, 1.0
        %v7287 = vadd.f32 %v7102, 1.0
        %v7288 = vadd.f32 %v7104, 1.0
        %v7289 = vadd.f32 %v7106, 1.0
        %v7290 = vadd.f32 %v7108, 1.0
        %v7291 = vadd.f32 %v7110, 1.0
        %v7292 = vadd.f32 %v7112, 1.0
        %v7293 = vadd.f32 %v7114, 1.0
        %v7294 = vadd.f32 %v7116, 1.0
        %v7295 = vadd.f32 %v7118, 1.0
        %v7296 = vadd.f32 %v7120, 1.0
        %v7297 = vadd.f32 %v7122, 1.0
        %v7298 = vadd.f32 %v7124, 1.0
        %v7299 = vadd.f32 %v7126, 1.0
        %v7300 = vadd.f32 %v7128, 1.0
        %v7301 = vadd.f32 %v7130, 1.0
        %v7302 = vadd.f32 %v7132, 1.0
        %v7303 = vadd.f32 %v7134, 1.0
        %v7304 = vadd.f32 %v7136, 1.0
        %v7305 = vadd.f32 %v7138, 1.0
        %v7306 = vadd.f32 %v7140, 1.0
        %v7307 = vadd.f32 %v7142, 1.0
        %v7308 = vadd.f32 %v7144, 1.0
        %v7309 = vadd.f32 %v7146, 1.0
        %v7310 = vadd.f32 %v7148, 1.0
        %v7311 = vadd.f32 %v7150, 1.0
        %v7312 = vadd.f32 %v7152, 1.0
        %v7313 = vadd.f32 %v7154, 1.0
        %v7314 = vadd.f32 %v7156, 1.0
        %v7315 = vadd.f32 %v7158, 1.0
        %v7316 = vadd.f32 %v7160, 1.0
        %v7317 = vadd.f32 %v7162, 1.0
        %v7318 = vadd.f32 %v7164, 1.0
        %v7319 = vadd.f32 %v7166, 1.0
        %v7320 = vadd.f32 %v7168, 1.0
        %v7321 = vadd.f32 %v7170, 1.0
        %v7322 = vadd.f32 %v7172, 1.0
        %v7323 = vadd.f32 %v7174, 1.0
        %v7324 = vadd.f32 %v7176, 1.0
        %v7325 = vadd.f32 %v7178, 1.0
        %v7326 = vadd.f32 %v7180, 1.0
        %v7327 = vadd.f32 %v7182, 1.0
        %v7328 = vadd.f32 %v7184, 1.0
        %v7329 = vadd.f32 %v7186, 1.0
        %v7330 = vadd.f32 %v7188, 1.0
        %v7331 = vadd.f32 %v7190, 1.0
        %v7332 = vadd.f32 %v7192, 1.0
        %v7333 = vadd.f32 %v7194, 1.0
        %v7334 = vadd.f32 %v7196, 1.0
        %v7335 = vadd.f32 %v7198, 1.0
        %v7336 = vadd.f32 %v7200, 1.0
        %v7337 = vadd.f32 %v7202, 1.0
        %v7338 = vadd.f32 %v7204, 1.0
        %v7339 = vadd.f32 %v7206, 1.0
        %v7340 = vadd.f32 %v7208, 1.0
        %v7341 = vadd.f32 %v7210, 1.0
        %v7342 = vadd.f32 %v7212, 1.0
        %v7343 = vadd.f32 %v7214, 1.0
        %v7344 = vadd.f32 %v7216, 1.0
        %v7345 = vadd.f32 %v7218, 1.0
        %v7346 = vrcp.pop %v7219
        %v7347 = vmul.f32 %v7219, %v7346
        %v7348 = vsub.f32 1.0, %v7347
        %v7349 = vmul.f32 %v7346, %v7348
        %v7350 = vadd.f32 %v7346, %v7349
        %vm7351 = vweird.f32 %v7219
        %vm7352 = vweird.f32 %v7346
        %vm7353 = vmor %vm7351, %vm7352
        %v7354 = vsel %vm7353, %v7346, %v7350
        %v7355 = vand.u32 2147483647, %v7219
        %vm7356 = vcmp.eq.f32.partialorder %v7355, 8.507059e+37
        %v7357 = vand.u32 %v7219, 2147483648
        %v7358 = vor.u32 1.1754944e-38, %v7357
        %v7359 = vsel %vm7356, %v7358, %v7354
        %v7360 = vmul.f32 1.0, %v7359
        %v7361 = vrcp.pop %v7220
        %v7362 = vmul.f32 %v7220, %v7361
        %v7363 = vsub.f32 1.0, %v7362
        %v7364 = vmul.f32 %v7361, %v7363
        %v7365 = vadd.f32 %v7361, %v7364
        %vm7366 = vweird.f32 %v7220
        %vm7367 = vweird.f32 %v7361
        %vm7368 = vmor %vm7366, %vm7367
        %v7369 = vsel %vm7368, %v7361, %v7365
        %v7370 = vand.u32 2147483647, %v7220
        %vm7371 = vcmp.eq.f32.partialorder %v7370, 8.507059e+37
        %v7372 = vand.u32 %v7220, 2147483648
        %v7373 = vor.u32 1.1754944e-38, %v7372
        %v7374 = vsel %vm7371, %v7373, %v7369
        %v7375 = vmul.f32 1.0, %v7374
        %v7376 = vrcp.pop %v7221
        %v7377 = vmul.f32 %v7221, %v7376
        %v7378 = vsub.f32 1.0, %v7377
        %v7379 = vmul.f32 %v7376, %v7378
        %v7380 = vadd.f32 %v7376, %v7379
        %vm7381 = vweird.f32 %v7221
        %vm7382 = vweird.f32 %v7376
        %vm7383 = vmor %vm7381, %vm7382
        %v7384 = vsel %vm7383, %v7376, %v7380
        %v7385 = vand.u32 2147483647, %v7221
        %vm7386 = vcmp.eq.f32.partialorder %v7385, 8.507059e+37
        %v7387 = vand.u32 %v7221, 2147483648
        %v7388 = vor.u32 1.1754944e-38, %v7387
        %v7389 = vsel %vm7386, %v7388, %v7384
        %v7390 = vmul.f32 1.0, %v7389
        %v7391 = vrcp.pop %v7222
        %v7392 = vmul.f32 %v7222, %v7391
        %v7393 = vsub.f32 1.0, %v7392
        %v7394 = vmul.f32 %v7391, %v7393
        %v7395 = vadd.f32 %v7391, %v7394
        %vm7396 = vweird.f32 %v7222
        %vm7397 = vweird.f32 %v7391
        %vm7398 = vmor %vm7396, %vm7397
        %v7399 = vsel %vm7398, %v7391, %v7395
        %v7400 = vand.u32 2147483647, %v7222
        %vm7401 = vcmp.eq.f32.partialorder %v7400, 8.507059e+37
        %v7402 = vand.u32 %v7222, 2147483648
        %v7403 = vor.u32 1.1754944e-38, %v7402
        %v7404 = vsel %vm7401, %v7403, %v7399
        %v7405 = vmul.f32 1.0, %v7404
        %v7406 = vrcp.pop %v7223
        %v7407 = vmul.f32 %v7223, %v7406
        %v7408 = vsub.f32 1.0, %v7407
        %v7409 = vmul.f32 %v7406, %v7408
        %v7410 = vadd.f32 %v7406, %v7409
        %vm7411 = vweird.f32 %v7223
        %vm7412 = vweird.f32 %v7406
        %vm7413 = vmor %vm7411, %vm7412
        %v7414 = vsel %vm7413, %v7406, %v7410
        %v7415 = vand.u32 2147483647, %v7223
        %vm7416 = vcmp.eq.f32.partialorder %v7415, 8.507059e+37
        %v7417 = vand.u32 %v7223, 2147483648
        %v7418 = vor.u32 1.1754944e-38, %v7417
        %v7419 = vsel %vm7416, %v7418, %v7414
        %v7420 = vmul.f32 1.0, %v7419
        %v7421 = vrcp.pop %v7224
        %v7422 = vmul.f32 %v7224, %v7421
        %v7423 = vsub.f32 1.0, %v7422
        %v7424 = vmul.f32 %v7421, %v7423
        %v7425 = vadd.f32 %v7421, %v7424
        %vm7426 = vweird.f32 %v7224
        %vm7427 = vweird.f32 %v7421
        %vm7428 = vmor %vm7426, %vm7427
        %v7429 = vsel %vm7428, %v7421, %v7425
        %v7430 = vand.u32 2147483647, %v7224
        %vm7431 = vcmp.eq.f32.partialorder %v7430, 8.507059e+37
        %v7432 = vand.u32 %v7224, 2147483648
        %v7433 = vor.u32 1.1754944e-38, %v7432
        %v7434 = vsel %vm7431, %v7433, %v7429
        %v7435 = vmul.f32 1.0, %v7434
        %v7436 = vrcp.pop %v7225
        %v7437 = vmul.f32 %v7225, %v7436
        %v7438 = vsub.f32 1.0, %v7437
        %v7439 = vmul.f32 %v7436, %v7438
        %v7440 = vadd.f32 %v7436, %v7439
        %vm7441 = vweird.f32 %v7225
        %vm7442 = vweird.f32 %v7436
        %vm7443 = vmor %vm7441, %vm7442
        %v7444 = vsel %vm7443, %v7436, %v7440
        %v7445 = vand.u32 2147483647, %v7225
        %vm7446 = vcmp.eq.f32.partialorder %v7445, 8.507059e+37
        %v7447 = vand.u32 %v7225, 2147483648
        %v7448 = vor.u32 1.1754944e-38, %v7447
        %v7449 = vsel %vm7446, %v7448, %v7444
        %v7450 = vmul.f32 1.0, %v7449
        %v7451 = vrcp.pop %v7226
        %v7452 = vmul.f32 %v7226, %v7451
        %v7453 = vsub.f32 1.0, %v7452
        %v7454 = vmul.f32 %v7451, %v7453
        %v7455 = vadd.f32 %v7451, %v7454
        %vm7456 = vweird.f32 %v7226
        %vm7457 = vweird.f32 %v7451
        %vm7458 = vmor %vm7456, %vm7457
        %v7459 = vsel %vm7458, %v7451, %v7455
        %v7460 = vand.u32 2147483647, %v7226
        %vm7461 = vcmp.eq.f32.partialorder %v7460, 8.507059e+37
        %v7462 = vand.u32 %v7226, 2147483648
        %v7463 = vor.u32 1.1754944e-38, %v7462
        %v7464 = vsel %vm7461, %v7463, %v7459
        %v7465 = vmul.f32 1.0, %v7464
        %v7466 = vrcp.pop %v7227
        %v7467 = vmul.f32 %v7227, %v7466
        %v7468 = vsub.f32 1.0, %v7467
        %v7469 = vmul.f32 %v7466, %v7468
        %v7470 = vadd.f32 %v7466, %v7469
        %vm7471 = vweird.f32 %v7227
        %vm7472 = vweird.f32 %v7466
        %vm7473 = vmor %vm7471, %vm7472
        %v7474 = vsel %vm7473, %v7466, %v7470
        %v7475 = vand.u32 2147483647, %v7227
        %vm7476 = vcmp.eq.f32.partialorder %v7475, 8.507059e+37
        %v7477 = vand.u32 %v7227, 2147483648
        %v7478 = vor.u32 1.1754944e-38, %v7477
        %v7479 = vsel %vm7476, %v7478, %v7474
        %v7480 = vmul.f32 1.0, %v7479
        %v7481 = vrcp.pop %v7228
        %v7482 = vmul.f32 %v7228, %v7481
        %v7483 = vsub.f32 1.0, %v7482
        %v7484 = vmul.f32 %v7481, %v7483
        %v7485 = vadd.f32 %v7481, %v7484
        %vm7486 = vweird.f32 %v7228
        %vm7487 = vweird.f32 %v7481
        %vm7488 = vmor %vm7486, %vm7487
        %v7489 = vsel %vm7488, %v7481, %v7485
        %v7490 = vand.u32 2147483647, %v7228
        %vm7491 = vcmp.eq.f32.partialorder %v7490, 8.507059e+37
        %v7492 = vand.u32 %v7228, 2147483648
        %v7493 = vor.u32 1.1754944e-38, %v7492
        %v7494 = vsel %vm7491, %v7493, %v7489
        %v7495 = vmul.f32 1.0, %v7494
        %v7496 = vrcp.pop %v7229
        %v7497 = vmul.f32 %v7229, %v7496
        %v7498 = vsub.f32 1.0, %v7497
        %v7499 = vmul.f32 %v7496, %v7498
        %v7500 = vadd.f32 %v7496, %v7499
        %vm7501 = vweird.f32 %v7229
        %vm7502 = vweird.f32 %v7496
        %vm7503 = vmor %vm7501, %vm7502
        %v7504 = vsel %vm7503, %v7496, %v7500
        %v7505 = vand.u32 2147483647, %v7229
        %vm7506 = vcmp.eq.f32.partialorder %v7505, 8.507059e+37
        %v7507 = vand.u32 %v7229, 2147483648
        %v7508 = vor.u32 1.1754944e-38, %v7507
        %v7509 = vsel %vm7506, %v7508, %v7504
        %v7510 = vmul.f32 1.0, %v7509
        %v7511 = vrcp.pop %v7230
        %v7512 = vmul.f32 %v7230, %v7511
        %v7513 = vsub.f32 1.0, %v7512
        %v7514 = vmul.f32 %v7511, %v7513
        %v7515 = vadd.f32 %v7511, %v7514
        %vm7516 = vweird.f32 %v7230
        %vm7517 = vweird.f32 %v7511
        %vm7518 = vmor %vm7516, %vm7517
        %v7519 = vsel %vm7518, %v7511, %v7515
        %v7520 = vand.u32 2147483647, %v7230
        %vm7521 = vcmp.eq.f32.partialorder %v7520, 8.507059e+37
        %v7522 = vand.u32 %v7230, 2147483648
        %v7523 = vor.u32 1.1754944e-38, %v7522
        %v7524 = vsel %vm7521, %v7523, %v7519
        %v7525 = vmul.f32 1.0, %v7524
        %v7526 = vrcp.pop %v7231
        %v7527 = vmul.f32 %v7231, %v7526
        %v7528 = vsub.f32 1.0, %v7527
        %v7529 = vmul.f32 %v7526, %v7528
        %v7530 = vadd.f32 %v7526, %v7529
        %vm7531 = vweird.f32 %v7231
        %vm7532 = vweird.f32 %v7526
        %vm7533 = vmor %vm7531, %vm7532
        %v7534 = vsel %vm7533, %v7526, %v7530
        %v7535 = vand.u32 2147483647, %v7231
        %vm7536 = vcmp.eq.f32.partialorder %v7535, 8.507059e+37
        %v7537 = vand.u32 %v7231, 2147483648
        %v7538 = vor.u32 1.1754944e-38, %v7537
        %v7539 = vsel %vm7536, %v7538, %v7534
        %v7540 = vmul.f32 1.0, %v7539
        %v7541 = vrcp.pop %v7232
        %v7542 = vmul.f32 %v7232, %v7541
        %v7543 = vsub.f32 1.0, %v7542
        %v7544 = vmul.f32 %v7541, %v7543
        %v7545 = vadd.f32 %v7541, %v7544
        %vm7546 = vweird.f32 %v7232
        %vm7547 = vweird.f32 %v7541
        %vm7548 = vmor %vm7546, %vm7547
        %v7549 = vsel %vm7548, %v7541, %v7545
        %v7550 = vand.u32 2147483647, %v7232
        %vm7551 = vcmp.eq.f32.partialorder %v7550, 8.507059e+37
        %v7552 = vand.u32 %v7232, 2147483648
        %v7553 = vor.u32 1.1754944e-38, %v7552
        %v7554 = vsel %vm7551, %v7553, %v7549
        %v7555 = vmul.f32 1.0, %v7554
        %v7556 = vrcp.pop %v7233
        %v7557 = vmul.f32 %v7233, %v7556
        %v7558 = vsub.f32 1.0, %v7557
        %v7559 = vmul.f32 %v7556, %v7558
        %v7560 = vadd.f32 %v7556, %v7559
        %vm7561 = vweird.f32 %v7233
        %vm7562 = vweird.f32 %v7556
        %vm7563 = vmor %vm7561, %vm7562
        %v7564 = vsel %vm7563, %v7556, %v7560
        %v7565 = vand.u32 2147483647, %v7233
        %vm7566 = vcmp.eq.f32.partialorder %v7565, 8.507059e+37
        %v7567 = vand.u32 %v7233, 2147483648
        %v7568 = vor.u32 1.1754944e-38, %v7567
        %v7569 = vsel %vm7566, %v7568, %v7564
        %v7570 = vmul.f32 1.0, %v7569
        %v7571 = vrcp.pop %v7234
        %v7572 = vmul.f32 %v7234, %v7571
        %v7573 = vsub.f32 1.0, %v7572
        %v7574 = vmul.f32 %v7571, %v7573
        %v7575 = vadd.f32 %v7571, %v7574
        %vm7576 = vweird.f32 %v7234
        %vm7577 = vweird.f32 %v7571
        %vm7578 = vmor %vm7576, %vm7577
        %v7579 = vsel %vm7578, %v7571, %v7575
        %v7580 = vand.u32 2147483647, %v7234
        %vm7581 = vcmp.eq.f32.partialorder %v7580, 8.507059e+37
        %v7582 = vand.u32 %v7234, 2147483648
        %v7583 = vor.u32 1.1754944e-38, %v7582
        %v7584 = vsel %vm7581, %v7583, %v7579
        %v7585 = vmul.f32 1.0, %v7584
        %v7586 = vrcp.pop %v7235
        %v7587 = vmul.f32 %v7235, %v7586
        %v7588 = vsub.f32 1.0, %v7587
        %v7589 = vmul.f32 %v7586, %v7588
        %v7590 = vadd.f32 %v7586, %v7589
        %vm7591 = vweird.f32 %v7235
        %vm7592 = vweird.f32 %v7586
        %vm7593 = vmor %vm7591, %vm7592
        %v7594 = vsel %vm7593, %v7586, %v7590
        %v7595 = vand.u32 2147483647, %v7235
        %vm7596 = vcmp.eq.f32.partialorder %v7595, 8.507059e+37
        %v7597 = vand.u32 %v7235, 2147483648
        %v7598 = vor.u32 1.1754944e-38, %v7597
        %v7599 = vsel %vm7596, %v7598, %v7594
        %v7600 = vmul.f32 1.0, %v7599
        %v7601 = vrcp.pop %v7236
        %v7602 = vmul.f32 %v7236, %v7601
        %v7603 = vsub.f32 1.0, %v7602
        %v7604 = vmul.f32 %v7601, %v7603
        %v7605 = vadd.f32 %v7601, %v7604
        %vm7606 = vweird.f32 %v7236
        %vm7607 = vweird.f32 %v7601
        %vm7608 = vmor %vm7606, %vm7607
        %v7609 = vsel %vm7608, %v7601, %v7605
        %v7610 = vand.u32 2147483647, %v7236
        %vm7611 = vcmp.eq.f32.partialorder %v7610, 8.507059e+37
        %v7612 = vand.u32 %v7236, 2147483648
        %v7613 = vor.u32 1.1754944e-38, %v7612
        %v7614 = vsel %vm7611, %v7613, %v7609
        %v7615 = vmul.f32 1.0, %v7614
        %v7616 = vrcp.pop %v7237
        %v7617 = vmul.f32 %v7237, %v7616
        %v7618 = vsub.f32 1.0, %v7617
        %v7619 = vmul.f32 %v7616, %v7618
        %v7620 = vadd.f32 %v7616, %v7619
        %vm7621 = vweird.f32 %v7237
        %vm7622 = vweird.f32 %v7616
        %vm7623 = vmor %vm7621, %vm7622
        %v7624 = vsel %vm7623, %v7616, %v7620
        %v7625 = vand.u32 2147483647, %v7237
        %vm7626 = vcmp.eq.f32.partialorder %v7625, 8.507059e+37
        %v7627 = vand.u32 %v7237, 2147483648
        %v7628 = vor.u32 1.1754944e-38, %v7627
        %v7629 = vsel %vm7626, %v7628, %v7624
        %v7630 = vmul.f32 1.0, %v7629
        %v7631 = vrcp.pop %v7238
        %v7632 = vmul.f32 %v7238, %v7631
        %v7633 = vsub.f32 1.0, %v7632
        %v7634 = vmul.f32 %v7631, %v7633
        %v7635 = vadd.f32 %v7631, %v7634
        %vm7636 = vweird.f32 %v7238
        %vm7637 = vweird.f32 %v7631
        %vm7638 = vmor %vm7636, %vm7637
        %v7639 = vsel %vm7638, %v7631, %v7635
        %v7640 = vand.u32 2147483647, %v7238
        %vm7641 = vcmp.eq.f32.partialorder %v7640, 8.507059e+37
        %v7642 = vand.u32 %v7238, 2147483648
        %v7643 = vor.u32 1.1754944e-38, %v7642
        %v7644 = vsel %vm7641, %v7643, %v7639
        %v7645 = vmul.f32 1.0, %v7644
        %v7646 = vrcp.pop %v7239
        %v7647 = vmul.f32 %v7239, %v7646
        %v7648 = vsub.f32 1.0, %v7647
        %v7649 = vmul.f32 %v7646, %v7648
        %v7650 = vadd.f32 %v7646, %v7649
        %vm7651 = vweird.f32 %v7239
        %vm7652 = vweird.f32 %v7646
        %vm7653 = vmor %vm7651, %vm7652
        %v7654 = vsel %vm7653, %v7646, %v7650
        %v7655 = vand.u32 2147483647, %v7239
        %vm7656 = vcmp.eq.f32.partialorder %v7655, 8.507059e+37
        %v7657 = vand.u32 %v7239, 2147483648
        %v7658 = vor.u32 1.1754944e-38, %v7657
        %v7659 = vsel %vm7656, %v7658, %v7654
        %v7660 = vmul.f32 1.0, %v7659
        %v7661 = vrcp.pop %v7240
        %v7662 = vmul.f32 %v7240, %v7661
        %v7663 = vsub.f32 1.0, %v7662
        %v7664 = vmul.f32 %v7661, %v7663
        %v7665 = vadd.f32 %v7661, %v7664
        %vm7666 = vweird.f32 %v7240
        %vm7667 = vweird.f32 %v7661
        %vm7668 = vmor %vm7666, %vm7667
        %v7669 = vsel %vm7668, %v7661, %v7665
        %v7670 = vand.u32 2147483647, %v7240
        %vm7671 = vcmp.eq.f32.partialorder %v7670, 8.507059e+37
        %v7672 = vand.u32 %v7240, 2147483648
        %v7673 = vor.u32 1.1754944e-38, %v7672
        %v7674 = vsel %vm7671, %v7673, %v7669
        %v7675 = vmul.f32 1.0, %v7674
        %v7676 = vrcp.pop %v7241
        %v7677 = vmul.f32 %v7241, %v7676
        %v7678 = vsub.f32 1.0, %v7677
        %v7679 = vmul.f32 %v7676, %v7678
        %v7680 = vadd.f32 %v7676, %v7679
        %vm7681 = vweird.f32 %v7241
        %vm7682 = vweird.f32 %v7676
        %vm7683 = vmor %vm7681, %vm7682
        %v7684 = vsel %vm7683, %v7676, %v7680
        %v7685 = vand.u32 2147483647, %v7241
        %vm7686 = vcmp.eq.f32.partialorder %v7685, 8.507059e+37
        %v7687 = vand.u32 %v7241, 2147483648
        %v7688 = vor.u32 1.1754944e-38, %v7687
        %v7689 = vsel %vm7686, %v7688, %v7684
        %v7690 = vmul.f32 1.0, %v7689
        %v7691 = vrcp.pop %v7242
        %v7692 = vmul.f32 %v7242, %v7691
        %v7693 = vsub.f32 1.0, %v7692
        %v7694 = vmul.f32 %v7691, %v7693
        %v7695 = vadd.f32 %v7691, %v7694
        %vm7696 = vweird.f32 %v7242
        %vm7697 = vweird.f32 %v7691
        %vm7698 = vmor %vm7696, %vm7697
        %v7699 = vsel %vm7698, %v7691, %v7695
        %v7700 = vand.u32 2147483647, %v7242
        %vm7701 = vcmp.eq.f32.partialorder %v7700, 8.507059e+37
        %v7702 = vand.u32 %v7242, 2147483648
        %v7703 = vor.u32 1.1754944e-38, %v7702
        %v7704 = vsel %vm7701, %v7703, %v7699
        %v7705 = vmul.f32 1.0, %v7704
        %v7706 = vrcp.pop %v7243
        %v7707 = vmul.f32 %v7243, %v7706
        %v7708 = vsub.f32 1.0, %v7707
        %v7709 = vmul.f32 %v7706, %v7708
        %v7710 = vadd.f32 %v7706, %v7709
        %vm7711 = vweird.f32 %v7243
        %vm7712 = vweird.f32 %v7706
        %vm7713 = vmor %vm7711, %vm7712
        %v7714 = vsel %vm7713, %v7706, %v7710
        %v7715 = vand.u32 2147483647, %v7243
        %vm7716 = vcmp.eq.f32.partialorder %v7715, 8.507059e+37
        %v7717 = vand.u32 %v7243, 2147483648
        %v7718 = vor.u32 1.1754944e-38, %v7717
        %v7719 = vsel %vm7716, %v7718, %v7714
        %v7720 = vmul.f32 1.0, %v7719
        %v7721 = vrcp.pop %v7244
        %v7722 = vmul.f32 %v7244, %v7721
        %v7723 = vsub.f32 1.0, %v7722
        %v7724 = vmul.f32 %v7721, %v7723
        %v7725 = vadd.f32 %v7721, %v7724
        %vm7726 = vweird.f32 %v7244
        %vm7727 = vweird.f32 %v7721
        %vm7728 = vmor %vm7726, %vm7727
        %v7729 = vsel %vm7728, %v7721, %v7725
        %v7730 = vand.u32 2147483647, %v7244
        %vm7731 = vcmp.eq.f32.partialorder %v7730, 8.507059e+37
        %v7732 = vand.u32 %v7244, 2147483648
        %v7733 = vor.u32 1.1754944e-38, %v7732
        %v7734 = vsel %vm7731, %v7733, %v7729
        %v7735 = vmul.f32 1.0, %v7734
        %v7736 = vrcp.pop %v7245
        %v7737 = vmul.f32 %v7245, %v7736
        %v7738 = vsub.f32 1.0, %v7737
        %v7739 = vmul.f32 %v7736, %v7738
        %v7740 = vadd.f32 %v7736, %v7739
        %vm7741 = vweird.f32 %v7245
        %vm7742 = vweird.f32 %v7736
        %vm7743 = vmor %vm7741, %vm7742
        %v7744 = vsel %vm7743, %v7736, %v7740
        %v7745 = vand.u32 2147483647, %v7245
        %vm7746 = vcmp.eq.f32.partialorder %v7745, 8.507059e+37
        %v7747 = vand.u32 %v7245, 2147483648
        %v7748 = vor.u32 1.1754944e-38, %v7747
        %v7749 = vsel %vm7746, %v7748, %v7744
        %v7750 = vmul.f32 1.0, %v7749
        %v7751 = vrcp.pop %v7246
        %v7752 = vmul.f32 %v7246, %v7751
        %v7753 = vsub.f32 1.0, %v7752
        %v7754 = vmul.f32 %v7751, %v7753
        %v7755 = vadd.f32 %v7751, %v7754
        %vm7756 = vweird.f32 %v7246
        %vm7757 = vweird.f32 %v7751
        %vm7758 = vmor %vm7756, %vm7757
        %v7759 = vsel %vm7758, %v7751, %v7755
        %v7760 = vand.u32 2147483647, %v7246
        %vm7761 = vcmp.eq.f32.partialorder %v7760, 8.507059e+37
        %v7762 = vand.u32 %v7246, 2147483648
        %v7763 = vor.u32 1.1754944e-38, %v7762
        %v7764 = vsel %vm7761, %v7763, %v7759
        %v7765 = vmul.f32 1.0, %v7764
        %v7766 = vrcp.pop %v7247
        %v7767 = vmul.f32 %v7247, %v7766
        %v7768 = vsub.f32 1.0, %v7767
        %v7769 = vmul.f32 %v7766, %v7768
        %v7770 = vadd.f32 %v7766, %v7769
        %vm7771 = vweird.f32 %v7247
        %vm7772 = vweird.f32 %v7766
        %vm7773 = vmor %vm7771, %vm7772
        %v7774 = vsel %vm7773, %v7766, %v7770
        %v7775 = vand.u32 2147483647, %v7247
        %vm7776 = vcmp.eq.f32.partialorder %v7775, 8.507059e+37
        %v7777 = vand.u32 %v7247, 2147483648
        %v7778 = vor.u32 1.1754944e-38, %v7777
        %v7779 = vsel %vm7776, %v7778, %v7774
        %v7780 = vmul.f32 1.0, %v7779
        %v7781 = vrcp.pop %v7248
        %v7782 = vmul.f32 %v7248, %v7781
        %v7783 = vsub.f32 1.0, %v7782
        %v7784 = vmul.f32 %v7781, %v7783
        %v7785 = vadd.f32 %v7781, %v7784
        %vm7786 = vweird.f32 %v7248
        %vm7787 = vweird.f32 %v7781
        %vm7788 = vmor %vm7786, %vm7787
        %v7789 = vsel %vm7788, %v7781, %v7785
        %v7790 = vand.u32 2147483647, %v7248
        %vm7791 = vcmp.eq.f32.partialorder %v7790, 8.507059e+37
        %v7792 = vand.u32 %v7248, 2147483648
        %v7793 = vor.u32 1.1754944e-38, %v7792
        %v7794 = vsel %vm7791, %v7793, %v7789
        %v7795 = vmul.f32 1.0, %v7794
        %v7796 = vrcp.pop %v7249
        %v7797 = vmul.f32 %v7249, %v7796
        %v7798 = vsub.f32 1.0, %v7797
        %v7799 = vmul.f32 %v7796, %v7798
        %v7800 = vadd.f32 %v7796, %v7799
        %vm7801 = vweird.f32 %v7249
        %vm7802 = vweird.f32 %v7796
        %vm7803 = vmor %vm7801, %vm7802
        %v7804 = vsel %vm7803, %v7796, %v7800
        %v7805 = vand.u32 2147483647, %v7249
        %vm7806 = vcmp.eq.f32.partialorder %v7805, 8.507059e+37
        %v7807 = vand.u32 %v7249, 2147483648
        %v7808 = vor.u32 1.1754944e-38, %v7807
        %v7809 = vsel %vm7806, %v7808, %v7804
        %v7810 = vmul.f32 1.0, %v7809
        %v7811 = vrcp.pop %v7250
        %v7812 = vmul.f32 %v7250, %v7811
        %v7813 = vsub.f32 1.0, %v7812
        %v7814 = vmul.f32 %v7811, %v7813
        %v7815 = vadd.f32 %v7811, %v7814
        %vm7816 = vweird.f32 %v7250
        %vm7817 = vweird.f32 %v7811
        %vm7818 = vmor %vm7816, %vm7817
        %v7819 = vsel %vm7818, %v7811, %v7815
        %v7820 = vand.u32 2147483647, %v7250
        %vm7821 = vcmp.eq.f32.partialorder %v7820, 8.507059e+37
        %v7822 = vand.u32 %v7250, 2147483648
        %v7823 = vor.u32 1.1754944e-38, %v7822
        %v7824 = vsel %vm7821, %v7823, %v7819
        %v7825 = vmul.f32 1.0, %v7824
        %v7826 = vrcp.pop %v7251
        %v7827 = vmul.f32 %v7251, %v7826
        %v7828 = vsub.f32 1.0, %v7827
        %v7829 = vmul.f32 %v7826, %v7828
        %v7830 = vadd.f32 %v7826, %v7829
        %vm7831 = vweird.f32 %v7251
        %vm7832 = vweird.f32 %v7826
        %vm7833 = vmor %vm7831, %vm7832
        %v7834 = vsel %vm7833, %v7826, %v7830
        %v7835 = vand.u32 2147483647, %v7251
        %vm7836 = vcmp.eq.f32.partialorder %v7835, 8.507059e+37
        %v7837 = vand.u32 %v7251, 2147483648
        %v7838 = vor.u32 1.1754944e-38, %v7837
        %v7839 = vsel %vm7836, %v7838, %v7834
        %v7840 = vmul.f32 1.0, %v7839
        %v7841 = vrcp.pop %v7252
        %v7842 = vmul.f32 %v7252, %v7841
        %v7843 = vsub.f32 1.0, %v7842
        %v7844 = vmul.f32 %v7841, %v7843
        %v7845 = vadd.f32 %v7841, %v7844
        %vm7846 = vweird.f32 %v7252
        %vm7847 = vweird.f32 %v7841
        %vm7848 = vmor %vm7846, %vm7847
        %v7849 = vsel %vm7848, %v7841, %v7845
        %v7850 = vand.u32 2147483647, %v7252
        %vm7851 = vcmp.eq.f32.partialorder %v7850, 8.507059e+37
        %v7852 = vand.u32 %v7252, 2147483648
        %v7853 = vor.u32 1.1754944e-38, %v7852
        %v7854 = vsel %vm7851, %v7853, %v7849
        %v7855 = vmul.f32 1.0, %v7854
        %v7856 = vrcp.pop %v7253
        %v7857 = vmul.f32 %v7253, %v7856
        %v7858 = vsub.f32 1.0, %v7857
        %v7859 = vmul.f32 %v7856, %v7858
        %v7860 = vadd.f32 %v7856, %v7859
        %vm7861 = vweird.f32 %v7253
        %vm7862 = vweird.f32 %v7856
        %vm7863 = vmor %vm7861, %vm7862
        %v7864 = vsel %vm7863, %v7856, %v7860
        %v7865 = vand.u32 2147483647, %v7253
        %vm7866 = vcmp.eq.f32.partialorder %v7865, 8.507059e+37
        %v7867 = vand.u32 %v7253, 2147483648
        %v7868 = vor.u32 1.1754944e-38, %v7867
        %v7869 = vsel %vm7866, %v7868, %v7864
        %v7870 = vmul.f32 1.0, %v7869
        %v7871 = vrcp.pop %v7254
        %v7872 = vmul.f32 %v7254, %v7871
        %v7873 = vsub.f32 1.0, %v7872
        %v7874 = vmul.f32 %v7871, %v7873
        %v7875 = vadd.f32 %v7871, %v7874
        %vm7876 = vweird.f32 %v7254
        %vm7877 = vweird.f32 %v7871
        %vm7878 = vmor %vm7876, %vm7877
        %v7879 = vsel %vm7878, %v7871, %v7875
        %v7880 = vand.u32 2147483647, %v7254
        %vm7881 = vcmp.eq.f32.partialorder %v7880, 8.507059e+37
        %v7882 = vand.u32 %v7254, 2147483648
        %v7883 = vor.u32 1.1754944e-38, %v7882
        %v7884 = vsel %vm7881, %v7883, %v7879
        %v7885 = vmul.f32 1.0, %v7884
        %v7886 = vrcp.pop %v7255
        %v7887 = vmul.f32 %v7255, %v7886
        %v7888 = vsub.f32 1.0, %v7887
        %v7889 = vmul.f32 %v7886, %v7888
        %v7890 = vadd.f32 %v7886, %v7889
        %vm7891 = vweird.f32 %v7255
        %vm7892 = vweird.f32 %v7886
        %vm7893 = vmor %vm7891, %vm7892
        %v7894 = vsel %vm7893, %v7886, %v7890
        %v7895 = vand.u32 2147483647, %v7255
        %vm7896 = vcmp.eq.f32.partialorder %v7895, 8.507059e+37
        %v7897 = vand.u32 %v7255, 2147483648
        %v7898 = vor.u32 1.1754944e-38, %v7897
        %v7899 = vsel %vm7896, %v7898, %v7894
        %v7900 = vmul.f32 1.0, %v7899
        %v7901 = vrcp.pop %v7256
        %v7902 = vmul.f32 %v7256, %v7901
        %v7903 = vsub.f32 1.0, %v7902
        %v7904 = vmul.f32 %v7901, %v7903
        %v7905 = vadd.f32 %v7901, %v7904
        %vm7906 = vweird.f32 %v7256
        %vm7907 = vweird.f32 %v7901
        %vm7908 = vmor %vm7906, %vm7907
        %v7909 = vsel %vm7908, %v7901, %v7905
        %v7910 = vand.u32 2147483647, %v7256
        %vm7911 = vcmp.eq.f32.partialorder %v7910, 8.507059e+37
        %v7912 = vand.u32 %v7256, 2147483648
        %v7913 = vor.u32 1.1754944e-38, %v7912
        %v7914 = vsel %vm7911, %v7913, %v7909
        %v7915 = vmul.f32 1.0, %v7914
        %v7916 = vrcp.pop %v7257
        %v7917 = vmul.f32 %v7257, %v7916
        %v7918 = vsub.f32 1.0, %v7917
        %v7919 = vmul.f32 %v7916, %v7918
        %v7920 = vadd.f32 %v7916, %v7919
        %vm7921 = vweird.f32 %v7257
        %vm7922 = vweird.f32 %v7916
        %vm7923 = vmor %vm7921, %vm7922
        %v7924 = vsel %vm7923, %v7916, %v7920
        %v7925 = vand.u32 2147483647, %v7257
        %vm7926 = vcmp.eq.f32.partialorder %v7925, 8.507059e+37
        %v7927 = vand.u32 %v7257, 2147483648
        %v7928 = vor.u32 1.1754944e-38, %v7927
        %v7929 = vsel %vm7926, %v7928, %v7924
        %v7930 = vmul.f32 1.0, %v7929
        %v7931 = vrcp.pop %v7258
        %v7932 = vmul.f32 %v7258, %v7931
        %v7933 = vsub.f32 1.0, %v7932
        %v7934 = vmul.f32 %v7931, %v7933
        %v7935 = vadd.f32 %v7931, %v7934
        %vm7936 = vweird.f32 %v7258
        %vm7937 = vweird.f32 %v7931
        %vm7938 = vmor %vm7936, %vm7937
        %v7939 = vsel %vm7938, %v7931, %v7935
        %v7940 = vand.u32 2147483647, %v7258
        %vm7941 = vcmp.eq.f32.partialorder %v7940, 8.507059e+37
        %v7942 = vand.u32 %v7258, 2147483648
        %v7943 = vor.u32 1.1754944e-38, %v7942
        %v7944 = vsel %vm7941, %v7943, %v7939
        %v7945 = vmul.f32 1.0, %v7944
        %v7946 = vrcp.pop %v7259
        %v7947 = vmul.f32 %v7259, %v7946
        %v7948 = vsub.f32 1.0, %v7947
        %v7949 = vmul.f32 %v7946, %v7948
        %v7950 = vadd.f32 %v7946, %v7949
        %vm7951 = vweird.f32 %v7259
        %vm7952 = vweird.f32 %v7946
        %vm7953 = vmor %vm7951, %vm7952
        %v7954 = vsel %vm7953, %v7946, %v7950
        %v7955 = vand.u32 2147483647, %v7259
        %vm7956 = vcmp.eq.f32.partialorder %v7955, 8.507059e+37
        %v7957 = vand.u32 %v7259, 2147483648
        %v7958 = vor.u32 1.1754944e-38, %v7957
        %v7959 = vsel %vm7956, %v7958, %v7954
        %v7960 = vmul.f32 1.0, %v7959
        %v7961 = vrcp.pop %v7260
        %v7962 = vmul.f32 %v7260, %v7961
        %v7963 = vsub.f32 1.0, %v7962
        %v7964 = vmul.f32 %v7961, %v7963
        %v7965 = vadd.f32 %v7961, %v7964
        %vm7966 = vweird.f32 %v7260
        %vm7967 = vweird.f32 %v7961
        %vm7968 = vmor %vm7966, %vm7967
        %v7969 = vsel %vm7968, %v7961, %v7965
        %v7970 = vand.u32 2147483647, %v7260
        %vm7971 = vcmp.eq.f32.partialorder %v7970, 8.507059e+37
        %v7972 = vand.u32 %v7260, 2147483648
        %v7973 = vor.u32 1.1754944e-38, %v7972
        %v7974 = vsel %vm7971, %v7973, %v7969
        %v7975 = vmul.f32 1.0, %v7974
        %v7976 = vrcp.pop %v7261
        %v7977 = vmul.f32 %v7261, %v7976
        %v7978 = vsub.f32 1.0, %v7977
        %v7979 = vmul.f32 %v7976, %v7978
        %v7980 = vadd.f32 %v7976, %v7979
        %vm7981 = vweird.f32 %v7261
        %vm7982 = vweird.f32 %v7976
        %vm7983 = vmor %vm7981, %vm7982
        %v7984 = vsel %vm7983, %v7976, %v7980
        %v7985 = vand.u32 2147483647, %v7261
        %vm7986 = vcmp.eq.f32.partialorder %v7985, 8.507059e+37
        %v7987 = vand.u32 %v7261, 2147483648
        %v7988 = vor.u32 1.1754944e-38, %v7987
        %v7989 = vsel %vm7986, %v7988, %v7984
        %v7990 = vmul.f32 1.0, %v7989
        %v7991 = vrcp.pop %v7262
        %v7992 = vmul.f32 %v7262, %v7991
        %v7993 = vsub.f32 1.0, %v7992
        %v7994 = vmul.f32 %v7991, %v7993
        %v7995 = vadd.f32 %v7991, %v7994
        %vm7996 = vweird.f32 %v7262
        %vm7997 = vweird.f32 %v7991
        %vm7998 = vmor %vm7996, %vm7997
        %v7999 = vsel %vm7998, %v7991, %v7995
        %v8000 = vand.u32 2147483647, %v7262
        %vm8001 = vcmp.eq.f32.partialorder %v8000, 8.507059e+37
        %v8002 = vand.u32 %v7262, 2147483648
        %v8003 = vor.u32 1.1754944e-38, %v8002
        %v8004 = vsel %vm8001, %v8003, %v7999
        %v8005 = vmul.f32 1.0, %v8004
        %v8006 = vrcp.pop %v7263
        %v8007 = vmul.f32 %v7263, %v8006
        %v8008 = vsub.f32 1.0, %v8007
        %v8009 = vmul.f32 %v8006, %v8008
        %v8010 = vadd.f32 %v8006, %v8009
        %vm8011 = vweird.f32 %v7263
        %vm8012 = vweird.f32 %v8006
        %vm8013 = vmor %vm8011, %vm8012
        %v8014 = vsel %vm8013, %v8006, %v8010
        %v8015 = vand.u32 2147483647, %v7263
        %vm8016 = vcmp.eq.f32.partialorder %v8015, 8.507059e+37
        %v8017 = vand.u32 %v7263, 2147483648
        %v8018 = vor.u32 1.1754944e-38, %v8017
        %v8019 = vsel %vm8016, %v8018, %v8014
        %v8020 = vmul.f32 1.0, %v8019
        %v8021 = vrcp.pop %v7264
        %v8022 = vmul.f32 %v7264, %v8021
        %v8023 = vsub.f32 1.0, %v8022
        %v8024 = vmul.f32 %v8021, %v8023
        %v8025 = vadd.f32 %v8021, %v8024
        %vm8026 = vweird.f32 %v7264
        %vm8027 = vweird.f32 %v8021
        %vm8028 = vmor %vm8026, %vm8027
        %v8029 = vsel %vm8028, %v8021, %v8025
        %v8030 = vand.u32 2147483647, %v7264
        %vm8031 = vcmp.eq.f32.partialorder %v8030, 8.507059e+37
        %v8032 = vand.u32 %v7264, 2147483648
        %v8033 = vor.u32 1.1754944e-38, %v8032
        %v8034 = vsel %vm8031, %v8033, %v8029
        %v8035 = vmul.f32 1.0, %v8034
        %v8036 = vrcp.pop %v7265
        %v8037 = vmul.f32 %v7265, %v8036
        %v8038 = vsub.f32 1.0, %v8037
        %v8039 = vmul.f32 %v8036, %v8038
        %v8040 = vadd.f32 %v8036, %v8039
        %vm8041 = vweird.f32 %v7265
        %vm8042 = vweird.f32 %v8036
        %vm8043 = vmor %vm8041, %vm8042
        %v8044 = vsel %vm8043, %v8036, %v8040
        %v8045 = vand.u32 2147483647, %v7265
        %vm8046 = vcmp.eq.f32.partialorder %v8045, 8.507059e+37
        %v8047 = vand.u32 %v7265, 2147483648
        %v8048 = vor.u32 1.1754944e-38, %v8047
        %v8049 = vsel %vm8046, %v8048, %v8044
        %v8050 = vmul.f32 1.0, %v8049
        %v8051 = vrcp.pop %v7266
        %v8052 = vmul.f32 %v7266, %v8051
        %v8053 = vsub.f32 1.0, %v8052
        %v8054 = vmul.f32 %v8051, %v8053
        %v8055 = vadd.f32 %v8051, %v8054
        %vm8056 = vweird.f32 %v7266
        %vm8057 = vweird.f32 %v8051
        %vm8058 = vmor %vm8056, %vm8057
        %v8059 = vsel %vm8058, %v8051, %v8055
        %v8060 = vand.u32 2147483647, %v7266
        %vm8061 = vcmp.eq.f32.partialorder %v8060, 8.507059e+37
        %v8062 = vand.u32 %v7266, 2147483648
        %v8063 = vor.u32 1.1754944e-38, %v8062
        %v8064 = vsel %vm8061, %v8063, %v8059
        %v8065 = vmul.f32 1.0, %v8064
        %v8066 = vrcp.pop %v7267
        %v8067 = vmul.f32 %v7267, %v8066
        %v8068 = vsub.f32 1.0, %v8067
        %v8069 = vmul.f32 %v8066, %v8068
        %v8070 = vadd.f32 %v8066, %v8069
        %vm8071 = vweird.f32 %v7267
        %vm8072 = vweird.f32 %v8066
        %vm8073 = vmor %vm8071, %vm8072
        %v8074 = vsel %vm8073, %v8066, %v8070
        %v8075 = vand.u32 2147483647, %v7267
        %vm8076 = vcmp.eq.f32.partialorder %v8075, 8.507059e+37
        %v8077 = vand.u32 %v7267, 2147483648
        %v8078 = vor.u32 1.1754944e-38, %v8077
        %v8079 = vsel %vm8076, %v8078, %v8074
        %v8080 = vmul.f32 1.0, %v8079
        %v8081 = vrcp.pop %v7268
        %v8082 = vmul.f32 %v7268, %v8081
        %v8083 = vsub.f32 1.0, %v8082
        %v8084 = vmul.f32 %v8081, %v8083
        %v8085 = vadd.f32 %v8081, %v8084
        %vm8086 = vweird.f32 %v7268
        %vm8087 = vweird.f32 %v8081
        %vm8088 = vmor %vm8086, %vm8087
        %v8089 = vsel %vm8088, %v8081, %v8085
        %v8090 = vand.u32 2147483647, %v7268
        %vm8091 = vcmp.eq.f32.partialorder %v8090, 8.507059e+37
        %v8092 = vand.u32 %v7268, 2147483648
        %v8093 = vor.u32 1.1754944e-38, %v8092
        %v8094 = vsel %vm8091, %v8093, %v8089
        %v8095 = vmul.f32 1.0, %v8094
        %v8096 = vrcp.pop %v7269
        %v8097 = vmul.f32 %v7269, %v8096
        %v8098 = vsub.f32 1.0, %v8097
        %v8099 = vmul.f32 %v8096, %v8098
        %v8100 = vadd.f32 %v8096, %v8099
        %vm8101 = vweird.f32 %v7269
        %vm8102 = vweird.f32 %v8096
        %vm8103 = vmor %vm8101, %vm8102
        %v8104 = vsel %vm8103, %v8096, %v8100
        %v8105 = vand.u32 2147483647, %v7269
        %vm8106 = vcmp.eq.f32.partialorder %v8105, 8.507059e+37
        %v8107 = vand.u32 %v7269, 2147483648
        %v8108 = vor.u32 1.1754944e-38, %v8107
        %v8109 = vsel %vm8106, %v8108, %v8104
        %v8110 = vmul.f32 1.0, %v8109
        %v8111 = vrcp.pop %v7270
        %v8112 = vmul.f32 %v7270, %v8111
        %v8113 = vsub.f32 1.0, %v8112
        %v8114 = vmul.f32 %v8111, %v8113
        %v8115 = vadd.f32 %v8111, %v8114
        %vm8116 = vweird.f32 %v7270
        %vm8117 = vweird.f32 %v8111
        %vm8118 = vmor %vm8116, %vm8117
        %v8119 = vsel %vm8118, %v8111, %v8115
        %v8120 = vand.u32 2147483647, %v7270
        %vm8121 = vcmp.eq.f32.partialorder %v8120, 8.507059e+37
        %v8122 = vand.u32 %v7270, 2147483648
        %v8123 = vor.u32 1.1754944e-38, %v8122
        %v8124 = vsel %vm8121, %v8123, %v8119
        %v8125 = vmul.f32 1.0, %v8124
        %v8126 = vrcp.pop %v7271
        %v8127 = vmul.f32 %v7271, %v8126
        %v8128 = vsub.f32 1.0, %v8127
        %v8129 = vmul.f32 %v8126, %v8128
        %v8130 = vadd.f32 %v8126, %v8129
        %vm8131 = vweird.f32 %v7271
        %vm8132 = vweird.f32 %v8126
        %vm8133 = vmor %vm8131, %vm8132
        %v8134 = vsel %vm8133, %v8126, %v8130
        %v8135 = vand.u32 2147483647, %v7271
        %vm8136 = vcmp.eq.f32.partialorder %v8135, 8.507059e+37
        %v8137 = vand.u32 %v7271, 2147483648
        %v8138 = vor.u32 1.1754944e-38, %v8137
        %v8139 = vsel %vm8136, %v8138, %v8134
        %v8140 = vmul.f32 1.0, %v8139
        %v8141 = vrcp.pop %v7272
        %v8142 = vmul.f32 %v7272, %v8141
        %v8143 = vsub.f32 1.0, %v8142
        %v8144 = vmul.f32 %v8141, %v8143
        %v8145 = vadd.f32 %v8141, %v8144
        %vm8146 = vweird.f32 %v7272
        %vm8147 = vweird.f32 %v8141
        %vm8148 = vmor %vm8146, %vm8147
        %v8149 = vsel %vm8148, %v8141, %v8145
        %v8150 = vand.u32 2147483647, %v7272
        %vm8151 = vcmp.eq.f32.partialorder %v8150, 8.507059e+37
        %v8152 = vand.u32 %v7272, 2147483648
        %v8153 = vor.u32 1.1754944e-38, %v8152
        %v8154 = vsel %vm8151, %v8153, %v8149
        %v8155 = vmul.f32 1.0, %v8154
        %v8156 = vrcp.pop %v7273
        %v8157 = vmul.f32 %v7273, %v8156
        %v8158 = vsub.f32 1.0, %v8157
        %v8159 = vmul.f32 %v8156, %v8158
        %v8160 = vadd.f32 %v8156, %v8159
        %vm8161 = vweird.f32 %v7273
        %vm8162 = vweird.f32 %v8156
        %vm8163 = vmor %vm8161, %vm8162
        %v8164 = vsel %vm8163, %v8156, %v8160
        %v8165 = vand.u32 2147483647, %v7273
        %vm8166 = vcmp.eq.f32.partialorder %v8165, 8.507059e+37
        %v8167 = vand.u32 %v7273, 2147483648
        %v8168 = vor.u32 1.1754944e-38, %v8167
        %v8169 = vsel %vm8166, %v8168, %v8164
        %v8170 = vmul.f32 1.0, %v8169
        %v8171 = vrcp.pop %v7274
        %v8172 = vmul.f32 %v7274, %v8171
        %v8173 = vsub.f32 1.0, %v8172
        %v8174 = vmul.f32 %v8171, %v8173
        %v8175 = vadd.f32 %v8171, %v8174
        %vm8176 = vweird.f32 %v7274
        %vm8177 = vweird.f32 %v8171
        %vm8178 = vmor %vm8176, %vm8177
        %v8179 = vsel %vm8178, %v8171, %v8175
        %v8180 = vand.u32 2147483647, %v7274
        %vm8181 = vcmp.eq.f32.partialorder %v8180, 8.507059e+37
        %v8182 = vand.u32 %v7274, 2147483648
        %v8183 = vor.u32 1.1754944e-38, %v8182
        %v8184 = vsel %vm8181, %v8183, %v8179
        %v8185 = vmul.f32 1.0, %v8184
        %v8186 = vrcp.pop %v7275
        %v8187 = vmul.f32 %v7275, %v8186
        %v8188 = vsub.f32 1.0, %v8187
        %v8189 = vmul.f32 %v8186, %v8188
        %v8190 = vadd.f32 %v8186, %v8189
        %vm8191 = vweird.f32 %v7275
        %vm8192 = vweird.f32 %v8186
        %vm8193 = vmor %vm8191, %vm8192
        %v8194 = vsel %vm8193, %v8186, %v8190
        %v8195 = vand.u32 2147483647, %v7275
        %vm8196 = vcmp.eq.f32.partialorder %v8195, 8.507059e+37
        %v8197 = vand.u32 %v7275, 2147483648
        %v8198 = vor.u32 1.1754944e-38, %v8197
        %v8199 = vsel %vm8196, %v8198, %v8194
        %v8200 = vmul.f32 1.0, %v8199
        %v8201 = vrcp.pop %v7276
        %v8202 = vmul.f32 %v7276, %v8201
        %v8203 = vsub.f32 1.0, %v8202
        %v8204 = vmul.f32 %v8201, %v8203
        %v8205 = vadd.f32 %v8201, %v8204
        %vm8206 = vweird.f32 %v7276
        %vm8207 = vweird.f32 %v8201
        %vm8208 = vmor %vm8206, %vm8207
        %v8209 = vsel %vm8208, %v8201, %v8205
        %v8210 = vand.u32 2147483647, %v7276
        %vm8211 = vcmp.eq.f32.partialorder %v8210, 8.507059e+37
        %v8212 = vand.u32 %v7276, 2147483648
        %v8213 = vor.u32 1.1754944e-38, %v8212
        %v8214 = vsel %vm8211, %v8213, %v8209
        %v8215 = vmul.f32 1.0, %v8214
        %v8216 = vrcp.pop %v7277
        %v8217 = vmul.f32 %v7277, %v8216
        %v8218 = vsub.f32 1.0, %v8217
        %v8219 = vmul.f32 %v8216, %v8218
        %v8220 = vadd.f32 %v8216, %v8219
        %vm8221 = vweird.f32 %v7277
        %vm8222 = vweird.f32 %v8216
        %vm8223 = vmor %vm8221, %vm8222
        %v8224 = vsel %vm8223, %v8216, %v8220
        %v8225 = vand.u32 2147483647, %v7277
        %vm8226 = vcmp.eq.f32.partialorder %v8225, 8.507059e+37
        %v8227 = vand.u32 %v7277, 2147483648
        %v8228 = vor.u32 1.1754944e-38, %v8227
        %v8229 = vsel %vm8226, %v8228, %v8224
        %v8230 = vmul.f32 1.0, %v8229
        %v8231 = vrcp.pop %v7278
        %v8232 = vmul.f32 %v7278, %v8231
        %v8233 = vsub.f32 1.0, %v8232
        %v8234 = vmul.f32 %v8231, %v8233
        %v8235 = vadd.f32 %v8231, %v8234
        %vm8236 = vweird.f32 %v7278
        %vm8237 = vweird.f32 %v8231
        %vm8238 = vmor %vm8236, %vm8237
        %v8239 = vsel %vm8238, %v8231, %v8235
        %v8240 = vand.u32 2147483647, %v7278
        %vm8241 = vcmp.eq.f32.partialorder %v8240, 8.507059e+37
        %v8242 = vand.u32 %v7278, 2147483648
        %v8243 = vor.u32 1.1754944e-38, %v8242
        %v8244 = vsel %vm8241, %v8243, %v8239
        %v8245 = vmul.f32 1.0, %v8244
        %v8246 = vrcp.pop %v7279
        %v8247 = vmul.f32 %v7279, %v8246
        %v8248 = vsub.f32 1.0, %v8247
        %v8249 = vmul.f32 %v8246, %v8248
        %v8250 = vadd.f32 %v8246, %v8249
        %vm8251 = vweird.f32 %v7279
        %vm8252 = vweird.f32 %v8246
        %vm8253 = vmor %vm8251, %vm8252
        %v8254 = vsel %vm8253, %v8246, %v8250
        %v8255 = vand.u32 2147483647, %v7279
        %vm8256 = vcmp.eq.f32.partialorder %v8255, 8.507059e+37
        %v8257 = vand.u32 %v7279, 2147483648
        %v8258 = vor.u32 1.1754944e-38, %v8257
        %v8259 = vsel %vm8256, %v8258, %v8254
        %v8260 = vmul.f32 1.0, %v8259
        %v8261 = vrcp.pop %v7280
        %v8262 = vmul.f32 %v7280, %v8261
        %v8263 = vsub.f32 1.0, %v8262
        %v8264 = vmul.f32 %v8261, %v8263
        %v8265 = vadd.f32 %v8261, %v8264
        %vm8266 = vweird.f32 %v7280
        %vm8267 = vweird.f32 %v8261
        %vm8268 = vmor %vm8266, %vm8267
        %v8269 = vsel %vm8268, %v8261, %v8265
        %v8270 = vand.u32 2147483647, %v7280
        %vm8271 = vcmp.eq.f32.partialorder %v8270, 8.507059e+37
        %v8272 = vand.u32 %v7280, 2147483648
        %v8273 = vor.u32 1.1754944e-38, %v8272
        %v8274 = vsel %vm8271, %v8273, %v8269
        %v8275 = vmul.f32 1.0, %v8274
        %v8276 = vrcp.pop %v7281
        %v8277 = vmul.f32 %v7281, %v8276
        %v8278 = vsub.f32 1.0, %v8277
        %v8279 = vmul.f32 %v8276, %v8278
        %v8280 = vadd.f32 %v8276, %v8279
        %vm8281 = vweird.f32 %v7281
        %vm8282 = vweird.f32 %v8276
        %vm8283 = vmor %vm8281, %vm8282
        %v8284 = vsel %vm8283, %v8276, %v8280
        %v8285 = vand.u32 2147483647, %v7281
        %vm8286 = vcmp.eq.f32.partialorder %v8285, 8.507059e+37
        %v8287 = vand.u32 %v7281, 2147483648
        %v8288 = vor.u32 1.1754944e-38, %v8287
        %v8289 = vsel %vm8286, %v8288, %v8284
        %v8290 = vmul.f32 1.0, %v8289
        %v8291 = vrcp.pop %v7282
        %v8292 = vmul.f32 %v7282, %v8291
        %v8293 = vsub.f32 1.0, %v8292
        %v8294 = vmul.f32 %v8291, %v8293
        %v8295 = vadd.f32 %v8291, %v8294
        %vm8296 = vweird.f32 %v7282
        %vm8297 = vweird.f32 %v8291
        %vm8298 = vmor %vm8296, %vm8297
        %v8299 = vsel %vm8298, %v8291, %v8295
        %v8300 = vand.u32 2147483647, %v7282
        %vm8301 = vcmp.eq.f32.partialorder %v8300, 8.507059e+37
        %v8302 = vand.u32 %v7282, 2147483648
        %v8303 = vor.u32 1.1754944e-38, %v8302
        %v8304 = vsel %vm8301, %v8303, %v8299
        %v8305 = vmul.f32 1.0, %v8304
        %v8306 = vrcp.pop %v7283
        %v8307 = vmul.f32 %v7283, %v8306
        %v8308 = vsub.f32 1.0, %v8307
        %v8309 = vmul.f32 %v8306, %v8308
        %v8310 = vadd.f32 %v8306, %v8309
        %vm8311 = vweird.f32 %v7283
        %vm8312 = vweird.f32 %v8306
        %vm8313 = vmor %vm8311, %vm8312
        %v8314 = vsel %vm8313, %v8306, %v8310
        %v8315 = vand.u32 2147483647, %v7283
        %vm8316 = vcmp.eq.f32.partialorder %v8315, 8.507059e+37
        %v8317 = vand.u32 %v7283, 2147483648
        %v8318 = vor.u32 1.1754944e-38, %v8317
        %v8319 = vsel %vm8316, %v8318, %v8314
        %v8320 = vmul.f32 1.0, %v8319
        %v8321 = vrcp.pop %v7284
        %v8322 = vmul.f32 %v7284, %v8321
        %v8323 = vsub.f32 1.0, %v8322
        %v8324 = vmul.f32 %v8321, %v8323
        %v8325 = vadd.f32 %v8321, %v8324
        %vm8326 = vweird.f32 %v7284
        %vm8327 = vweird.f32 %v8321
        %vm8328 = vmor %vm8326, %vm8327
        %v8329 = vsel %vm8328, %v8321, %v8325
        %v8330 = vand.u32 2147483647, %v7284
        %vm8331 = vcmp.eq.f32.partialorder %v8330, 8.507059e+37
        %v8332 = vand.u32 %v7284, 2147483648
        %v8333 = vor.u32 1.1754944e-38, %v8332
        %v8334 = vsel %vm8331, %v8333, %v8329
        %v8335 = vmul.f32 1.0, %v8334
        %v8336 = vrcp.pop %v7285
        %v8337 = vmul.f32 %v7285, %v8336
        %v8338 = vsub.f32 1.0, %v8337
        %v8339 = vmul.f32 %v8336, %v8338
        %v8340 = vadd.f32 %v8336, %v8339
        %vm8341 = vweird.f32 %v7285
        %vm8342 = vweird.f32 %v8336
        %vm8343 = vmor %vm8341, %vm8342
        %v8344 = vsel %vm8343, %v8336, %v8340
        %v8345 = vand.u32 2147483647, %v7285
        %vm8346 = vcmp.eq.f32.partialorder %v8345, 8.507059e+37
        %v8347 = vand.u32 %v7285, 2147483648
        %v8348 = vor.u32 1.1754944e-38, %v8347
        %v8349 = vsel %vm8346, %v8348, %v8344
        %v8350 = vmul.f32 1.0, %v8349
        %v8351 = vrcp.pop %v7286
        %v8352 = vmul.f32 %v7286, %v8351
        %v8353 = vsub.f32 1.0, %v8352
        %v8354 = vmul.f32 %v8351, %v8353
        %v8355 = vadd.f32 %v8351, %v8354
        %vm8356 = vweird.f32 %v7286
        %vm8357 = vweird.f32 %v8351
        %vm8358 = vmor %vm8356, %vm8357
        %v8359 = vsel %vm8358, %v8351, %v8355
        %v8360 = vand.u32 2147483647, %v7286
        %vm8361 = vcmp.eq.f32.partialorder %v8360, 8.507059e+37
        %v8362 = vand.u32 %v7286, 2147483648
        %v8363 = vor.u32 1.1754944e-38, %v8362
        %v8364 = vsel %vm8361, %v8363, %v8359
        %v8365 = vmul.f32 1.0, %v8364
        %v8366 = vrcp.pop %v7287
        %v8367 = vmul.f32 %v7287, %v8366
        %v8368 = vsub.f32 1.0, %v8367
        %v8369 = vmul.f32 %v8366, %v8368
        %v8370 = vadd.f32 %v8366, %v8369
        %vm8371 = vweird.f32 %v7287
        %vm8372 = vweird.f32 %v8366
        %vm8373 = vmor %vm8371, %vm8372
        %v8374 = vsel %vm8373, %v8366, %v8370
        %v8375 = vand.u32 2147483647, %v7287
        %vm8376 = vcmp.eq.f32.partialorder %v8375, 8.507059e+37
        %v8377 = vand.u32 %v7287, 2147483648
        %v8378 = vor.u32 1.1754944e-38, %v8377
        %v8379 = vsel %vm8376, %v8378, %v8374
        %v8380 = vmul.f32 1.0, %v8379
        %v8381 = vrcp.pop %v7288
        %v8382 = vmul.f32 %v7288, %v8381
        %v8383 = vsub.f32 1.0, %v8382
        %v8384 = vmul.f32 %v8381, %v8383
        %v8385 = vadd.f32 %v8381, %v8384
        %vm8386 = vweird.f32 %v7288
        %vm8387 = vweird.f32 %v8381
        %vm8388 = vmor %vm8386, %vm8387
        %v8389 = vsel %vm8388, %v8381, %v8385
        %v8390 = vand.u32 2147483647, %v7288
        %vm8391 = vcmp.eq.f32.partialorder %v8390, 8.507059e+37
        %v8392 = vand.u32 %v7288, 2147483648
        %v8393 = vor.u32 1.1754944e-38, %v8392
        %v8394 = vsel %vm8391, %v8393, %v8389
        %v8395 = vmul.f32 1.0, %v8394
        %v8396 = vrcp.pop %v7289
        %v8397 = vmul.f32 %v7289, %v8396
        %v8398 = vsub.f32 1.0, %v8397
        %v8399 = vmul.f32 %v8396, %v8398
        %v8400 = vadd.f32 %v8396, %v8399
        %vm8401 = vweird.f32 %v7289
        %vm8402 = vweird.f32 %v8396
        %vm8403 = vmor %vm8401, %vm8402
        %v8404 = vsel %vm8403, %v8396, %v8400
        %v8405 = vand.u32 2147483647, %v7289
        %vm8406 = vcmp.eq.f32.partialorder %v8405, 8.507059e+37
        %v8407 = vand.u32 %v7289, 2147483648
        %v8408 = vor.u32 1.1754944e-38, %v8407
        %v8409 = vsel %vm8406, %v8408, %v8404
        %v8410 = vmul.f32 1.0, %v8409
        %v8411 = vrcp.pop %v7290
        %v8412 = vmul.f32 %v7290, %v8411
        %v8413 = vsub.f32 1.0, %v8412
        %v8414 = vmul.f32 %v8411, %v8413
        %v8415 = vadd.f32 %v8411, %v8414
        %vm8416 = vweird.f32 %v7290
        %vm8417 = vweird.f32 %v8411
        %vm8418 = vmor %vm8416, %vm8417
        %v8419 = vsel %vm8418, %v8411, %v8415
        %v8420 = vand.u32 2147483647, %v7290
        %vm8421 = vcmp.eq.f32.partialorder %v8420, 8.507059e+37
        %v8422 = vand.u32 %v7290, 2147483648
        %v8423 = vor.u32 1.1754944e-38, %v8422
        %v8424 = vsel %vm8421, %v8423, %v8419
        %v8425 = vmul.f32 1.0, %v8424
        %v8426 = vrcp.pop %v7291
        %v8427 = vmul.f32 %v7291, %v8426
        %v8428 = vsub.f32 1.0, %v8427
        %v8429 = vmul.f32 %v8426, %v8428
        %v8430 = vadd.f32 %v8426, %v8429
        %vm8431 = vweird.f32 %v7291
        %vm8432 = vweird.f32 %v8426
        %vm8433 = vmor %vm8431, %vm8432
        %v8434 = vsel %vm8433, %v8426, %v8430
        %v8435 = vand.u32 2147483647, %v7291
        %vm8436 = vcmp.eq.f32.partialorder %v8435, 8.507059e+37
        %v8437 = vand.u32 %v7291, 2147483648
        %v8438 = vor.u32 1.1754944e-38, %v8437
        %v8439 = vsel %vm8436, %v8438, %v8434
        %v8440 = vmul.f32 1.0, %v8439
        %v8441 = vrcp.pop %v7292
        %v8442 = vmul.f32 %v7292, %v8441
        %v8443 = vsub.f32 1.0, %v8442
        %v8444 = vmul.f32 %v8441, %v8443
        %v8445 = vadd.f32 %v8441, %v8444
        %vm8446 = vweird.f32 %v7292
        %vm8447 = vweird.f32 %v8441
        %vm8448 = vmor %vm8446, %vm8447
        %v8449 = vsel %vm8448, %v8441, %v8445
        %v8450 = vand.u32 2147483647, %v7292
        %vm8451 = vcmp.eq.f32.partialorder %v8450, 8.507059e+37
        %v8452 = vand.u32 %v7292, 2147483648
        %v8453 = vor.u32 1.1754944e-38, %v8452
        %v8454 = vsel %vm8451, %v8453, %v8449
        %v8455 = vmul.f32 1.0, %v8454
        %v8456 = vrcp.pop %v7293
        %v8457 = vmul.f32 %v7293, %v8456
        %v8458 = vsub.f32 1.0, %v8457
        %v8459 = vmul.f32 %v8456, %v8458
        %v8460 = vadd.f32 %v8456, %v8459
        %vm8461 = vweird.f32 %v7293
        %vm8462 = vweird.f32 %v8456
        %vm8463 = vmor %vm8461, %vm8462
        %v8464 = vsel %vm8463, %v8456, %v8460
        %v8465 = vand.u32 2147483647, %v7293
        %vm8466 = vcmp.eq.f32.partialorder %v8465, 8.507059e+37
        %v8467 = vand.u32 %v7293, 2147483648
        %v8468 = vor.u32 1.1754944e-38, %v8467
        %v8469 = vsel %vm8466, %v8468, %v8464
        %v8470 = vmul.f32 1.0, %v8469
        %v8471 = vrcp.pop %v7294
        %v8472 = vmul.f32 %v7294, %v8471
        %v8473 = vsub.f32 1.0, %v8472
        %v8474 = vmul.f32 %v8471, %v8473
        %v8475 = vadd.f32 %v8471, %v8474
        %vm8476 = vweird.f32 %v7294
        %vm8477 = vweird.f32 %v8471
        %vm8478 = vmor %vm8476, %vm8477
        %v8479 = vsel %vm8478, %v8471, %v8475
        %v8480 = vand.u32 2147483647, %v7294
        %vm8481 = vcmp.eq.f32.partialorder %v8480, 8.507059e+37
        %v8482 = vand.u32 %v7294, 2147483648
        %v8483 = vor.u32 1.1754944e-38, %v8482
        %v8484 = vsel %vm8481, %v8483, %v8479
        %v8485 = vmul.f32 1.0, %v8484
        %v8486 = vrcp.pop %v7295
        %v8487 = vmul.f32 %v7295, %v8486
        %v8488 = vsub.f32 1.0, %v8487
        %v8489 = vmul.f32 %v8486, %v8488
        %v8490 = vadd.f32 %v8486, %v8489
        %vm8491 = vweird.f32 %v7295
        %vm8492 = vweird.f32 %v8486
        %vm8493 = vmor %vm8491, %vm8492
        %v8494 = vsel %vm8493, %v8486, %v8490
        %v8495 = vand.u32 2147483647, %v7295
        %vm8496 = vcmp.eq.f32.partialorder %v8495, 8.507059e+37
        %v8497 = vand.u32 %v7295, 2147483648
        %v8498 = vor.u32 1.1754944e-38, %v8497
        %v8499 = vsel %vm8496, %v8498, %v8494
        %v8500 = vmul.f32 1.0, %v8499
        %v8501 = vrcp.pop %v7296
        %v8502 = vmul.f32 %v7296, %v8501
        %v8503 = vsub.f32 1.0, %v8502
        %v8504 = vmul.f32 %v8501, %v8503
        %v8505 = vadd.f32 %v8501, %v8504
        %vm8506 = vweird.f32 %v7296
        %vm8507 = vweird.f32 %v8501
        %vm8508 = vmor %vm8506, %vm8507
        %v8509 = vsel %vm8508, %v8501, %v8505
        %v8510 = vand.u32 2147483647, %v7296
        %vm8511 = vcmp.eq.f32.partialorder %v8510, 8.507059e+37
        %v8512 = vand.u32 %v7296, 2147483648
        %v8513 = vor.u32 1.1754944e-38, %v8512
        %v8514 = vsel %vm8511, %v8513, %v8509
        %v8515 = vmul.f32 1.0, %v8514
        %v8516 = vrcp.pop %v7297
        %v8517 = vmul.f32 %v7297, %v8516
        %v8518 = vsub.f32 1.0, %v8517
        %v8519 = vmul.f32 %v8516, %v8518
        %v8520 = vadd.f32 %v8516, %v8519
        %vm8521 = vweird.f32 %v7297
        %vm8522 = vweird.f32 %v8516
        %vm8523 = vmor %vm8521, %vm8522
        %v8524 = vsel %vm8523, %v8516, %v8520
        %v8525 = vand.u32 2147483647, %v7297
        %vm8526 = vcmp.eq.f32.partialorder %v8525, 8.507059e+37
        %v8527 = vand.u32 %v7297, 2147483648
        %v8528 = vor.u32 1.1754944e-38, %v8527
        %v8529 = vsel %vm8526, %v8528, %v8524
        %v8530 = vmul.f32 1.0, %v8529
        %v8531 = vrcp.pop %v7298
        %v8532 = vmul.f32 %v7298, %v8531
        %v8533 = vsub.f32 1.0, %v8532
        %v8534 = vmul.f32 %v8531, %v8533
        %v8535 = vadd.f32 %v8531, %v8534
        %vm8536 = vweird.f32 %v7298
        %vm8537 = vweird.f32 %v8531
        %vm8538 = vmor %vm8536, %vm8537
        %v8539 = vsel %vm8538, %v8531, %v8535
        %v8540 = vand.u32 2147483647, %v7298
        %vm8541 = vcmp.eq.f32.partialorder %v8540, 8.507059e+37
        %v8542 = vand.u32 %v7298, 2147483648
        %v8543 = vor.u32 1.1754944e-38, %v8542
        %v8544 = vsel %vm8541, %v8543, %v8539
        %v8545 = vmul.f32 1.0, %v8544
        %v8546 = vrcp.pop %v7299
        %v8547 = vmul.f32 %v7299, %v8546
        %v8548 = vsub.f32 1.0, %v8547
        %v8549 = vmul.f32 %v8546, %v8548
        %v8550 = vadd.f32 %v8546, %v8549
        %vm8551 = vweird.f32 %v7299
        %vm8552 = vweird.f32 %v8546
        %vm8553 = vmor %vm8551, %vm8552
        %v8554 = vsel %vm8553, %v8546, %v8550
        %v8555 = vand.u32 2147483647, %v7299
        %vm8556 = vcmp.eq.f32.partialorder %v8555, 8.507059e+37
        %v8557 = vand.u32 %v7299, 2147483648
        %v8558 = vor.u32 1.1754944e-38, %v8557
        %v8559 = vsel %vm8556, %v8558, %v8554
        %v8560 = vmul.f32 1.0, %v8559
        %v8561 = vrcp.pop %v7300
        %v8562 = vmul.f32 %v7300, %v8561
        %v8563 = vsub.f32 1.0, %v8562
        %v8564 = vmul.f32 %v8561, %v8563
        %v8565 = vadd.f32 %v8561, %v8564
        %vm8566 = vweird.f32 %v7300
        %vm8567 = vweird.f32 %v8561
        %vm8568 = vmor %vm8566, %vm8567
        %v8569 = vsel %vm8568, %v8561, %v8565
        %v8570 = vand.u32 2147483647, %v7300
        %vm8571 = vcmp.eq.f32.partialorder %v8570, 8.507059e+37
        %v8572 = vand.u32 %v7300, 2147483648
        %v8573 = vor.u32 1.1754944e-38, %v8572
        %v8574 = vsel %vm8571, %v8573, %v8569
        %v8575 = vmul.f32 1.0, %v8574
        %v8576 = vrcp.pop %v7301
        %v8577 = vmul.f32 %v7301, %v8576
        %v8578 = vsub.f32 1.0, %v8577
        %v8579 = vmul.f32 %v8576, %v8578
        %v8580 = vadd.f32 %v8576, %v8579
        %vm8581 = vweird.f32 %v7301
        %vm8582 = vweird.f32 %v8576
        %vm8583 = vmor %vm8581, %vm8582
        %v8584 = vsel %vm8583, %v8576, %v8580
        %v8585 = vand.u32 2147483647, %v7301
        %vm8586 = vcmp.eq.f32.partialorder %v8585, 8.507059e+37
        %v8587 = vand.u32 %v7301, 2147483648
        %v8588 = vor.u32 1.1754944e-38, %v8587
        %v8589 = vsel %vm8586, %v8588, %v8584
        %v8590 = vmul.f32 1.0, %v8589
        %v8591 = vrcp.pop %v7302
        %v8592 = vmul.f32 %v7302, %v8591
        %v8593 = vsub.f32 1.0, %v8592
        %v8594 = vmul.f32 %v8591, %v8593
        %v8595 = vadd.f32 %v8591, %v8594
        %vm8596 = vweird.f32 %v7302
        %vm8597 = vweird.f32 %v8591
        %vm8598 = vmor %vm8596, %vm8597
        %v8599 = vsel %vm8598, %v8591, %v8595
        %v8600 = vand.u32 2147483647, %v7302
        %vm8601 = vcmp.eq.f32.partialorder %v8600, 8.507059e+37
        %v8602 = vand.u32 %v7302, 2147483648
        %v8603 = vor.u32 1.1754944e-38, %v8602
        %v8604 = vsel %vm8601, %v8603, %v8599
        %v8605 = vmul.f32 1.0, %v8604
        %v8606 = vrcp.pop %v7303
        %v8607 = vmul.f32 %v7303, %v8606
        %v8608 = vsub.f32 1.0, %v8607
        %v8609 = vmul.f32 %v8606, %v8608
        %v8610 = vadd.f32 %v8606, %v8609
        %vm8611 = vweird.f32 %v7303
        %vm8612 = vweird.f32 %v8606
        %vm8613 = vmor %vm8611, %vm8612
        %v8614 = vsel %vm8613, %v8606, %v8610
        %v8615 = vand.u32 2147483647, %v7303
        %vm8616 = vcmp.eq.f32.partialorder %v8615, 8.507059e+37
        %v8617 = vand.u32 %v7303, 2147483648
        %v8618 = vor.u32 1.1754944e-38, %v8617
        %v8619 = vsel %vm8616, %v8618, %v8614
        %v8620 = vmul.f32 1.0, %v8619
        %v8621 = vrcp.pop %v7304
        %v8622 = vmul.f32 %v7304, %v8621
        %v8623 = vsub.f32 1.0, %v8622
        %v8624 = vmul.f32 %v8621, %v8623
        %v8625 = vadd.f32 %v8621, %v8624
        %vm8626 = vweird.f32 %v7304
        %vm8627 = vweird.f32 %v8621
        %vm8628 = vmor %vm8626, %vm8627
        %v8629 = vsel %vm8628, %v8621, %v8625
        %v8630 = vand.u32 2147483647, %v7304
        %vm8631 = vcmp.eq.f32.partialorder %v8630, 8.507059e+37
        %v8632 = vand.u32 %v7304, 2147483648
        %v8633 = vor.u32 1.1754944e-38, %v8632
        %v8634 = vsel %vm8631, %v8633, %v8629
        %v8635 = vmul.f32 1.0, %v8634
        %v8636 = vrcp.pop %v7305
        %v8637 = vmul.f32 %v7305, %v8636
        %v8638 = vsub.f32 1.0, %v8637
        %v8639 = vmul.f32 %v8636, %v8638
        %v8640 = vadd.f32 %v8636, %v8639
        %vm8641 = vweird.f32 %v7305
        %vm8642 = vweird.f32 %v8636
        %vm8643 = vmor %vm8641, %vm8642
        %v8644 = vsel %vm8643, %v8636, %v8640
        %v8645 = vand.u32 2147483647, %v7305
        %vm8646 = vcmp.eq.f32.partialorder %v8645, 8.507059e+37
        %v8647 = vand.u32 %v7305, 2147483648
        %v8648 = vor.u32 1.1754944e-38, %v8647
        %v8649 = vsel %vm8646, %v8648, %v8644
        %v8650 = vmul.f32 1.0, %v8649
        %v8651 = vrcp.pop %v7306
        %v8652 = vmul.f32 %v7306, %v8651
        %v8653 = vsub.f32 1.0, %v8652
        %v8654 = vmul.f32 %v8651, %v8653
        %v8655 = vadd.f32 %v8651, %v8654
        %vm8656 = vweird.f32 %v7306
        %vm8657 = vweird.f32 %v8651
        %vm8658 = vmor %vm8656, %vm8657
        %v8659 = vsel %vm8658, %v8651, %v8655
        %v8660 = vand.u32 2147483647, %v7306
        %vm8661 = vcmp.eq.f32.partialorder %v8660, 8.507059e+37
        %v8662 = vand.u32 %v7306, 2147483648
        %v8663 = vor.u32 1.1754944e-38, %v8662
        %v8664 = vsel %vm8661, %v8663, %v8659
        %v8665 = vmul.f32 1.0, %v8664
        %v8666 = vrcp.pop %v7307
        %v8667 = vmul.f32 %v7307, %v8666
        %v8668 = vsub.f32 1.0, %v8667
        %v8669 = vmul.f32 %v8666, %v8668
        %v8670 = vadd.f32 %v8666, %v8669
        %vm8671 = vweird.f32 %v7307
        %vm8672 = vweird.f32 %v8666
        %vm8673 = vmor %vm8671, %vm8672
        %v8674 = vsel %vm8673, %v8666, %v8670
        %v8675 = vand.u32 2147483647, %v7307
        %vm8676 = vcmp.eq.f32.partialorder %v8675, 8.507059e+37
        %v8677 = vand.u32 %v7307, 2147483648
        %v8678 = vor.u32 1.1754944e-38, %v8677
        %v8679 = vsel %vm8676, %v8678, %v8674
        %v8680 = vmul.f32 1.0, %v8679
        %v8681 = vrcp.pop %v7308
        %v8682 = vmul.f32 %v7308, %v8681
        %v8683 = vsub.f32 1.0, %v8682
        %v8684 = vmul.f32 %v8681, %v8683
        %v8685 = vadd.f32 %v8681, %v8684
        %vm8686 = vweird.f32 %v7308
        %vm8687 = vweird.f32 %v8681
        %vm8688 = vmor %vm8686, %vm8687
        %v8689 = vsel %vm8688, %v8681, %v8685
        %v8690 = vand.u32 2147483647, %v7308
        %vm8691 = vcmp.eq.f32.partialorder %v8690, 8.507059e+37
        %v8692 = vand.u32 %v7308, 2147483648
        %v8693 = vor.u32 1.1754944e-38, %v8692
        %v8694 = vsel %vm8691, %v8693, %v8689
        %v8695 = vmul.f32 1.0, %v8694
        %v8696 = vrcp.pop %v7309
        %v8697 = vmul.f32 %v7309, %v8696
        %v8698 = vsub.f32 1.0, %v8697
        %v8699 = vmul.f32 %v8696, %v8698
        %v8700 = vadd.f32 %v8696, %v8699
        %vm8701 = vweird.f32 %v7309
        %vm8702 = vweird.f32 %v8696
        %vm8703 = vmor %vm8701, %vm8702
        %v8704 = vsel %vm8703, %v8696, %v8700
        %v8705 = vand.u32 2147483647, %v7309
        %vm8706 = vcmp.eq.f32.partialorder %v8705, 8.507059e+37
        %v8707 = vand.u32 %v7309, 2147483648
        %v8708 = vor.u32 1.1754944e-38, %v8707
        %v8709 = vsel %vm8706, %v8708, %v8704
        %v8710 = vmul.f32 1.0, %v8709
        %v8711 = vrcp.pop %v7310
        %v8712 = vmul.f32 %v7310, %v8711
        %v8713 = vsub.f32 1.0, %v8712
        %v8714 = vmul.f32 %v8711, %v8713
        %v8715 = vadd.f32 %v8711, %v8714
        %vm8716 = vweird.f32 %v7310
        %vm8717 = vweird.f32 %v8711
        %vm8718 = vmor %vm8716, %vm8717
        %v8719 = vsel %vm8718, %v8711, %v8715
        %v8720 = vand.u32 2147483647, %v7310
        %vm8721 = vcmp.eq.f32.partialorder %v8720, 8.507059e+37
        %v8722 = vand.u32 %v7310, 2147483648
        %v8723 = vor.u32 1.1754944e-38, %v8722
        %v8724 = vsel %vm8721, %v8723, %v8719
        %v8725 = vmul.f32 1.0, %v8724
        %v8726 = vrcp.pop %v7311
        %v8727 = vmul.f32 %v7311, %v8726
        %v8728 = vsub.f32 1.0, %v8727
        %v8729 = vmul.f32 %v8726, %v8728
        %v8730 = vadd.f32 %v8726, %v8729
        %vm8731 = vweird.f32 %v7311
        %vm8732 = vweird.f32 %v8726
        %vm8733 = vmor %vm8731, %vm8732
        %v8734 = vsel %vm8733, %v8726, %v8730
        %v8735 = vand.u32 2147483647, %v7311
        %vm8736 = vcmp.eq.f32.partialorder %v8735, 8.507059e+37
        %v8737 = vand.u32 %v7311, 2147483648
        %v8738 = vor.u32 1.1754944e-38, %v8737
        %v8739 = vsel %vm8736, %v8738, %v8734
        %v8740 = vmul.f32 1.0, %v8739
        %v8741 = vrcp.pop %v7312
        %v8742 = vmul.f32 %v7312, %v8741
        %v8743 = vsub.f32 1.0, %v8742
        %v8744 = vmul.f32 %v8741, %v8743
        %v8745 = vadd.f32 %v8741, %v8744
        %vm8746 = vweird.f32 %v7312
        %vm8747 = vweird.f32 %v8741
        %vm8748 = vmor %vm8746, %vm8747
        %v8749 = vsel %vm8748, %v8741, %v8745
        %v8750 = vand.u32 2147483647, %v7312
        %vm8751 = vcmp.eq.f32.partialorder %v8750, 8.507059e+37
        %v8752 = vand.u32 %v7312, 2147483648
        %v8753 = vor.u32 1.1754944e-38, %v8752
        %v8754 = vsel %vm8751, %v8753, %v8749
        %v8755 = vmul.f32 1.0, %v8754
        %v8756 = vrcp.pop %v7313
        %v8757 = vmul.f32 %v7313, %v8756
        %v8758 = vsub.f32 1.0, %v8757
        %v8759 = vmul.f32 %v8756, %v8758
        %v8760 = vadd.f32 %v8756, %v8759
        %vm8761 = vweird.f32 %v7313
        %vm8762 = vweird.f32 %v8756
        %vm8763 = vmor %vm8761, %vm8762
        %v8764 = vsel %vm8763, %v8756, %v8760
        %v8765 = vand.u32 2147483647, %v7313
        %vm8766 = vcmp.eq.f32.partialorder %v8765, 8.507059e+37
        %v8767 = vand.u32 %v7313, 2147483648
        %v8768 = vor.u32 1.1754944e-38, %v8767
        %v8769 = vsel %vm8766, %v8768, %v8764
        %v8770 = vmul.f32 1.0, %v8769
        %v8771 = vrcp.pop %v7314
        %v8772 = vmul.f32 %v7314, %v8771
        %v8773 = vsub.f32 1.0, %v8772
        %v8774 = vmul.f32 %v8771, %v8773
        %v8775 = vadd.f32 %v8771, %v8774
        %vm8776 = vweird.f32 %v7314
        %vm8777 = vweird.f32 %v8771
        %vm8778 = vmor %vm8776, %vm8777
        %v8779 = vsel %vm8778, %v8771, %v8775
        %v8780 = vand.u32 2147483647, %v7314
        %vm8781 = vcmp.eq.f32.partialorder %v8780, 8.507059e+37
        %v8782 = vand.u32 %v7314, 2147483648
        %v8783 = vor.u32 1.1754944e-38, %v8782
        %v8784 = vsel %vm8781, %v8783, %v8779
        %v8785 = vmul.f32 1.0, %v8784
        %v8786 = vrcp.pop %v7315
        %v8787 = vmul.f32 %v7315, %v8786
        %v8788 = vsub.f32 1.0, %v8787
        %v8789 = vmul.f32 %v8786, %v8788
        %v8790 = vadd.f32 %v8786, %v8789
        %vm8791 = vweird.f32 %v7315
        %vm8792 = vweird.f32 %v8786
        %vm8793 = vmor %vm8791, %vm8792
        %v8794 = vsel %vm8793, %v8786, %v8790
        %v8795 = vand.u32 2147483647, %v7315
        %vm8796 = vcmp.eq.f32.partialorder %v8795, 8.507059e+37
        %v8797 = vand.u32 %v7315, 2147483648
        %v8798 = vor.u32 1.1754944e-38, %v8797
        %v8799 = vsel %vm8796, %v8798, %v8794
        %v8800 = vmul.f32 1.0, %v8799
        %v8801 = vrcp.pop %v7316
        %v8802 = vmul.f32 %v7316, %v8801
        %v8803 = vsub.f32 1.0, %v8802
        %v8804 = vmul.f32 %v8801, %v8803
        %v8805 = vadd.f32 %v8801, %v8804
        %vm8806 = vweird.f32 %v7316
        %vm8807 = vweird.f32 %v8801
        %vm8808 = vmor %vm8806, %vm8807
        %v8809 = vsel %vm8808, %v8801, %v8805
        %v8810 = vand.u32 2147483647, %v7316
        %vm8811 = vcmp.eq.f32.partialorder %v8810, 8.507059e+37
        %v8812 = vand.u32 %v7316, 2147483648
        %v8813 = vor.u32 1.1754944e-38, %v8812
        %v8814 = vsel %vm8811, %v8813, %v8809
        %v8815 = vmul.f32 1.0, %v8814
        %v8816 = vrcp.pop %v7317
        %v8817 = vmul.f32 %v7317, %v8816
        %v8818 = vsub.f32 1.0, %v8817
        %v8819 = vmul.f32 %v8816, %v8818
        %v8820 = vadd.f32 %v8816, %v8819
        %vm8821 = vweird.f32 %v7317
        %vm8822 = vweird.f32 %v8816
        %vm8823 = vmor %vm8821, %vm8822
        %v8824 = vsel %vm8823, %v8816, %v8820
        %v8825 = vand.u32 2147483647, %v7317
        %vm8826 = vcmp.eq.f32.partialorder %v8825, 8.507059e+37
        %v8827 = vand.u32 %v7317, 2147483648
        %v8828 = vor.u32 1.1754944e-38, %v8827
        %v8829 = vsel %vm8826, %v8828, %v8824
        %v8830 = vmul.f32 1.0, %v8829
        %v8831 = vrcp.pop %v7318
        %v8832 = vmul.f32 %v7318, %v8831
        %v8833 = vsub.f32 1.0, %v8832
        %v8834 = vmul.f32 %v8831, %v8833
        %v8835 = vadd.f32 %v8831, %v8834
        %vm8836 = vweird.f32 %v7318
        %vm8837 = vweird.f32 %v8831
        %vm8838 = vmor %vm8836, %vm8837
        %v8839 = vsel %vm8838, %v8831, %v8835
        %v8840 = vand.u32 2147483647, %v7318
        %vm8841 = vcmp.eq.f32.partialorder %v8840, 8.507059e+37
        %v8842 = vand.u32 %v7318, 2147483648
        %v8843 = vor.u32 1.1754944e-38, %v8842
        %v8844 = vsel %vm8841, %v8843, %v8839
        %v8845 = vmul.f32 1.0, %v8844
        %v8846 = vrcp.pop %v7319
        %v8847 = vmul.f32 %v7319, %v8846
        %v8848 = vsub.f32 1.0, %v8847
        %v8849 = vmul.f32 %v8846, %v8848
        %v8850 = vadd.f32 %v8846, %v8849
        %vm8851 = vweird.f32 %v7319
        %vm8852 = vweird.f32 %v8846
        %vm8853 = vmor %vm8851, %vm8852
        %v8854 = vsel %vm8853, %v8846, %v8850
        %v8855 = vand.u32 2147483647, %v7319
        %vm8856 = vcmp.eq.f32.partialorder %v8855, 8.507059e+37
        %v8857 = vand.u32 %v7319, 2147483648
        %v8858 = vor.u32 1.1754944e-38, %v8857
        %v8859 = vsel %vm8856, %v8858, %v8854
        %v8860 = vmul.f32 1.0, %v8859
        %v8861 = vrcp.pop %v7320
        %v8862 = vmul.f32 %v7320, %v8861
        %v8863 = vsub.f32 1.0, %v8862
        %v8864 = vmul.f32 %v8861, %v8863
        %v8865 = vadd.f32 %v8861, %v8864
        %vm8866 = vweird.f32 %v7320
        %vm8867 = vweird.f32 %v8861
        %vm8868 = vmor %vm8866, %vm8867
        %v8869 = vsel %vm8868, %v8861, %v8865
        %v8870 = vand.u32 2147483647, %v7320
        %vm8871 = vcmp.eq.f32.partialorder %v8870, 8.507059e+37
        %v8872 = vand.u32 %v7320, 2147483648
        %v8873 = vor.u32 1.1754944e-38, %v8872
        %v8874 = vsel %vm8871, %v8873, %v8869
        %v8875 = vmul.f32 1.0, %v8874
        %v8876 = vrcp.pop %v7321
        %v8877 = vmul.f32 %v7321, %v8876
        %v8878 = vsub.f32 1.0, %v8877
        %v8879 = vmul.f32 %v8876, %v8878
        %v8880 = vadd.f32 %v8876, %v8879
        %vm8881 = vweird.f32 %v7321
        %vm8882 = vweird.f32 %v8876
        %vm8883 = vmor %vm8881, %vm8882
        %v8884 = vsel %vm8883, %v8876, %v8880
        %v8885 = vand.u32 2147483647, %v7321
        %vm8886 = vcmp.eq.f32.partialorder %v8885, 8.507059e+37
        %v8887 = vand.u32 %v7321, 2147483648
        %v8888 = vor.u32 1.1754944e-38, %v8887
        %v8889 = vsel %vm8886, %v8888, %v8884
        %v8890 = vmul.f32 1.0, %v8889
        %v8891 = vrcp.pop %v7322
        %v8892 = vmul.f32 %v7322, %v8891
        %v8893 = vsub.f32 1.0, %v8892
        %v8894 = vmul.f32 %v8891, %v8893
        %v8895 = vadd.f32 %v8891, %v8894
        %vm8896 = vweird.f32 %v7322
        %vm8897 = vweird.f32 %v8891
        %vm8898 = vmor %vm8896, %vm8897
        %v8899 = vsel %vm8898, %v8891, %v8895
        %v8900 = vand.u32 2147483647, %v7322
        %vm8901 = vcmp.eq.f32.partialorder %v8900, 8.507059e+37
        %v8902 = vand.u32 %v7322, 2147483648
        %v8903 = vor.u32 1.1754944e-38, %v8902
        %v8904 = vsel %vm8901, %v8903, %v8899
        %v8905 = vmul.f32 1.0, %v8904
        %v8906 = vrcp.pop %v7323
        %v8907 = vmul.f32 %v7323, %v8906
        %v8908 = vsub.f32 1.0, %v8907
        %v8909 = vmul.f32 %v8906, %v8908
        %v8910 = vadd.f32 %v8906, %v8909
        %vm8911 = vweird.f32 %v7323
        %vm8912 = vweird.f32 %v8906
        %vm8913 = vmor %vm8911, %vm8912
        %v8914 = vsel %vm8913, %v8906, %v8910
        %v8915 = vand.u32 2147483647, %v7323
        %vm8916 = vcmp.eq.f32.partialorder %v8915, 8.507059e+37
        %v8917 = vand.u32 %v7323, 2147483648
        %v8918 = vor.u32 1.1754944e-38, %v8917
        %v8919 = vsel %vm8916, %v8918, %v8914
        %v8920 = vmul.f32 1.0, %v8919
        %v8921 = vrcp.pop %v7324
        %v8922 = vmul.f32 %v7324, %v8921
        %v8923 = vsub.f32 1.0, %v8922
        %v8924 = vmul.f32 %v8921, %v8923
        %v8925 = vadd.f32 %v8921, %v8924
        %vm8926 = vweird.f32 %v7324
        %vm8927 = vweird.f32 %v8921
        %vm8928 = vmor %vm8926, %vm8927
        %v8929 = vsel %vm8928, %v8921, %v8925
        %v8930 = vand.u32 2147483647, %v7324
        %vm8931 = vcmp.eq.f32.partialorder %v8930, 8.507059e+37
        %v8932 = vand.u32 %v7324, 2147483648
        %v8933 = vor.u32 1.1754944e-38, %v8932
        %v8934 = vsel %vm8931, %v8933, %v8929
        %v8935 = vmul.f32 1.0, %v8934
        %v8936 = vrcp.pop %v7325
        %v8937 = vmul.f32 %v7325, %v8936
        %v8938 = vsub.f32 1.0, %v8937
        %v8939 = vmul.f32 %v8936, %v8938
        %v8940 = vadd.f32 %v8936, %v8939
        %vm8941 = vweird.f32 %v7325
        %vm8942 = vweird.f32 %v8936
        %vm8943 = vmor %vm8941, %vm8942
        %v8944 = vsel %vm8943, %v8936, %v8940
        %v8945 = vand.u32 2147483647, %v7325
        %vm8946 = vcmp.eq.f32.partialorder %v8945, 8.507059e+37
        %v8947 = vand.u32 %v7325, 2147483648
        %v8948 = vor.u32 1.1754944e-38, %v8947
        %v8949 = vsel %vm8946, %v8948, %v8944
        %v8950 = vmul.f32 1.0, %v8949
        %v8951 = vrcp.pop %v7326
        %v8952 = vmul.f32 %v7326, %v8951
        %v8953 = vsub.f32 1.0, %v8952
        %v8954 = vmul.f32 %v8951, %v8953
        %v8955 = vadd.f32 %v8951, %v8954
        %vm8956 = vweird.f32 %v7326
        %vm8957 = vweird.f32 %v8951
        %vm8958 = vmor %vm8956, %vm8957
        %v8959 = vsel %vm8958, %v8951, %v8955
        %v8960 = vand.u32 2147483647, %v7326
        %vm8961 = vcmp.eq.f32.partialorder %v8960, 8.507059e+37
        %v8962 = vand.u32 %v7326, 2147483648
        %v8963 = vor.u32 1.1754944e-38, %v8962
        %v8964 = vsel %vm8961, %v8963, %v8959
        %v8965 = vmul.f32 1.0, %v8964
        %v8966 = vrcp.pop %v7327
        %v8967 = vmul.f32 %v7327, %v8966
        %v8968 = vsub.f32 1.0, %v8967
        %v8969 = vmul.f32 %v8966, %v8968
        %v8970 = vadd.f32 %v8966, %v8969
        %vm8971 = vweird.f32 %v7327
        %vm8972 = vweird.f32 %v8966
        %vm8973 = vmor %vm8971, %vm8972
        %v8974 = vsel %vm8973, %v8966, %v8970
        %v8975 = vand.u32 2147483647, %v7327
        %vm8976 = vcmp.eq.f32.partialorder %v8975, 8.507059e+37
        %v8977 = vand.u32 %v7327, 2147483648
        %v8978 = vor.u32 1.1754944e-38, %v8977
        %v8979 = vsel %vm8976, %v8978, %v8974
        %v8980 = vmul.f32 1.0, %v8979
        %v8981 = vrcp.pop %v7328
        %v8982 = vmul.f32 %v7328, %v8981
        %v8983 = vsub.f32 1.0, %v8982
        %v8984 = vmul.f32 %v8981, %v8983
        %v8985 = vadd.f32 %v8981, %v8984
        %vm8986 = vweird.f32 %v7328
        %vm8987 = vweird.f32 %v8981
        %vm8988 = vmor %vm8986, %vm8987
        %v8989 = vsel %vm8988, %v8981, %v8985
        %v8990 = vand.u32 2147483647, %v7328
        %vm8991 = vcmp.eq.f32.partialorder %v8990, 8.507059e+37
        %v8992 = vand.u32 %v7328, 2147483648
        %v8993 = vor.u32 1.1754944e-38, %v8992
        %v8994 = vsel %vm8991, %v8993, %v8989
        %v8995 = vmul.f32 1.0, %v8994
        %v8996 = vrcp.pop %v7329
        %v8997 = vmul.f32 %v7329, %v8996
        %v8998 = vsub.f32 1.0, %v8997
        %v8999 = vmul.f32 %v8996, %v8998
        %v9000 = vadd.f32 %v8996, %v8999
        %vm9001 = vweird.f32 %v7329
        %vm9002 = vweird.f32 %v8996
        %vm9003 = vmor %vm9001, %vm9002
        %v9004 = vsel %vm9003, %v8996, %v9000
        %v9005 = vand.u32 2147483647, %v7329
        %vm9006 = vcmp.eq.f32.partialorder %v9005, 8.507059e+37
        %v9007 = vand.u32 %v7329, 2147483648
        %v9008 = vor.u32 1.1754944e-38, %v9007
        %v9009 = vsel %vm9006, %v9008, %v9004
        %v9010 = vmul.f32 1.0, %v9009
        %v9011 = vrcp.pop %v7330
        %v9012 = vmul.f32 %v7330, %v9011
        %v9013 = vsub.f32 1.0, %v9012
        %v9014 = vmul.f32 %v9011, %v9013
        %v9015 = vadd.f32 %v9011, %v9014
        %vm9016 = vweird.f32 %v7330
        %vm9017 = vweird.f32 %v9011
        %vm9018 = vmor %vm9016, %vm9017
        %v9019 = vsel %vm9018, %v9011, %v9015
        %v9020 = vand.u32 2147483647, %v7330
        %vm9021 = vcmp.eq.f32.partialorder %v9020, 8.507059e+37
        %v9022 = vand.u32 %v7330, 2147483648
        %v9023 = vor.u32 1.1754944e-38, %v9022
        %v9024 = vsel %vm9021, %v9023, %v9019
        %v9025 = vmul.f32 1.0, %v9024
        %v9026 = vrcp.pop %v7331
        %v9027 = vmul.f32 %v7331, %v9026
        %v9028 = vsub.f32 1.0, %v9027
        %v9029 = vmul.f32 %v9026, %v9028
        %v9030 = vadd.f32 %v9026, %v9029
        %vm9031 = vweird.f32 %v7331
        %vm9032 = vweird.f32 %v9026
        %vm9033 = vmor %vm9031, %vm9032
        %v9034 = vsel %vm9033, %v9026, %v9030
        %v9035 = vand.u32 2147483647, %v7331
        %vm9036 = vcmp.eq.f32.partialorder %v9035, 8.507059e+37
        %v9037 = vand.u32 %v7331, 2147483648
        %v9038 = vor.u32 1.1754944e-38, %v9037
        %v9039 = vsel %vm9036, %v9038, %v9034
        %v9040 = vmul.f32 1.0, %v9039
        %v9041 = vrcp.pop %v7332
        %v9042 = vmul.f32 %v7332, %v9041
        %v9043 = vsub.f32 1.0, %v9042
        %v9044 = vmul.f32 %v9041, %v9043
        %v9045 = vadd.f32 %v9041, %v9044
        %vm9046 = vweird.f32 %v7332
        %vm9047 = vweird.f32 %v9041
        %vm9048 = vmor %vm9046, %vm9047
        %v9049 = vsel %vm9048, %v9041, %v9045
        %v9050 = vand.u32 2147483647, %v7332
        %vm9051 = vcmp.eq.f32.partialorder %v9050, 8.507059e+37
        %v9052 = vand.u32 %v7332, 2147483648
        %v9053 = vor.u32 1.1754944e-38, %v9052
        %v9054 = vsel %vm9051, %v9053, %v9049
        %v9055 = vmul.f32 1.0, %v9054
        %v9056 = vrcp.pop %v7333
        %v9057 = vmul.f32 %v7333, %v9056
        %v9058 = vsub.f32 1.0, %v9057
        %v9059 = vmul.f32 %v9056, %v9058
        %v9060 = vadd.f32 %v9056, %v9059
        %vm9061 = vweird.f32 %v7333
        %vm9062 = vweird.f32 %v9056
        %vm9063 = vmor %vm9061, %vm9062
        %v9064 = vsel %vm9063, %v9056, %v9060
        %v9065 = vand.u32 2147483647, %v7333
        %vm9066 = vcmp.eq.f32.partialorder %v9065, 8.507059e+37
        %v9067 = vand.u32 %v7333, 2147483648
        %v9068 = vor.u32 1.1754944e-38, %v9067
        %v9069 = vsel %vm9066, %v9068, %v9064
        %v9070 = vmul.f32 1.0, %v9069
        %v9071 = vrcp.pop %v7334
        %v9072 = vmul.f32 %v7334, %v9071
        %v9073 = vsub.f32 1.0, %v9072
        %v9074 = vmul.f32 %v9071, %v9073
        %v9075 = vadd.f32 %v9071, %v9074
        %vm9076 = vweird.f32 %v7334
        %vm9077 = vweird.f32 %v9071
        %vm9078 = vmor %vm9076, %vm9077
        %v9079 = vsel %vm9078, %v9071, %v9075
        %v9080 = vand.u32 2147483647, %v7334
        %vm9081 = vcmp.eq.f32.partialorder %v9080, 8.507059e+37
        %v9082 = vand.u32 %v7334, 2147483648
        %v9083 = vor.u32 1.1754944e-38, %v9082
        %v9084 = vsel %vm9081, %v9083, %v9079
        %v9085 = vmul.f32 1.0, %v9084
        %v9086 = vrcp.pop %v7335
        %v9087 = vmul.f32 %v7335, %v9086
        %v9088 = vsub.f32 1.0, %v9087
        %v9089 = vmul.f32 %v9086, %v9088
        %v9090 = vadd.f32 %v9086, %v9089
        %vm9091 = vweird.f32 %v7335
        %vm9092 = vweird.f32 %v9086
        %vm9093 = vmor %vm9091, %vm9092
        %v9094 = vsel %vm9093, %v9086, %v9090
        %v9095 = vand.u32 2147483647, %v7335
        %vm9096 = vcmp.eq.f32.partialorder %v9095, 8.507059e+37
        %v9097 = vand.u32 %v7335, 2147483648
        %v9098 = vor.u32 1.1754944e-38, %v9097
        %v9099 = vsel %vm9096, %v9098, %v9094
        %v9100 = vmul.f32 1.0, %v9099
        %v9101 = vrcp.pop %v7336
        %v9102 = vmul.f32 %v7336, %v9101
        %v9103 = vsub.f32 1.0, %v9102
        %v9104 = vmul.f32 %v9101, %v9103
        %v9105 = vadd.f32 %v9101, %v9104
        %vm9106 = vweird.f32 %v7336
        %vm9107 = vweird.f32 %v9101
        %vm9108 = vmor %vm9106, %vm9107
        %v9109 = vsel %vm9108, %v9101, %v9105
        %v9110 = vand.u32 2147483647, %v7336
        %vm9111 = vcmp.eq.f32.partialorder %v9110, 8.507059e+37
        %v9112 = vand.u32 %v7336, 2147483648
        %v9113 = vor.u32 1.1754944e-38, %v9112
        %v9114 = vsel %vm9111, %v9113, %v9109
        %v9115 = vmul.f32 1.0, %v9114
        %v9116 = vrcp.pop %v7337
        %v9117 = vmul.f32 %v7337, %v9116
        %v9118 = vsub.f32 1.0, %v9117
        %v9119 = vmul.f32 %v9116, %v9118
        %v9120 = vadd.f32 %v9116, %v9119
        %vm9121 = vweird.f32 %v7337
        %vm9122 = vweird.f32 %v9116
        %vm9123 = vmor %vm9121, %vm9122
        %v9124 = vsel %vm9123, %v9116, %v9120
        %v9125 = vand.u32 2147483647, %v7337
        %vm9126 = vcmp.eq.f32.partialorder %v9125, 8.507059e+37
        %v9127 = vand.u32 %v7337, 2147483648
        %v9128 = vor.u32 1.1754944e-38, %v9127
        %v9129 = vsel %vm9126, %v9128, %v9124
        %v9130 = vmul.f32 1.0, %v9129
        %v9131 = vrcp.pop %v7338
        %v9132 = vmul.f32 %v7338, %v9131
        %v9133 = vsub.f32 1.0, %v9132
        %v9134 = vmul.f32 %v9131, %v9133
        %v9135 = vadd.f32 %v9131, %v9134
        %vm9136 = vweird.f32 %v7338
        %vm9137 = vweird.f32 %v9131
        %vm9138 = vmor %vm9136, %vm9137
        %v9139 = vsel %vm9138, %v9131, %v9135
        %v9140 = vand.u32 2147483647, %v7338
        %vm9141 = vcmp.eq.f32.partialorder %v9140, 8.507059e+37
        %v9142 = vand.u32 %v7338, 2147483648
        %v9143 = vor.u32 1.1754944e-38, %v9142
        %v9144 = vsel %vm9141, %v9143, %v9139
        %v9145 = vmul.f32 1.0, %v9144
        %v9146 = vrcp.pop %v7339
        %v9147 = vmul.f32 %v7339, %v9146
        %v9148 = vsub.f32 1.0, %v9147
        %v9149 = vmul.f32 %v9146, %v9148
        %v9150 = vadd.f32 %v9146, %v9149
        %vm9151 = vweird.f32 %v7339
        %vm9152 = vweird.f32 %v9146
        %vm9153 = vmor %vm9151, %vm9152
        %v9154 = vsel %vm9153, %v9146, %v9150
        %v9155 = vand.u32 2147483647, %v7339
        %vm9156 = vcmp.eq.f32.partialorder %v9155, 8.507059e+37
        %v9157 = vand.u32 %v7339, 2147483648
        %v9158 = vor.u32 1.1754944e-38, %v9157
        %v9159 = vsel %vm9156, %v9158, %v9154
        %v9160 = vmul.f32 1.0, %v9159
        %v9161 = vrcp.pop %v7340
        %v9162 = vmul.f32 %v7340, %v9161
        %v9163 = vsub.f32 1.0, %v9162
        %v9164 = vmul.f32 %v9161, %v9163
        %v9165 = vadd.f32 %v9161, %v9164
        %vm9166 = vweird.f32 %v7340
        %vm9167 = vweird.f32 %v9161
        %vm9168 = vmor %vm9166, %vm9167
        %v9169 = vsel %vm9168, %v9161, %v9165
        %v9170 = vand.u32 2147483647, %v7340
        %vm9171 = vcmp.eq.f32.partialorder %v9170, 8.507059e+37
        %v9172 = vand.u32 %v7340, 2147483648
        %v9173 = vor.u32 1.1754944e-38, %v9172
        %v9174 = vsel %vm9171, %v9173, %v9169
        %v9175 = vmul.f32 1.0, %v9174
        %v9176 = vrcp.pop %v7341
        %v9177 = vmul.f32 %v7341, %v9176
        %v9178 = vsub.f32 1.0, %v9177
        %v9179 = vmul.f32 %v9176, %v9178
        %v9180 = vadd.f32 %v9176, %v9179
        %vm9181 = vweird.f32 %v7341
        %vm9182 = vweird.f32 %v9176
        %vm9183 = vmor %vm9181, %vm9182
        %v9184 = vsel %vm9183, %v9176, %v9180
        %v9185 = vand.u32 2147483647, %v7341
        %vm9186 = vcmp.eq.f32.partialorder %v9185, 8.507059e+37
        %v9187 = vand.u32 %v7341, 2147483648
        %v9188 = vor.u32 1.1754944e-38, %v9187
        %v9189 = vsel %vm9186, %v9188, %v9184
        %v9190 = vmul.f32 1.0, %v9189
        %v9191 = vrcp.pop %v7342
        %v9192 = vmul.f32 %v7342, %v9191
        %v9193 = vsub.f32 1.0, %v9192
        %v9194 = vmul.f32 %v9191, %v9193
        %v9195 = vadd.f32 %v9191, %v9194
        %vm9196 = vweird.f32 %v7342
        %vm9197 = vweird.f32 %v9191
        %vm9198 = vmor %vm9196, %vm9197
        %v9199 = vsel %vm9198, %v9191, %v9195
        %v9200 = vand.u32 2147483647, %v7342
        %vm9201 = vcmp.eq.f32.partialorder %v9200, 8.507059e+37
        %v9202 = vand.u32 %v7342, 2147483648
        %v9203 = vor.u32 1.1754944e-38, %v9202
        %v9204 = vsel %vm9201, %v9203, %v9199
        %v9205 = vmul.f32 1.0, %v9204
        %v9206 = vrcp.pop %v7343
        %v9207 = vmul.f32 %v7343, %v9206
        %v9208 = vsub.f32 1.0, %v9207
        %v9209 = vmul.f32 %v9206, %v9208
        %v9210 = vadd.f32 %v9206, %v9209
        %vm9211 = vweird.f32 %v7343
        %vm9212 = vweird.f32 %v9206
        %vm9213 = vmor %vm9211, %vm9212
        %v9214 = vsel %vm9213, %v9206, %v9210
        %v9215 = vand.u32 2147483647, %v7343
        %vm9216 = vcmp.eq.f32.partialorder %v9215, 8.507059e+37
        %v9217 = vand.u32 %v7343, 2147483648
        %v9218 = vor.u32 1.1754944e-38, %v9217
        %v9219 = vsel %vm9216, %v9218, %v9214
        %v9220 = vmul.f32 1.0, %v9219
        %v9221 = vrcp.pop %v7344
        %v9222 = vmul.f32 %v7344, %v9221
        %v9223 = vsub.f32 1.0, %v9222
        %v9224 = vmul.f32 %v9221, %v9223
        %v9225 = vadd.f32 %v9221, %v9224
        %vm9226 = vweird.f32 %v7344
        %vm9227 = vweird.f32 %v9221
        %vm9228 = vmor %vm9226, %vm9227
        %v9229 = vsel %vm9228, %v9221, %v9225
        %v9230 = vand.u32 2147483647, %v7344
        %vm9231 = vcmp.eq.f32.partialorder %v9230, 8.507059e+37
        %v9232 = vand.u32 %v7344, 2147483648
        %v9233 = vor.u32 1.1754944e-38, %v9232
        %v9234 = vsel %vm9231, %v9233, %v9229
        %v9235 = vmul.f32 1.0, %v9234
        %v9236 = vrcp.pop %v7345
        %v9237 = vmul.f32 %v7345, %v9236
        %v9238 = vsub.f32 1.0, %v9237
        %v9239 = vmul.f32 %v9236, %v9238
        %v9240 = vadd.f32 %v9236, %v9239
        %vm9241 = vweird.f32 %v7345
        %vm9242 = vweird.f32 %v9236
        %vm9243 = vmor %vm9241, %vm9242
        %v9244 = vsel %vm9243, %v9236, %v9240
        %v9245 = vand.u32 2147483647, %v7345
        %vm9246 = vcmp.eq.f32.partialorder %v9245, 8.507059e+37
        %v9247 = vand.u32 %v7345, 2147483648
        %v9248 = vor.u32 1.1754944e-38, %v9247
        %v9249 = vsel %vm9246, %v9248, %v9244
        %v9250 = vmul.f32 1.0, %v9249
        %v9251 = vpack.c.bf16 %v7360, %v7360
        %v9252 = vpack.c.bf16 %v7375, %v7375
        %v9253 = vpack.c.bf16 %v7390, %v7390
        %v9254 = vpack.c.bf16 %v7405, %v7405
        %v9255 = vpack.c.bf16 %v7420, %v7420
        %v9256 = vpack.c.bf16 %v7435, %v7435
        %v9257 = vpack.c.bf16 %v7450, %v7450
        %v9258 = vpack.c.bf16 %v7465, %v7465
        %v9259 = vpack.c.bf16 %v7480, %v7480
        %v9260 = vpack.c.bf16 %v7495, %v7495
        %v9261 = vpack.c.bf16 %v7510, %v7510
        %v9262 = vpack.c.bf16 %v7525, %v7525
        %v9263 = vpack.c.bf16 %v7540, %v7540
        %v9264 = vpack.c.bf16 %v7555, %v7555
        %v9265 = vpack.c.bf16 %v7570, %v7570
        %v9266 = vpack.c.bf16 %v7585, %v7585
        %v9267 = vpack.c.bf16 %v7600, %v7600
        %v9268 = vpack.c.bf16 %v7615, %v7615
        %v9269 = vpack.c.bf16 %v7630, %v7630
        %v9270 = vpack.c.bf16 %v7645, %v7645
        %v9271 = vpack.c.bf16 %v7660, %v7660
        %v9272 = vpack.c.bf16 %v7675, %v7675
        %v9273 = vpack.c.bf16 %v7690, %v7690
        %v9274 = vpack.c.bf16 %v7705, %v7705
        %v9275 = vpack.c.bf16 %v7720, %v7720
        %v9276 = vpack.c.bf16 %v7735, %v7735
        %v9277 = vpack.c.bf16 %v7750, %v7750
        %v9278 = vpack.c.bf16 %v7765, %v7765
        %v9279 = vpack.c.bf16 %v7780, %v7780
        %v9280 = vpack.c.bf16 %v7795, %v7795
        %v9281 = vpack.c.bf16 %v7810, %v7810
        %v9282 = vpack.c.bf16 %v7825, %v7825
        %v9283 = vpack.c.bf16 %v7840, %v7840
        %v9284 = vpack.c.bf16 %v7855, %v7855
        %v9285 = vpack.c.bf16 %v7870, %v7870
        %v9286 = vpack.c.bf16 %v7885, %v7885
        %v9287 = vpack.c.bf16 %v7900, %v7900
        %v9288 = vpack.c.bf16 %v7915, %v7915
        %v9289 = vpack.c.bf16 %v7930, %v7930
        %v9290 = vpack.c.bf16 %v7945, %v7945
        %v9291 = vpack.c.bf16 %v7960, %v7960
        %v9292 = vpack.c.bf16 %v7975, %v7975
        %v9293 = vpack.c.bf16 %v7990, %v7990
        %v9294 = vpack.c.bf16 %v8005, %v8005
        %v9295 = vpack.c.bf16 %v8020, %v8020
        %v9296 = vpack.c.bf16 %v8035, %v8035
        %v9297 = vpack.c.bf16 %v8050, %v8050
        %v9298 = vpack.c.bf16 %v8065, %v8065
        %v9299 = vpack.c.bf16 %v8080, %v8080
        %v9300 = vpack.c.bf16 %v8095, %v8095
        %v9301 = vpack.c.bf16 %v8110, %v8110
        %v9302 = vpack.c.bf16 %v8125, %v8125
        %v9303 = vpack.c.bf16 %v8140, %v8140
        %v9304 = vpack.c.bf16 %v8155, %v8155
        %v9305 = vpack.c.bf16 %v8170, %v8170
        %v9306 = vpack.c.bf16 %v8185, %v8185
        %v9307 = vpack.c.bf16 %v8200, %v8200
        %v9308 = vpack.c.bf16 %v8215, %v8215
        %v9309 = vpack.c.bf16 %v8230, %v8230
        %v9310 = vpack.c.bf16 %v8245, %v8245
        %v9311 = vpack.c.bf16 %v8260, %v8260
        %v9312 = vpack.c.bf16 %v8275, %v8275
        %v9313 = vpack.c.bf16 %v8290, %v8290
        %v9314 = vpack.c.bf16 %v8305, %v8305
        %v9315 = vpack.c.bf16 %v8320, %v8320
        %v9316 = vpack.c.bf16 %v8335, %v8335
        %v9317 = vpack.c.bf16 %v8350, %v8350
        %v9318 = vpack.c.bf16 %v8365, %v8365
        %v9319 = vpack.c.bf16 %v8380, %v8380
        %v9320 = vpack.c.bf16 %v8395, %v8395
        %v9321 = vpack.c.bf16 %v8410, %v8410
        %v9322 = vpack.c.bf16 %v8425, %v8425
        %v9323 = vpack.c.bf16 %v8440, %v8440
        %v9324 = vpack.c.bf16 %v8455, %v8455
        %v9325 = vpack.c.bf16 %v8470, %v8470
        %v9326 = vpack.c.bf16 %v8485, %v8485
        %v9327 = vpack.c.bf16 %v8500, %v8500
        %v9328 = vpack.c.bf16 %v8515, %v8515
        %v9329 = vpack.c.bf16 %v8530, %v8530
        %v9330 = vpack.c.bf16 %v8545, %v8545
        %v9331 = vpack.c.bf16 %v8560, %v8560
        %v9332 = vpack.c.bf16 %v8575, %v8575
        %v9333 = vpack.c.bf16 %v8590, %v8590
        %v9334 = vpack.c.bf16 %v8605, %v8605
        %v9335 = vpack.c.bf16 %v8620, %v8620
        %v9336 = vpack.c.bf16 %v8635, %v8635
        %v9337 = vpack.c.bf16 %v8650, %v8650
        %v9338 = vpack.c.bf16 %v8665, %v8665
        %v9339 = vpack.c.bf16 %v8680, %v8680
        %v9340 = vpack.c.bf16 %v8695, %v8695
        %v9341 = vpack.c.bf16 %v8710, %v8710
        %v9342 = vpack.c.bf16 %v8725, %v8725
        %v9343 = vpack.c.bf16 %v8740, %v8740
        %v9344 = vpack.c.bf16 %v8755, %v8755
        %v9345 = vpack.c.bf16 %v8770, %v8770
        %v9346 = vpack.c.bf16 %v8785, %v8785
        %v9347 = vpack.c.bf16 %v8800, %v8800
        %v9348 = vpack.c.bf16 %v8815, %v8815
        %v9349 = vpack.c.bf16 %v8830, %v8830
        %v9350 = vpack.c.bf16 %v8845, %v8845
        %v9351 = vpack.c.bf16 %v8860, %v8860
        %v9352 = vpack.c.bf16 %v8875, %v8875
        %v9353 = vpack.c.bf16 %v8890, %v8890
        %v9354 = vpack.c.bf16 %v8905, %v8905
        %v9355 = vpack.c.bf16 %v8920, %v8920
        %v9356 = vpack.c.bf16 %v8935, %v8935
        %v9357 = vpack.c.bf16 %v8950, %v8950
        %v9358 = vpack.c.bf16 %v8965, %v8965
        %v9359 = vpack.c.bf16 %v8980, %v8980
        %v9360 = vpack.c.bf16 %v8995, %v8995
        %v9361 = vpack.c.bf16 %v9010, %v9010
        %v9362 = vpack.c.bf16 %v9025, %v9025
        %v9363 = vpack.c.bf16 %v9040, %v9040
        %v9364 = vpack.c.bf16 %v9055, %v9055
        %v9365 = vpack.c.bf16 %v9070, %v9070
        %v9366 = vpack.c.bf16 %v9085, %v9085
        %v9367 = vpack.c.bf16 %v9100, %v9100
        %v9368 = vpack.c.bf16 %v9115, %v9115
        %v9369 = vpack.c.bf16 %v9130, %v9130
        %v9370 = vpack.c.bf16 %v9145, %v9145
        %v9371 = vpack.c.bf16 %v9160, %v9160
        %v9372 = vpack.c.bf16 %v9175, %v9175
        %v9373 = vpack.c.bf16 %v9190, %v9190
        %v9374 = vpack.c.bf16 %v9205, %v9205
        %v9375 = vpack.c.bf16 %v9220, %v9220
        %v9376 = vpack.c.bf16 %v9235, %v9235
        %v9377 = vpack.c.bf16 %v9250, %v9250
        %9378 = vst [vmem:[%s272] sm:$0xf] %v9251
        %9379 = vst [vmem:[%s272 + $0x4] sm:$0xf] %v9252
        %9380 = vst [vmem:[%s272 + $0x8] sm:$0xf] %v9253
        %9381 = vst [vmem:[%s272 + $0xc] sm:$0xf] %v9254
        %9382 = vst [vmem:[%s272 + $0x10] sm:$0xf] %v9255
        %9383 = vst [vmem:[%s272 + $0x14] sm:$0xf] %v9256
        %9384 = vst [vmem:[%s272 + $0x18] sm:$0xf] %v9257
        %9385 = vst [vmem:[%s272 + $0x1c] sm:$0xf] %v9258
        %9386 = vst [vmem:[%s272 + $0x20] sm:$0xf] %v9259
        %9387 = vst [vmem:[%s272 + $0x24] sm:$0xf] %v9260
        %9388 = vst [vmem:[%s272 + $0x28] sm:$0xf] %v9261
        %9389 = vst [vmem:[%s272 + $0x2c] sm:$0xf] %v9262
        %9390 = vst [vmem:[%s272 + $0x30] sm:$0xf] %v9263
        %9391 = vst [vmem:[%s272 + $0x34] sm:$0xf] %v9264
        %9392 = vst [vmem:[%s272 + $0x38] sm:$0xf] %v9265
        %9393 = vst [vmem:[%s272 + $0x3c] sm:$0xf] %v9266
        %9394 = vst [vmem:[%s272 + $0x40] sm:$0xf] %v9267
        %9395 = vst [vmem:[%s272 + $0x44] sm:$0xf] %v9268
        %9396 = vst [vmem:[%s272 + $0x48] sm:$0xf] %v9269
        %9397 = vst [vmem:[%s272 + $0x4c] sm:$0xf] %v9270
        %9398 = vst [vmem:[%s272 + $0x50] sm:$0xf] %v9271
        %9399 = vst [vmem:[%s272 + $0x54] sm:$0xf] %v9272
        %9400 = vst [vmem:[%s272 + $0x58] sm:$0xf] %v9273
        %9401 = vst [vmem:[%s272 + $0x5c] sm:$0xf] %v9274
        %9402 = vst [vmem:[%s272 + $0x60] sm:$0xf] %v9275
        %9403 = vst [vmem:[%s272 + $0x64] sm:$0xf] %v9276
        %9404 = vst [vmem:[%s272 + $0x68] sm:$0xf] %v9277
        %9405 = vst [vmem:[%s272 + $0x6c] sm:$0xf] %v9278
        %9406 = vst [vmem:[%s272 + $0x70] sm:$0xf] %v9279
        %9407 = vst [vmem:[%s272 + $0x74] sm:$0xf] %v9280
        %9408 = vst [vmem:[%s272 + $0x78] sm:$0xf] %v9281
        %9409 = vst [vmem:[%s272 + $0x7c] sm:$0xf] %v9282
        %9410 = vst [vmem:[%s272 + $0x80] sm:$0xf] %v9283
        %9411 = vst [vmem:[%s272 + $0x84] sm:$0xf] %v9284
        %9412 = vst [vmem:[%s272 + $0x88] sm:$0xf] %v9285
        %9413 = vst [vmem:[%s272 + $0x8c] sm:$0xf] %v9286
        %9414 = vst [vmem:[%s272 + $0x90] sm:$0xf] %v9287
        %9415 = vst [vmem:[%s272 + $0x94] sm:$0xf] %v9288
        %9416 = vst [vmem:[%s272 + $0x98] sm:$0xf] %v9289
        %9417 = vst [vmem:[%s272 + $0x9c] sm:$0xf] %v9290
        %9418 = vst [vmem:[%s272 + $0xa0] sm:$0xf] %v9291
        %9419 = vst [vmem:[%s272 + $0xa4] sm:$0xf] %v9292
        %9420 = vst [vmem:[%s272 + $0xa8] sm:$0xf] %v9293
        %9421 = vst [vmem:[%s272 + $0xac] sm:$0xf] %v9294
        %9422 = vst [vmem:[%s272 + $0xb0] sm:$0xf] %v9295
        %9423 = vst [vmem:[%s272 + $0xb4] sm:$0xf] %v9296
        %9424 = vst [vmem:[%s272 + $0xb8] sm:$0xf] %v9297
        %9425 = vst [vmem:[%s272 + $0xbc] sm:$0xf] %v9298
        %9426 = vst [vmem:[%s272 + $0xc0] sm:$0xf] %v9299
        %9427 = vst [vmem:[%s272 + $0xc4] sm:$0xf] %v9300
        %9428 = vst [vmem:[%s272 + $0xc8] sm:$0xf] %v9301
        %9429 = vst [vmem:[%s272 + $0xcc] sm:$0xf] %v9302
        %9430 = vst [vmem:[%s272 + $0xd0] sm:$0xf] %v9303
        %9431 = vst [vmem:[%s272 + $0xd4] sm:$0xf] %v9304
        %9432 = vst [vmem:[%s272 + $0xd8] sm:$0xf] %v9305
        %9433 = vst [vmem:[%s272 + $0xdc] sm:$0xf] %v9306
        %9434 = vst [vmem:[%s272 + $0xe0] sm:$0xf] %v9307
        %9435 = vst [vmem:[%s272 + $0xe4] sm:$0xf] %v9308
        %9436 = vst [vmem:[%s272 + $0xe8] sm:$0xf] %v9309
        %9437 = vst [vmem:[%s272 + $0xec] sm:$0xf] %v9310
        %9438 = vst [vmem:[%s272 + $0xf0] sm:$0xf] %v9311
        %9439 = vst [vmem:[%s272 + $0xf4] sm:$0xf] %v9312
        %9440 = vst [vmem:[%s272 + $0xf8] sm:$0xf] %v9313
        %9441 = vst [vmem:[%s272 + $0xfc] sm:$0xf] %v9314
        %9442 = vst [vmem:[%s272 + $0x100] sm:$0xf] %v9315
        %9443 = vst [vmem:[%s272 + $0x104] sm:$0xf] %v9316
        %9444 = vst [vmem:[%s272 + $0x108] sm:$0xf] %v9317
        %9445 = vst [vmem:[%s272 + $0x10c] sm:$0xf] %v9318
        %9446 = vst [vmem:[%s272 + $0x110] sm:$0xf] %v9319
        %9447 = vst [vmem:[%s272 + $0x114] sm:$0xf] %v9320
        %9448 = vst [vmem:[%s272 + $0x118] sm:$0xf] %v9321
        %9449 = vst [vmem:[%s272 + $0x11c] sm:$0xf] %v9322
        %9450 = vst [vmem:[%s272 + $0x120] sm:$0xf] %v9323
        %9451 = vst [vmem:[%s272 + $0x124] sm:$0xf] %v9324
        %9452 = vst [vmem:[%s272 + $0x128] sm:$0xf] %v9325
        %9453 = vst [vmem:[%s272 + $0x12c] sm:$0xf] %v9326
        %9454 = vst [vmem:[%s272 + $0x130] sm:$0xf] %v9327
        %9455 = vst [vmem:[%s272 + $0x134] sm:$0xf] %v9328
        %9456 = vst [vmem:[%s272 + $0x138] sm:$0xf] %v9329
        %9457 = vst [vmem:[%s272 + $0x13c] sm:$0xf] %v9330
        %9458 = vst [vmem:[%s272 + $0x140] sm:$0xf] %v9331
        %9459 = vst [vmem:[%s272 + $0x144] sm:$0xf] %v9332
        %9460 = vst [vmem:[%s272 + $0x148] sm:$0xf] %v9333
        %9461 = vst [vmem:[%s272 + $0x14c] sm:$0xf] %v9334
        %9462 = vst [vmem:[%s272 + $0x150] sm:$0xf] %v9335
        %9463 = vst [vmem:[%s272 + $0x154] sm:$0xf] %v9336
        %9464 = vst [vmem:[%s272 + $0x158] sm:$0xf] %v9337
        %9465 = vst [vmem:[%s272 + $0x15c] sm:$0xf] %v9338
        %9466 = vst [vmem:[%s272 + $0x160] sm:$0xf] %v9339
        %9467 = vst [vmem:[%s272 + $0x164] sm:$0xf] %v9340
        %9468 = vst [vmem:[%s272 + $0x168] sm:$0xf] %v9341
        %9469 = vst [vmem:[%s272 + $0x16c] sm:$0xf] %v9342
        %9470 = vst [vmem:[%s272 + $0x170] sm:$0xf] %v9343
        %9471 = vst [vmem:[%s272 + $0x174] sm:$0xf] %v9344
        %9472 = vst [vmem:[%s272 + $0x178] sm:$0xf] %v9345
        %9473 = vst [vmem:[%s272 + $0x17c] sm:$0xf] %v9346
        %9474 = vst [vmem:[%s272 + $0x180] sm:$0xf] %v9347
        %9475 = vst [vmem:[%s272 + $0x184] sm:$0xf] %v9348
        %9476 = vst [vmem:[%s272 + $0x188] sm:$0xf] %v9349
        %9477 = vst [vmem:[%s272 + $0x18c] sm:$0xf] %v9350
        %9478 = vst [vmem:[%s272 + $0x190] sm:$0xf] %v9351
        %9479 = vst [vmem:[%s272 + $0x194] sm:$0xf] %v9352
        %9480 = vst [vmem:[%s272 + $0x198] sm:$0xf] %v9353
        %9481 = vst [vmem:[%s272 + $0x19c] sm:$0xf] %v9354
        %9482 = vst [vmem:[%s272 + $0x1a0] sm:$0xf] %v9355
        %9483 = vst [vmem:[%s272 + $0x1a4] sm:$0xf] %v9356
        %9484 = vst [vmem:[%s272 + $0x1a8] sm:$0xf] %v9357
        %9485 = vst [vmem:[%s272 + $0x1ac] sm:$0xf] %v9358
        %9486 = vst [vmem:[%s272 + $0x1b0] sm:$0xf] %v9359
        %9487 = vst [vmem:[%s272 + $0x1b4] sm:$0xf] %v9360
        %9488 = vst [vmem:[%s272 + $0x1b8] sm:$0xf] %v9361
        %9489 = vst [vmem:[%s272 + $0x1bc] sm:$0xf] %v9362
        %9490 = vst [vmem:[%s272 + $0x1c0] sm:$0xf] %v9363
        %9491 = vst [vmem:[%s272 + $0x1c4] sm:$0xf] %v9364
        %9492 = vst [vmem:[%s272 + $0x1c8] sm:$0xf] %v9365
        %9493 = vst [vmem:[%s272 + $0x1cc] sm:$0xf] %v9366
        %9494 = vst [vmem:[%s272 + $0x1d0] sm:$0xf] %v9367
        %9495 = vst [vmem:[%s272 + $0x1d4] sm:$0xf] %v9368
        %9496 = vst [vmem:[%s272 + $0x1d8] sm:$0xf] %v9369
        %9497 = vst [vmem:[%s272 + $0x1dc] sm:$0xf] %v9370
        %9498 = vst [vmem:[%s272 + $0x1e0] sm:$0xf] %v9371
        %9499 = vst [vmem:[%s272 + $0x1e4] sm:$0xf] %v9372
        %9500 = vst [vmem:[%s272 + $0x1e8] sm:$0xf] %v9373
        %9501 = vst [vmem:[%s272 + $0x1ec] sm:$0xf] %v9374
        %9502 = vst [vmem:[%s272 + $0x1f0] sm:$0xf] %v9375
        %9503 = vst [vmem:[%s272 + $0x1f4] sm:$0xf] %v9376
        %9504 = vst [vmem:[%s272 + $0x1f8] sm:$0xf] %v9377
        %s9505 = sand.u32 %s181, 1
        %s9506 = scalar_lea.sflag [#allocation3], %s9505
        %s9507 = sand.u32 %s181, 1
        %s9508 = smul.addr %s9507, 508
        %s9509 = scalar_lea.vmem [#allocation2], %s9508
        // Predicated region
        $region49: #{tpu_custom_call.1} parent=47 // pred_check
          %p9510 = pneg %p191
        $region50: #{tpu_custom_call.1} parent=47 // pred_check_branch
          %9512 = sbr.rel (%p9510) target = $region52
        $region51: #{tpu_custom_call.1} parent=47 // pred_region
          %s9513 = smul.u32 127, %s21
          %9515 = vsyncadd %s9506, 0
          %s9516 = smul.addr %s9513, 4
          %s9517 = scalar_lea.hbm %s7, %s9516
          %s9518 = sshll.u32 %s9509, 4
          %s9519 = int_to_ptr.vmem [resolvable:$true] %s9518
          %s9520 = sshll.u32 %s9517, 4
          %s9521 = int_to_ptr.hbm [resolvable:$true] %s9520
          %9526 = dma.vmem_to_hbm [thread:$0]  %s9519, 8128, %s9521, %s9506, 64, 64, 4
        $region52: #{tpu_custom_call.1} parent=47 // pred_fallthru
          _
      $region48: #{tpu_custom_call.1} parent=5 // pred_fallthru
        _
      %p9527 = scmp.le.s32.totalorder 2, %s16
      // Predicated region
      $region53: #{tpu_custom_call.1} parent=5 // pred_check
        %p9528 = pneg %p9527
      $region54: #{tpu_custom_call.1} parent=5 // pred_check_branch
        %9530 = sbr.rel (%p9528) target = $region56
      $region55: #{tpu_custom_call.1} parent=5 // pred_region
        %s9531 = ssub.s32 %s16, 2
        // Predicated region
        $region57: #{tpu_custom_call.1} parent=55 // pred_check
          %p9532 = pneg %p197
        $region58: #{tpu_custom_call.1} parent=55 // pred_check_branch
          %9534 = sbr.rel (%p9532) target = $region60
        $region59: #{tpu_custom_call.1} parent=55 // pred_region
          %s9535 = sand.u32 %s182, 1
          %s9536 = scalar_lea.sflag [#allocation3], %s9535
          %s9537 = sand.u32 %s182, 1
          %s9538 = smul.addr %s9537, 508
          %s9539 = scalar_lea.vmem [#allocation2], %s9538
          %9541 = dma.done %s9536, 8128
        $region60: #{tpu_custom_call.1} parent=55 // pred_fallthru
          _
      $region56: #{tpu_custom_call.1} parent=5 // pred_fallthru
        _
    $region6: #{tpu_custom_call.1} parent=1 // loop_footer
      %s20 = sadd.s32 1, %s16
    $region7: #{tpu_custom_call.1} parent=1 // loop_footer_branch
      %15 = sbr.rel target = $region3
    $region8: #{tpu_custom_call.1} parent=1 // loop_exit
      _
    %9542 = vsyncpa [#allocation3], 1
    %s9543 = scalar_lea.sflag [#allocation3], 1
    %9544 = vsyncpa %s9543, 1

</llo_original>
